<compile_context>
chip_gen: v7x
topology: tpu7x:2x2x1
jax: 0.10.0
libtpu: 0.0.40
codegen_flags: <defaults>
</compile_context>

<pallas_src>
import jax
import jax.numpy as jnp
import numpy as np
from jax.experimental import pallas as pl
from jax.experimental.pallas import tpu as pltpu

N_BATCH = 8
D_IN = 16             # input_size
H_SMALL = 64          # Real_LSTM / CMD_LSTM hidden size
H_FUSED = 2 * H_SMALL # fused real+cmd hidden width
H_BIG = 512           # concat_LSTM hidden size
N_LAYERS = 5
CONV_CH = 16
POOL_OUT = 31         # MaxPool1d(kernel=3, stride=2) over 64 -> 31
POOL_PAD = 32         # zero-pad 31 -> 32 per channel so flattened pool output is (N, 512)
CONCAT_IN = CONV_CH * POOL_OUT   # 496 (PyTorch flatten order ch*31 + j)
POOL_FLAT = CONV_CH * POOL_PAD   # 512 (kernel's padded flatten, index ch*32 + j)
OUT_SIZE = 8
BN_EPS = 1e-5

G_SMALL = 3 * H_FUSED   # 384  fused gates [i_r|i_c | g_r|g_c | o_r|o_c] (f gate dropped)
G_BIG = 3 * H_BIG       # 1536 gates [i | g | o] (f gate dropped)


# ----------------------------------------------------------------------------- kernel

def _cell(gates, H):
    # Forget gate dropped: with h0 = c0 = 0 and a single time step, c = sigmoid(i)*tanh(g).
    i = jax.nn.sigmoid(gates[:, 0 * H:1 * H])
    g = jnp.tanh(gates[:, 1 * H:2 * H])
    o = jax.nn.sigmoid(gates[:, 2 * H:3 * H])
    return o * jnp.tanh(i * g)


def double_lstm_kernel(x12_ref, w0f_ref, wrf_ref, bf_ref,
                       a_ref, bp_ref, cw0_ref, cb0_ref,
                       cwr_ref, cbr_ref, fcw_ref, fcb_ref,
                       out_ref, h_ref):
    step = pl.program_id(0)
    bf16 = jnp.bfloat16
    f32 = jnp.float32

    @pl.when(step == 0)
    def _front():
        # fused Real_LSTM + CMD_LSTM stack (block-diagonal weights, zero initial state)
        gates = jnp.dot(x12_ref[...].astype(bf16), w0f_ref[...],
                        preferred_element_type=f32) + bf_ref[0]
        h2 = _cell(gates, H_FUSED)
        for l in range(N_LAYERS - 1):
            gates = jnp.dot(h2.astype(bf16), wrf_ref[l],
                            preferred_element_type=f32) + bf_ref[l + 1]
            h2 = _cell(gates, H_FUSED)

        # BN (folded) + Conv2d(1,16,(2,1)) + ReLU + MaxPool1d(3,2) + flatten:
        # three (128, 512) matmuls (one per pool-window offset) + relu + elementwise max.
        h2b = h2.astype(bf16)
        pooled = None
        for d in range(3):
            pre = jnp.dot(h2b, a_ref[d], preferred_element_type=f32) + bp_ref[d]
            pre = jnp.maximum(pre, 0.0)
            pooled = pre if pooled is None else jnp.maximum(pooled, pre)

        # concat_LSTM layer 0 on the padded (N, 512) pooled features
        gates = jnp.dot(pooled.astype(bf16), cw0_ref[...],
                        preferred_element_type=f32) + cb0_ref[...]
        h_ref[...] = _cell(gates, H_BIG)

    # concat_LSTM recurrent layer (layer step+1).  cwr is the only large grid-blocked
    # operand, so later layers' (512, 1536) bf16 slabs stream in while earlier layers compute.
    gates = jnp.dot(h_ref[...].astype(bf16), cwr_ref[0],
                    preferred_element_type=f32) + cbr_ref[0]
    h_ref[...] = _cell(gates, H_BIG)

    @pl.when(step == pl.num_programs(0) - 1)
    def _final():
        out_ref[...] = jnp.dot(h_ref[...], fcw_ref[...],
                               preferred_element_type=f32) + fcb_ref[...]


def _pallas_forward(x12, p, buffer_depth):
    n = x12.shape[0]

    def const(shape):
        nd = len(shape)
        return pl.BlockSpec(shape, lambda l, nd=nd: (0,) * nd)

    if buffer_depth is None:
        cwr_spec = pl.BlockSpec((1, H_BIG, G_BIG), lambda l: (l, 0, 0))
    else:
        # Deeper weight-streaming pipeline: layers 2..3 slabs DMA while step 0 computes.
        cwr_spec = pl.BlockSpec((1, H_BIG, G_BIG), lambda l: (l, 0, 0),
                                pipeline_mode=pl.Buffered(buffer_depth))

    in_specs = [
        const(x12.shape),
        const(p["w0f"].shape),
        const(p["wrf"].shape),
        const(p["bf"].shape),
        const(p["a_mats"].shape),
        const(p["b_pool"].shape),
        const(p["cat_w0"].shape),
        const(p["cat_b0"].shape),
        cwr_spec,                                               # streamed per layer
        pl.BlockSpec((1, 1, G_BIG), lambda l: (l, 0, 0)),
        const(p["fc_w"].shape),
        const(p["fc_b"].shape),
    ]
    out_spec = pl.BlockSpec((n, OUT_SIZE), lambda l: (0, 0))

    return pl.pallas_call(
        double_lstm_kernel,
        out_shape=jax.ShapeDtypeStruct((n, OUT_SIZE), jnp.float32),
        grid_spec=pltpu.PrefetchScalarGridSpec(
            num_scalar_prefetch=0,
            grid=(N_LAYERS - 1,),
            in_specs=in_specs,
            out_specs=out_spec,
            scratch_shapes=[pltpu.VMEM((n, H_BIG), jnp.float32)],
        ),
        compiler_params=pltpu.CompilerParams(
            dimension_semantics=("arbitrary",),          # h is carried across layers
            vmem_limit_bytes=32 * 1024 * 1024,           # v7x-safe (64 MiB physical)
        ),
    )(x12, p["w0f"], p["wrf"], p["bf"], p["a_mats"], p["b_pool"],
      p["cat_w0"], p["cat_b0"], p["cat_wr"], p["cat_br"], p["fc_w"], p["fc_b"])


def double_lstm_forward(x1, x2, p):
    # [x1 | x2] lane-concat is pure layout plumbing; do it once in the wrapper.
    x12 = jnp.concatenate([x1, x2], axis=1).astype(jnp.float32)   # (N, 32)
    try:
        out = _pallas_forward(x12, p, buffer_depth=3)
        return jax.block_until_ready(out)                 # surface any lowering/runtime issue
    except Exception:                                      # noqa: BLE001
        # Installed JAX/Mosaic rejected pipeline_mode=pl.Buffered -> default double buffering.
        return _pallas_forward(x12, p, buffer_depth=None)


# ----------------------------------------------------------------------------- params

def init_raw_params(key):
    """PyTorch-layout parameters (full 4-gate LSTMs, raw BN / Conv / FC params)."""
    keys = iter(jax.random.split(key, 80))

    def nrm(shape, scale=0.1):
        return scale * jax.random.normal(next(keys), shape, jnp.float32)

    def lstm_raw(in_dim, hidden):
        layers = []
        for l in range(N_LAYERS):
            d = in_dim if l == 0 else hidden
            layers.append(dict(
                w_ih=nrm((4 * hidden, d)),
                w_hh=nrm((4 * hidden, hidden)),   # unused: h0 == 0 and seq_len == 1
                b_ih=nrm((4 * hidden,)),
                b_hh=nrm((4 * hidden,)),
            ))
        return layers

    def bn_raw(c):
        return dict(gamma=1.0 + nrm((c,)), beta=nrm((c,)),
                    mean=nrm((c,)), var=1.0 + jnp.abs(nrm((c,))))

    return dict(
        real_lstm=lstm_raw(D_IN, H_SMALL),
        cmd_lstm=lstm_raw(D_IN, H_SMALL),
        bn1=bn_raw(H_SMALL), bn2=bn_raw(H_SMALL),
        conv_w=nrm((CONV_CH, 1, 2, 1)), conv_b=nrm((CONV_CH,)),
        cat_lstm=lstm_raw(CONCAT_IN, H_BIG),
        fc_w=nrm((OUT_SIZE, H_BIG)), fc_b=nrm((OUT_SIZE,)),
    )


def prepare_params(raw):
    """Fold / fuse / quantize raw params into the kernel operand set."""
    H = H_SMALL

    def npf(x):
        return np.asarray(x, dtype=np.float32)

    def igo_cols(w_ih):               # torch (4H, in) -> (in, 3H) columns [i|g|o]
        w = npf(w_ih)
        h = w.shape[0] // 4
        return np.concatenate([w[0 * h:1 * h], w[2 * h:3 * h], w[3 * h:4 * h]], axis=0).T

    def igo_bias(layer):              # -> (3H,)  (b_ih + b_hh, f gate dropped)
        b = npf(layer["b_ih"]) + npf(layer["b_hh"])
        h = b.shape[0] // 4
        return np.concatenate([b[0 * h:1 * h], b[2 * h:3 * h], b[3 * h:4 * h]])

    # --- fused Real/CMD stack, gate layout [i_r|i_c | g_r|g_c | o_r|o_c] (128-aligned slices)
    w0f = np.zeros((2 * D_IN, G_SMALL), np.float32)
    wrf = np.zeros((N_LAYERS - 1, H_FUSED, G_SMALL), np.float32)
    bf = np.zeros((N_LAYERS, 1, G_SMALL), np.float32)
    for which, lstm in enumerate((raw["real_lstm"], raw["cmd_lstm"])):   # 0 = real, 1 = cmd
        w = igo_cols(lstm[0]["w_ih"])                                    # (16, 192)
        b = igo_bias(lstm[0])
        for gi in range(3):
            c0 = gi * H_FUSED + which * H
            w0f[which * D_IN:(which + 1) * D_IN, c0:c0 + H] = w[:, gi * H:(gi + 1) * H]
            bf[0, 0, c0:c0 + H] = b[gi * H:(gi + 1) * H]
        for l in range(1, N_LAYERS):
            w = igo_cols(lstm[l]["w_ih"])                                # (64, 192)
            b = igo_bias(lstm[l])
            for gi in range(3):
                c0 = gi * H_FUSED + which * H
                wrf[l - 1, which * H:(which + 1) * H, c0:c0 + H] = w[:, gi * H:(gi + 1) * H]
                bf[l, 0, c0:c0 + H] = b[gi * H:(gi + 1) * H]

    # --- BN (eval stats) + Conv2d(1,16,(2,1)) + MaxPool window offsets folded into matmuls
    s1 = npf(raw["bn1"]["gamma"]) / np.sqrt(npf(raw["bn1"]["var"]) + BN_EPS)
    t1 = npf(raw["bn1"]["beta"]) - npf(raw["bn1"]["mean"]) * s1
    s2 = npf(raw["bn2"]["gamma"]) / np.sqrt(npf(raw["bn2"]["var"]) + BN_EPS)
    t2 = npf(raw["bn2"]["beta"]) - npf(raw["bn2"]["mean"]) * s2
    wreal = npf(raw["conv_w"])[:, 0, 0, 0]
    wcmd = npf(raw["conv_w"])[:, 0, 1, 0]
    cb = npf(raw["conv_b"])

    a_mats = np.zeros((3, H_FUSED, POOL_FLAT), np.float32)
    b_pool = np.zeros((3, 1, POOL_FLAT), np.float32)
    for d in range(3):
        for ch in range(CONV_CH):
            for j in range(POOL_OUT):
                k = 2 * j + d
                col = ch * POOL_PAD + j
                a_mats[d, k, col] = s1[k] * wreal[ch]
                a_mats[d, H + k, col] = s2[k] * wcmd[ch]
                b_pool[d, 0, col] = t1[k] * wreal[ch] + t2[k] * wcmd[ch] + cb[ch]

    # --- concat_LSTM layer 0: scatter (496, 1536) into the padded (512, 1536) layout
    cw0_compact = igo_cols(raw["cat_lstm"][0]["w_ih"])          # (496, 1536)
    cat_w0 = np.zeros((POOL_FLAT, G_BIG), np.float32)
    for ch in range(CONV_CH):
        cat_w0[ch * POOL_PAD:ch * POOL_PAD + POOL_OUT, :] = \
            cw0_compact[ch * POOL_OUT:(ch + 1) * POOL_OUT, :]
    cat_b0 = igo_bias(raw["cat_lstm"][0])[None, :]              # (1, 1536)

    cat_wr = np.stack([igo_cols(raw["cat_lstm"][l]["w_ih"]) for l in range(1, N_LAYERS)])
    cat_br = np.stack([igo_bias(raw["cat_lstm"][l])[None, :] for l in range(1, N_LAYERS)])

    fc_w = npf(raw["fc_w"]).T                                   # (512, OUT)
    fc_b = npf(raw["fc_b"])[None, :]                            # (1, OUT)

    bfl = jnp.bfloat16
    return dict(
        w0f=jnp.asarray(w0f, bfl), wrf=jnp.asarray(wrf, bfl), bf=jnp.asarray(bf, jnp.float32),
        a_mats=jnp.asarray(a_mats, bfl), b_pool=jnp.asarray(b_pool, jnp.float32),
        cat_w0=jnp.asarray(cat_w0, bfl), cat_b0=jnp.asarray(cat_b0, jnp.float32),
        cat_wr=jnp.asarray(cat_wr, bfl), cat_br=jnp.asarray(cat_br, jnp.float32),
        fc_w=jnp.asarray(fc_w, jnp.float32), fc_b=jnp.asarray(fc_b, jnp.float32),
    )


# ----------------------------------------------------------------------------- reference

def reference_forward(x1, x2, raw):
    """Pure-JAX eval-mode forward from the raw PyTorch-layout params (full 4-gate LSTM)."""
    hi = jax.lax.Precision.HIGHEST

    def mm(a, b):
        return jnp.dot(a, b, precision=hi)

    def lstm_stack(x, layers):
        h = x
        for lay in layers:
            Hn = lay["w_hh"].shape[1]
            gates = mm(h, lay["w_ih"].T) + lay["b_ih"] + lay["b_hh"]   # h0 = 0 => no w_hh term
            i = jax.nn.sigmoid(gates[:, 0 * Hn:1 * Hn])
            f = jax.nn.sigmoid(gates[:, 1 * Hn:2 * Hn])
            g = jnp.tanh(gates[:, 2 * Hn:3 * Hn])
            o = jax.nn.sigmoid(gates[:, 3 * Hn:4 * Hn])
            c = f * 0.0 + i * g                                        # c0 = 0
            h = o * jnp.tanh(c)
        return h

    def bn(x, p):
        return (x - p["mean"]) / jnp.sqrt(p["var"] + BN_EPS) * p["gamma"] + p["beta"]

    real_h = lstm_stack(x1, raw["real_lstm"])
    cmd_h = lstm_stack(x2, raw["cmd_lstm"])
    real_bn = bn(real_h, raw["bn1"])
    cmd_bn = bn(cmd_h, raw["bn2"])

    wr = raw["conv_w"][:, 0, 0, 0]
    wc = raw["conv_w"][:, 0, 1, 0]
    conv = (real_bn[:, None, :] * wr[None, :, None]
            + cmd_bn[:, None, :] * wc[None, :, None]
            + raw["conv_b"][None, :, None])                            # (N, 16, 64)
    conv = jnp.maximum(conv, 0.0)
    pooled = jnp.stack([jnp.max(conv[:, :, 2 * j:2 * j + 3], axis=-1)
                        for j in range(POOL_OUT)], axis=-1)            # (N, 16, 31)
    flat = pooled.reshape(x1.shape[0], CONCAT_IN)

    h = lstm_stack(flat, raw["cat_lstm"])
    return mm(h, raw["fc_w"].T) + raw["fc_b"]


# ----------------------------------------------------------------------------- main

if __name__ == "__main__":
    key = jax.random.PRNGKey(0)
    kx1, kx2, kp = jax.random.split(key, 3)
    x1 = jax.random.normal(kx1, (N_BATCH, D_IN), jnp.float32)
    x2 = jax.random.normal(kx2, (N_BATCH, D_IN), jnp.float32)

    raw = init_raw_params(kp)
    params = prepare_params(raw)

    out = jax.block_until_ready(double_lstm_forward(x1, x2, params))
    ref = jax.block_until_ready(reference_forward(x1, x2, raw))

    assert out.shape == (N_BATCH, OUT_SIZE)
    assert bool(jnp.all(jnp.isfinite(out)))
    out_np, ref_np = np.asarray(out), np.asarray(ref)
    if not np.allclose(out_np, ref_np, atol=2e-2, rtol=2e-2):
        raise AssertionError(
            f"mismatch: max abs diff = {np.max(np.abs(out_np - ref_np))}")
    print("KERNEL_OK")
</pallas_src>

<mosaic_0001>
module attributes {stable_mosaic.version = 11 : i64} {
  func.func @double_lstm_kernel(%arg0: i32, %arg1: memref<8x32xf32, #tpu.memory_space<vmem>>, %arg2: memref<32x384xbf16, #tpu.memory_space<vmem>>, %arg3: memref<4x128x384xbf16, #tpu.memory_space<vmem>>, %arg4: memref<5x1x384xf32, #tpu.memory_space<vmem>>, %arg5: memref<3x128x512xbf16, #tpu.memory_space<vmem>>, %arg6: memref<3x1x512xf32, #tpu.memory_space<vmem>>, %arg7: memref<512x1536xbf16, #tpu.memory_space<vmem>>, %arg8: memref<1x1536xf32, #tpu.memory_space<vmem>>, %arg9: memref<1x512x1536xbf16, #tpu.memory_space<vmem>>, %arg10: memref<1x1x1536xf32, #tpu.memory_space<vmem>>, %arg11: memref<512x8xf32, #tpu.memory_space<vmem>>, %arg12: memref<1x8xf32, #tpu.memory_space<vmem>>, %arg13: memref<8x8xf32, #tpu.memory_space<vmem>>, %arg14: memref<8x512xf32, #tpu.memory_space<vmem>>) attributes {dimension_semantics = [#tpu.dimension_semantics<arbitrary>], iteration_bounds = array<i64: 4>, scalar_prefetch = 0 : i64, scratch_operands = 1 : i64, tpu.core_type = #tpu.core_type<tc>, window_params = [{pipeline_mode = #tpu.pipeline_mode<synchronous>, transform_indices = @transform_0, window_bounds = array<i64: 8, 32>}, {pipeline_mode = #tpu.pipeline_mode<synchronous>, transform_indices = @transform_1, window_bounds = array<i64: 32, 384>}, {pipeline_mode = #tpu.pipeline_mode<synchronous>, transform_indices = @transform_2, window_bounds = array<i64: 4, 128, 384>}, {pipeline_mode = #tpu.pipeline_mode<synchronous>, transform_indices = @transform_3, window_bounds = array<i64: 5, 1, 384>}, {pipeline_mode = #tpu.pipeline_mode<synchronous>, transform_indices = @transform_4, window_bounds = array<i64: 3, 128, 512>}, {pipeline_mode = #tpu.pipeline_mode<synchronous>, transform_indices = @transform_5, window_bounds = array<i64: 3, 1, 512>}, {pipeline_mode = #tpu.pipeline_mode<synchronous>, transform_indices = @transform_6, window_bounds = array<i64: 512, 1536>}, {pipeline_mode = #tpu.pipeline_mode<synchronous>, transform_indices = @transform_7, window_bounds = array<i64: 1, 1536>}, {transform_indices = @transform_8, window_bounds = array<i64: 1, 512, 1536>}, {transform_indices = @transform_9, window_bounds = array<i64: 1, 1, 1536>}, {pipeline_mode = #tpu.pipeline_mode<synchronous>, transform_indices = @transform_10, window_bounds = array<i64: 512, 8>}, {pipeline_mode = #tpu.pipeline_mode<synchronous>, transform_indices = @transform_11, window_bounds = array<i64: 1, 8>}, {pipeline_mode = #tpu.pipeline_mode<synchronous>, transform_indices = @transform_12, window_bounds = array<i64: 8, 8>}]} {
    %c0_i32 = arith.constant 0 : i32
    %0 = arith.cmpi eq, %arg0, %c0_i32 : i32
    %1 = arith.extui %0 : i1 to i32
    %c0_i32_0 = arith.constant 0 : i32
    %2 = arith.cmpi ne, %1, %c0_i32_0 : i32
    scf.if %2 {
      %c0_13 = arith.constant 0 : index
      %c0_14 = arith.constant 0 : index
      %33 = vector.load %arg1[%c0_13, %c0_14] : memref<8x32xf32, #tpu.memory_space<vmem>>, vector<8x32xf32>
      %34 = arith.truncf %33 : vector<8x32xf32> to vector<8x32xbf16>
      %c0_15 = arith.constant 0 : index
      %c0_16 = arith.constant 0 : index
      %35 = vector.load %arg2[%c0_15, %c0_16] : memref<32x384xbf16, #tpu.memory_space<vmem>>, vector<32x384xbf16>
      %cst_17 = arith.constant dense<0.000000e+00> : vector<8x384xf32>
      %36 = tpu.matmul %34, %35, %cst_17 {dimension_numbers = #tpu.dot_dimension_numbers<[1], [0], [0], [1], [0, 0, 1, 1], [], []>} : vector<8x32xbf16>, vector<32x384xbf16>, vector<8x384xf32> -> vector<8x384xf32>
      %c0_18 = arith.constant 0 : index
      %c0_19 = arith.constant 0 : index
      %c0_20 = arith.constant 0 : index
      %37 = vector.load %arg4[%c0_18, %c0_19, %c0_20] : memref<5x1x384xf32, #tpu.memory_space<vmem>>, vector<1x1x384xf32>
      %38 = vector.shape_cast %37 : vector<1x1x384xf32> to vector<1x384xf32>
      %39 = vector.broadcast %38 : vector<1x384xf32> to vector<8x384xf32>
      %40 = arith.addf %36, %39 : vector<8x384xf32>
      %41 = vector.extract_strided_slice %40 {offsets = [0, 0], sizes = [8, 128], strides = [1, 1]} : vector<8x384xf32> to vector<8x128xf32>
      %42 = arith.negf %41 : vector<8x128xf32>
      %43 = math.exp %42 : vector<8x128xf32>
      %cst_21 = arith.constant 1.000000e+00 : f32
      %44 = vector.broadcast %cst_21 : f32 to vector<8x128xf32>
      %45 = arith.addf %44, %43 : vector<8x128xf32>
      %46 = arith.divf %44, %45 : vector<8x128xf32>
      %47 = vector.extract_strided_slice %40 {offsets = [0, 128], sizes = [8, 128], strides = [1, 1]} : vector<8x384xf32> to vector<8x128xf32>
      %48 = math.tanh %47 : vector<8x128xf32>
      %49 = vector.extract_strided_slice %40 {offsets = [0, 256], sizes = [8, 128], strides = [1, 1]} : vector<8x384xf32> to vector<8x128xf32>
      %50 = arith.negf %49 : vector<8x128xf32>
      %51 = math.exp %50 : vector<8x128xf32>
      %cst_22 = arith.constant 1.000000e+00 : f32
      %52 = vector.broadcast %cst_22 : f32 to vector<8x128xf32>
      %53 = arith.addf %52, %51 : vector<8x128xf32>
      %54 = arith.divf %52, %53 : vector<8x128xf32>
      %55 = arith.mulf %46, %48 : vector<8x128xf32>
      %56 = math.tanh %55 : vector<8x128xf32>
      %57 = arith.mulf %54, %56 : vector<8x128xf32>
      %58 = arith.truncf %57 : vector<8x128xf32> to vector<8x128xbf16>
      %c0_23 = arith.constant 0 : index
      %c0_24 = arith.constant 0 : index
      %c0_25 = arith.constant 0 : index
      %59 = vector.load %arg3[%c0_23, %c0_24, %c0_25] : memref<4x128x384xbf16, #tpu.memory_space<vmem>>, vector<1x128x384xbf16>
      %60 = vector.shape_cast %59 : vector<1x128x384xbf16> to vector<128x384xbf16>
      %cst_26 = arith.constant dense<0.000000e+00> : vector<8x384xf32>
      %61 = tpu.matmul %58, %60, %cst_26 {dimension_numbers = #tpu.dot_dimension_numbers<[1], [0], [0], [1], [0, 0, 1, 1], [], []>} : vector<8x128xbf16>, vector<128x384xbf16>, vector<8x384xf32> -> vector<8x384xf32>
      %c1 = arith.constant 1 : index
      %c0_27 = arith.constant 0 : index
      %c0_28 = arith.constant 0 : index
      %62 = vector.load %arg4[%c1, %c0_27, %c0_28] : memref<5x1x384xf32, #tpu.memory_space<vmem>>, vector<1x1x384xf32>
      %63 = vector.shape_cast %62 : vector<1x1x384xf32> to vector<1x384xf32>
      %64 = vector.broadcast %63 : vector<1x384xf32> to vector<8x384xf32>
      %65 = arith.addf %61, %64 : vector<8x384xf32>
      %66 = vector.extract_strided_slice %65 {offsets = [0, 0], sizes = [8, 128], strides = [1, 1]} : vector<8x384xf32> to vector<8x128xf32>
      %67 = arith.negf %66 : vector<8x128xf32>
      %68 = math.exp %67 : vector<8x128xf32>
      %cst_29 = arith.constant 1.000000e+00 : f32
      %69 = vector.broadcast %cst_29 : f32 to vector<8x128xf32>
      %70 = arith.addf %69, %68 : vector<8x128xf32>
      %71 = arith.divf %69, %70 : vector<8x128xf32>
      %72 = vector.extract_strided_slice %65 {offsets = [0, 128], sizes = [8, 128], strides = [1, 1]} : vector<8x384xf32> to vector<8x128xf32>
      %73 = math.tanh %72 : vector<8x128xf32>
      %74 = vector.extract_strided_slice %65 {offsets = [0, 256], sizes = [8, 128], strides = [1, 1]} : vector<8x384xf32> to vector<8x128xf32>
      %75 = arith.negf %74 : vector<8x128xf32>
      %76 = math.exp %75 : vector<8x128xf32>
      %cst_30 = arith.constant 1.000000e+00 : f32
      %77 = vector.broadcast %cst_30 : f32 to vector<8x128xf32>
      %78 = arith.addf %77, %76 : vector<8x128xf32>
      %79 = arith.divf %77, %78 : vector<8x128xf32>
      %80 = arith.mulf %71, %73 : vector<8x128xf32>
      %81 = math.tanh %80 : vector<8x128xf32>
      %82 = arith.mulf %79, %81 : vector<8x128xf32>
      %83 = arith.truncf %82 : vector<8x128xf32> to vector<8x128xbf16>
      %c1_31 = arith.constant 1 : index
      %c0_32 = arith.constant 0 : index
      %c0_33 = arith.constant 0 : index
      %84 = vector.load %arg3[%c1_31, %c0_32, %c0_33] : memref<4x128x384xbf16, #tpu.memory_space<vmem>>, vector<1x128x384xbf16>
      %85 = vector.shape_cast %84 : vector<1x128x384xbf16> to vector<128x384xbf16>
      %cst_34 = arith.constant dense<0.000000e+00> : vector<8x384xf32>
      %86 = tpu.matmul %83, %85, %cst_34 {dimension_numbers = #tpu.dot_dimension_numbers<[1], [0], [0], [1], [0, 0, 1, 1], [], []>} : vector<8x128xbf16>, vector<128x384xbf16>, vector<8x384xf32> -> vector<8x384xf32>
      %c2 = arith.constant 2 : index
      %c0_35 = arith.constant 0 : index
      %c0_36 = arith.constant 0 : index
      %87 = vector.load %arg4[%c2, %c0_35, %c0_36] : memref<5x1x384xf32, #tpu.memory_space<vmem>>, vector<1x1x384xf32>
      %88 = vector.shape_cast %87 : vector<1x1x384xf32> to vector<1x384xf32>
      %89 = vector.broadcast %88 : vector<1x384xf32> to vector<8x384xf32>
      %90 = arith.addf %86, %89 : vector<8x384xf32>
      %91 = vector.extract_strided_slice %90 {offsets = [0, 0], sizes = [8, 128], strides = [1, 1]} : vector<8x384xf32> to vector<8x128xf32>
      %92 = arith.negf %91 : vector<8x128xf32>
      %93 = math.exp %92 : vector<8x128xf32>
      %cst_37 = arith.constant 1.000000e+00 : f32
      %94 = vector.broadcast %cst_37 : f32 to vector<8x128xf32>
      %95 = arith.addf %94, %93 : vector<8x128xf32>
      %96 = arith.divf %94, %95 : vector<8x128xf32>
      %97 = vector.extract_strided_slice %90 {offsets = [0, 128], sizes = [8, 128], strides = [1, 1]} : vector<8x384xf32> to vector<8x128xf32>
      %98 = math.tanh %97 : vector<8x128xf32>
      %99 = vector.extract_strided_slice %90 {offsets = [0, 256], sizes = [8, 128], strides = [1, 1]} : vector<8x384xf32> to vector<8x128xf32>
      %100 = arith.negf %99 : vector<8x128xf32>
      %101 = math.exp %100 : vector<8x128xf32>
      %cst_38 = arith.constant 1.000000e+00 : f32
      %102 = vector.broadcast %cst_38 : f32 to vector<8x128xf32>
      %103 = arith.addf %102, %101 : vector<8x128xf32>
      %104 = arith.divf %102, %103 : vector<8x128xf32>
      %105 = arith.mulf %96, %98 : vector<8x128xf32>
      %106 = math.tanh %105 : vector<8x128xf32>
      %107 = arith.mulf %104, %106 : vector<8x128xf32>
      %108 = arith.truncf %107 : vector<8x128xf32> to vector<8x128xbf16>
      %c2_39 = arith.constant 2 : index
      %c0_40 = arith.constant 0 : index
      %c0_41 = arith.constant 0 : index
      %109 = vector.load %arg3[%c2_39, %c0_40, %c0_41] : memref<4x128x384xbf16, #tpu.memory_space<vmem>>, vector<1x128x384xbf16>
      %110 = vector.shape_cast %109 : vector<1x128x384xbf16> to vector<128x384xbf16>
      %cst_42 = arith.constant dense<0.000000e+00> : vector<8x384xf32>
      %111 = tpu.matmul %108, %110, %cst_42 {dimension_numbers = #tpu.dot_dimension_numbers<[1], [0], [0], [1], [0, 0, 1, 1], [], []>} : vector<8x128xbf16>, vector<128x384xbf16>, vector<8x384xf32> -> vector<8x384xf32>
      %c3 = arith.constant 3 : index
      %c0_43 = arith.constant 0 : index
      %c0_44 = arith.constant 0 : index
      %112 = vector.load %arg4[%c3, %c0_43, %c0_44] : memref<5x1x384xf32, #tpu.memory_space<vmem>>, vector<1x1x384xf32>
      %113 = vector.shape_cast %112 : vector<1x1x384xf32> to vector<1x384xf32>
      %114 = vector.broadcast %113 : vector<1x384xf32> to vector<8x384xf32>
      %115 = arith.addf %111, %114 : vector<8x384xf32>
      %116 = vector.extract_strided_slice %115 {offsets = [0, 0], sizes = [8, 128], strides = [1, 1]} : vector<8x384xf32> to vector<8x128xf32>
      %117 = arith.negf %116 : vector<8x128xf32>
      %118 = math.exp %117 : vector<8x128xf32>
      %cst_45 = arith.constant 1.000000e+00 : f32
      %119 = vector.broadcast %cst_45 : f32 to vector<8x128xf32>
      %120 = arith.addf %119, %118 : vector<8x128xf32>
      %121 = arith.divf %119, %120 : vector<8x128xf32>
      %122 = vector.extract_strided_slice %115 {offsets = [0, 128], sizes = [8, 128], strides = [1, 1]} : vector<8x384xf32> to vector<8x128xf32>
      %123 = math.tanh %122 : vector<8x128xf32>
      %124 = vector.extract_strided_slice %115 {offsets = [0, 256], sizes = [8, 128], strides = [1, 1]} : vector<8x384xf32> to vector<8x128xf32>
      %125 = arith.negf %124 : vector<8x128xf32>
      %126 = math.exp %125 : vector<8x128xf32>
      %cst_46 = arith.constant 1.000000e+00 : f32
      %127 = vector.broadcast %cst_46 : f32 to vector<8x128xf32>
      %128 = arith.addf %127, %126 : vector<8x128xf32>
      %129 = arith.divf %127, %128 : vector<8x128xf32>
      %130 = arith.mulf %121, %123 : vector<8x128xf32>
      %131 = math.tanh %130 : vector<8x128xf32>
      %132 = arith.mulf %129, %131 : vector<8x128xf32>
      %133 = arith.truncf %132 : vector<8x128xf32> to vector<8x128xbf16>
      %c3_47 = arith.constant 3 : index
      %c0_48 = arith.constant 0 : index
      %c0_49 = arith.constant 0 : index
      %134 = vector.load %arg3[%c3_47, %c0_48, %c0_49] : memref<4x128x384xbf16, #tpu.memory_space<vmem>>, vector<1x128x384xbf16>
      %135 = vector.shape_cast %134 : vector<1x128x384xbf16> to vector<128x384xbf16>
      %cst_50 = arith.constant dense<0.000000e+00> : vector<8x384xf32>
      %136 = tpu.matmul %133, %135, %cst_50 {dimension_numbers = #tpu.dot_dimension_numbers<[1], [0], [0], [1], [0, 0, 1, 1], [], []>} : vector<8x128xbf16>, vector<128x384xbf16>, vector<8x384xf32> -> vector<8x384xf32>
      %c4 = arith.constant 4 : index
      %c0_51 = arith.constant 0 : index
      %c0_52 = arith.constant 0 : index
      %137 = vector.load %arg4[%c4, %c0_51, %c0_52] : memref<5x1x384xf32, #tpu.memory_space<vmem>>, vector<1x1x384xf32>
      %138 = vector.shape_cast %137 : vector<1x1x384xf32> to vector<1x384xf32>
      %139 = vector.broadcast %138 : vector<1x384xf32> to vector<8x384xf32>
      %140 = arith.addf %136, %139 : vector<8x384xf32>
      %141 = vector.extract_strided_slice %140 {offsets = [0, 0], sizes = [8, 128], strides = [1, 1]} : vector<8x384xf32> to vector<8x128xf32>
      %142 = arith.negf %141 : vector<8x128xf32>
      %143 = math.exp %142 : vector<8x128xf32>
      %cst_53 = arith.constant 1.000000e+00 : f32
      %144 = vector.broadcast %cst_53 : f32 to vector<8x128xf32>
      %145 = arith.addf %144, %143 : vector<8x128xf32>
      %146 = arith.divf %144, %145 : vector<8x128xf32>
      %147 = vector.extract_strided_slice %140 {offsets = [0, 128], sizes = [8, 128], strides = [1, 1]} : vector<8x384xf32> to vector<8x128xf32>
      %148 = math.tanh %147 : vector<8x128xf32>
      %149 = vector.extract_strided_slice %140 {offsets = [0, 256], sizes = [8, 128], strides = [1, 1]} : vector<8x384xf32> to vector<8x128xf32>
      %150 = arith.negf %149 : vector<8x128xf32>
      %151 = math.exp %150 : vector<8x128xf32>
      %cst_54 = arith.constant 1.000000e+00 : f32
      %152 = vector.broadcast %cst_54 : f32 to vector<8x128xf32>
      %153 = arith.addf %152, %151 : vector<8x128xf32>
      %154 = arith.divf %152, %153 : vector<8x128xf32>
      %155 = arith.mulf %146, %148 : vector<8x128xf32>
      %156 = math.tanh %155 : vector<8x128xf32>
      %157 = arith.mulf %154, %156 : vector<8x128xf32>
      %158 = arith.truncf %157 : vector<8x128xf32> to vector<8x128xbf16>
      %c0_55 = arith.constant 0 : index
      %c0_56 = arith.constant 0 : index
      %c0_57 = arith.constant 0 : index
      %159 = vector.load %arg5[%c0_55, %c0_56, %c0_57] : memref<3x128x512xbf16, #tpu.memory_space<vmem>>, vector<1x128x512xbf16>
      %160 = vector.shape_cast %159 : vector<1x128x512xbf16> to vector<128x512xbf16>
      %cst_58 = arith.constant dense<0.000000e+00> : vector<8x512xf32>
      %161 = tpu.matmul %158, %160, %cst_58 {dimension_numbers = #tpu.dot_dimension_numbers<[1], [0], [0], [1], [0, 0, 1, 1], [], []>} : vector<8x128xbf16>, vector<128x512xbf16>, vector<8x512xf32> -> vector<8x512xf32>
      %c0_59 = arith.constant 0 : index
      %c0_60 = arith.constant 0 : index
      %c0_61 = arith.constant 0 : index
      %162 = vector.load %arg6[%c0_59, %c0_60, %c0_61] : memref<3x1x512xf32, #tpu.memory_space<vmem>>, vector<1x1x512xf32>
      %163 = vector.shape_cast %162 : vector<1x1x512xf32> to vector<1x512xf32>
      %164 = vector.broadcast %163 : vector<1x512xf32> to vector<8x512xf32>
      %165 = arith.addf %161, %164 : vector<8x512xf32>
      %cst_62 = arith.constant 0.000000e+00 : f32
      %166 = vector.broadcast %cst_62 : f32 to vector<8x512xf32>
      %167 = arith.maximumf %165, %166 : vector<8x512xf32>
      %c1_63 = arith.constant 1 : index
      %c0_64 = arith.constant 0 : index
      %c0_65 = arith.constant 0 : index
      %168 = vector.load %arg5[%c1_63, %c0_64, %c0_65] : memref<3x128x512xbf16, #tpu.memory_space<vmem>>, vector<1x128x512xbf16>
      %169 = vector.shape_cast %168 : vector<1x128x512xbf16> to vector<128x512xbf16>
      %cst_66 = arith.constant dense<0.000000e+00> : vector<8x512xf32>
      %170 = tpu.matmul %158, %169, %cst_66 {dimension_numbers = #tpu.dot_dimension_numbers<[1], [0], [0], [1], [0, 0, 1, 1], [], []>} : vector<8x128xbf16>, vector<128x512xbf16>, vector<8x512xf32> -> vector<8x512xf32>
      %c1_67 = arith.constant 1 : index
      %c0_68 = arith.constant 0 : index
      %c0_69 = arith.constant 0 : index
      %171 = vector.load %arg6[%c1_67, %c0_68, %c0_69] : memref<3x1x512xf32, #tpu.memory_space<vmem>>, vector<1x1x512xf32>
      %172 = vector.shape_cast %171 : vector<1x1x512xf32> to vector<1x512xf32>
      %173 = vector.broadcast %172 : vector<1x512xf32> to vector<8x512xf32>
      %174 = arith.addf %170, %173 : vector<8x512xf32>
      %cst_70 = arith.constant 0.000000e+00 : f32
      %175 = vector.broadcast %cst_70 : f32 to vector<8x512xf32>
      %176 = arith.maximumf %174, %175 : vector<8x512xf32>
      %177 = arith.maximumf %167, %176 : vector<8x512xf32>
      %c2_71 = arith.constant 2 : index
      %c0_72 = arith.constant 0 : index
      %c0_73 = arith.constant 0 : index
      %178 = vector.load %arg5[%c2_71, %c0_72, %c0_73] : memref<3x128x512xbf16, #tpu.memory_space<vmem>>, vector<1x128x512xbf16>
      %179 = vector.shape_cast %178 : vector<1x128x512xbf16> to vector<128x512xbf16>
      %cst_74 = arith.constant dense<0.000000e+00> : vector<8x512xf32>
      %180 = tpu.matmul %158, %179, %cst_74 {dimension_numbers = #tpu.dot_dimension_numbers<[1], [0], [0], [1], [0, 0, 1, 1], [], []>} : vector<8x128xbf16>, vector<128x512xbf16>, vector<8x512xf32> -> vector<8x512xf32>
      %c2_75 = arith.constant 2 : index
      %c0_76 = arith.constant 0 : index
      %c0_77 = arith.constant 0 : index
      %181 = vector.load %arg6[%c2_75, %c0_76, %c0_77] : memref<3x1x512xf32, #tpu.memory_space<vmem>>, vector<1x1x512xf32>
      %182 = vector.shape_cast %181 : vector<1x1x512xf32> to vector<1x512xf32>
      %183 = vector.broadcast %182 : vector<1x512xf32> to vector<8x512xf32>
      %184 = arith.addf %180, %183 : vector<8x512xf32>
      %cst_78 = arith.constant 0.000000e+00 : f32
      %185 = vector.broadcast %cst_78 : f32 to vector<8x512xf32>
      %186 = arith.maximumf %184, %185 : vector<8x512xf32>
      %187 = arith.maximumf %177, %186 : vector<8x512xf32>
      %188 = arith.truncf %187 : vector<8x512xf32> to vector<8x512xbf16>
      %c0_79 = arith.constant 0 : index
      %c0_80 = arith.constant 0 : index
      %189 = vector.load %arg7[%c0_79, %c0_80] : memref<512x1536xbf16, #tpu.memory_space<vmem>>, vector<512x1536xbf16>
      %cst_81 = arith.constant dense<0.000000e+00> : vector<8x1536xf32>
      %190 = tpu.matmul %188, %189, %cst_81 {dimension_numbers = #tpu.dot_dimension_numbers<[1], [0], [0], [1], [0, 0, 1, 1], [], []>} : vector<8x512xbf16>, vector<512x1536xbf16>, vector<8x1536xf32> -> vector<8x1536xf32>
      %c0_82 = arith.constant 0 : index
      %c0_83 = arith.constant 0 : index
      %191 = vector.load %arg8[%c0_82, %c0_83] : memref<1x1536xf32, #tpu.memory_space<vmem>>, vector<1x1536xf32>
      %192 = vector.broadcast %191 : vector<1x1536xf32> to vector<8x1536xf32>
      %193 = arith.addf %190, %192 : vector<8x1536xf32>
      %194 = vector.extract_strided_slice %193 {offsets = [0, 0], sizes = [8, 512], strides = [1, 1]} : vector<8x1536xf32> to vector<8x512xf32>
      %195 = arith.negf %194 : vector<8x512xf32>
      %196 = math.exp %195 : vector<8x512xf32>
      %cst_84 = arith.constant 1.000000e+00 : f32
      %197 = vector.broadcast %cst_84 : f32 to vector<8x512xf32>
      %198 = arith.addf %197, %196 : vector<8x512xf32>
      %199 = arith.divf %197, %198 : vector<8x512xf32>
      %200 = vector.extract_strided_slice %193 {offsets = [0, 512], sizes = [8, 512], strides = [1, 1]} : vector<8x1536xf32> to vector<8x512xf32>
      %201 = math.tanh %200 : vector<8x512xf32>
      %202 = vector.extract_strided_slice %193 {offsets = [0, 1024], sizes = [8, 512], strides = [1, 1]} : vector<8x1536xf32> to vector<8x512xf32>
      %203 = arith.negf %202 : vector<8x512xf32>
      %204 = math.exp %203 : vector<8x512xf32>
      %cst_85 = arith.constant 1.000000e+00 : f32
      %205 = vector.broadcast %cst_85 : f32 to vector<8x512xf32>
      %206 = arith.addf %205, %204 : vector<8x512xf32>
      %207 = arith.divf %205, %206 : vector<8x512xf32>
      %208 = arith.mulf %199, %201 : vector<8x512xf32>
      %209 = math.tanh %208 : vector<8x512xf32>
      %210 = arith.mulf %207, %209 : vector<8x512xf32>
      %c0_86 = arith.constant 0 : index
      %c0_87 = arith.constant 0 : index
      %211 = vector.load %arg14[%c0_86, %c0_87] : memref<8x512xf32, #tpu.memory_space<vmem>>, vector<8x512xf32>
      tpu.vector_store %arg14[%c0_86, %c0_87], %210 {strides = array<i32>} : memref<8x512xf32, #tpu.memory_space<vmem>>, vector<8x512xf32>,
    } else {
    }
    %c0 = arith.constant 0 : index
    %c0_1 = arith.constant 0 : index
    %3 = vector.load %arg14[%c0, %c0_1] : memref<8x512xf32, #tpu.memory_space<vmem>>, vector<8x512xf32>
    %4 = arith.truncf %3 : vector<8x512xf32> to vector<8x512xbf16>
    %c0_2 = arith.constant 0 : index
    %c0_3 = arith.constant 0 : index
    %c0_4 = arith.constant 0 : index
    %5 = vector.load %arg9[%c0_2, %c0_3, %c0_4] : memref<1x512x1536xbf16, #tpu.memory_space<vmem>>, vector<1x512x1536xbf16>
    %6 = vector.shape_cast %5 : vector<1x512x1536xbf16> to vector<512x1536xbf16>
    %cst = arith.constant dense<0.000000e+00> : vector<8x1536xf32>
    %7 = tpu.matmul %4, %6, %cst {dimension_numbers = #tpu.dot_dimension_numbers<[1], [0], [0], [1], [0, 0, 1, 1], [], []>} : vector<8x512xbf16>, vector<512x1536xbf16>, vector<8x1536xf32> -> vector<8x1536xf32>
    %c0_5 = arith.constant 0 : index
    %c0_6 = arith.constant 0 : index
    %c0_7 = arith.constant 0 : index
    %8 = vector.load %arg10[%c0_5, %c0_6, %c0_7] : memref<1x1x1536xf32, #tpu.memory_space<vmem>>, vector<1x1x1536xf32>
    %9 = vector.shape_cast %8 : vector<1x1x1536xf32> to vector<1x1536xf32>
    %10 = vector.broadcast %9 : vector<1x1536xf32> to vector<8x1536xf32>
    %11 = arith.addf %7, %10 : vector<8x1536xf32>
    %12 = vector.extract_strided_slice %11 {offsets = [0, 0], sizes = [8, 512], strides = [1, 1]} : vector<8x1536xf32> to vector<8x512xf32>
    %13 = arith.negf %12 : vector<8x512xf32>
    %14 = math.exp %13 : vector<8x512xf32>
    %cst_8 = arith.constant 1.000000e+00 : f32
    %15 = vector.broadcast %cst_8 : f32 to vector<8x512xf32>
    %16 = arith.addf %15, %14 : vector<8x512xf32>
    %17 = arith.divf %15, %16 : vector<8x512xf32>
    %18 = vector.extract_strided_slice %11 {offsets = [0, 512], sizes = [8, 512], strides = [1, 1]} : vector<8x1536xf32> to vector<8x512xf32>
    %19 = math.tanh %18 : vector<8x512xf32>
    %20 = vector.extract_strided_slice %11 {offsets = [0, 1024], sizes = [8, 512], strides = [1, 1]} : vector<8x1536xf32> to vector<8x512xf32>
    %21 = arith.negf %20 : vector<8x512xf32>
    %22 = math.exp %21 : vector<8x512xf32>
    %cst_9 = arith.constant 1.000000e+00 : f32
    %23 = vector.broadcast %cst_9 : f32 to vector<8x512xf32>
    %24 = arith.addf %23, %22 : vector<8x512xf32>
    %25 = arith.divf %23, %24 : vector<8x512xf32>
    %26 = arith.mulf %17, %19 : vector<8x512xf32>
    %27 = math.tanh %26 : vector<8x512xf32>
    %28 = arith.mulf %25, %27 : vector<8x512xf32>
    %c0_10 = arith.constant 0 : index
    %c0_11 = arith.constant 0 : index
    %29 = vector.load %arg14[%c0_10, %c0_11] : memref<8x512xf32, #tpu.memory_space<vmem>>, vector<8x512xf32>
    tpu.vector_store %arg14[%c0_10, %c0_11], %28 {strides = array<i32>} : memref<8x512xf32, #tpu.memory_space<vmem>>, vector<8x512xf32>,
    %c3_i32 = arith.constant 3 : i32
    %30 = arith.cmpi eq, %arg0, %c3_i32 : i32
    %31 = arith.extui %30 : i1 to i32
    %c0_i32_12 = arith.constant 0 : i32
    %32 = arith.cmpi ne, %31, %c0_i32_12 : i32
    scf.if %32 {
      %c0_13 = arith.constant 0 : index
      %c0_14 = arith.constant 0 : index
      %33 = vector.load %arg14[%c0_13, %c0_14] : memref<8x512xf32, #tpu.memory_space<vmem>>, vector<8x512xf32>
      %c0_15 = arith.constant 0 : index
      %c0_16 = arith.constant 0 : index
      %34 = vector.load %arg11[%c0_15, %c0_16] : memref<512x8xf32, #tpu.memory_space<vmem>>, vector<512x8xf32>
      %cst_17 = arith.constant dense<0.000000e+00> : vector<8x8xf32>
      %35 = tpu.matmul %33, %34, %cst_17 {dimension_numbers = #tpu.dot_dimension_numbers<[1], [0], [0], [1], [0, 0, 1, 1], [], []>} : vector<8x512xf32>, vector<512x8xf32>, vector<8x8xf32> -> vector<8x8xf32>
      %c0_18 = arith.constant 0 : index
      %c0_19 = arith.constant 0 : index
      %36 = vector.load %arg12[%c0_18, %c0_19] : memref<1x8xf32, #tpu.memory_space<vmem>>, vector<1x8xf32>
      %37 = vector.broadcast %36 : vector<1x8xf32> to vector<8x8xf32>
      %38 = arith.addf %35, %37 : vector<8x8xf32>
      %c0_20 = arith.constant 0 : index
      %c0_21 = arith.constant 0 : index
      %39 = vector.load %arg13[%c0_20, %c0_21] : memref<8x8xf32, #tpu.memory_space<vmem>>, vector<8x8xf32>
      tpu.vector_store %arg13[%c0_20, %c0_21], %38 {strides = array<i32>} : memref<8x8xf32, #tpu.memory_space<vmem>>, vector<8x8xf32>,
    } else {
    }
    return
  }
  func.func @transform_0(%arg0: i32) -> (i32, i32) {
    %c0_i32 = arith.constant 0 : i32
    %c0_i32_0 = arith.constant 0 : i32
    %c0_i32_1 = arith.constant 0 : i32
    return %c0_i32, %c0_i32_0 : i32, i32
  }
  func.func @transform_1(%arg0: i32) -> (i32, i32) {
    %c0_i32 = arith.constant 0 : i32
    %c0_i32_0 = arith.constant 0 : i32
    %c0_i32_1 = arith.constant 0 : i32
    return %c0_i32, %c0_i32_0 : i32, i32
  }
  func.func @transform_2(%arg0: i32) -> (i32, i32, i32) {
    %c0_i32 = arith.constant 0 : i32
    %c0_i32_0 = arith.constant 0 : i32
    %c0_i32_1 = arith.constant 0 : i32
    %c0_i32_2 = arith.constant 0 : i32
    return %c0_i32, %c0_i32_0, %c0_i32_1 : i32, i32, i32
  }
  func.func @transform_3(%arg0: i32) -> (i32, i32, i32) {
    %c0_i32 = arith.constant 0 : i32
    %c0_i32_0 = arith.constant 0 : i32
    %c0_i32_1 = arith.constant 0 : i32
    %c0_i32_2 = arith.constant 0 : i32
    return %c0_i32, %c0_i32_0, %c0_i32_1 : i32, i32, i32
  }
  func.func @transform_4(%arg0: i32) -> (i32, i32, i32) {
    %c0_i32 = arith.constant 0 : i32
    %c0_i32_0 = arith.constant 0 : i32
    %c0_i32_1 = arith.constant 0 : i32
    %c0_i32_2 = arith.constant 0 : i32
    return %c0_i32, %c0_i32_0, %c0_i32_1 : i32, i32, i32
  }
  func.func @transform_5(%arg0: i32) -> (i32, i32, i32) {
    %c0_i32 = arith.constant 0 : i32
    %c0_i32_0 = arith.constant 0 : i32
    %c0_i32_1 = arith.constant 0 : i32
    %c0_i32_2 = arith.constant 0 : i32
    return %c0_i32, %c0_i32_0, %c0_i32_1 : i32, i32, i32
  }
  func.func @transform_6(%arg0: i32) -> (i32, i32) {
    %c0_i32 = arith.constant 0 : i32
    %c0_i32_0 = arith.constant 0 : i32
    %c0_i32_1 = arith.constant 0 : i32
    return %c0_i32, %c0_i32_0 : i32, i32
  }
  func.func @transform_7(%arg0: i32) -> (i32, i32) {
    %c0_i32 = arith.constant 0 : i32
    %c0_i32_0 = arith.constant 0 : i32
    %c0_i32_1 = arith.constant 0 : i32
    return %c0_i32, %c0_i32_0 : i32, i32
  }
  func.func @transform_8(%arg0: i32) -> (i32, i32, i32) {
    %c0_i32 = arith.constant 0 : i32
    %c0_i32_0 = arith.constant 0 : i32
    %c0_i32_1 = arith.constant 0 : i32
    return %arg0, %c0_i32, %c0_i32_0 : i32, i32, i32
  }
  func.func @transform_9(%arg0: i32) -> (i32, i32, i32) {
    %c0_i32 = arith.constant 0 : i32
    %c0_i32_0 = arith.constant 0 : i32
    %c0_i32_1 = arith.constant 0 : i32
    return %arg0, %c0_i32, %c0_i32_0 : i32, i32, i32
  }
  func.func @transform_10(%arg0: i32) -> (i32, i32) {
    %c0_i32 = arith.constant 0 : i32
    %c0_i32_0 = arith.constant 0 : i32
    %c0_i32_1 = arith.constant 0 : i32
    return %c0_i32, %c0_i32_0 : i32, i32
  }
  func.func @transform_11(%arg0: i32) -> (i32, i32) {
    %c0_i32 = arith.constant 0 : i32
    %c0_i32_0 = arith.constant 0 : i32
    %c0_i32_1 = arith.constant 0 : i32
    return %c0_i32, %c0_i32_0 : i32, i32
  }
  func.func @transform_12(%arg0: i32) -> (i32, i32) {
    %c0_i32 = arith.constant 0 : i32
    %c0_i32_0 = arith.constant 0 : i32
    %c0_i32_1 = arith.constant 0 : i32
    return %c0_i32, %c0_i32_0 : i32, i32
  }
}

</mosaic_0001>

<llo_original>
// kernel: tpu_custom_call.1
$region0: #{tpu_custom_call.1}
  #allocation0 [shape = 'u32[]', space=smem, size = 0x4, offset = 0x4, fixed_abs, tag = 'smem constant byte address 0x4 - core index']
  #allocation1 [shape = 'u32[144,128]{1,0:T(1,128)}', space=vmem, size = 0x12000, scoped, tag = 'internal scratch']
  #allocation2 [shape = 'f32[8,512]{1,0:T(8,128)}', space=vmem, size = 0x4000, scoped, tag = 'scratch operand']
  %s0 = inlined_call_operand.hbm [shape: f32[8,32], index: 0, kind: input, shape index: {}]
  %s1 = inlined_call_operand.hbm [shape: bf16[32,384], index: 1, kind: input, shape index: {}]
  %s2 = inlined_call_operand.hbm [shape: bf16[4,128,384], index: 2, kind: input, shape index: {}]
  %s3 = inlined_call_operand.hbm [shape: f32[5,1,384], index: 3, kind: input, shape index: {}]
  %s4 = inlined_call_operand.hbm [shape: bf16[3,128,512], index: 4, kind: input, shape index: {}]
  %s5 = inlined_call_operand.hbm [shape: f32[3,1,512], index: 5, kind: input, shape index: {}]
  %s6 = inlined_call_operand.hbm [shape: bf16[512,1536], index: 6, kind: input, shape index: {}]
  %s7 = inlined_call_operand.hbm [shape: f32[1,1536], index: 7, kind: input, shape index: {}]
  %s8 = inlined_call_operand.hbm [shape: bf16[4,512,1536], index: 8, kind: input, shape index: {}]
  %s9 = inlined_call_operand.hbm [shape: f32[4,1,1536], index: 9, kind: input, shape index: {}]
  %s10 = inlined_call_operand.vmem [shape: f32[512,8], index: 10, kind: input, shape index: {}]
  %s11 = inlined_call_operand.hbm [shape: f32[1,8], index: 11, kind: input, shape index: {}]
  %s12 = inlined_call_operand.hbm [shape: f32[8,8], index: 12, kind: output, shape index: {}]
  %s13 = sld [smem:[#allocation0]]
  $region133: #{tpu_custom_call.1} parent=0
    _
  %s15 = ssub.s32 1, %s13
  %s16 = scalar_select 0, %s15, %s13
  $region1: #{tpu_custom_call.1} parent=0
    #allocation3 [shape = 'u8[4096]{0}', space=vmem, size = 0x1000, scoped, tag = 'input window, operand 0, single buffered']
    #allocation4 [shape = 's32[2]{0}', space=sflag, size = 0x8, scoped, tag = 'scoped memory for tpu_custom_call.1']
    #allocation5 [shape = 's32[2]{0}', space=sflag, size = 0x8, scoped, tag = 'scoped memory for tpu_custom_call.1']
    #allocation6 [shape = 'u8[24576]{0}', space=vmem, size = 0x6000, scoped, tag = 'input window, operand 1, single buffered']
    #allocation7 [shape = 's32[1]{0}', space=sflag, size = 0x4, scoped, tag = 'scoped memory for tpu_custom_call.1']
    #allocation8 [shape = 'u8[393216]{0}', space=vmem, size = 0x60000, scoped, tag = 'input window, operand 2, single buffered']
    #allocation9 [shape = 'u8[7680]{0}', space=vmem, size = 0x2000, scoped, tag = 'input window, operand 3, single buffered']
    #allocation10 [shape = 's32[1]{0}', space=sflag, size = 0x4, scoped, tag = 'scoped memory for tpu_custom_call.1']
    #allocation11 [shape = 'u8[393216]{0}', space=vmem, size = 0x60000, scoped, tag = 'input window, operand 4, single buffered']
    #allocation12 [shape = 'u8[6144]{0}', space=vmem, size = 0x1800, scoped, tag = 'input window, operand 5, single buffered']
    #allocation13 [shape = 's32[1]{0}', space=sflag, size = 0x4, scoped, tag = 'scoped memory for tpu_custom_call.1']
    #allocation14 [shape = 'u8[1572864]{0}', space=vmem, size = 0x180000, scoped, tag = 'input window, operand 6, single buffered']
    #allocation15 [shape = 'u8[6144]{0}', space=vmem, size = 0x1800, scoped, tag = 'input window, operand 7, single buffered']
    #allocation16 [shape = 's32[1]{0}', space=sflag, size = 0x4, scoped, tag = 'scoped memory for tpu_custom_call.1']
    #allocation17 [shape = 'u8[3145728]{0}', space=vmem, size = 0x300000, scoped, tag = 'input window, operand 8']
    #allocation18 [shape = 'u8[12288]{0}', space=vmem, size = 0x3000, scoped, tag = 'input window, operand 9']
    #allocation19 [shape = 'u8[512]{0}', space=vmem, size = 0x400, scoped, tag = 'input window, operand 11, single buffered']
    #allocation20 [shape = 'u8[4096]{0}', space=vmem, size = 0x1000, scoped, tag = 'output window, operand 0, single buffered']
    %17 = vsyncpa [#allocation4], 0
    %18 = vsyncpa [#allocation7], 0
    %19 = vsyncpa [#allocation10], 0
    %20 = vsyncpa [#allocation13], 0
    %21 = vsyncpa [#allocation16], 0
    %22 = vsyncpa [#allocation5], 0
    loop: start=0, step=1, limit=6
    $region2: #{tpu_custom_call.1} parent=1 // loop_pre_header
      _
    $region3: #{tpu_custom_call.1} parent=1 // loop_header
      %s24 = sphi 0, %s28
      %p25 = scmp.ge.s32.totalorder %s24, 6
      %s32 = sphi 0, %s32
      %s34 = sphi 0, %s32
      %s35 = sphi 0, %s34
      %s49 = sphi 0, %s35
      %s53 = sphi 0, %s53
      %s55 = sphi 0, %s53
      %s56 = sphi 0, %s55
      %s70 = sphi 0, %s56
      %s74 = sphi 0, %s74
      %s76 = sphi 0, %s74
      %s77 = sphi 0, %s76
      %s91 = sphi 0, %s77
      %s95 = sphi 0, %s95
      %s97 = sphi 0, %s95
      %s98 = sphi 0, %s97
      %s112 = sphi 0, %s98
      %s116 = sphi 0, %s116
      %s118 = sphi 0, %s116
      %s119 = sphi 0, %s118
      %s133 = sphi 0, %s119
      %s137 = sphi 0, %s137
      %s139 = sphi 0, %s137
      %s140 = sphi 0, %s139
      %s154 = sphi 0, %s140
      %s158 = sphi 0, %s158
      %s160 = sphi 0, %s158
      %s161 = sphi 0, %s160
      %s175 = sphi 0, %s161
      %s179 = sphi 0, %s179
      %s181 = sphi 0, %s179
      %s182 = sphi 0, %s181
      %s196 = sphi 0, %s182
      %s202 = sphi 0, %s204
      %s205 = sphi 0, %s202
      %s206 = sphi 0, %s205
      %s222 = sphi 0, %s206
      %s228 = sphi 0, %s230
      %s231 = sphi 0, %s228
      %s232 = sphi 0, %s231
      %s248 = sphi 0, %s232
      %s252 = sphi 0, %s252
      %s254 = sphi 0, %s252
      %s255 = sphi 0, %s254
      %s269 = sphi 0, %s255
      %s273 = sphi 0, %s273
      %s275 = sphi 0, %s273
      %s276 = sphi 0, %s275
      %s290 = sphi 0, %s276
      %s294 = sphi 0, %s294
      %s296 = sphi 0, %s294
      %s297 = sphi 0, %s296
      %s311 = sphi 0, %s297
    $region4: #{tpu_custom_call.1} parent=1 // loop_header_branch
      %27 = sbr.rel (%p25) target = $region8
    $region5: #{tpu_custom_call.1} parent=1 // loop_body
      %s29 = ssub.s32 %s24, 1
      %s30 = ssub.s32 %s24, 2
      %s31 = sadd.s32 %s24, 1
      %s33 = sadd.s32 %s32, 1
      %p36 = scmp.eq.s32.totalorder %s24, 3
      %p37 = scmp.ne.s32.totalorder %s32, %s34
      %p38 = scmp.eq.s32.totalorder %s24, 0
      %p39 = por %p37, %p38
      %p40 = scmp.ne.s32.totalorder %s32, %s34
      %p41 = scmp.eq.s32.totalorder %s29, 3
      %p42 = por %p40, %p41
      %p43 = scmp.ne.s32.totalorder %s34, %s35
      %p44 = scmp.eq.s32.totalorder %s29, 0
      %p45 = por %p43, %p44
      %p46 = scmp.ne.s32.totalorder %s34, %s35
      %p47 = scmp.eq.s32.totalorder %s30, 3
      %p48 = por %p46, %p47
      %p50 = scmp.ne.s32.totalorder %s35, %s49
      %p51 = scmp.eq.s32.totalorder %s30, 0
      %p52 = por %p50, %p51
      %s54 = sadd.s32 %s53, 1
      %p57 = scmp.eq.s32.totalorder %s24, 3
      %p58 = scmp.ne.s32.totalorder %s53, %s55
      %p59 = scmp.eq.s32.totalorder %s24, 0
      %p60 = por %p58, %p59
      %p61 = scmp.ne.s32.totalorder %s53, %s55
      %p62 = scmp.eq.s32.totalorder %s29, 3
      %p63 = por %p61, %p62
      %p64 = scmp.ne.s32.totalorder %s55, %s56
      %p65 = scmp.eq.s32.totalorder %s29, 0
      %p66 = por %p64, %p65
      %p67 = scmp.ne.s32.totalorder %s55, %s56
      %p68 = scmp.eq.s32.totalorder %s30, 3
      %p69 = por %p67, %p68
      %p71 = scmp.ne.s32.totalorder %s56, %s70
      %p72 = scmp.eq.s32.totalorder %s30, 0
      %p73 = por %p71, %p72
      %s75 = sadd.s32 %s74, 1
      %p78 = scmp.eq.s32.totalorder %s24, 3
      %p79 = scmp.ne.s32.totalorder %s74, %s76
      %p80 = scmp.eq.s32.totalorder %s24, 0
      %p81 = por %p79, %p80
      %p82 = scmp.ne.s32.totalorder %s74, %s76
      %p83 = scmp.eq.s32.totalorder %s29, 3
      %p84 = por %p82, %p83
      %p85 = scmp.ne.s32.totalorder %s76, %s77
      %p86 = scmp.eq.s32.totalorder %s29, 0
      %p87 = por %p85, %p86
      %p88 = scmp.ne.s32.totalorder %s76, %s77
      %p89 = scmp.eq.s32.totalorder %s30, 3
      %p90 = por %p88, %p89
      %p92 = scmp.ne.s32.totalorder %s77, %s91
      %p93 = scmp.eq.s32.totalorder %s30, 0
      %p94 = por %p92, %p93
      %s96 = sadd.s32 %s95, 1
      %p99 = scmp.eq.s32.totalorder %s24, 3
      %p100 = scmp.ne.s32.totalorder %s95, %s97
      %p101 = scmp.eq.s32.totalorder %s24, 0
      %p102 = por %p100, %p101
      %p103 = scmp.ne.s32.totalorder %s95, %s97
      %p104 = scmp.eq.s32.totalorder %s29, 3
      %p105 = por %p103, %p104
      %p106 = scmp.ne.s32.totalorder %s97, %s98
      %p107 = scmp.eq.s32.totalorder %s29, 0
      %p108 = por %p106, %p107
      %p109 = scmp.ne.s32.totalorder %s97, %s98
      %p110 = scmp.eq.s32.totalorder %s30, 3
      %p111 = por %p109, %p110
      %p113 = scmp.ne.s32.totalorder %s98, %s112
      %p114 = scmp.eq.s32.totalorder %s30, 0
      %p115 = por %p113, %p114
      %s117 = sadd.s32 %s116, 1
      %p120 = scmp.eq.s32.totalorder %s24, 3
      %p121 = scmp.ne.s32.totalorder %s116, %s118
      %p122 = scmp.eq.s32.totalorder %s24, 0
      %p123 = por %p121, %p122
      %p124 = scmp.ne.s32.totalorder %s116, %s118
      %p125 = scmp.eq.s32.totalorder %s29, 3
      %p126 = por %p124, %p125
      %p127 = scmp.ne.s32.totalorder %s118, %s119
      %p128 = scmp.eq.s32.totalorder %s29, 0
      %p129 = por %p127, %p128
      %p130 = scmp.ne.s32.totalorder %s118, %s119
      %p131 = scmp.eq.s32.totalorder %s30, 3
      %p132 = por %p130, %p131
      %p134 = scmp.ne.s32.totalorder %s119, %s133
      %p135 = scmp.eq.s32.totalorder %s30, 0
      %p136 = por %p134, %p135
      %s138 = sadd.s32 %s137, 1
      %p141 = scmp.eq.s32.totalorder %s24, 3
      %p142 = scmp.ne.s32.totalorder %s137, %s139
      %p143 = scmp.eq.s32.totalorder %s24, 0
      %p144 = por %p142, %p143
      %p145 = scmp.ne.s32.totalorder %s137, %s139
      %p146 = scmp.eq.s32.totalorder %s29, 3
      %p147 = por %p145, %p146
      %p148 = scmp.ne.s32.totalorder %s139, %s140
      %p149 = scmp.eq.s32.totalorder %s29, 0
      %p150 = por %p148, %p149
      %p151 = scmp.ne.s32.totalorder %s139, %s140
      %p152 = scmp.eq.s32.totalorder %s30, 3
      %p153 = por %p151, %p152
      %p155 = scmp.ne.s32.totalorder %s140, %s154
      %p156 = scmp.eq.s32.totalorder %s30, 0
      %p157 = por %p155, %p156
      %s159 = sadd.s32 %s158, 1
      %p162 = scmp.eq.s32.totalorder %s24, 3
      %p163 = scmp.ne.s32.totalorder %s158, %s160
      %p164 = scmp.eq.s32.totalorder %s24, 0
      %p165 = por %p163, %p164
      %p166 = scmp.ne.s32.totalorder %s158, %s160
      %p167 = scmp.eq.s32.totalorder %s29, 3
      %p168 = por %p166, %p167
      %p169 = scmp.ne.s32.totalorder %s160, %s161
      %p170 = scmp.eq.s32.totalorder %s29, 0
      %p171 = por %p169, %p170
      %p172 = scmp.ne.s32.totalorder %s160, %s161
      %p173 = scmp.eq.s32.totalorder %s30, 3
      %p174 = por %p172, %p173
      %p176 = scmp.ne.s32.totalorder %s161, %s175
      %p177 = scmp.eq.s32.totalorder %s30, 0
      %p178 = por %p176, %p177
      %s180 = sadd.s32 %s179, 1
      %p183 = scmp.eq.s32.totalorder %s24, 3
      %p184 = scmp.ne.s32.totalorder %s179, %s181
      %p185 = scmp.eq.s32.totalorder %s24, 0
      %p186 = por %p184, %p185
      %p187 = scmp.ne.s32.totalorder %s179, %s181
      %p188 = scmp.eq.s32.totalorder %s29, 3
      %p189 = por %p187, %p188
      %p190 = scmp.ne.s32.totalorder %s181, %s182
      %p191 = scmp.eq.s32.totalorder %s29, 0
      %p192 = por %p190, %p191
      %p193 = scmp.ne.s32.totalorder %s181, %s182
      %p194 = scmp.eq.s32.totalorder %s30, 3
      %p195 = por %p193, %p194
      %p197 = scmp.ne.s32.totalorder %s182, %s196
      %p198 = scmp.eq.s32.totalorder %s30, 0
      %p199 = por %p197, %p198
      %s200 = ssub.s32 %s24, %s31
      %p201 = scmp.eq.s32.totalorder %s200, 0
      %s203 = sadd.s32 %s202, 1
      %s204 = scalar_select %p201, %s202, %s203
      %p207 = pneg %p201
      %p208 = scmp.eq.s32.totalorder %s24, 3
      %p209 = por %p207, %p208
      %p210 = scmp.ne.s32.totalorder %s202, %s205
      %p211 = scmp.eq.s32.totalorder %s24, 0
      %p212 = por %p210, %p211
      %p213 = scmp.ne.s32.totalorder %s202, %s205
      %p214 = scmp.eq.s32.totalorder %s29, 3
      %p215 = por %p213, %p214
      %p216 = scmp.ne.s32.totalorder %s205, %s206
      %p217 = scmp.eq.s32.totalorder %s29, 0
      %p218 = por %p216, %p217
      %p219 = scmp.ne.s32.totalorder %s205, %s206
      %p220 = scmp.eq.s32.totalorder %s30, 3
      %p221 = por %p219, %p220
      %p223 = scmp.ne.s32.totalorder %s206, %s222
      %p224 = scmp.eq.s32.totalorder %s30, 0
      %p225 = por %p223, %p224
      %s226 = ssub.s32 %s24, %s31
      %p227 = scmp.eq.s32.totalorder %s226, 0
      %s229 = sadd.s32 %s228, 1
      %s230 = scalar_select %p227, %s228, %s229
      %p233 = pneg %p227
      %p234 = scmp.eq.s32.totalorder %s24, 3
      %p235 = por %p233, %p234
      %p236 = scmp.ne.s32.totalorder %s228, %s231
      %p237 = scmp.eq.s32.totalorder %s24, 0
      %p238 = por %p236, %p237
      %p239 = scmp.ne.s32.totalorder %s228, %s231
      %p240 = scmp.eq.s32.totalorder %s29, 3
      %p241 = por %p239, %p240
      %p242 = scmp.ne.s32.totalorder %s231, %s232
      %p243 = scmp.eq.s32.totalorder %s29, 0
      %p244 = por %p242, %p243
      %p245 = scmp.ne.s32.totalorder %s231, %s232
      %p246 = scmp.eq.s32.totalorder %s30, 3
      %p247 = por %p245, %p246
      %p249 = scmp.ne.s32.totalorder %s232, %s248
      %p250 = scmp.eq.s32.totalorder %s30, 0
      %p251 = por %p249, %p250
      %s253 = sadd.s32 %s252, 1
      %p256 = scmp.eq.s32.totalorder %s24, 3
      %p257 = scmp.ne.s32.totalorder %s252, %s254
      %p258 = scmp.eq.s32.totalorder %s24, 0
      %p259 = por %p257, %p258
      %p260 = scmp.ne.s32.totalorder %s252, %s254
      %p261 = scmp.eq.s32.totalorder %s29, 3
      %p262 = por %p260, %p261
      %p263 = scmp.ne.s32.totalorder %s254, %s255
      %p264 = scmp.eq.s32.totalorder %s29, 0
      %p265 = por %p263, %p264
      %p266 = scmp.ne.s32.totalorder %s254, %s255
      %p267 = scmp.eq.s32.totalorder %s30, 3
      %p268 = por %p266, %p267
      %p270 = scmp.ne.s32.totalorder %s255, %s269
      %p271 = scmp.eq.s32.totalorder %s30, 0
      %p272 = por %p270, %p271
      %s274 = sadd.s32 %s273, 1
      %p277 = scmp.eq.s32.totalorder %s24, 3
      %p278 = scmp.ne.s32.totalorder %s273, %s275
      %p279 = scmp.eq.s32.totalorder %s24, 0
      %p280 = por %p278, %p279
      %p281 = scmp.ne.s32.totalorder %s273, %s275
      %p282 = scmp.eq.s32.totalorder %s29, 3
      %p283 = por %p281, %p282
      %p284 = scmp.ne.s32.totalorder %s275, %s276
      %p285 = scmp.eq.s32.totalorder %s29, 0
      %p286 = por %p284, %p285
      %p287 = scmp.ne.s32.totalorder %s275, %s276
      %p288 = scmp.eq.s32.totalorder %s30, 3
      %p289 = por %p287, %p288
      %p291 = scmp.ne.s32.totalorder %s276, %s290
      %p292 = scmp.eq.s32.totalorder %s30, 0
      %p293 = por %p291, %p292
      %s295 = sadd.s32 %s294, 1
      %p298 = scmp.eq.s32.totalorder %s24, 3
      %p299 = scmp.ne.s32.totalorder %s294, %s296
      %p300 = scmp.eq.s32.totalorder %s24, 0
      %p301 = por %p299, %p300
      %p302 = scmp.ne.s32.totalorder %s294, %s296
      %p303 = scmp.eq.s32.totalorder %s29, 3
      %p304 = por %p302, %p303
      %p305 = scmp.ne.s32.totalorder %s296, %s297
      %p306 = scmp.eq.s32.totalorder %s29, 0
      %p307 = por %p305, %p306
      %p308 = scmp.ne.s32.totalorder %s296, %s297
      %p309 = scmp.eq.s32.totalorder %s30, 3
      %p310 = por %p308, %p309
      %p312 = scmp.ne.s32.totalorder %s297, %s311
      %p313 = scmp.eq.s32.totalorder %s30, 0
      %p314 = por %p312, %p313
      %p315 = scmp.le.s32.totalorder 1, %s24
      %p316 = scmp.lt.s32.totalorder %s24, 5
      %p317 = pnand %p315, %p316
      %p318 = pneg %p317
      // Predicated region
      $region9: #{tpu_custom_call.1} parent=5 // pred_check
        _
      $region10: #{tpu_custom_call.1} parent=5 // pred_check_branch
        %320 = sbr.rel (%p317) target = $region12
      $region11: #{tpu_custom_call.1} parent=5 // pred_region
        %s321 = ssub.s32 %s24, 1
        // Predicated region
        $region13: #{tpu_custom_call.1} parent=11 // pred_check
          %p322 = pneg %p45
        $region14: #{tpu_custom_call.1} parent=11 // pred_check_branch
          %324 = sbr.rel (%p322) target = $region16
        $region15: #{tpu_custom_call.1} parent=11 // pred_region
          %s326 = ssub.s32 128, 128
          %327 = vsyncadd [#allocation4], %s326
          %s329 = sshll.u32 [#allocation3], 4
          %s330 = int_to_ptr.vmem [resolvable:$true] %s329
          %332 = dma.hbm_to_vmem [thread:$0]  %s0, 128, %s330, [#allocation4]
        $region16: #{tpu_custom_call.1} parent=11 // pred_fallthru
          _
        // Predicated region
        $region17: #{tpu_custom_call.1} parent=11 // pred_check
          %p333 = pneg %p66
        $region18: #{tpu_custom_call.1} parent=11 // pred_check_branch
          %335 = sbr.rel (%p333) target = $region20
        $region19: #{tpu_custom_call.1} parent=11 // pred_region
          %s337 = ssub.s32 768, 768
          %338 = vsyncadd [#allocation7], %s337
          %s339 = sshll.u32 [#allocation6], 4
          %s340 = int_to_ptr.vmem [resolvable:$true] %s339
          %345 = dma.hbm_to_vmem [thread:$0]  %s1, 768, %s340, [#allocation7], 192, 192, 12
        $region20: #{tpu_custom_call.1} parent=11 // pred_fallthru
          _
        // Predicated region
        $region21: #{tpu_custom_call.1} parent=11 // pred_check
          %p346 = pneg %p87
        $region22: #{tpu_custom_call.1} parent=11 // pred_check_branch
          %348 = sbr.rel (%p346) target = $region24
        $region23: #{tpu_custom_call.1} parent=11 // pred_region
          %s350 = ssub.s32 12288, 12288
          %351 = vsyncadd [#allocation7], %s350
          %s352 = sshll.u32 [#allocation8], 4
          %s353 = int_to_ptr.vmem [resolvable:$true] %s352
          %358 = dma.hbm_to_vmem [thread:$0]  %s2, 12288, %s353, [#allocation7], 192, 192, 12
        $region24: #{tpu_custom_call.1} parent=11 // pred_fallthru
          _
        // Predicated region
        $region25: #{tpu_custom_call.1} parent=11 // pred_check
          %p359 = pneg %p108
        $region26: #{tpu_custom_call.1} parent=11 // pred_check_branch
          %361 = sbr.rel (%p359) target = $region28
        $region27: #{tpu_custom_call.1} parent=11 // pred_region
          %s363 = ssub.s32 240, 240
          %364 = vsyncadd [#allocation10], %s363
          %s365 = sshll.u32 [#allocation9], 4
          %s366 = int_to_ptr.vmem [resolvable:$true] %s365
          %371 = dma.hbm_to_vmem [thread:$0]  %s3, 240, %s366, [#allocation10], 48, 48, 3
        $region28: #{tpu_custom_call.1} parent=11 // pred_fallthru
          _
        // Predicated region
        $region29: #{tpu_custom_call.1} parent=11 // pred_check
          %p372 = pneg %p129
        $region30: #{tpu_custom_call.1} parent=11 // pred_check_branch
          %374 = sbr.rel (%p372) target = $region32
        $region31: #{tpu_custom_call.1} parent=11 // pred_region
          %s376 = ssub.s32 12288, 12288
          %377 = vsyncadd [#allocation10], %s376
          %s378 = sshll.u32 [#allocation11], 4
          %s379 = int_to_ptr.vmem [resolvable:$true] %s378
          %384 = dma.hbm_to_vmem [thread:$0]  %s4, 12288, %s379, [#allocation10], 256, 256, 16
        $region32: #{tpu_custom_call.1} parent=11 // pred_fallthru
          _
        // Predicated region
        $region33: #{tpu_custom_call.1} parent=11 // pred_check
          %p385 = pneg %p150
        $region34: #{tpu_custom_call.1} parent=11 // pred_check_branch
          %387 = sbr.rel (%p385) target = $region36
        $region35: #{tpu_custom_call.1} parent=11 // pred_region
          %s389 = ssub.s32 192, 192
          %390 = vsyncadd [#allocation13], %s389
          %s391 = sshll.u32 [#allocation12], 4
          %s392 = int_to_ptr.vmem [resolvable:$true] %s391
          %397 = dma.hbm_to_vmem [thread:$0]  %s5, 192, %s392, [#allocation13], 64, 64, 4
        $region36: #{tpu_custom_call.1} parent=11 // pred_fallthru
          _
        // Predicated region
        $region37: #{tpu_custom_call.1} parent=11 // pred_check
          %p398 = pneg %p171
        $region38: #{tpu_custom_call.1} parent=11 // pred_check_branch
          %400 = sbr.rel (%p398) target = $region40
        $region39: #{tpu_custom_call.1} parent=11 // pred_region
          %s402 = ssub.s32 49152, 49152
          %403 = vsyncadd [#allocation13], %s402
          %s404 = sshll.u32 [#allocation14], 4
          %s405 = int_to_ptr.vmem [resolvable:$true] %s404
          %410 = dma.hbm_to_vmem [thread:$0]  %s6, 49152, %s405, [#allocation13], 768, 768, 48
        $region40: #{tpu_custom_call.1} parent=11 // pred_fallthru
          _
        // Predicated region
        $region41: #{tpu_custom_call.1} parent=11 // pred_check
          %p411 = pneg %p192
        $region42: #{tpu_custom_call.1} parent=11 // pred_check_branch
          %413 = sbr.rel (%p411) target = $region44
        $region43: #{tpu_custom_call.1} parent=11 // pred_region
          %s415 = ssub.s32 192, 192
          %416 = vsyncadd [#allocation16], %s415
          %s418 = sshll.u32 [#allocation15], 4
          %s419 = int_to_ptr.vmem [resolvable:$true] %s418
          %421 = dma.hbm_to_vmem [thread:$0]  %s7, 192, %s419, [#allocation16]
        $region44: #{tpu_custom_call.1} parent=11 // pred_fallthru
          _
        // Predicated region
        $region45: #{tpu_custom_call.1} parent=11 // pred_check
          %p422 = pneg %p265
        $region46: #{tpu_custom_call.1} parent=11 // pred_check_branch
          %424 = sbr.rel (%p422) target = $region48
        $region47: #{tpu_custom_call.1} parent=11 // pred_region
          _
        $region48: #{tpu_custom_call.1} parent=11 // pred_fallthru
          _
        // Predicated region
        $region49: #{tpu_custom_call.1} parent=11 // pred_check
          %p425 = pneg %p286
        $region50: #{tpu_custom_call.1} parent=11 // pred_check_branch
          %427 = sbr.rel (%p425) target = $region52
        $region51: #{tpu_custom_call.1} parent=11 // pred_region
          %s429 = ssub.s32 16, 16
          %430 = vsyncadd [#allocation7], %s429
          %s432 = sshll.u32 [#allocation19], 4
          %s433 = int_to_ptr.vmem [resolvable:$true] %s432
          %435 = dma.hbm_to_vmem [thread:$0]  %s11, 16, %s433, [#allocation7]
        $region52: #{tpu_custom_call.1} parent=11 // pred_fallthru
          _
      $region12: #{tpu_custom_call.1} parent=5 // pred_fallthru
        _
      %p436 = scmp.lt.s32.totalorder %s24, 4
      // Predicated region
      $region53: #{tpu_custom_call.1} parent=5 // pred_check
        %p437 = pneg %p436
      $region54: #{tpu_custom_call.1} parent=5 // pred_check_branch
        %439 = sbr.rel (%p437) target = $region56
      $region55: #{tpu_custom_call.1} parent=5 // pred_region
        // Predicated region
        $region57: #{tpu_custom_call.1} parent=55 // pred_check
          %p440 = pneg %p212
        $region58: #{tpu_custom_call.1} parent=55 // pred_check_branch
          %442 = sbr.rel (%p440) target = $region60
        $region59: #{tpu_custom_call.1} parent=55 // pred_region
          %s443 = sand.u32 %s24, 1
          %s444 = scalar_lea.sflag [#allocation4], %s443
          %s445 = sand.u32 %s202, 1
          %s446 = smul.addr %s445, 3072
          %s447 = scalar_lea.vmem [#allocation17], %s446
          %s449 = ssub.s32 49152, 49152
          %450 = vsyncadd %s444, %s449
          %s451 = smul.addr %s24, 768
          %s452 = smul.addr %s451, 64
          %s453 = scalar_lea.hbm %s8, %s452
          %s454 = sshll.u32 %s447, 4
          %s455 = int_to_ptr.vmem [resolvable:$true] %s454
          %460 = dma.hbm_to_vmem [thread:$0]  %s453, 49152, %s455, %s444, 768, 768, 48
        $region60: #{tpu_custom_call.1} parent=55 // pred_fallthru
          _
        // Predicated region
        $region61: #{tpu_custom_call.1} parent=55 // pred_check
          %p461 = pneg %p238
        $region62: #{tpu_custom_call.1} parent=55 // pred_check_branch
          %463 = sbr.rel (%p461) target = $region64
        $region63: #{tpu_custom_call.1} parent=55 // pred_region
          %s464 = sand.u32 %s24, 1
          %s465 = scalar_lea.sflag [#allocation4], %s464
          %s466 = sand.u32 %s228, 1
          %s467 = smul.addr %s466, 12
          %s468 = scalar_lea.vmem [#allocation18], %s467
          %s470 = ssub.s32 192, 192
          %471 = vsyncadd %s465, %s470
          %s472 = smul.addr %s24, 12
          %s473 = smul.addr %s472, 16
          %s474 = scalar_lea.hbm %s9, %s473
          %s476 = sshll.u32 %s468, 4
          %s477 = int_to_ptr.vmem [resolvable:$true] %s476
          %479 = dma.hbm_to_vmem [thread:$0]  %s474, 192, %s477, %s465
        $region64: #{tpu_custom_call.1} parent=55 // pred_fallthru
          _
      $region56: #{tpu_custom_call.1} parent=5 // pred_fallthru
        _
      %p480 = scmp.le.s32.totalorder 1, %s24
      %p481 = scmp.lt.s32.totalorder %s24, 5
      %p482 = pnand %p480, %p481
      %p483 = pneg %p482
      // Predicated region
      $region65: #{tpu_custom_call.1} parent=5 // pred_check
        _
      $region66: #{tpu_custom_call.1} parent=5 // pred_check_branch
        %485 = sbr.rel (%p482) target = $region68
      $region67: #{tpu_custom_call.1} parent=5 // pred_region
        %s486 = ssub.s32 %s24, 1
        // Predicated region
        $region69: #{tpu_custom_call.1} parent=67 // pred_check
          %p487 = pneg %p45
        $region70: #{tpu_custom_call.1} parent=67 // pred_check_branch
          %489 = sbr.rel (%p487) target = $region72
        $region71: #{tpu_custom_call.1} parent=67 // pred_region
          %490 = dma.done [#allocation4], 128
        $region72: #{tpu_custom_call.1} parent=67 // pred_fallthru
          _
        // Predicated region
        $region73: #{tpu_custom_call.1} parent=67 // pred_check
          %p491 = pneg %p66
        $region74: #{tpu_custom_call.1} parent=67 // pred_check_branch
          %493 = sbr.rel (%p491) target = $region76
        $region75: #{tpu_custom_call.1} parent=67 // pred_region
          %494 = dma.done [#allocation7], 768
        $region76: #{tpu_custom_call.1} parent=67 // pred_fallthru
          _
        // Predicated region
        $region77: #{tpu_custom_call.1} parent=67 // pred_check
          %p495 = pneg %p87
        $region78: #{tpu_custom_call.1} parent=67 // pred_check_branch
          %497 = sbr.rel (%p495) target = $region80
        $region79: #{tpu_custom_call.1} parent=67 // pred_region
          %498 = dma.done [#allocation7], 12288
        $region80: #{tpu_custom_call.1} parent=67 // pred_fallthru
          _
        // Predicated region
        $region81: #{tpu_custom_call.1} parent=67 // pred_check
          %p499 = pneg %p108
        $region82: #{tpu_custom_call.1} parent=67 // pred_check_branch
          %501 = sbr.rel (%p499) target = $region84
        $region83: #{tpu_custom_call.1} parent=67 // pred_region
          %502 = dma.done [#allocation10], 240
        $region84: #{tpu_custom_call.1} parent=67 // pred_fallthru
          _
        // Predicated region
        $region85: #{tpu_custom_call.1} parent=67 // pred_check
          %p503 = pneg %p129
        $region86: #{tpu_custom_call.1} parent=67 // pred_check_branch
          %505 = sbr.rel (%p503) target = $region88
        $region87: #{tpu_custom_call.1} parent=67 // pred_region
          %506 = dma.done [#allocation10], 12288
        $region88: #{tpu_custom_call.1} parent=67 // pred_fallthru
          _
        // Predicated region
        $region89: #{tpu_custom_call.1} parent=67 // pred_check
          %p507 = pneg %p150
        $region90: #{tpu_custom_call.1} parent=67 // pred_check_branch
          %509 = sbr.rel (%p507) target = $region92
        $region91: #{tpu_custom_call.1} parent=67 // pred_region
          %510 = dma.done [#allocation13], 192
        $region92: #{tpu_custom_call.1} parent=67 // pred_fallthru
          _
        // Predicated region
        $region93: #{tpu_custom_call.1} parent=67 // pred_check
          %p511 = pneg %p171
        $region94: #{tpu_custom_call.1} parent=67 // pred_check_branch
          %513 = sbr.rel (%p511) target = $region96
        $region95: #{tpu_custom_call.1} parent=67 // pred_region
          %514 = dma.done [#allocation13], 49152
        $region96: #{tpu_custom_call.1} parent=67 // pred_fallthru
          _
        // Predicated region
        $region97: #{tpu_custom_call.1} parent=67 // pred_check
          %p515 = pneg %p192
        $region98: #{tpu_custom_call.1} parent=67 // pred_check_branch
          %517 = sbr.rel (%p515) target = $region100
        $region99: #{tpu_custom_call.1} parent=67 // pred_region
          %518 = dma.done [#allocation16], 192
        $region100: #{tpu_custom_call.1} parent=67 // pred_fallthru
          _
        %s519 = sand.u32 %s29, 1
        %s520 = scalar_lea.sflag [#allocation4], %s519
        %s521 = sand.u32 %s205, 1
        %s522 = smul.addr %s521, 3072
        %s523 = scalar_lea.vmem [#allocation17], %s522
        // Predicated region
        $region101: #{tpu_custom_call.1} parent=67 // pred_check
          %p524 = pneg %p218
        $region102: #{tpu_custom_call.1} parent=67 // pred_check_branch
          %526 = sbr.rel (%p524) target = $region104
        $region103: #{tpu_custom_call.1} parent=67 // pred_region
          %527 = dma.done %s520, 49152
        $region104: #{tpu_custom_call.1} parent=67 // pred_fallthru
          _
        %s528 = sand.u32 %s29, 1
        %s529 = scalar_lea.sflag [#allocation4], %s528
        %s530 = sand.u32 %s231, 1
        %s531 = smul.addr %s530, 12
        %s532 = scalar_lea.vmem [#allocation18], %s531
        // Predicated region
        $region105: #{tpu_custom_call.1} parent=67 // pred_check
          %p533 = pneg %p244
        $region106: #{tpu_custom_call.1} parent=67 // pred_check_branch
          %535 = sbr.rel (%p533) target = $region108
        $region107: #{tpu_custom_call.1} parent=67 // pred_region
          %536 = dma.done %s529, 192
        $region108: #{tpu_custom_call.1} parent=67 // pred_fallthru
          _
        // Predicated region
        $region109: #{tpu_custom_call.1} parent=67 // pred_check
          %p537 = pneg %p286
        $region110: #{tpu_custom_call.1} parent=67 // pred_check_branch
          %539 = sbr.rel (%p537) target = $region112
        $region111: #{tpu_custom_call.1} parent=67 // pred_region
          %540 = dma.done [#allocation7], 16
        $region112: #{tpu_custom_call.1} parent=67 // pred_fallthru
          _
        %p541 = pneg %p45
        %p542 = pneg %p42
        %p543 = pneg %p66
        %p544 = pneg %p63
        %p545 = pneg %p87
        %p546 = pneg %p84
        %p547 = pneg %p108
        %p548 = pneg %p105
        %p549 = pneg %p129
        %p550 = pneg %p126
        %p551 = pneg %p150
        %p552 = pneg %p147
        %p553 = pneg %p171
        %p554 = pneg %p168
        %p555 = pneg %p192
        %p556 = pneg %p189
        %s557 = sand.u32 %s29, 1
        %s558 = scalar_lea.sflag [#allocation4], %s557
        %s559 = sand.u32 %s205, 1
        %s560 = smul.addr %s559, 3072
        %s561 = scalar_lea.vmem [#allocation17], %s560
        %p562 = pneg %p218
        %p563 = pneg %p215
        %s564 = sand.u32 %s29, 1
        %s565 = scalar_lea.sflag [#allocation4], %s564
        %s566 = sand.u32 %s231, 1
        %s567 = smul.addr %s566, 12
        %s568 = scalar_lea.vmem [#allocation18], %s567
        %p569 = pneg %p244
        %p570 = pneg %p241
        %p571 = pneg %p265
        %p572 = pneg %p262
        %p573 = pneg %p286
        %p574 = pneg %p283
        %p575 = pneg %p307
        %p576 = pneg %p304
        %p578 = scmp.eq.s32.totalorder %s29, 0
        // Predicated region
        $region113: #{tpu_custom_call.1} parent=67 // pred_check
          %p579 = pneg %p578
        $region114: #{tpu_custom_call.1} parent=67 // pred_check_branch
          %581 = sbr.rel (%p579) target = $region116
        $region115: #{tpu_custom_call.1} parent=67 // pred_region
          %v582 = vld [vmem:[#allocation3] sm:$0xff]
          %v583 = vpack.c.bf16 %v582, %v582
          %v584 = vld [vmem:[#allocation6] sm:$0xff]
          %v585 = vld [vmem:[#allocation6 + $0x8] sm:$0xf]
          %v586 = vld [vmem:[#allocation6 + $0xc] sm:$0xff]
          %v587 = vld [vmem:[#allocation6 + $0x14] sm:$0xf]
          %v588 = vld [vmem:[#allocation6 + $0x18] sm:$0xff]
          %v589 = vld [vmem:[#allocation6 + $0x20] sm:$0xf]
          %v590 = vld [vmem:[#allocation6 + $0x24] sm:$0xff]
          %v591 = vld [vmem:[#allocation6 + $0x2c] sm:$0xf]
          %v592 = vld [vmem:[#allocation9] sm:$0x7]
          %v594 = vlaneseq
          %v595 = vshrl.u32 %v594, 7
          %v596 = vsub.s32 0, %v595
          %v597 = vrot.slane %v592, %v596
          %v598 = vlaneseq
          %v599 = vshrl.u32 %v598, 7
          %v600 = vsub.s32 1, %v599
          %v601 = vrot.slane %v592, %v600
          %v602 = vlaneseq
          %v603 = vshrl.u32 %v602, 7
          %v604 = vsub.s32 2, %v603
          %v605 = vrot.slane %v592, %v604
          %v617 = vunpack.c.l.b16 %v584
          %v618 = vunpack.c.h.b16 %v584
          %v619 = vunpack.c.l.b16 %v585
          %v620 = vunpack.c.l.b16 %v586
          %v621 = vunpack.c.h.b16 %v586
          %v622 = vunpack.c.l.b16 %v587
          %v623 = vunpack.c.l.b16 %v588
          %v624 = vunpack.c.h.b16 %v588
          %v625 = vunpack.c.l.b16 %v589
          %v626 = vunpack.c.l.b16 %v590
          %v627 = vunpack.c.h.b16 %v590
          %v628 = vunpack.c.l.b16 %v591
          %v629 = vpack.c.b16 %v620, %v617
          %v630 = vpack.c.b16 %v621, %v618
          %v631 = vpack.c.b16 %v622, %v619
          %v632 = vpack.c.b16 %v626, %v623
          %v633 = vpack.c.b16 %v627, %v624
          %v634 = vpack.c.b16 %v628, %v625
          %vm641 = vcmask 261120
          %v643 = vsel %vm641, %v583, 0
          %645 = vmatprep.subr.bf16.mxu0 %v630
          %646 = vmatpush1.bf16.msra.mxu0 %v629
          %647 = vmatprep.subr.bf16.mxu0 %v633
          %648 = vmatpush1.bf16.msra.mxu0 %v632
          %649 = vmatprep.subr.bf16.mxu0 0
          %650 = vmatpush1.bf16.msra.mxu0 0
          %651 = vmatprep.subr.bf16.mxu0 0
          %652 = vmatpush1.bf16.msra.mxu0 0
          %653 = vmatprep.subr.bf16.mxu0 0
          %654 = vmatpush1.bf16.msra.mxu0 0
          %655 = vmatprep.subr.bf16.mxu0 0
          %656 = vmatpush1.bf16.msra.mxu0 0
          %657 = vmatprep.subr.bf16.mxu0 0
          %658 = vmatpush1.bf16.msra.mxu0 0
          %659 = vmatprep.subr.bf16.mxu0 0
          %660 = vmatpush1.bf16.msra.mxu0 0
          %661 = vmatprep.subr.bf16.mxu0 0
          %662 = vmatpush1.bf16.msra.mxu0 0
          %663 = vmatprep.subr.bf16.mxu0 0
          %664 = vmatpush1.bf16.msra.mxu0 0
          %665 = vmatprep.subr.bf16.mxu0 0
          %666 = vmatpush1.bf16.msra.mxu0 0
          %667 = vmatprep.subr.bf16.mxu0 0
          %668 = vmatpush1.bf16.msra.mxu0 0
          %669 = vmatprep.subr.bf16.mxu0 0
          %670 = vmatpush1.bf16.msra.mxu0 0
          %671 = vmatprep.subr.bf16.mxu0 0
          %672 = vmatpush1.bf16.msra.mxu0 0
          %673 = vmatprep.subr.bf16.mxu0 0
          %674 = vmatpush1.bf16.msra.mxu0 0
          %675 = vmatprep.subr.bf16.mxu0 0
          %676 = vmatpush1.bf16.msra.mxu0 0
          %677 = vmatprep.mubr.bf16.mxu0 0
          %678 = vmatmul.mubr.bf16.gmra.mrb[0].mxu0 %v643
          %v679 = vpop.f32.mrb[0].mxu0
          %v680 = vadd.f32 %v597, %v679
          %v681 = vpop.f32.mrb[0].mxu0
          %v682 = vadd.f32 %v601, %v681
          %v683 = vpop.f32.mrb[0].mxu0
          %v684 = vpop.f32.mrb[0].mxu0
          %685 = vdwg.mxu0
          %686 = vmatprep.subr.bf16.mxu0 0
          %687 = vmatpush1.bf16.msra.mxu0 %v631
          %688 = vmatprep.subr.bf16.mxu0 0
          %689 = vmatpush1.bf16.msra.mxu0 %v634
          %690 = vmatprep.subr.bf16.mxu0 0
          %691 = vmatpush1.bf16.msra.mxu0 0
          %692 = vmatprep.subr.bf16.mxu0 0
          %693 = vmatpush1.bf16.msra.mxu0 0
          %694 = vmatprep.subr.bf16.mxu0 0
          %695 = vmatpush1.bf16.msra.mxu0 0
          %696 = vmatprep.subr.bf16.mxu0 0
          %697 = vmatpush1.bf16.msra.mxu0 0
          %698 = vmatprep.subr.bf16.mxu0 0
          %699 = vmatpush1.bf16.msra.mxu0 0
          %700 = vmatprep.subr.bf16.mxu0 0
          %701 = vmatpush1.bf16.msra.mxu0 0
          %702 = vmatprep.subr.bf16.mxu0 0
          %703 = vmatpush1.bf16.msra.mxu0 0
          %704 = vmatprep.subr.bf16.mxu0 0
          %705 = vmatpush1.bf16.msra.mxu0 0
          %706 = vmatprep.subr.bf16.mxu0 0
          %707 = vmatpush1.bf16.msra.mxu0 0
          %708 = vmatprep.subr.bf16.mxu0 0
          %709 = vmatpush1.bf16.msra.mxu0 0
          %710 = vmatprep.subr.bf16.mxu0 0
          %711 = vmatpush1.bf16.msra.mxu0 0
          %712 = vmatprep.subr.bf16.mxu0 0
          %713 = vmatpush1.bf16.msra.mxu0 0
          %714 = vmatprep.subr.bf16.mxu0 0
          %715 = vmatpush1.bf16.msra.mxu0 0
          %716 = vmatprep.subr.bf16.mxu0 0
          %717 = vmatpush1.bf16.msra.mxu0 0
          %718 = vmatprep.mubr.bf16.mxu0 0
          %719 = vmatmul.mubr.bf16.gmra.mrb[0].mxu0 %v643
          %v720 = vpop.f32.mrb[0].mxu0
          %v721 = vadd.f32 %v605, %v720
          %v722 = vpop.f32.mrb[0].mxu0
          %v723 = vpop.f32.mrb[0].mxu0
          %v724 = vpop.f32.mrb[0].mxu0
          %725 = vdwg.mxu0
          %v726 = vxor.u32 %v680, 2147483648
          %v727 = vmul.f32 %v726, 1.442695
          %v728 = vpow.pop %v727
          %v729 = vadd.f32 %v728, 1.0
          %v730 = vrcp.pop %v729
          %v731 = vmul.f32 1.0, %v730
          %v732 = vtanh.pop %v682
          %v733 = vxor.u32 %v721, 2147483648
          %v734 = vmul.f32 %v733, 1.442695
          %v735 = vpow.pop %v734
          %v736 = vadd.f32 %v735, 1.0
          %v737 = vrcp.pop %v736
          %v738 = vmul.f32 1.0, %v737
          %v739 = vmul.f32 %v731, %v732
          %v740 = vtanh.pop %v739
          %v741 = vmul.f32 %v738, %v740
          %v742 = vpack.c.bf16 %v741, %v741
          %v743 = vld [vmem:[#allocation8] sm:$0xff]
          %v744 = vld [vmem:[#allocation8 + $0x8] sm:$0xf]
          %v745 = vld [vmem:[#allocation8 + $0xc] sm:$0xff]
          %v746 = vld [vmem:[#allocation8 + $0x14] sm:$0xf]
          %v747 = vld [vmem:[#allocation8 + $0x18] sm:$0xff]
          %v748 = vld [vmem:[#allocation8 + $0x20] sm:$0xf]
          %v749 = vld [vmem:[#allocation8 + $0x24] sm:$0xff]
          %v750 = vld [vmem:[#allocation8 + $0x2c] sm:$0xf]
          %v751 = vld [vmem:[#allocation8 + $0x30] sm:$0xff]
          %v752 = vld [vmem:[#allocation8 + $0x38] sm:$0xf]
          %v753 = vld [vmem:[#allocation8 + $0x3c] sm:$0xff]
          %v754 = vld [vmem:[#allocation8 + $0x44] sm:$0xf]
          %v755 = vld [vmem:[#allocation8 + $0x48] sm:$0xff]
          %v756 = vld [vmem:[#allocation8 + $0x50] sm:$0xf]
          %v757 = vld [vmem:[#allocation8 + $0x54] sm:$0xff]
          %v758 = vld [vmem:[#allocation8 + $0x5c] sm:$0xf]
          %v759 = vld [vmem:[#allocation8 + $0x60] sm:$0xff]
          %v760 = vld [vmem:[#allocation8 + $0x68] sm:$0xf]
          %v761 = vld [vmem:[#allocation8 + $0x6c] sm:$0xff]
          %v762 = vld [vmem:[#allocation8 + $0x74] sm:$0xf]
          %v763 = vld [vmem:[#allocation8 + $0x78] sm:$0xff]
          %v764 = vld [vmem:[#allocation8 + $0x80] sm:$0xf]
          %v765 = vld [vmem:[#allocation8 + $0x84] sm:$0xff]
          %v766 = vld [vmem:[#allocation8 + $0x8c] sm:$0xf]
          %v767 = vld [vmem:[#allocation8 + $0x90] sm:$0xff]
          %v768 = vld [vmem:[#allocation8 + $0x98] sm:$0xf]
          %v769 = vld [vmem:[#allocation8 + $0x9c] sm:$0xff]
          %v770 = vld [vmem:[#allocation8 + $0xa4] sm:$0xf]
          %v771 = vld [vmem:[#allocation8 + $0xa8] sm:$0xff]
          %v772 = vld [vmem:[#allocation8 + $0xb0] sm:$0xf]
          %v773 = vld [vmem:[#allocation8 + $0xb4] sm:$0xff]
          %v774 = vld [vmem:[#allocation8 + $0xbc] sm:$0xf]
          %s775 = scalar_lea.vmem [#allocation9], 3
          %v776 = vld [vmem:[%s775] sm:$0x7]
          %v778 = vlaneseq
          %v779 = vshrl.u32 %v778, 7
          %v780 = vsub.s32 0, %v779
          %v781 = vrot.slane %v776, %v780
          %v782 = vlaneseq
          %v783 = vshrl.u32 %v782, 7
          %v784 = vsub.s32 1, %v783
          %v785 = vrot.slane %v776, %v784
          %v786 = vlaneseq
          %v787 = vshrl.u32 %v786, 7
          %v788 = vsub.s32 2, %v787
          %v789 = vrot.slane %v776, %v788
          %v825 = vunpack.c.l.b16 %v743
          %v826 = vunpack.c.h.b16 %v743
          %v827 = vunpack.c.l.b16 %v744
          %v828 = vunpack.c.l.b16 %v745
          %v829 = vunpack.c.h.b16 %v745
          %v830 = vunpack.c.l.b16 %v746
          %v831 = vunpack.c.l.b16 %v747
          %v832 = vunpack.c.h.b16 %v747
          %v833 = vunpack.c.l.b16 %v748
          %v834 = vunpack.c.l.b16 %v749
          %v835 = vunpack.c.h.b16 %v749
          %v836 = vunpack.c.l.b16 %v750
          %v837 = vunpack.c.l.b16 %v751
          %v838 = vunpack.c.h.b16 %v751
          %v839 = vunpack.c.l.b16 %v752
          %v840 = vunpack.c.l.b16 %v753
          %v841 = vunpack.c.h.b16 %v753
          %v842 = vunpack.c.l.b16 %v754
          %v843 = vunpack.c.l.b16 %v755
          %v844 = vunpack.c.h.b16 %v755
          %v845 = vunpack.c.l.b16 %v756
          %v846 = vunpack.c.l.b16 %v757
          %v847 = vunpack.c.h.b16 %v757
          %v848 = vunpack.c.l.b16 %v758
          %v849 = vunpack.c.l.b16 %v759
          %v850 = vunpack.c.h.b16 %v759
          %v851 = vunpack.c.l.b16 %v760
          %v852 = vunpack.c.l.b16 %v761
          %v853 = vunpack.c.h.b16 %v761
          %v854 = vunpack.c.l.b16 %v762
          %v855 = vunpack.c.l.b16 %v763
          %v856 = vunpack.c.h.b16 %v763
          %v857 = vunpack.c.l.b16 %v764
          %v858 = vunpack.c.l.b16 %v765
          %v859 = vunpack.c.h.b16 %v765
          %v860 = vunpack.c.l.b16 %v766
          %v861 = vunpack.c.l.b16 %v767
          %v862 = vunpack.c.h.b16 %v767
          %v863 = vunpack.c.l.b16 %v768
          %v864 = vunpack.c.l.b16 %v769
          %v865 = vunpack.c.h.b16 %v769
          %v866 = vunpack.c.l.b16 %v770
          %v867 = vunpack.c.l.b16 %v771
          %v868 = vunpack.c.h.b16 %v771
          %v869 = vunpack.c.l.b16 %v772
          %v870 = vunpack.c.l.b16 %v773
          %v871 = vunpack.c.h.b16 %v773
          %v872 = vunpack.c.l.b16 %v774
          %v873 = vpack.c.b16 %v828, %v825
          %v874 = vpack.c.b16 %v829, %v826
          %v875 = vpack.c.b16 %v830, %v827
          %v876 = vpack.c.b16 %v834, %v831
          %v877 = vpack.c.b16 %v835, %v832
          %v878 = vpack.c.b16 %v836, %v833
          %v879 = vpack.c.b16 %v840, %v837
          %v880 = vpack.c.b16 %v841, %v838
          %v881 = vpack.c.b16 %v842, %v839
          %v882 = vpack.c.b16 %v846, %v843
          %v883 = vpack.c.b16 %v847, %v844
          %v884 = vpack.c.b16 %v848, %v845
          %v885 = vpack.c.b16 %v852, %v849
          %v886 = vpack.c.b16 %v853, %v850
          %v887 = vpack.c.b16 %v854, %v851
          %v888 = vpack.c.b16 %v858, %v855
          %v889 = vpack.c.b16 %v859, %v856
          %v890 = vpack.c.b16 %v860, %v857
          %v891 = vpack.c.b16 %v864, %v861
          %v892 = vpack.c.b16 %v865, %v862
          %v893 = vpack.c.b16 %v866, %v863
          %v894 = vpack.c.b16 %v870, %v867
          %v895 = vpack.c.b16 %v871, %v868
          %v896 = vpack.c.b16 %v872, %v869
          %921 = vmatprep.subr.bf16.mxu0 %v874
          %922 = vmatpush1.bf16.msra.mxu0 %v873
          %923 = vmatprep.subr.bf16.mxu0 %v877
          %924 = vmatpush1.bf16.msra.mxu0 %v876
          %925 = vmatprep.subr.bf16.mxu0 %v880
          %926 = vmatpush1.bf16.msra.mxu0 %v879
          %927 = vmatprep.subr.bf16.mxu0 %v883
          %928 = vmatpush1.bf16.msra.mxu0 %v882
          %929 = vmatprep.subr.bf16.mxu0 %v886
          %930 = vmatpush1.bf16.msra.mxu0 %v885
          %931 = vmatprep.subr.bf16.mxu0 %v889
          %932 = vmatpush1.bf16.msra.mxu0 %v888
          %933 = vmatprep.subr.bf16.mxu0 %v892
          %934 = vmatpush1.bf16.msra.mxu0 %v891
          %935 = vmatprep.subr.bf16.mxu0 %v895
          %936 = vmatpush1.bf16.msra.mxu0 %v894
          %937 = vmatprep.subr.bf16.mxu0 0
          %938 = vmatpush1.bf16.msra.mxu0 0
          %939 = vmatprep.subr.bf16.mxu0 0
          %940 = vmatpush1.bf16.msra.mxu0 0
          %941 = vmatprep.subr.bf16.mxu0 0
          %942 = vmatpush1.bf16.msra.mxu0 0
          %943 = vmatprep.subr.bf16.mxu0 0
          %944 = vmatpush1.bf16.msra.mxu0 0
          %945 = vmatprep.subr.bf16.mxu0 0
          %946 = vmatpush1.bf16.msra.mxu0 0
          %947 = vmatprep.subr.bf16.mxu0 0
          %948 = vmatpush1.bf16.msra.mxu0 0
          %949 = vmatprep.subr.bf16.mxu0 0
          %950 = vmatpush1.bf16.msra.mxu0 0
          %951 = vmatprep.subr.bf16.mxu0 0
          %952 = vmatpush1.bf16.msra.mxu0 0
          %953 = vmatprep.mubr.bf16.mxu0 0
          %954 = vmatmul.mubr.bf16.gmra.mrb[0].mxu0 %v742
          %v955 = vpop.f32.mrb[0].mxu0
          %v956 = vadd.f32 %v781, %v955
          %v957 = vpop.f32.mrb[0].mxu0
          %v958 = vadd.f32 %v785, %v957
          %v959 = vpop.f32.mrb[0].mxu0
          %v960 = vpop.f32.mrb[0].mxu0
          %961 = vdwg.mxu0
          %962 = vmatprep.subr.bf16.mxu0 0
          %963 = vmatpush1.bf16.msra.mxu0 %v875
          %964 = vmatprep.subr.bf16.mxu0 0
          %965 = vmatpush1.bf16.msra.mxu0 %v878
          %966 = vmatprep.subr.bf16.mxu0 0
          %967 = vmatpush1.bf16.msra.mxu0 %v881
          %968 = vmatprep.subr.bf16.mxu0 0
          %969 = vmatpush1.bf16.msra.mxu0 %v884
          %970 = vmatprep.subr.bf16.mxu0 0
          %971 = vmatpush1.bf16.msra.mxu0 %v887
          %972 = vmatprep.subr.bf16.mxu0 0
          %973 = vmatpush1.bf16.msra.mxu0 %v890
          %974 = vmatprep.subr.bf16.mxu0 0
          %975 = vmatpush1.bf16.msra.mxu0 %v893
          %976 = vmatprep.subr.bf16.mxu0 0
          %977 = vmatpush1.bf16.msra.mxu0 %v896
          %978 = vmatprep.subr.bf16.mxu0 0
          %979 = vmatpush1.bf16.msra.mxu0 0
          %980 = vmatprep.subr.bf16.mxu0 0
          %981 = vmatpush1.bf16.msra.mxu0 0
          %982 = vmatprep.subr.bf16.mxu0 0
          %983 = vmatpush1.bf16.msra.mxu0 0
          %984 = vmatprep.subr.bf16.mxu0 0
          %985 = vmatpush1.bf16.msra.mxu0 0
          %986 = vmatprep.subr.bf16.mxu0 0
          %987 = vmatpush1.bf16.msra.mxu0 0
          %988 = vmatprep.subr.bf16.mxu0 0
          %989 = vmatpush1.bf16.msra.mxu0 0
          %990 = vmatprep.subr.bf16.mxu0 0
          %991 = vmatpush1.bf16.msra.mxu0 0
          %992 = vmatprep.subr.bf16.mxu0 0
          %993 = vmatpush1.bf16.msra.mxu0 0
          %994 = vmatprep.mubr.bf16.mxu0 0
          %995 = vmatmul.mubr.bf16.gmra.mrb[0].mxu0 %v742
          %v996 = vpop.f32.mrb[0].mxu0
          %v997 = vadd.f32 %v789, %v996
          %v998 = vpop.f32.mrb[0].mxu0
          %v999 = vpop.f32.mrb[0].mxu0
          %v1000 = vpop.f32.mrb[0].mxu0
          %1001 = vdwg.mxu0
          %v1002 = vxor.u32 %v956, 2147483648
          %v1003 = vmul.f32 %v1002, 1.442695
          %v1004 = vpow.pop %v1003
          %v1005 = vadd.f32 %v1004, 1.0
          %v1006 = vrcp.pop %v1005
          %v1007 = vmul.f32 1.0, %v1006
          %v1008 = vtanh.pop %v958
          %v1009 = vxor.u32 %v997, 2147483648
          %v1010 = vmul.f32 %v1009, 1.442695
          %v1011 = vpow.pop %v1010
          %v1012 = vadd.f32 %v1011, 1.0
          %v1013 = vrcp.pop %v1012
          %v1014 = vmul.f32 1.0, %v1013
          %v1015 = vmul.f32 %v1007, %v1008
          %v1016 = vtanh.pop %v1015
          %v1017 = vmul.f32 %v1014, %v1016
          %v1018 = vpack.c.bf16 %v1017, %v1017
          %s1019 = scalar_lea.vmem [#allocation8], 192
          %v1020 = vld [vmem:[%s1019] sm:$0xff]
          %v1021 = vld [vmem:[%s1019 + $0x8] sm:$0xf]
          %v1022 = vld [vmem:[%s1019 + $0xc] sm:$0xff]
          %v1023 = vld [vmem:[%s1019 + $0x14] sm:$0xf]
          %v1024 = vld [vmem:[%s1019 + $0x18] sm:$0xff]
          %v1025 = vld [vmem:[%s1019 + $0x20] sm:$0xf]
          %v1026 = vld [vmem:[%s1019 + $0x24] sm:$0xff]
          %v1027 = vld [vmem:[%s1019 + $0x2c] sm:$0xf]
          %v1028 = vld [vmem:[%s1019 + $0x30] sm:$0xff]
          %v1029 = vld [vmem:[%s1019 + $0x38] sm:$0xf]
          %v1030 = vld [vmem:[%s1019 + $0x3c] sm:$0xff]
          %v1031 = vld [vmem:[%s1019 + $0x44] sm:$0xf]
          %v1032 = vld [vmem:[%s1019 + $0x48] sm:$0xff]
          %v1033 = vld [vmem:[%s1019 + $0x50] sm:$0xf]
          %v1034 = vld [vmem:[%s1019 + $0x54] sm:$0xff]
          %v1035 = vld [vmem:[%s1019 + $0x5c] sm:$0xf]
          %v1036 = vld [vmem:[%s1019 + $0x60] sm:$0xff]
          %v1037 = vld [vmem:[%s1019 + $0x68] sm:$0xf]
          %v1038 = vld [vmem:[%s1019 + $0x6c] sm:$0xff]
          %v1039 = vld [vmem:[%s1019 + $0x74] sm:$0xf]
          %v1040 = vld [vmem:[%s1019 + $0x78] sm:$0xff]
          %v1041 = vld [vmem:[%s1019 + $0x80] sm:$0xf]
          %v1042 = vld [vmem:[%s1019 + $0x84] sm:$0xff]
          %v1043 = vld [vmem:[%s1019 + $0x8c] sm:$0xf]
          %v1044 = vld [vmem:[%s1019 + $0x90] sm:$0xff]
          %v1045 = vld [vmem:[%s1019 + $0x98] sm:$0xf]
          %v1046 = vld [vmem:[%s1019 + $0x9c] sm:$0xff]
          %v1047 = vld [vmem:[%s1019 + $0xa4] sm:$0xf]
          %v1048 = vld [vmem:[%s1019 + $0xa8] sm:$0xff]
          %v1049 = vld [vmem:[%s1019 + $0xb0] sm:$0xf]
          %v1050 = vld [vmem:[%s1019 + $0xb4] sm:$0xff]
          %v1051 = vld [vmem:[%s1019 + $0xbc] sm:$0xf]
          %s1052 = scalar_lea.vmem [#allocation9], 6
          %v1053 = vld [vmem:[%s1052] sm:$0x7]
          %v1055 = vlaneseq
          %v1056 = vshrl.u32 %v1055, 7
          %v1057 = vsub.s32 0, %v1056
          %v1058 = vrot.slane %v1053, %v1057
          %v1059 = vlaneseq
          %v1060 = vshrl.u32 %v1059, 7
          %v1061 = vsub.s32 1, %v1060
          %v1062 = vrot.slane %v1053, %v1061
          %v1063 = vlaneseq
          %v1064 = vshrl.u32 %v1063, 7
          %v1065 = vsub.s32 2, %v1064
          %v1066 = vrot.slane %v1053, %v1065
          %v1102 = vunpack.c.l.b16 %v1020
          %v1103 = vunpack.c.h.b16 %v1020
          %v1104 = vunpack.c.l.b16 %v1021
          %v1105 = vunpack.c.l.b16 %v1022
          %v1106 = vunpack.c.h.b16 %v1022
          %v1107 = vunpack.c.l.b16 %v1023
          %v1108 = vunpack.c.l.b16 %v1024
          %v1109 = vunpack.c.h.b16 %v1024
          %v1110 = vunpack.c.l.b16 %v1025
          %v1111 = vunpack.c.l.b16 %v1026
          %v1112 = vunpack.c.h.b16 %v1026
          %v1113 = vunpack.c.l.b16 %v1027
          %v1114 = vunpack.c.l.b16 %v1028
          %v1115 = vunpack.c.h.b16 %v1028
          %v1116 = vunpack.c.l.b16 %v1029
          %v1117 = vunpack.c.l.b16 %v1030
          %v1118 = vunpack.c.h.b16 %v1030
          %v1119 = vunpack.c.l.b16 %v1031
          %v1120 = vunpack.c.l.b16 %v1032
          %v1121 = vunpack.c.h.b16 %v1032
          %v1122 = vunpack.c.l.b16 %v1033
          %v1123 = vunpack.c.l.b16 %v1034
          %v1124 = vunpack.c.h.b16 %v1034
          %v1125 = vunpack.c.l.b16 %v1035
          %v1126 = vunpack.c.l.b16 %v1036
          %v1127 = vunpack.c.h.b16 %v1036
          %v1128 = vunpack.c.l.b16 %v1037
          %v1129 = vunpack.c.l.b16 %v1038
          %v1130 = vunpack.c.h.b16 %v1038
          %v1131 = vunpack.c.l.b16 %v1039
          %v1132 = vunpack.c.l.b16 %v1040
          %v1133 = vunpack.c.h.b16 %v1040
          %v1134 = vunpack.c.l.b16 %v1041
          %v1135 = vunpack.c.l.b16 %v1042
          %v1136 = vunpack.c.h.b16 %v1042
          %v1137 = vunpack.c.l.b16 %v1043
          %v1138 = vunpack.c.l.b16 %v1044
          %v1139 = vunpack.c.h.b16 %v1044
          %v1140 = vunpack.c.l.b16 %v1045
          %v1141 = vunpack.c.l.b16 %v1046
          %v1142 = vunpack.c.h.b16 %v1046
          %v1143 = vunpack.c.l.b16 %v1047
          %v1144 = vunpack.c.l.b16 %v1048
          %v1145 = vunpack.c.h.b16 %v1048
          %v1146 = vunpack.c.l.b16 %v1049
          %v1147 = vunpack.c.l.b16 %v1050
          %v1148 = vunpack.c.h.b16 %v1050
          %v1149 = vunpack.c.l.b16 %v1051
          %v1150 = vpack.c.b16 %v1105, %v1102
          %v1151 = vpack.c.b16 %v1106, %v1103
          %v1152 = vpack.c.b16 %v1107, %v1104
          %v1153 = vpack.c.b16 %v1111, %v1108
          %v1154 = vpack.c.b16 %v1112, %v1109
          %v1155 = vpack.c.b16 %v1113, %v1110
          %v1156 = vpack.c.b16 %v1117, %v1114
          %v1157 = vpack.c.b16 %v1118, %v1115
          %v1158 = vpack.c.b16 %v1119, %v1116
          %v1159 = vpack.c.b16 %v1123, %v1120
          %v1160 = vpack.c.b16 %v1124, %v1121
          %v1161 = vpack.c.b16 %v1125, %v1122
          %v1162 = vpack.c.b16 %v1129, %v1126
          %v1163 = vpack.c.b16 %v1130, %v1127
          %v1164 = vpack.c.b16 %v1131, %v1128
          %v1165 = vpack.c.b16 %v1135, %v1132
          %v1166 = vpack.c.b16 %v1136, %v1133
          %v1167 = vpack.c.b16 %v1137, %v1134
          %v1168 = vpack.c.b16 %v1141, %v1138
          %v1169 = vpack.c.b16 %v1142, %v1139
          %v1170 = vpack.c.b16 %v1143, %v1140
          %v1171 = vpack.c.b16 %v1147, %v1144
          %v1172 = vpack.c.b16 %v1148, %v1145
          %v1173 = vpack.c.b16 %v1149, %v1146
          %1198 = vmatprep.subr.bf16.mxu0 %v1151
          %1199 = vmatpush1.bf16.msra.mxu0 %v1150
          %1200 = vmatprep.subr.bf16.mxu0 %v1154
          %1201 = vmatpush1.bf16.msra.mxu0 %v1153
          %1202 = vmatprep.subr.bf16.mxu0 %v1157
          %1203 = vmatpush1.bf16.msra.mxu0 %v1156
          %1204 = vmatprep.subr.bf16.mxu0 %v1160
          %1205 = vmatpush1.bf16.msra.mxu0 %v1159
          %1206 = vmatprep.subr.bf16.mxu0 %v1163
          %1207 = vmatpush1.bf16.msra.mxu0 %v1162
          %1208 = vmatprep.subr.bf16.mxu0 %v1166
          %1209 = vmatpush1.bf16.msra.mxu0 %v1165
          %1210 = vmatprep.subr.bf16.mxu0 %v1169
          %1211 = vmatpush1.bf16.msra.mxu0 %v1168
          %1212 = vmatprep.subr.bf16.mxu0 %v1172
          %1213 = vmatpush1.bf16.msra.mxu0 %v1171
          %1214 = vmatprep.subr.bf16.mxu0 0
          %1215 = vmatpush1.bf16.msra.mxu0 0
          %1216 = vmatprep.subr.bf16.mxu0 0
          %1217 = vmatpush1.bf16.msra.mxu0 0
          %1218 = vmatprep.subr.bf16.mxu0 0
          %1219 = vmatpush1.bf16.msra.mxu0 0
          %1220 = vmatprep.subr.bf16.mxu0 0
          %1221 = vmatpush1.bf16.msra.mxu0 0
          %1222 = vmatprep.subr.bf16.mxu0 0
          %1223 = vmatpush1.bf16.msra.mxu0 0
          %1224 = vmatprep.subr.bf16.mxu0 0
          %1225 = vmatpush1.bf16.msra.mxu0 0
          %1226 = vmatprep.subr.bf16.mxu0 0
          %1227 = vmatpush1.bf16.msra.mxu0 0
          %1228 = vmatprep.subr.bf16.mxu0 0
          %1229 = vmatpush1.bf16.msra.mxu0 0
          %1230 = vmatprep.mubr.bf16.mxu0 0
          %1231 = vmatmul.mubr.bf16.gmra.mrb[0].mxu0 %v1018
          %v1232 = vpop.f32.mrb[0].mxu0
          %v1233 = vadd.f32 %v1058, %v1232
          %v1234 = vpop.f32.mrb[0].mxu0
          %v1235 = vadd.f32 %v1062, %v1234
          %v1236 = vpop.f32.mrb[0].mxu0
          %v1237 = vpop.f32.mrb[0].mxu0
          %1238 = vdwg.mxu0
          %1239 = vmatprep.subr.bf16.mxu0 0
          %1240 = vmatpush1.bf16.msra.mxu0 %v1152
          %1241 = vmatprep.subr.bf16.mxu0 0
          %1242 = vmatpush1.bf16.msra.mxu0 %v1155
          %1243 = vmatprep.subr.bf16.mxu0 0
          %1244 = vmatpush1.bf16.msra.mxu0 %v1158
          %1245 = vmatprep.subr.bf16.mxu0 0
          %1246 = vmatpush1.bf16.msra.mxu0 %v1161
          %1247 = vmatprep.subr.bf16.mxu0 0
          %1248 = vmatpush1.bf16.msra.mxu0 %v1164
          %1249 = vmatprep.subr.bf16.mxu0 0
          %1250 = vmatpush1.bf16.msra.mxu0 %v1167
          %1251 = vmatprep.subr.bf16.mxu0 0
          %1252 = vmatpush1.bf16.msra.mxu0 %v1170
          %1253 = vmatprep.subr.bf16.mxu0 0
          %1254 = vmatpush1.bf16.msra.mxu0 %v1173
          %1255 = vmatprep.subr.bf16.mxu0 0
          %1256 = vmatpush1.bf16.msra.mxu0 0
          %1257 = vmatprep.subr.bf16.mxu0 0
          %1258 = vmatpush1.bf16.msra.mxu0 0
          %1259 = vmatprep.subr.bf16.mxu0 0
          %1260 = vmatpush1.bf16.msra.mxu0 0
          %1261 = vmatprep.subr.bf16.mxu0 0
          %1262 = vmatpush1.bf16.msra.mxu0 0
          %1263 = vmatprep.subr.bf16.mxu0 0
          %1264 = vmatpush1.bf16.msra.mxu0 0
          %1265 = vmatprep.subr.bf16.mxu0 0
          %1266 = vmatpush1.bf16.msra.mxu0 0
          %1267 = vmatprep.subr.bf16.mxu0 0
          %1268 = vmatpush1.bf16.msra.mxu0 0
          %1269 = vmatprep.subr.bf16.mxu0 0
          %1270 = vmatpush1.bf16.msra.mxu0 0
          %1271 = vmatprep.mubr.bf16.mxu0 0
          %1272 = vmatmul.mubr.bf16.gmra.mrb[0].mxu0 %v1018
          %v1273 = vpop.f32.mrb[0].mxu0
          %v1274 = vadd.f32 %v1066, %v1273
          %v1275 = vpop.f32.mrb[0].mxu0
          %v1276 = vpop.f32.mrb[0].mxu0
          %v1277 = vpop.f32.mrb[0].mxu0
          %1278 = vdwg.mxu0
          %v1279 = vxor.u32 %v1233, 2147483648
          %v1280 = vmul.f32 %v1279, 1.442695
          %v1281 = vpow.pop %v1280
          %v1282 = vadd.f32 %v1281, 1.0
          %v1283 = vrcp.pop %v1282
          %v1284 = vmul.f32 1.0, %v1283
          %v1285 = vtanh.pop %v1235
          %v1286 = vxor.u32 %v1274, 2147483648
          %v1287 = vmul.f32 %v1286, 1.442695
          %v1288 = vpow.pop %v1287
          %v1289 = vadd.f32 %v1288, 1.0
          %v1290 = vrcp.pop %v1289
          %v1291 = vmul.f32 1.0, %v1290
          %v1292 = vmul.f32 %v1284, %v1285
          %v1293 = vtanh.pop %v1292
          %v1294 = vmul.f32 %v1291, %v1293
          %v1295 = vpack.c.bf16 %v1294, %v1294
          %s1296 = scalar_lea.vmem [#allocation8], 384
          %v1297 = vld [vmem:[%s1296] sm:$0xff]
          %v1298 = vld [vmem:[%s1296 + $0x8] sm:$0xf]
          %v1299 = vld [vmem:[%s1296 + $0xc] sm:$0xff]
          %v1300 = vld [vmem:[%s1296 + $0x14] sm:$0xf]
          %v1301 = vld [vmem:[%s1296 + $0x18] sm:$0xff]
          %v1302 = vld [vmem:[%s1296 + $0x20] sm:$0xf]
          %v1303 = vld [vmem:[%s1296 + $0x24] sm:$0xff]
          %v1304 = vld [vmem:[%s1296 + $0x2c] sm:$0xf]
          %v1305 = vld [vmem:[%s1296 + $0x30] sm:$0xff]
          %v1306 = vld [vmem:[%s1296 + $0x38] sm:$0xf]
          %v1307 = vld [vmem:[%s1296 + $0x3c] sm:$0xff]
          %v1308 = vld [vmem:[%s1296 + $0x44] sm:$0xf]
          %v1309 = vld [vmem:[%s1296 + $0x48] sm:$0xff]
          %v1310 = vld [vmem:[%s1296 + $0x50] sm:$0xf]
          %v1311 = vld [vmem:[%s1296 + $0x54] sm:$0xff]
          %v1312 = vld [vmem:[%s1296 + $0x5c] sm:$0xf]
          %v1313 = vld [vmem:[%s1296 + $0x60] sm:$0xff]
          %v1314 = vld [vmem:[%s1296 + $0x68] sm:$0xf]
          %v1315 = vld [vmem:[%s1296 + $0x6c] sm:$0xff]
          %v1316 = vld [vmem:[%s1296 + $0x74] sm:$0xf]
          %v1317 = vld [vmem:[%s1296 + $0x78] sm:$0xff]
          %v1318 = vld [vmem:[%s1296 + $0x80] sm:$0xf]
          %v1319 = vld [vmem:[%s1296 + $0x84] sm:$0xff]
          %v1320 = vld [vmem:[%s1296 + $0x8c] sm:$0xf]
          %v1321 = vld [vmem:[%s1296 + $0x90] sm:$0xff]
          %v1322 = vld [vmem:[%s1296 + $0x98] sm:$0xf]
          %v1323 = vld [vmem:[%s1296 + $0x9c] sm:$0xff]
          %v1324 = vld [vmem:[%s1296 + $0xa4] sm:$0xf]
          %v1325 = vld [vmem:[%s1296 + $0xa8] sm:$0xff]
          %v1326 = vld [vmem:[%s1296 + $0xb0] sm:$0xf]
          %v1327 = vld [vmem:[%s1296 + $0xb4] sm:$0xff]
          %v1328 = vld [vmem:[%s1296 + $0xbc] sm:$0xf]
          %s1329 = scalar_lea.vmem [#allocation9], 9
          %v1330 = vld [vmem:[%s1329] sm:$0x7]
          %v1332 = vlaneseq
          %v1333 = vshrl.u32 %v1332, 7
          %v1334 = vsub.s32 0, %v1333
          %v1335 = vrot.slane %v1330, %v1334
          %v1336 = vlaneseq
          %v1337 = vshrl.u32 %v1336, 7
          %v1338 = vsub.s32 1, %v1337
          %v1339 = vrot.slane %v1330, %v1338
          %v1340 = vlaneseq
          %v1341 = vshrl.u32 %v1340, 7
          %v1342 = vsub.s32 2, %v1341
          %v1343 = vrot.slane %v1330, %v1342
          %v1379 = vunpack.c.l.b16 %v1297
          %v1380 = vunpack.c.h.b16 %v1297
          %v1381 = vunpack.c.l.b16 %v1298
          %v1382 = vunpack.c.l.b16 %v1299
          %v1383 = vunpack.c.h.b16 %v1299
          %v1384 = vunpack.c.l.b16 %v1300
          %v1385 = vunpack.c.l.b16 %v1301
          %v1386 = vunpack.c.h.b16 %v1301
          %v1387 = vunpack.c.l.b16 %v1302
          %v1388 = vunpack.c.l.b16 %v1303
          %v1389 = vunpack.c.h.b16 %v1303
          %v1390 = vunpack.c.l.b16 %v1304
          %v1391 = vunpack.c.l.b16 %v1305
          %v1392 = vunpack.c.h.b16 %v1305
          %v1393 = vunpack.c.l.b16 %v1306
          %v1394 = vunpack.c.l.b16 %v1307
          %v1395 = vunpack.c.h.b16 %v1307
          %v1396 = vunpack.c.l.b16 %v1308
          %v1397 = vunpack.c.l.b16 %v1309
          %v1398 = vunpack.c.h.b16 %v1309
          %v1399 = vunpack.c.l.b16 %v1310
          %v1400 = vunpack.c.l.b16 %v1311
          %v1401 = vunpack.c.h.b16 %v1311
          %v1402 = vunpack.c.l.b16 %v1312
          %v1403 = vunpack.c.l.b16 %v1313
          %v1404 = vunpack.c.h.b16 %v1313
          %v1405 = vunpack.c.l.b16 %v1314
          %v1406 = vunpack.c.l.b16 %v1315
          %v1407 = vunpack.c.h.b16 %v1315
          %v1408 = vunpack.c.l.b16 %v1316
          %v1409 = vunpack.c.l.b16 %v1317
          %v1410 = vunpack.c.h.b16 %v1317
          %v1411 = vunpack.c.l.b16 %v1318
          %v1412 = vunpack.c.l.b16 %v1319
          %v1413 = vunpack.c.h.b16 %v1319
          %v1414 = vunpack.c.l.b16 %v1320
          %v1415 = vunpack.c.l.b16 %v1321
          %v1416 = vunpack.c.h.b16 %v1321
          %v1417 = vunpack.c.l.b16 %v1322
          %v1418 = vunpack.c.l.b16 %v1323
          %v1419 = vunpack.c.h.b16 %v1323
          %v1420 = vunpack.c.l.b16 %v1324
          %v1421 = vunpack.c.l.b16 %v1325
          %v1422 = vunpack.c.h.b16 %v1325
          %v1423 = vunpack.c.l.b16 %v1326
          %v1424 = vunpack.c.l.b16 %v1327
          %v1425 = vunpack.c.h.b16 %v1327
          %v1426 = vunpack.c.l.b16 %v1328
          %v1427 = vpack.c.b16 %v1382, %v1379
          %v1428 = vpack.c.b16 %v1383, %v1380
          %v1429 = vpack.c.b16 %v1384, %v1381
          %v1430 = vpack.c.b16 %v1388, %v1385
          %v1431 = vpack.c.b16 %v1389, %v1386
          %v1432 = vpack.c.b16 %v1390, %v1387
          %v1433 = vpack.c.b16 %v1394, %v1391
          %v1434 = vpack.c.b16 %v1395, %v1392
          %v1435 = vpack.c.b16 %v1396, %v1393
          %v1436 = vpack.c.b16 %v1400, %v1397
          %v1437 = vpack.c.b16 %v1401, %v1398
          %v1438 = vpack.c.b16 %v1402, %v1399
          %v1439 = vpack.c.b16 %v1406, %v1403
          %v1440 = vpack.c.b16 %v1407, %v1404
          %v1441 = vpack.c.b16 %v1408, %v1405
          %v1442 = vpack.c.b16 %v1412, %v1409
          %v1443 = vpack.c.b16 %v1413, %v1410
          %v1444 = vpack.c.b16 %v1414, %v1411
          %v1445 = vpack.c.b16 %v1418, %v1415
          %v1446 = vpack.c.b16 %v1419, %v1416
          %v1447 = vpack.c.b16 %v1420, %v1417
          %v1448 = vpack.c.b16 %v1424, %v1421
          %v1449 = vpack.c.b16 %v1425, %v1422
          %v1450 = vpack.c.b16 %v1426, %v1423
          %1475 = vmatprep.subr.bf16.mxu0 %v1428
          %1476 = vmatpush1.bf16.msra.mxu0 %v1427
          %1477 = vmatprep.subr.bf16.mxu0 %v1431
          %1478 = vmatpush1.bf16.msra.mxu0 %v1430
          %1479 = vmatprep.subr.bf16.mxu0 %v1434
          %1480 = vmatpush1.bf16.msra.mxu0 %v1433
          %1481 = vmatprep.subr.bf16.mxu0 %v1437
          %1482 = vmatpush1.bf16.msra.mxu0 %v1436
          %1483 = vmatprep.subr.bf16.mxu0 %v1440
          %1484 = vmatpush1.bf16.msra.mxu0 %v1439
          %1485 = vmatprep.subr.bf16.mxu0 %v1443
          %1486 = vmatpush1.bf16.msra.mxu0 %v1442
          %1487 = vmatprep.subr.bf16.mxu0 %v1446
          %1488 = vmatpush1.bf16.msra.mxu0 %v1445
          %1489 = vmatprep.subr.bf16.mxu0 %v1449
          %1490 = vmatpush1.bf16.msra.mxu0 %v1448
          %1491 = vmatprep.subr.bf16.mxu0 0
          %1492 = vmatpush1.bf16.msra.mxu0 0
          %1493 = vmatprep.subr.bf16.mxu0 0
          %1494 = vmatpush1.bf16.msra.mxu0 0
          %1495 = vmatprep.subr.bf16.mxu0 0
          %1496 = vmatpush1.bf16.msra.mxu0 0
          %1497 = vmatprep.subr.bf16.mxu0 0
          %1498 = vmatpush1.bf16.msra.mxu0 0
          %1499 = vmatprep.subr.bf16.mxu0 0
          %1500 = vmatpush1.bf16.msra.mxu0 0
          %1501 = vmatprep.subr.bf16.mxu0 0
          %1502 = vmatpush1.bf16.msra.mxu0 0
          %1503 = vmatprep.subr.bf16.mxu0 0
          %1504 = vmatpush1.bf16.msra.mxu0 0
          %1505 = vmatprep.subr.bf16.mxu0 0
          %1506 = vmatpush1.bf16.msra.mxu0 0
          %1507 = vmatprep.mubr.bf16.mxu0 0
          %1508 = vmatmul.mubr.bf16.gmra.mrb[0].mxu0 %v1295
          %v1509 = vpop.f32.mrb[0].mxu0
          %v1510 = vadd.f32 %v1335, %v1509
          %v1511 = vpop.f32.mrb[0].mxu0
          %v1512 = vadd.f32 %v1339, %v1511
          %v1513 = vpop.f32.mrb[0].mxu0
          %v1514 = vpop.f32.mrb[0].mxu0
          %1515 = vdwg.mxu0
          %1516 = vmatprep.subr.bf16.mxu0 0
          %1517 = vmatpush1.bf16.msra.mxu0 %v1429
          %1518 = vmatprep.subr.bf16.mxu0 0
          %1519 = vmatpush1.bf16.msra.mxu0 %v1432
          %1520 = vmatprep.subr.bf16.mxu0 0
          %1521 = vmatpush1.bf16.msra.mxu0 %v1435
          %1522 = vmatprep.subr.bf16.mxu0 0
          %1523 = vmatpush1.bf16.msra.mxu0 %v1438
          %1524 = vmatprep.subr.bf16.mxu0 0
          %1525 = vmatpush1.bf16.msra.mxu0 %v1441
          %1526 = vmatprep.subr.bf16.mxu0 0
          %1527 = vmatpush1.bf16.msra.mxu0 %v1444
          %1528 = vmatprep.subr.bf16.mxu0 0
          %1529 = vmatpush1.bf16.msra.mxu0 %v1447
          %1530 = vmatprep.subr.bf16.mxu0 0
          %1531 = vmatpush1.bf16.msra.mxu0 %v1450
          %1532 = vmatprep.subr.bf16.mxu0 0
          %1533 = vmatpush1.bf16.msra.mxu0 0
          %1534 = vmatprep.subr.bf16.mxu0 0
          %1535 = vmatpush1.bf16.msra.mxu0 0
          %1536 = vmatprep.subr.bf16.mxu0 0
          %1537 = vmatpush1.bf16.msra.mxu0 0
          %1538 = vmatprep.subr.bf16.mxu0 0
          %1539 = vmatpush1.bf16.msra.mxu0 0
          %1540 = vmatprep.subr.bf16.mxu0 0
          %1541 = vmatpush1.bf16.msra.mxu0 0
          %1542 = vmatprep.subr.bf16.mxu0 0
          %1543 = vmatpush1.bf16.msra.mxu0 0
          %1544 = vmatprep.subr.bf16.mxu0 0
          %1545 = vmatpush1.bf16.msra.mxu0 0
          %1546 = vmatprep.subr.bf16.mxu0 0
          %1547 = vmatpush1.bf16.msra.mxu0 0
          %1548 = vmatprep.mubr.bf16.mxu0 0
          %1549 = vmatmul.mubr.bf16.gmra.mrb[0].mxu0 %v1295
          %v1550 = vpop.f32.mrb[0].mxu0
          %v1551 = vadd.f32 %v1343, %v1550
          %v1552 = vpop.f32.mrb[0].mxu0
          %v1553 = vpop.f32.mrb[0].mxu0
          %v1554 = vpop.f32.mrb[0].mxu0
          %1555 = vdwg.mxu0
          %v1556 = vxor.u32 %v1510, 2147483648
          %v1557 = vmul.f32 %v1556, 1.442695
          %v1558 = vpow.pop %v1557
          %v1559 = vadd.f32 %v1558, 1.0
          %v1560 = vrcp.pop %v1559
          %v1561 = vmul.f32 1.0, %v1560
          %v1562 = vtanh.pop %v1512
          %v1563 = vxor.u32 %v1551, 2147483648
          %v1564 = vmul.f32 %v1563, 1.442695
          %v1565 = vpow.pop %v1564
          %v1566 = vadd.f32 %v1565, 1.0
          %v1567 = vrcp.pop %v1566
          %v1568 = vmul.f32 1.0, %v1567
          %v1569 = vmul.f32 %v1561, %v1562
          %v1570 = vtanh.pop %v1569
          %v1571 = vmul.f32 %v1568, %v1570
          %v1572 = vpack.c.bf16 %v1571, %v1571
          %s1573 = scalar_lea.vmem [#allocation8], 576
          %v1574 = vld [vmem:[%s1573] sm:$0xff]
          %v1575 = vld [vmem:[%s1573 + $0x8] sm:$0xf]
          %v1576 = vld [vmem:[%s1573 + $0xc] sm:$0xff]
          %v1577 = vld [vmem:[%s1573 + $0x14] sm:$0xf]
          %v1578 = vld [vmem:[%s1573 + $0x18] sm:$0xff]
          %v1579 = vld [vmem:[%s1573 + $0x20] sm:$0xf]
          %v1580 = vld [vmem:[%s1573 + $0x24] sm:$0xff]
          %v1581 = vld [vmem:[%s1573 + $0x2c] sm:$0xf]
          %v1582 = vld [vmem:[%s1573 + $0x30] sm:$0xff]
          %v1583 = vld [vmem:[%s1573 + $0x38] sm:$0xf]
          %v1584 = vld [vmem:[%s1573 + $0x3c] sm:$0xff]
          %v1585 = vld [vmem:[%s1573 + $0x44] sm:$0xf]
          %v1586 = vld [vmem:[%s1573 + $0x48] sm:$0xff]
          %v1587 = vld [vmem:[%s1573 + $0x50] sm:$0xf]
          %v1588 = vld [vmem:[%s1573 + $0x54] sm:$0xff]
          %v1589 = vld [vmem:[%s1573 + $0x5c] sm:$0xf]
          %v1590 = vld [vmem:[%s1573 + $0x60] sm:$0xff]
          %v1591 = vld [vmem:[%s1573 + $0x68] sm:$0xf]
          %v1592 = vld [vmem:[%s1573 + $0x6c] sm:$0xff]
          %v1593 = vld [vmem:[%s1573 + $0x74] sm:$0xf]
          %v1594 = vld [vmem:[%s1573 + $0x78] sm:$0xff]
          %v1595 = vld [vmem:[%s1573 + $0x80] sm:$0xf]
          %v1596 = vld [vmem:[%s1573 + $0x84] sm:$0xff]
          %v1597 = vld [vmem:[%s1573 + $0x8c] sm:$0xf]
          %v1598 = vld [vmem:[%s1573 + $0x90] sm:$0xff]
          %v1599 = vld [vmem:[%s1573 + $0x98] sm:$0xf]
          %v1600 = vld [vmem:[%s1573 + $0x9c] sm:$0xff]
          %v1601 = vld [vmem:[%s1573 + $0xa4] sm:$0xf]
          %v1602 = vld [vmem:[%s1573 + $0xa8] sm:$0xff]
          %v1603 = vld [vmem:[%s1573 + $0xb0] sm:$0xf]
          %v1604 = vld [vmem:[%s1573 + $0xb4] sm:$0xff]
          %v1605 = vld [vmem:[%s1573 + $0xbc] sm:$0xf]
          %s1606 = scalar_lea.vmem [#allocation9], 12
          %v1607 = vld [vmem:[%s1606] sm:$0x7]
          %v1609 = vlaneseq
          %v1610 = vshrl.u32 %v1609, 7
          %v1611 = vsub.s32 0, %v1610
          %v1612 = vrot.slane %v1607, %v1611
          %v1613 = vlaneseq
          %v1614 = vshrl.u32 %v1613, 7
          %v1615 = vsub.s32 1, %v1614
          %v1616 = vrot.slane %v1607, %v1615
          %v1617 = vlaneseq
          %v1618 = vshrl.u32 %v1617, 7
          %v1619 = vsub.s32 2, %v1618
          %v1620 = vrot.slane %v1607, %v1619
          %v1656 = vunpack.c.l.b16 %v1574
          %v1657 = vunpack.c.h.b16 %v1574
          %v1658 = vunpack.c.l.b16 %v1575
          %v1659 = vunpack.c.l.b16 %v1576
          %v1660 = vunpack.c.h.b16 %v1576
          %v1661 = vunpack.c.l.b16 %v1577
          %v1662 = vunpack.c.l.b16 %v1578
          %v1663 = vunpack.c.h.b16 %v1578
          %v1664 = vunpack.c.l.b16 %v1579
          %v1665 = vunpack.c.l.b16 %v1580
          %v1666 = vunpack.c.h.b16 %v1580
          %v1667 = vunpack.c.l.b16 %v1581
          %v1668 = vunpack.c.l.b16 %v1582
          %v1669 = vunpack.c.h.b16 %v1582
          %v1670 = vunpack.c.l.b16 %v1583
          %v1671 = vunpack.c.l.b16 %v1584
          %v1672 = vunpack.c.h.b16 %v1584
          %v1673 = vunpack.c.l.b16 %v1585
          %v1674 = vunpack.c.l.b16 %v1586
          %v1675 = vunpack.c.h.b16 %v1586
          %v1676 = vunpack.c.l.b16 %v1587
          %v1677 = vunpack.c.l.b16 %v1588
          %v1678 = vunpack.c.h.b16 %v1588
          %v1679 = vunpack.c.l.b16 %v1589
          %v1680 = vunpack.c.l.b16 %v1590
          %v1681 = vunpack.c.h.b16 %v1590
          %v1682 = vunpack.c.l.b16 %v1591
          %v1683 = vunpack.c.l.b16 %v1592
          %v1684 = vunpack.c.h.b16 %v1592
          %v1685 = vunpack.c.l.b16 %v1593
          %v1686 = vunpack.c.l.b16 %v1594
          %v1687 = vunpack.c.h.b16 %v1594
          %v1688 = vunpack.c.l.b16 %v1595
          %v1689 = vunpack.c.l.b16 %v1596
          %v1690 = vunpack.c.h.b16 %v1596
          %v1691 = vunpack.c.l.b16 %v1597
          %v1692 = vunpack.c.l.b16 %v1598
          %v1693 = vunpack.c.h.b16 %v1598
          %v1694 = vunpack.c.l.b16 %v1599
          %v1695 = vunpack.c.l.b16 %v1600
          %v1696 = vunpack.c.h.b16 %v1600
          %v1697 = vunpack.c.l.b16 %v1601
          %v1698 = vunpack.c.l.b16 %v1602
          %v1699 = vunpack.c.h.b16 %v1602
          %v1700 = vunpack.c.l.b16 %v1603
          %v1701 = vunpack.c.l.b16 %v1604
          %v1702 = vunpack.c.h.b16 %v1604
          %v1703 = vunpack.c.l.b16 %v1605
          %v1704 = vpack.c.b16 %v1659, %v1656
          %v1705 = vpack.c.b16 %v1660, %v1657
          %v1706 = vpack.c.b16 %v1661, %v1658
          %v1707 = vpack.c.b16 %v1665, %v1662
          %v1708 = vpack.c.b16 %v1666, %v1663
          %v1709 = vpack.c.b16 %v1667, %v1664
          %v1710 = vpack.c.b16 %v1671, %v1668
          %v1711 = vpack.c.b16 %v1672, %v1669
          %v1712 = vpack.c.b16 %v1673, %v1670
          %v1713 = vpack.c.b16 %v1677, %v1674
          %v1714 = vpack.c.b16 %v1678, %v1675
          %v1715 = vpack.c.b16 %v1679, %v1676
          %v1716 = vpack.c.b16 %v1683, %v1680
          %v1717 = vpack.c.b16 %v1684, %v1681
          %v1718 = vpack.c.b16 %v1685, %v1682
          %v1719 = vpack.c.b16 %v1689, %v1686
          %v1720 = vpack.c.b16 %v1690, %v1687
          %v1721 = vpack.c.b16 %v1691, %v1688
          %v1722 = vpack.c.b16 %v1695, %v1692
          %v1723 = vpack.c.b16 %v1696, %v1693
          %v1724 = vpack.c.b16 %v1697, %v1694
          %v1725 = vpack.c.b16 %v1701, %v1698
          %v1726 = vpack.c.b16 %v1702, %v1699
          %v1727 = vpack.c.b16 %v1703, %v1700
          %1752 = vmatprep.subr.bf16.mxu0 %v1705
          %1753 = vmatpush1.bf16.msra.mxu0 %v1704
          %1754 = vmatprep.subr.bf16.mxu0 %v1708
          %1755 = vmatpush1.bf16.msra.mxu0 %v1707
          %1756 = vmatprep.subr.bf16.mxu0 %v1711
          %1757 = vmatpush1.bf16.msra.mxu0 %v1710
          %1758 = vmatprep.subr.bf16.mxu0 %v1714
          %1759 = vmatpush1.bf16.msra.mxu0 %v1713
          %1760 = vmatprep.subr.bf16.mxu0 %v1717
          %1761 = vmatpush1.bf16.msra.mxu0 %v1716
          %1762 = vmatprep.subr.bf16.mxu0 %v1720
          %1763 = vmatpush1.bf16.msra.mxu0 %v1719
          %1764 = vmatprep.subr.bf16.mxu0 %v1723
          %1765 = vmatpush1.bf16.msra.mxu0 %v1722
          %1766 = vmatprep.subr.bf16.mxu0 %v1726
          %1767 = vmatpush1.bf16.msra.mxu0 %v1725
          %1768 = vmatprep.subr.bf16.mxu0 0
          %1769 = vmatpush1.bf16.msra.mxu0 0
          %1770 = vmatprep.subr.bf16.mxu0 0
          %1771 = vmatpush1.bf16.msra.mxu0 0
          %1772 = vmatprep.subr.bf16.mxu0 0
          %1773 = vmatpush1.bf16.msra.mxu0 0
          %1774 = vmatprep.subr.bf16.mxu0 0
          %1775 = vmatpush1.bf16.msra.mxu0 0
          %1776 = vmatprep.subr.bf16.mxu0 0
          %1777 = vmatpush1.bf16.msra.mxu0 0
          %1778 = vmatprep.subr.bf16.mxu0 0
          %1779 = vmatpush1.bf16.msra.mxu0 0
          %1780 = vmatprep.subr.bf16.mxu0 0
          %1781 = vmatpush1.bf16.msra.mxu0 0
          %1782 = vmatprep.subr.bf16.mxu0 0
          %1783 = vmatpush1.bf16.msra.mxu0 0
          %1784 = vmatprep.mubr.bf16.mxu0 0
          %1785 = vmatmul.mubr.bf16.gmra.mrb[0].mxu0 %v1572
          %v1786 = vpop.f32.mrb[0].mxu0
          %v1787 = vadd.f32 %v1612, %v1786
          %v1788 = vpop.f32.mrb[0].mxu0
          %v1789 = vadd.f32 %v1616, %v1788
          %v1790 = vpop.f32.mrb[0].mxu0
          %v1791 = vpop.f32.mrb[0].mxu0
          %1792 = vdwg.mxu0
          %1793 = vmatprep.subr.bf16.mxu0 0
          %1794 = vmatpush1.bf16.msra.mxu0 %v1706
          %1795 = vmatprep.subr.bf16.mxu0 0
          %1796 = vmatpush1.bf16.msra.mxu0 %v1709
          %1797 = vmatprep.subr.bf16.mxu0 0
          %1798 = vmatpush1.bf16.msra.mxu0 %v1712
          %1799 = vmatprep.subr.bf16.mxu0 0
          %1800 = vmatpush1.bf16.msra.mxu0 %v1715
          %1801 = vmatprep.subr.bf16.mxu0 0
          %1802 = vmatpush1.bf16.msra.mxu0 %v1718
          %1803 = vmatprep.subr.bf16.mxu0 0
          %1804 = vmatpush1.bf16.msra.mxu0 %v1721
          %1805 = vmatprep.subr.bf16.mxu0 0
          %1806 = vmatpush1.bf16.msra.mxu0 %v1724
          %1807 = vmatprep.subr.bf16.mxu0 0
          %1808 = vmatpush1.bf16.msra.mxu0 %v1727
          %1809 = vmatprep.subr.bf16.mxu0 0
          %1810 = vmatpush1.bf16.msra.mxu0 0
          %1811 = vmatprep.subr.bf16.mxu0 0
          %1812 = vmatpush1.bf16.msra.mxu0 0
          %1813 = vmatprep.subr.bf16.mxu0 0
          %1814 = vmatpush1.bf16.msra.mxu0 0
          %1815 = vmatprep.subr.bf16.mxu0 0
          %1816 = vmatpush1.bf16.msra.mxu0 0
          %1817 = vmatprep.subr.bf16.mxu0 0
          %1818 = vmatpush1.bf16.msra.mxu0 0
          %1819 = vmatprep.subr.bf16.mxu0 0
          %1820 = vmatpush1.bf16.msra.mxu0 0
          %1821 = vmatprep.subr.bf16.mxu0 0
          %1822 = vmatpush1.bf16.msra.mxu0 0
          %1823 = vmatprep.subr.bf16.mxu0 0
          %1824 = vmatpush1.bf16.msra.mxu0 0
          %1825 = vmatprep.mubr.bf16.mxu0 0
          %1826 = vmatmul.mubr.bf16.gmra.mrb[0].mxu0 %v1572
          %v1827 = vpop.f32.mrb[0].mxu0
          %v1828 = vadd.f32 %v1620, %v1827
          %v1829 = vpop.f32.mrb[0].mxu0
          %v1830 = vpop.f32.mrb[0].mxu0
          %v1831 = vpop.f32.mrb[0].mxu0
          %1832 = vdwg.mxu0
          %v1833 = vxor.u32 %v1787, 2147483648
          %v1834 = vmul.f32 %v1833, 1.442695
          %v1835 = vpow.pop %v1834
          %v1836 = vadd.f32 %v1835, 1.0
          %v1837 = vrcp.pop %v1836
          %v1838 = vmul.f32 1.0, %v1837
          %v1839 = vtanh.pop %v1789
          %v1840 = vxor.u32 %v1828, 2147483648
          %v1841 = vmul.f32 %v1840, 1.442695
          %v1842 = vpow.pop %v1841
          %v1843 = vadd.f32 %v1842, 1.0
          %v1844 = vrcp.pop %v1843
          %v1845 = vmul.f32 1.0, %v1844
          %v1846 = vmul.f32 %v1838, %v1839
          %v1847 = vtanh.pop %v1846
          %v1848 = vmul.f32 %v1845, %v1847
          %v1849 = vpack.c.bf16 %v1848, %v1848
          %v1850 = vld [vmem:[#allocation11] sm:$0xff]
          %v1851 = vld [vmem:[#allocation11 + $0x8] sm:$0xff]
          %v1852 = vld [vmem:[#allocation11 + $0x10] sm:$0xff]
          %v1853 = vld [vmem:[#allocation11 + $0x18] sm:$0xff]
          %v1854 = vld [vmem:[#allocation11 + $0x20] sm:$0xff]
          %v1855 = vld [vmem:[#allocation11 + $0x28] sm:$0xff]
          %v1856 = vld [vmem:[#allocation11 + $0x30] sm:$0xff]
          %v1857 = vld [vmem:[#allocation11 + $0x38] sm:$0xff]
          %v1858 = vld [vmem:[#allocation11 + $0x40] sm:$0xff]
          %v1859 = vld [vmem:[#allocation11 + $0x48] sm:$0xff]
          %v1860 = vld [vmem:[#allocation11 + $0x50] sm:$0xff]
          %v1861 = vld [vmem:[#allocation11 + $0x58] sm:$0xff]
          %v1862 = vld [vmem:[#allocation11 + $0x60] sm:$0xff]
          %v1863 = vld [vmem:[#allocation11 + $0x68] sm:$0xff]
          %v1864 = vld [vmem:[#allocation11 + $0x70] sm:$0xff]
          %v1865 = vld [vmem:[#allocation11 + $0x78] sm:$0xff]
          %v1866 = vld [vmem:[#allocation11 + $0x80] sm:$0xff]
          %v1867 = vld [vmem:[#allocation11 + $0x88] sm:$0xff]
          %v1868 = vld [vmem:[#allocation11 + $0x90] sm:$0xff]
          %v1869 = vld [vmem:[#allocation11 + $0x98] sm:$0xff]
          %v1870 = vld [vmem:[#allocation11 + $0xa0] sm:$0xff]
          %v1871 = vld [vmem:[#allocation11 + $0xa8] sm:$0xff]
          %v1872 = vld [vmem:[#allocation11 + $0xb0] sm:$0xff]
          %v1873 = vld [vmem:[#allocation11 + $0xb8] sm:$0xff]
          %v1874 = vld [vmem:[#allocation11 + $0xc0] sm:$0xff]
          %v1875 = vld [vmem:[#allocation11 + $0xc8] sm:$0xff]
          %v1876 = vld [vmem:[#allocation11 + $0xd0] sm:$0xff]
          %v1877 = vld [vmem:[#allocation11 + $0xd8] sm:$0xff]
          %v1878 = vld [vmem:[#allocation11 + $0xe0] sm:$0xff]
          %v1879 = vld [vmem:[#allocation11 + $0xe8] sm:$0xff]
          %v1880 = vld [vmem:[#allocation11 + $0xf0] sm:$0xff]
          %v1881 = vld [vmem:[#allocation11 + $0xf8] sm:$0xff]
          %v1882 = vld [vmem:[#allocation12] sm:$0xf]
          %v1884 = vlaneseq
          %v1885 = vshrl.u32 %v1884, 7
          %v1886 = vsub.s32 0, %v1885
          %v1887 = vrot.slane %v1882, %v1886
          %v1888 = vlaneseq
          %v1889 = vshrl.u32 %v1888, 7
          %v1890 = vsub.s32 1, %v1889
          %v1891 = vrot.slane %v1882, %v1890
          %v1892 = vlaneseq
          %v1893 = vshrl.u32 %v1892, 7
          %v1894 = vsub.s32 2, %v1893
          %v1895 = vrot.slane %v1882, %v1894
          %v1896 = vlaneseq
          %v1897 = vshrl.u32 %v1896, 7
          %v1898 = vsub.s32 3, %v1897
          %v1899 = vrot.slane %v1882, %v1898
          %v1936 = vunpack.c.l.b16 %v1850
          %v1937 = vunpack.c.h.b16 %v1850
          %v1938 = vunpack.c.l.b16 %v1851
          %v1939 = vunpack.c.h.b16 %v1851
          %v1940 = vunpack.c.l.b16 %v1852
          %v1941 = vunpack.c.h.b16 %v1852
          %v1942 = vunpack.c.l.b16 %v1853
          %v1943 = vunpack.c.h.b16 %v1853
          %v1944 = vunpack.c.l.b16 %v1854
          %v1945 = vunpack.c.h.b16 %v1854
          %v1946 = vunpack.c.l.b16 %v1855
          %v1947 = vunpack.c.h.b16 %v1855
          %v1948 = vunpack.c.l.b16 %v1856
          %v1949 = vunpack.c.h.b16 %v1856
          %v1950 = vunpack.c.l.b16 %v1857
          %v1951 = vunpack.c.h.b16 %v1857
          %v1952 = vunpack.c.l.b16 %v1858
          %v1953 = vunpack.c.h.b16 %v1858
          %v1954 = vunpack.c.l.b16 %v1859
          %v1955 = vunpack.c.h.b16 %v1859
          %v1956 = vunpack.c.l.b16 %v1860
          %v1957 = vunpack.c.h.b16 %v1860
          %v1958 = vunpack.c.l.b16 %v1861
          %v1959 = vunpack.c.h.b16 %v1861
          %v1960 = vunpack.c.l.b16 %v1862
          %v1961 = vunpack.c.h.b16 %v1862
          %v1962 = vunpack.c.l.b16 %v1863
          %v1963 = vunpack.c.h.b16 %v1863
          %v1964 = vunpack.c.l.b16 %v1864
          %v1965 = vunpack.c.h.b16 %v1864
          %v1966 = vunpack.c.l.b16 %v1865
          %v1967 = vunpack.c.h.b16 %v1865
          %v1968 = vunpack.c.l.b16 %v1866
          %v1969 = vunpack.c.h.b16 %v1866
          %v1970 = vunpack.c.l.b16 %v1867
          %v1971 = vunpack.c.h.b16 %v1867
          %v1972 = vunpack.c.l.b16 %v1868
          %v1973 = vunpack.c.h.b16 %v1868
          %v1974 = vunpack.c.l.b16 %v1869
          %v1975 = vunpack.c.h.b16 %v1869
          %v1976 = vunpack.c.l.b16 %v1870
          %v1977 = vunpack.c.h.b16 %v1870
          %v1978 = vunpack.c.l.b16 %v1871
          %v1979 = vunpack.c.h.b16 %v1871
          %v1980 = vunpack.c.l.b16 %v1872
          %v1981 = vunpack.c.h.b16 %v1872
          %v1982 = vunpack.c.l.b16 %v1873
          %v1983 = vunpack.c.h.b16 %v1873
          %v1984 = vunpack.c.l.b16 %v1874
          %v1985 = vunpack.c.h.b16 %v1874
          %v1986 = vunpack.c.l.b16 %v1875
          %v1987 = vunpack.c.h.b16 %v1875
          %v1988 = vunpack.c.l.b16 %v1876
          %v1989 = vunpack.c.h.b16 %v1876
          %v1990 = vunpack.c.l.b16 %v1877
          %v1991 = vunpack.c.h.b16 %v1877
          %v1992 = vunpack.c.l.b16 %v1878
          %v1993 = vunpack.c.h.b16 %v1878
          %v1994 = vunpack.c.l.b16 %v1879
          %v1995 = vunpack.c.h.b16 %v1879
          %v1996 = vunpack.c.l.b16 %v1880
          %v1997 = vunpack.c.h.b16 %v1880
          %v1998 = vunpack.c.l.b16 %v1881
          %v1999 = vunpack.c.h.b16 %v1881
          %v2000 = vpack.c.b16 %v1940, %v1936
          %v2001 = vpack.c.b16 %v1941, %v1937
          %v2002 = vpack.c.b16 %v1942, %v1938
          %v2003 = vpack.c.b16 %v1943, %v1939
          %v2004 = vpack.c.b16 %v1948, %v1944
          %v2005 = vpack.c.b16 %v1949, %v1945
          %v2006 = vpack.c.b16 %v1950, %v1946
          %v2007 = vpack.c.b16 %v1951, %v1947
          %v2008 = vpack.c.b16 %v1956, %v1952
          %v2009 = vpack.c.b16 %v1957, %v1953
          %v2010 = vpack.c.b16 %v1958, %v1954
          %v2011 = vpack.c.b16 %v1959, %v1955
          %v2012 = vpack.c.b16 %v1964, %v1960
          %v2013 = vpack.c.b16 %v1965, %v1961
          %v2014 = vpack.c.b16 %v1966, %v1962
          %v2015 = vpack.c.b16 %v1967, %v1963
          %v2016 = vpack.c.b16 %v1972, %v1968
          %v2017 = vpack.c.b16 %v1973, %v1969
          %v2018 = vpack.c.b16 %v1974, %v1970
          %v2019 = vpack.c.b16 %v1975, %v1971
          %v2020 = vpack.c.b16 %v1980, %v1976
          %v2021 = vpack.c.b16 %v1981, %v1977
          %v2022 = vpack.c.b16 %v1982, %v1978
          %v2023 = vpack.c.b16 %v1983, %v1979
          %v2024 = vpack.c.b16 %v1988, %v1984
          %v2025 = vpack.c.b16 %v1989, %v1985
          %v2026 = vpack.c.b16 %v1990, %v1986
          %v2027 = vpack.c.b16 %v1991, %v1987
          %v2028 = vpack.c.b16 %v1996, %v1992
          %v2029 = vpack.c.b16 %v1997, %v1993
          %v2030 = vpack.c.b16 %v1998, %v1994
          %v2031 = vpack.c.b16 %v1999, %v1995
          %2064 = vmatprep.subr.bf16.mxu0 %v2001
          %2065 = vmatpush1.bf16.msra.mxu0 %v2000
          %2066 = vmatprep.subr.bf16.mxu0 %v2005
          %2067 = vmatpush1.bf16.msra.mxu0 %v2004
          %2068 = vmatprep.subr.bf16.mxu0 %v2009
          %2069 = vmatpush1.bf16.msra.mxu0 %v2008
          %2070 = vmatprep.subr.bf16.mxu0 %v2013
          %2071 = vmatpush1.bf16.msra.mxu0 %v2012
          %2072 = vmatprep.subr.bf16.mxu0 %v2017
          %2073 = vmatpush1.bf16.msra.mxu0 %v2016
          %2074 = vmatprep.subr.bf16.mxu0 %v2021
          %2075 = vmatpush1.bf16.msra.mxu0 %v2020
          %2076 = vmatprep.subr.bf16.mxu0 %v2025
          %2077 = vmatpush1.bf16.msra.mxu0 %v2024
          %2078 = vmatprep.subr.bf16.mxu0 %v2029
          %2079 = vmatpush1.bf16.msra.mxu0 %v2028
          %2080 = vmatprep.subr.bf16.mxu0 0
          %2081 = vmatpush1.bf16.msra.mxu0 0
          %2082 = vmatprep.subr.bf16.mxu0 0
          %2083 = vmatpush1.bf16.msra.mxu0 0
          %2084 = vmatprep.subr.bf16.mxu0 0
          %2085 = vmatpush1.bf16.msra.mxu0 0
          %2086 = vmatprep.subr.bf16.mxu0 0
          %2087 = vmatpush1.bf16.msra.mxu0 0
          %2088 = vmatprep.subr.bf16.mxu0 0
          %2089 = vmatpush1.bf16.msra.mxu0 0
          %2090 = vmatprep.subr.bf16.mxu0 0
          %2091 = vmatpush1.bf16.msra.mxu0 0
          %2092 = vmatprep.subr.bf16.mxu0 0
          %2093 = vmatpush1.bf16.msra.mxu0 0
          %2094 = vmatprep.subr.bf16.mxu0 0
          %2095 = vmatpush1.bf16.msra.mxu0 0
          %2096 = vmatprep.mubr.bf16.mxu0 0
          %2097 = vmatmul.mubr.bf16.gmra.mrb[0].mxu0 %v1849
          %v2098 = vpop.f32.mrb[0].mxu0
          %v2099 = vadd.f32 %v1887, %v2098
          %v2100 = vpop.f32.mrb[0].mxu0
          %v2101 = vadd.f32 %v1891, %v2100
          %v2102 = vpop.f32.mrb[0].mxu0
          %v2103 = vpop.f32.mrb[0].mxu0
          %2104 = vdwg.mxu0
          %2105 = vmatprep.subr.bf16.mxu0 %v2003
          %2106 = vmatpush1.bf16.msra.mxu0 %v2002
          %2107 = vmatprep.subr.bf16.mxu0 %v2007
          %2108 = vmatpush1.bf16.msra.mxu0 %v2006
          %2109 = vmatprep.subr.bf16.mxu0 %v2011
          %2110 = vmatpush1.bf16.msra.mxu0 %v2010
          %2111 = vmatprep.subr.bf16.mxu0 %v2015
          %2112 = vmatpush1.bf16.msra.mxu0 %v2014
          %2113 = vmatprep.subr.bf16.mxu0 %v2019
          %2114 = vmatpush1.bf16.msra.mxu0 %v2018
          %2115 = vmatprep.subr.bf16.mxu0 %v2023
          %2116 = vmatpush1.bf16.msra.mxu0 %v2022
          %2117 = vmatprep.subr.bf16.mxu0 %v2027
          %2118 = vmatpush1.bf16.msra.mxu0 %v2026
          %2119 = vmatprep.subr.bf16.mxu0 %v2031
          %2120 = vmatpush1.bf16.msra.mxu0 %v2030
          %2121 = vmatprep.subr.bf16.mxu0 0
          %2122 = vmatpush1.bf16.msra.mxu0 0
          %2123 = vmatprep.subr.bf16.mxu0 0
          %2124 = vmatpush1.bf16.msra.mxu0 0
          %2125 = vmatprep.subr.bf16.mxu0 0
          %2126 = vmatpush1.bf16.msra.mxu0 0
          %2127 = vmatprep.subr.bf16.mxu0 0
          %2128 = vmatpush1.bf16.msra.mxu0 0
          %2129 = vmatprep.subr.bf16.mxu0 0
          %2130 = vmatpush1.bf16.msra.mxu0 0
          %2131 = vmatprep.subr.bf16.mxu0 0
          %2132 = vmatpush1.bf16.msra.mxu0 0
          %2133 = vmatprep.subr.bf16.mxu0 0
          %2134 = vmatpush1.bf16.msra.mxu0 0
          %2135 = vmatprep.subr.bf16.mxu0 0
          %2136 = vmatpush1.bf16.msra.mxu0 0
          %2137 = vmatprep.mubr.bf16.mxu0 0
          %2138 = vmatmul.mubr.bf16.gmra.mrb[0].mxu0 %v1849
          %v2139 = vpop.f32.mrb[0].mxu0
          %v2140 = vadd.f32 %v1895, %v2139
          %v2141 = vpop.f32.mrb[0].mxu0
          %v2142 = vadd.f32 %v1899, %v2141
          %v2143 = vpop.f32.mrb[0].mxu0
          %v2144 = vpop.f32.mrb[0].mxu0
          %2145 = vdwg.mxu0
          %v2146 = vmax.f32 %v2099, 0.0
          %v2147 = vmax.f32 %v2101, 0.0
          %v2148 = vmax.f32 %v2140, 0.0
          %v2149 = vmax.f32 %v2142, 0.0
          %s2150 = scalar_lea.vmem [#allocation11], 256
          %v2151 = vld [vmem:[%s2150] sm:$0xff]
          %v2152 = vld [vmem:[%s2150 + $0x8] sm:$0xff]
          %v2153 = vld [vmem:[%s2150 + $0x10] sm:$0xff]
          %v2154 = vld [vmem:[%s2150 + $0x18] sm:$0xff]
          %v2155 = vld [vmem:[%s2150 + $0x20] sm:$0xff]
          %v2156 = vld [vmem:[%s2150 + $0x28] sm:$0xff]
          %v2157 = vld [vmem:[%s2150 + $0x30] sm:$0xff]
          %v2158 = vld [vmem:[%s2150 + $0x38] sm:$0xff]
          %v2159 = vld [vmem:[%s2150 + $0x40] sm:$0xff]
          %v2160 = vld [vmem:[%s2150 + $0x48] sm:$0xff]
          %v2161 = vld [vmem:[%s2150 + $0x50] sm:$0xff]
          %v2162 = vld [vmem:[%s2150 + $0x58] sm:$0xff]
          %v2163 = vld [vmem:[%s2150 + $0x60] sm:$0xff]
          %v2164 = vld [vmem:[%s2150 + $0x68] sm:$0xff]
          %v2165 = vld [vmem:[%s2150 + $0x70] sm:$0xff]
          %v2166 = vld [vmem:[%s2150 + $0x78] sm:$0xff]
          %v2167 = vld [vmem:[%s2150 + $0x80] sm:$0xff]
          %v2168 = vld [vmem:[%s2150 + $0x88] sm:$0xff]
          %v2169 = vld [vmem:[%s2150 + $0x90] sm:$0xff]
          %v2170 = vld [vmem:[%s2150 + $0x98] sm:$0xff]
          %v2171 = vld [vmem:[%s2150 + $0xa0] sm:$0xff]
          %v2172 = vld [vmem:[%s2150 + $0xa8] sm:$0xff]
          %v2173 = vld [vmem:[%s2150 + $0xb0] sm:$0xff]
          %v2174 = vld [vmem:[%s2150 + $0xb8] sm:$0xff]
          %v2175 = vld [vmem:[%s2150 + $0xc0] sm:$0xff]
          %v2176 = vld [vmem:[%s2150 + $0xc8] sm:$0xff]
          %v2177 = vld [vmem:[%s2150 + $0xd0] sm:$0xff]
          %v2178 = vld [vmem:[%s2150 + $0xd8] sm:$0xff]
          %v2179 = vld [vmem:[%s2150 + $0xe0] sm:$0xff]
          %v2180 = vld [vmem:[%s2150 + $0xe8] sm:$0xff]
          %v2181 = vld [vmem:[%s2150 + $0xf0] sm:$0xff]
          %v2182 = vld [vmem:[%s2150 + $0xf8] sm:$0xff]
          %s2183 = scalar_lea.vmem [#allocation12], 4
          %v2184 = vld [vmem:[%s2183] sm:$0xf]
          %v2186 = vlaneseq
          %v2187 = vshrl.u32 %v2186, 7
          %v2188 = vsub.s32 0, %v2187
          %v2189 = vrot.slane %v2184, %v2188
          %v2190 = vlaneseq
          %v2191 = vshrl.u32 %v2190, 7
          %v2192 = vsub.s32 1, %v2191
          %v2193 = vrot.slane %v2184, %v2192
          %v2194 = vlaneseq
          %v2195 = vshrl.u32 %v2194, 7
          %v2196 = vsub.s32 2, %v2195
          %v2197 = vrot.slane %v2184, %v2196
          %v2198 = vlaneseq
          %v2199 = vshrl.u32 %v2198, 7
          %v2200 = vsub.s32 3, %v2199
          %v2201 = vrot.slane %v2184, %v2200
          %v2238 = vunpack.c.l.b16 %v2151
          %v2239 = vunpack.c.h.b16 %v2151
          %v2240 = vunpack.c.l.b16 %v2152
          %v2241 = vunpack.c.h.b16 %v2152
          %v2242 = vunpack.c.l.b16 %v2153
          %v2243 = vunpack.c.h.b16 %v2153
          %v2244 = vunpack.c.l.b16 %v2154
          %v2245 = vunpack.c.h.b16 %v2154
          %v2246 = vunpack.c.l.b16 %v2155
          %v2247 = vunpack.c.h.b16 %v2155
          %v2248 = vunpack.c.l.b16 %v2156
          %v2249 = vunpack.c.h.b16 %v2156
          %v2250 = vunpack.c.l.b16 %v2157
          %v2251 = vunpack.c.h.b16 %v2157
          %v2252 = vunpack.c.l.b16 %v2158
          %v2253 = vunpack.c.h.b16 %v2158
          %v2254 = vunpack.c.l.b16 %v2159
          %v2255 = vunpack.c.h.b16 %v2159
          %v2256 = vunpack.c.l.b16 %v2160
          %v2257 = vunpack.c.h.b16 %v2160
          %v2258 = vunpack.c.l.b16 %v2161
          %v2259 = vunpack.c.h.b16 %v2161
          %v2260 = vunpack.c.l.b16 %v2162
          %v2261 = vunpack.c.h.b16 %v2162
          %v2262 = vunpack.c.l.b16 %v2163
          %v2263 = vunpack.c.h.b16 %v2163
          %v2264 = vunpack.c.l.b16 %v2164
          %v2265 = vunpack.c.h.b16 %v2164
          %v2266 = vunpack.c.l.b16 %v2165
          %v2267 = vunpack.c.h.b16 %v2165
          %v2268 = vunpack.c.l.b16 %v2166
          %v2269 = vunpack.c.h.b16 %v2166
          %v2270 = vunpack.c.l.b16 %v2167
          %v2271 = vunpack.c.h.b16 %v2167
          %v2272 = vunpack.c.l.b16 %v2168
          %v2273 = vunpack.c.h.b16 %v2168
          %v2274 = vunpack.c.l.b16 %v2169
          %v2275 = vunpack.c.h.b16 %v2169
          %v2276 = vunpack.c.l.b16 %v2170
          %v2277 = vunpack.c.h.b16 %v2170
          %v2278 = vunpack.c.l.b16 %v2171
          %v2279 = vunpack.c.h.b16 %v2171
          %v2280 = vunpack.c.l.b16 %v2172
          %v2281 = vunpack.c.h.b16 %v2172
          %v2282 = vunpack.c.l.b16 %v2173
          %v2283 = vunpack.c.h.b16 %v2173
          %v2284 = vunpack.c.l.b16 %v2174
          %v2285 = vunpack.c.h.b16 %v2174
          %v2286 = vunpack.c.l.b16 %v2175
          %v2287 = vunpack.c.h.b16 %v2175
          %v2288 = vunpack.c.l.b16 %v2176
          %v2289 = vunpack.c.h.b16 %v2176
          %v2290 = vunpack.c.l.b16 %v2177
          %v2291 = vunpack.c.h.b16 %v2177
          %v2292 = vunpack.c.l.b16 %v2178
          %v2293 = vunpack.c.h.b16 %v2178
          %v2294 = vunpack.c.l.b16 %v2179
          %v2295 = vunpack.c.h.b16 %v2179
          %v2296 = vunpack.c.l.b16 %v2180
          %v2297 = vunpack.c.h.b16 %v2180
          %v2298 = vunpack.c.l.b16 %v2181
          %v2299 = vunpack.c.h.b16 %v2181
          %v2300 = vunpack.c.l.b16 %v2182
          %v2301 = vunpack.c.h.b16 %v2182
          %v2302 = vpack.c.b16 %v2242, %v2238
          %v2303 = vpack.c.b16 %v2243, %v2239
          %v2304 = vpack.c.b16 %v2244, %v2240
          %v2305 = vpack.c.b16 %v2245, %v2241
          %v2306 = vpack.c.b16 %v2250, %v2246
          %v2307 = vpack.c.b16 %v2251, %v2247
          %v2308 = vpack.c.b16 %v2252, %v2248
          %v2309 = vpack.c.b16 %v2253, %v2249
          %v2310 = vpack.c.b16 %v2258, %v2254
          %v2311 = vpack.c.b16 %v2259, %v2255
          %v2312 = vpack.c.b16 %v2260, %v2256
          %v2313 = vpack.c.b16 %v2261, %v2257
          %v2314 = vpack.c.b16 %v2266, %v2262
          %v2315 = vpack.c.b16 %v2267, %v2263
          %v2316 = vpack.c.b16 %v2268, %v2264
          %v2317 = vpack.c.b16 %v2269, %v2265
          %v2318 = vpack.c.b16 %v2274, %v2270
          %v2319 = vpack.c.b16 %v2275, %v2271
          %v2320 = vpack.c.b16 %v2276, %v2272
          %v2321 = vpack.c.b16 %v2277, %v2273
          %v2322 = vpack.c.b16 %v2282, %v2278
          %v2323 = vpack.c.b16 %v2283, %v2279
          %v2324 = vpack.c.b16 %v2284, %v2280
          %v2325 = vpack.c.b16 %v2285, %v2281
          %v2326 = vpack.c.b16 %v2290, %v2286
          %v2327 = vpack.c.b16 %v2291, %v2287
          %v2328 = vpack.c.b16 %v2292, %v2288
          %v2329 = vpack.c.b16 %v2293, %v2289
          %v2330 = vpack.c.b16 %v2298, %v2294
          %v2331 = vpack.c.b16 %v2299, %v2295
          %v2332 = vpack.c.b16 %v2300, %v2296
          %v2333 = vpack.c.b16 %v2301, %v2297
          %2366 = vmatprep.subr.bf16.mxu0 %v2303
          %2367 = vmatpush1.bf16.msra.mxu0 %v2302
          %2368 = vmatprep.subr.bf16.mxu0 %v2307
          %2369 = vmatpush1.bf16.msra.mxu0 %v2306
          %2370 = vmatprep.subr.bf16.mxu0 %v2311
          %2371 = vmatpush1.bf16.msra.mxu0 %v2310
          %2372 = vmatprep.subr.bf16.mxu0 %v2315
          %2373 = vmatpush1.bf16.msra.mxu0 %v2314
          %2374 = vmatprep.subr.bf16.mxu0 %v2319
          %2375 = vmatpush1.bf16.msra.mxu0 %v2318
          %2376 = vmatprep.subr.bf16.mxu0 %v2323
          %2377 = vmatpush1.bf16.msra.mxu0 %v2322
          %2378 = vmatprep.subr.bf16.mxu0 %v2327
          %2379 = vmatpush1.bf16.msra.mxu0 %v2326
          %2380 = vmatprep.subr.bf16.mxu0 %v2331
          %2381 = vmatpush1.bf16.msra.mxu0 %v2330
          %2382 = vmatprep.subr.bf16.mxu0 0
          %2383 = vmatpush1.bf16.msra.mxu0 0
          %2384 = vmatprep.subr.bf16.mxu0 0
          %2385 = vmatpush1.bf16.msra.mxu0 0
          %2386 = vmatprep.subr.bf16.mxu0 0
          %2387 = vmatpush1.bf16.msra.mxu0 0
          %2388 = vmatprep.subr.bf16.mxu0 0
          %2389 = vmatpush1.bf16.msra.mxu0 0
          %2390 = vmatprep.subr.bf16.mxu0 0
          %2391 = vmatpush1.bf16.msra.mxu0 0
          %2392 = vmatprep.subr.bf16.mxu0 0
          %2393 = vmatpush1.bf16.msra.mxu0 0
          %2394 = vmatprep.subr.bf16.mxu0 0
          %2395 = vmatpush1.bf16.msra.mxu0 0
          %2396 = vmatprep.subr.bf16.mxu0 0
          %2397 = vmatpush1.bf16.msra.mxu0 0
          %2398 = vmatprep.mubr.bf16.mxu0 0
          %2399 = vmatmul.mubr.bf16.gmra.mrb[0].mxu0 %v1849
          %v2400 = vpop.f32.mrb[0].mxu0
          %v2401 = vadd.f32 %v2189, %v2400
          %v2402 = vpop.f32.mrb[0].mxu0
          %v2403 = vadd.f32 %v2193, %v2402
          %v2404 = vpop.f32.mrb[0].mxu0
          %v2405 = vpop.f32.mrb[0].mxu0
          %2406 = vdwg.mxu0
          %2407 = vmatprep.subr.bf16.mxu0 %v2305
          %2408 = vmatpush1.bf16.msra.mxu0 %v2304
          %2409 = vmatprep.subr.bf16.mxu0 %v2309
          %2410 = vmatpush1.bf16.msra.mxu0 %v2308
          %2411 = vmatprep.subr.bf16.mxu0 %v2313
          %2412 = vmatpush1.bf16.msra.mxu0 %v2312
          %2413 = vmatprep.subr.bf16.mxu0 %v2317
          %2414 = vmatpush1.bf16.msra.mxu0 %v2316
          %2415 = vmatprep.subr.bf16.mxu0 %v2321
          %2416 = vmatpush1.bf16.msra.mxu0 %v2320
          %2417 = vmatprep.subr.bf16.mxu0 %v2325
          %2418 = vmatpush1.bf16.msra.mxu0 %v2324
          %2419 = vmatprep.subr.bf16.mxu0 %v2329
          %2420 = vmatpush1.bf16.msra.mxu0 %v2328
          %2421 = vmatprep.subr.bf16.mxu0 %v2333
          %2422 = vmatpush1.bf16.msra.mxu0 %v2332
          %2423 = vmatprep.subr.bf16.mxu0 0
          %2424 = vmatpush1.bf16.msra.mxu0 0
          %2425 = vmatprep.subr.bf16.mxu0 0
          %2426 = vmatpush1.bf16.msra.mxu0 0
          %2427 = vmatprep.subr.bf16.mxu0 0
          %2428 = vmatpush1.bf16.msra.mxu0 0
          %2429 = vmatprep.subr.bf16.mxu0 0
          %2430 = vmatpush1.bf16.msra.mxu0 0
          %2431 = vmatprep.subr.bf16.mxu0 0
          %2432 = vmatpush1.bf16.msra.mxu0 0
          %2433 = vmatprep.subr.bf16.mxu0 0
          %2434 = vmatpush1.bf16.msra.mxu0 0
          %2435 = vmatprep.subr.bf16.mxu0 0
          %2436 = vmatpush1.bf16.msra.mxu0 0
          %2437 = vmatprep.subr.bf16.mxu0 0
          %2438 = vmatpush1.bf16.msra.mxu0 0
          %2439 = vmatprep.mubr.bf16.mxu0 0
          %2440 = vmatmul.mubr.bf16.gmra.mrb[0].mxu0 %v1849
          %v2441 = vpop.f32.mrb[0].mxu0
          %v2442 = vadd.f32 %v2197, %v2441
          %v2443 = vpop.f32.mrb[0].mxu0
          %v2444 = vadd.f32 %v2201, %v2443
          %v2445 = vpop.f32.mrb[0].mxu0
          %v2446 = vpop.f32.mrb[0].mxu0
          %2447 = vdwg.mxu0
          %v2448 = vmax.f32 %v2401, 0.0
          %v2449 = vmax.f32 %v2403, 0.0
          %v2450 = vmax.f32 %v2442, 0.0
          %v2451 = vmax.f32 %v2444, 0.0
          %v2452 = vmax.f32 %v2146, %v2448
          %v2453 = vmax.f32 %v2147, %v2449
          %v2454 = vmax.f32 %v2148, %v2450
          %v2455 = vmax.f32 %v2149, %v2451
          %s2456 = scalar_lea.vmem [#allocation11], 512
          %v2457 = vld [vmem:[%s2456] sm:$0xff]
          %v2458 = vld [vmem:[%s2456 + $0x8] sm:$0xff]
          %v2459 = vld [vmem:[%s2456 + $0x10] sm:$0xff]
          %v2460 = vld [vmem:[%s2456 + $0x18] sm:$0xff]
          %v2461 = vld [vmem:[%s2456 + $0x20] sm:$0xff]
          %v2462 = vld [vmem:[%s2456 + $0x28] sm:$0xff]
          %v2463 = vld [vmem:[%s2456 + $0x30] sm:$0xff]
          %v2464 = vld [vmem:[%s2456 + $0x38] sm:$0xff]
          %v2465 = vld [vmem:[%s2456 + $0x40] sm:$0xff]
          %v2466 = vld [vmem:[%s2456 + $0x48] sm:$0xff]
          %v2467 = vld [vmem:[%s2456 + $0x50] sm:$0xff]
          %v2468 = vld [vmem:[%s2456 + $0x58] sm:$0xff]
          %v2469 = vld [vmem:[%s2456 + $0x60] sm:$0xff]
          %v2470 = vld [vmem:[%s2456 + $0x68] sm:$0xff]
          %v2471 = vld [vmem:[%s2456 + $0x70] sm:$0xff]
          %v2472 = vld [vmem:[%s2456 + $0x78] sm:$0xff]
          %v2473 = vld [vmem:[%s2456 + $0x80] sm:$0xff]
          %v2474 = vld [vmem:[%s2456 + $0x88] sm:$0xff]
          %v2475 = vld [vmem:[%s2456 + $0x90] sm:$0xff]
          %v2476 = vld [vmem:[%s2456 + $0x98] sm:$0xff]
          %v2477 = vld [vmem:[%s2456 + $0xa0] sm:$0xff]
          %v2478 = vld [vmem:[%s2456 + $0xa8] sm:$0xff]
          %v2479 = vld [vmem:[%s2456 + $0xb0] sm:$0xff]
          %v2480 = vld [vmem:[%s2456 + $0xb8] sm:$0xff]
          %v2481 = vld [vmem:[%s2456 + $0xc0] sm:$0xff]
          %v2482 = vld [vmem:[%s2456 + $0xc8] sm:$0xff]
          %v2483 = vld [vmem:[%s2456 + $0xd0] sm:$0xff]
          %v2484 = vld [vmem:[%s2456 + $0xd8] sm:$0xff]
          %v2485 = vld [vmem:[%s2456 + $0xe0] sm:$0xff]
          %v2486 = vld [vmem:[%s2456 + $0xe8] sm:$0xff]
          %v2487 = vld [vmem:[%s2456 + $0xf0] sm:$0xff]
          %v2488 = vld [vmem:[%s2456 + $0xf8] sm:$0xff]
          %s2489 = scalar_lea.vmem [#allocation12], 8
          %v2490 = vld [vmem:[%s2489] sm:$0xf]
          %v2492 = vlaneseq
          %v2493 = vshrl.u32 %v2492, 7
          %v2494 = vsub.s32 0, %v2493
          %v2495 = vrot.slane %v2490, %v2494
          %v2496 = vlaneseq
          %v2497 = vshrl.u32 %v2496, 7
          %v2498 = vsub.s32 1, %v2497
          %v2499 = vrot.slane %v2490, %v2498
          %v2500 = vlaneseq
          %v2501 = vshrl.u32 %v2500, 7
          %v2502 = vsub.s32 2, %v2501
          %v2503 = vrot.slane %v2490, %v2502
          %v2504 = vlaneseq
          %v2505 = vshrl.u32 %v2504, 7
          %v2506 = vsub.s32 3, %v2505
          %v2507 = vrot.slane %v2490, %v2506
          %v2544 = vunpack.c.l.b16 %v2457
          %v2545 = vunpack.c.h.b16 %v2457
          %v2546 = vunpack.c.l.b16 %v2458
          %v2547 = vunpack.c.h.b16 %v2458
          %v2548 = vunpack.c.l.b16 %v2459
          %v2549 = vunpack.c.h.b16 %v2459
          %v2550 = vunpack.c.l.b16 %v2460
          %v2551 = vunpack.c.h.b16 %v2460
          %v2552 = vunpack.c.l.b16 %v2461
          %v2553 = vunpack.c.h.b16 %v2461
          %v2554 = vunpack.c.l.b16 %v2462
          %v2555 = vunpack.c.h.b16 %v2462
          %v2556 = vunpack.c.l.b16 %v2463
          %v2557 = vunpack.c.h.b16 %v2463
          %v2558 = vunpack.c.l.b16 %v2464
          %v2559 = vunpack.c.h.b16 %v2464
          %v2560 = vunpack.c.l.b16 %v2465
          %v2561 = vunpack.c.h.b16 %v2465
          %v2562 = vunpack.c.l.b16 %v2466
          %v2563 = vunpack.c.h.b16 %v2466
          %v2564 = vunpack.c.l.b16 %v2467
          %v2565 = vunpack.c.h.b16 %v2467
          %v2566 = vunpack.c.l.b16 %v2468
          %v2567 = vunpack.c.h.b16 %v2468
          %v2568 = vunpack.c.l.b16 %v2469
          %v2569 = vunpack.c.h.b16 %v2469
          %v2570 = vunpack.c.l.b16 %v2470
          %v2571 = vunpack.c.h.b16 %v2470
          %v2572 = vunpack.c.l.b16 %v2471
          %v2573 = vunpack.c.h.b16 %v2471
          %v2574 = vunpack.c.l.b16 %v2472
          %v2575 = vunpack.c.h.b16 %v2472
          %v2576 = vunpack.c.l.b16 %v2473
          %v2577 = vunpack.c.h.b16 %v2473
          %v2578 = vunpack.c.l.b16 %v2474
          %v2579 = vunpack.c.h.b16 %v2474
          %v2580 = vunpack.c.l.b16 %v2475
          %v2581 = vunpack.c.h.b16 %v2475
          %v2582 = vunpack.c.l.b16 %v2476
          %v2583 = vunpack.c.h.b16 %v2476
          %v2584 = vunpack.c.l.b16 %v2477
          %v2585 = vunpack.c.h.b16 %v2477
          %v2586 = vunpack.c.l.b16 %v2478
          %v2587 = vunpack.c.h.b16 %v2478
          %v2588 = vunpack.c.l.b16 %v2479
          %v2589 = vunpack.c.h.b16 %v2479
          %v2590 = vunpack.c.l.b16 %v2480
          %v2591 = vunpack.c.h.b16 %v2480
          %v2592 = vunpack.c.l.b16 %v2481
          %v2593 = vunpack.c.h.b16 %v2481
          %v2594 = vunpack.c.l.b16 %v2482
          %v2595 = vunpack.c.h.b16 %v2482
          %v2596 = vunpack.c.l.b16 %v2483
          %v2597 = vunpack.c.h.b16 %v2483
          %v2598 = vunpack.c.l.b16 %v2484
          %v2599 = vunpack.c.h.b16 %v2484
          %v2600 = vunpack.c.l.b16 %v2485
          %v2601 = vunpack.c.h.b16 %v2485
          %v2602 = vunpack.c.l.b16 %v2486
          %v2603 = vunpack.c.h.b16 %v2486
          %v2604 = vunpack.c.l.b16 %v2487
          %v2605 = vunpack.c.h.b16 %v2487
          %v2606 = vunpack.c.l.b16 %v2488
          %v2607 = vunpack.c.h.b16 %v2488
          %v2608 = vpack.c.b16 %v2548, %v2544
          %v2609 = vpack.c.b16 %v2549, %v2545
          %v2610 = vpack.c.b16 %v2550, %v2546
          %v2611 = vpack.c.b16 %v2551, %v2547
          %v2612 = vpack.c.b16 %v2556, %v2552
          %v2613 = vpack.c.b16 %v2557, %v2553
          %v2614 = vpack.c.b16 %v2558, %v2554
          %v2615 = vpack.c.b16 %v2559, %v2555
          %v2616 = vpack.c.b16 %v2564, %v2560
          %v2617 = vpack.c.b16 %v2565, %v2561
          %v2618 = vpack.c.b16 %v2566, %v2562
          %v2619 = vpack.c.b16 %v2567, %v2563
          %v2620 = vpack.c.b16 %v2572, %v2568
          %v2621 = vpack.c.b16 %v2573, %v2569
          %v2622 = vpack.c.b16 %v2574, %v2570
          %v2623 = vpack.c.b16 %v2575, %v2571
          %v2624 = vpack.c.b16 %v2580, %v2576
          %v2625 = vpack.c.b16 %v2581, %v2577
          %v2626 = vpack.c.b16 %v2582, %v2578
          %v2627 = vpack.c.b16 %v2583, %v2579
          %v2628 = vpack.c.b16 %v2588, %v2584
          %v2629 = vpack.c.b16 %v2589, %v2585
          %v2630 = vpack.c.b16 %v2590, %v2586
          %v2631 = vpack.c.b16 %v2591, %v2587
          %v2632 = vpack.c.b16 %v2596, %v2592
          %v2633 = vpack.c.b16 %v2597, %v2593
          %v2634 = vpack.c.b16 %v2598, %v2594
          %v2635 = vpack.c.b16 %v2599, %v2595
          %v2636 = vpack.c.b16 %v2604, %v2600
          %v2637 = vpack.c.b16 %v2605, %v2601
          %v2638 = vpack.c.b16 %v2606, %v2602
          %v2639 = vpack.c.b16 %v2607, %v2603
          %2672 = vmatprep.subr.bf16.mxu0 %v2609
          %2673 = vmatpush1.bf16.msra.mxu0 %v2608
          %2674 = vmatprep.subr.bf16.mxu0 %v2613
          %2675 = vmatpush1.bf16.msra.mxu0 %v2612
          %2676 = vmatprep.subr.bf16.mxu0 %v2617
          %2677 = vmatpush1.bf16.msra.mxu0 %v2616
          %2678 = vmatprep.subr.bf16.mxu0 %v2621
          %2679 = vmatpush1.bf16.msra.mxu0 %v2620
          %2680 = vmatprep.subr.bf16.mxu0 %v2625
          %2681 = vmatpush1.bf16.msra.mxu0 %v2624
          %2682 = vmatprep.subr.bf16.mxu0 %v2629
          %2683 = vmatpush1.bf16.msra.mxu0 %v2628
          %2684 = vmatprep.subr.bf16.mxu0 %v2633
          %2685 = vmatpush1.bf16.msra.mxu0 %v2632
          %2686 = vmatprep.subr.bf16.mxu0 %v2637
          %2687 = vmatpush1.bf16.msra.mxu0 %v2636
          %2688 = vmatprep.subr.bf16.mxu0 0
          %2689 = vmatpush1.bf16.msra.mxu0 0
          %2690 = vmatprep.subr.bf16.mxu0 0
          %2691 = vmatpush1.bf16.msra.mxu0 0
          %2692 = vmatprep.subr.bf16.mxu0 0
          %2693 = vmatpush1.bf16.msra.mxu0 0
          %2694 = vmatprep.subr.bf16.mxu0 0
          %2695 = vmatpush1.bf16.msra.mxu0 0
          %2696 = vmatprep.subr.bf16.mxu0 0
          %2697 = vmatpush1.bf16.msra.mxu0 0
          %2698 = vmatprep.subr.bf16.mxu0 0
          %2699 = vmatpush1.bf16.msra.mxu0 0
          %2700 = vmatprep.subr.bf16.mxu0 0
          %2701 = vmatpush1.bf16.msra.mxu0 0
          %2702 = vmatprep.subr.bf16.mxu0 0
          %2703 = vmatpush1.bf16.msra.mxu0 0
          %2704 = vmatprep.mubr.bf16.mxu0 0
          %2705 = vmatmul.mubr.bf16.gmra.mrb[0].mxu0 %v1849
          %v2706 = vpop.f32.mrb[0].mxu0
          %v2707 = vadd.f32 %v2495, %v2706
          %v2708 = vpop.f32.mrb[0].mxu0
          %v2709 = vadd.f32 %v2499, %v2708
          %v2710 = vpop.f32.mrb[0].mxu0
          %v2711 = vpop.f32.mrb[0].mxu0
          %2712 = vdwg.mxu0
          %2713 = vmatprep.subr.bf16.mxu0 %v2611
          %2714 = vmatpush1.bf16.msra.mxu0 %v2610
          %2715 = vmatprep.subr.bf16.mxu0 %v2615
          %2716 = vmatpush1.bf16.msra.mxu0 %v2614
          %2717 = vmatprep.subr.bf16.mxu0 %v2619
          %2718 = vmatpush1.bf16.msra.mxu0 %v2618
          %2719 = vmatprep.subr.bf16.mxu0 %v2623
          %2720 = vmatpush1.bf16.msra.mxu0 %v2622
          %2721 = vmatprep.subr.bf16.mxu0 %v2627
          %2722 = vmatpush1.bf16.msra.mxu0 %v2626
          %2723 = vmatprep.subr.bf16.mxu0 %v2631
          %2724 = vmatpush1.bf16.msra.mxu0 %v2630
          %2725 = vmatprep.subr.bf16.mxu0 %v2635
          %2726 = vmatpush1.bf16.msra.mxu0 %v2634
          %2727 = vmatprep.subr.bf16.mxu0 %v2639
          %2728 = vmatpush1.bf16.msra.mxu0 %v2638
          %2729 = vmatprep.subr.bf16.mxu0 0
          %2730 = vmatpush1.bf16.msra.mxu0 0
          %2731 = vmatprep.subr.bf16.mxu0 0
          %2732 = vmatpush1.bf16.msra.mxu0 0
          %2733 = vmatprep.subr.bf16.mxu0 0
          %2734 = vmatpush1.bf16.msra.mxu0 0
          %2735 = vmatprep.subr.bf16.mxu0 0
          %2736 = vmatpush1.bf16.msra.mxu0 0
          %2737 = vmatprep.subr.bf16.mxu0 0
          %2738 = vmatpush1.bf16.msra.mxu0 0
          %2739 = vmatprep.subr.bf16.mxu0 0
          %2740 = vmatpush1.bf16.msra.mxu0 0
          %2741 = vmatprep.subr.bf16.mxu0 0
          %2742 = vmatpush1.bf16.msra.mxu0 0
          %2743 = vmatprep.subr.bf16.mxu0 0
          %2744 = vmatpush1.bf16.msra.mxu0 0
          %2745 = vmatprep.mubr.bf16.mxu0 0
          %2746 = vmatmul.mubr.bf16.gmra.mrb[0].mxu0 %v1849
          %v2747 = vpop.f32.mrb[0].mxu0
          %v2748 = vadd.f32 %v2503, %v2747
          %v2749 = vpop.f32.mrb[0].mxu0
          %v2750 = vadd.f32 %v2507, %v2749
          %v2751 = vpop.f32.mrb[0].mxu0
          %v2752 = vpop.f32.mrb[0].mxu0
          %2753 = vdwg.mxu0
          %v2754 = vmax.f32 %v2707, 0.0
          %v2755 = vmax.f32 %v2709, 0.0
          %v2756 = vmax.f32 %v2748, 0.0
          %v2757 = vmax.f32 %v2750, 0.0
          %v2758 = vmax.f32 %v2452, %v2754
          %v2759 = vmax.f32 %v2453, %v2755
          %v2760 = vmax.f32 %v2454, %v2756
          %v2761 = vmax.f32 %v2455, %v2757
          %v2762 = vpack.c.bf16 %v2758, %v2758
          %v2763 = vpack.c.bf16 %v2759, %v2759
          %v2764 = vpack.c.bf16 %v2760, %v2760
          %v2765 = vpack.c.bf16 %v2761, %v2761
          %v2766 = vld [vmem:[#allocation14] sm:$0xff]
          %v2767 = vld [vmem:[#allocation14 + $0x8] sm:$0xff]
          %v2768 = vld [vmem:[#allocation14 + $0x10] sm:$0xff]
          %v2769 = vld [vmem:[#allocation14 + $0x18] sm:$0xff]
          %v2770 = vld [vmem:[#allocation14 + $0x20] sm:$0xff]
          %v2771 = vld [vmem:[#allocation14 + $0x28] sm:$0xff]
          %v2772 = vld [vmem:[#allocation14 + $0x30] sm:$0xff]
          %v2773 = vld [vmem:[#allocation14 + $0x38] sm:$0xff]
          %v2774 = vld [vmem:[#allocation14 + $0x40] sm:$0xff]
          %v2775 = vld [vmem:[#allocation14 + $0x48] sm:$0xff]
          %v2776 = vld [vmem:[#allocation14 + $0x50] sm:$0xff]
          %v2777 = vld [vmem:[#allocation14 + $0x58] sm:$0xff]
          %v2778 = vld [vmem:[#allocation14 + $0x60] sm:$0xff]
          %v2779 = vld [vmem:[#allocation14 + $0x68] sm:$0xff]
          %v2780 = vld [vmem:[#allocation14 + $0x70] sm:$0xff]
          %v2781 = vld [vmem:[#allocation14 + $0x78] sm:$0xff]
          %v2782 = vld [vmem:[#allocation14 + $0x80] sm:$0xff]
          %v2783 = vld [vmem:[#allocation14 + $0x88] sm:$0xff]
          %v2784 = vld [vmem:[#allocation14 + $0x90] sm:$0xff]
          %v2785 = vld [vmem:[#allocation14 + $0x98] sm:$0xff]
          %v2786 = vld [vmem:[#allocation14 + $0xa0] sm:$0xff]
          %v2787 = vld [vmem:[#allocation14 + $0xa8] sm:$0xff]
          %v2788 = vld [vmem:[#allocation14 + $0xb0] sm:$0xff]
          %v2789 = vld [vmem:[#allocation14 + $0xb8] sm:$0xff]
          %v2790 = vld [vmem:[#allocation14 + $0xc0] sm:$0xff]
          %v2791 = vld [vmem:[#allocation14 + $0xc8] sm:$0xff]
          %v2792 = vld [vmem:[#allocation14 + $0xd0] sm:$0xff]
          %v2793 = vld [vmem:[#allocation14 + $0xd8] sm:$0xff]
          %v2794 = vld [vmem:[#allocation14 + $0xe0] sm:$0xff]
          %v2795 = vld [vmem:[#allocation14 + $0xe8] sm:$0xff]
          %v2796 = vld [vmem:[#allocation14 + $0xf0] sm:$0xff]
          %v2797 = vld [vmem:[#allocation14 + $0xf8] sm:$0xff]
          %v2798 = vld [vmem:[#allocation14 + $0x100] sm:$0xff]
          %v2799 = vld [vmem:[#allocation14 + $0x108] sm:$0xff]
          %v2800 = vld [vmem:[#allocation14 + $0x110] sm:$0xff]
          %v2801 = vld [vmem:[#allocation14 + $0x118] sm:$0xff]
          %v2802 = vld [vmem:[#allocation14 + $0x120] sm:$0xff]
          %v2803 = vld [vmem:[#allocation14 + $0x128] sm:$0xff]
          %v2804 = vld [vmem:[#allocation14 + $0x130] sm:$0xff]
          %v2805 = vld [vmem:[#allocation14 + $0x138] sm:$0xff]
          %v2806 = vld [vmem:[#allocation14 + $0x140] sm:$0xff]
          %v2807 = vld [vmem:[#allocation14 + $0x148] sm:$0xff]
          %v2808 = vld [vmem:[#allocation14 + $0x150] sm:$0xff]
          %v2809 = vld [vmem:[#allocation14 + $0x158] sm:$0xff]
          %v2810 = vld [vmem:[#allocation14 + $0x160] sm:$0xff]
          %v2811 = vld [vmem:[#allocation14 + $0x168] sm:$0xff]
          %v2812 = vld [vmem:[#allocation14 + $0x170] sm:$0xff]
          %v2813 = vld [vmem:[#allocation14 + $0x178] sm:$0xff]
          %v2814 = vld [vmem:[#allocation14 + $0x180] sm:$0xff]
          %v2815 = vld [vmem:[#allocation14 + $0x188] sm:$0xff]
          %v2816 = vld [vmem:[#allocation14 + $0x190] sm:$0xff]
          %v2817 = vld [vmem:[#allocation14 + $0x198] sm:$0xff]
          %v2818 = vld [vmem:[#allocation14 + $0x1a0] sm:$0xff]
          %v2819 = vld [vmem:[#allocation14 + $0x1a8] sm:$0xff]
          %v2820 = vld [vmem:[#allocation14 + $0x1b0] sm:$0xff]
          %v2821 = vld [vmem:[#allocation14 + $0x1b8] sm:$0xff]
          %v2822 = vld [vmem:[#allocation14 + $0x1c0] sm:$0xff]
          %v2823 = vld [vmem:[#allocation14 + $0x1c8] sm:$0xff]
          %v2824 = vld [vmem:[#allocation14 + $0x1d0] sm:$0xff]
          %v2825 = vld [vmem:[#allocation14 + $0x1d8] sm:$0xff]
          %v2826 = vld [vmem:[#allocation14 + $0x1e0] sm:$0xff]
          %v2827 = vld [vmem:[#allocation14 + $0x1e8] sm:$0xff]
          %v2828 = vld [vmem:[#allocation14 + $0x1f0] sm:$0xff]
          %v2829 = vld [vmem:[#allocation14 + $0x1f8] sm:$0xff]
          %v2830 = vld [vmem:[#allocation14 + $0x200] sm:$0xff]
          %v2831 = vld [vmem:[#allocation14 + $0x208] sm:$0xff]
          %v2832 = vld [vmem:[#allocation14 + $0x210] sm:$0xff]
          %v2833 = vld [vmem:[#allocation14 + $0x218] sm:$0xff]
          %v2834 = vld [vmem:[#allocation14 + $0x220] sm:$0xff]
          %v2835 = vld [vmem:[#allocation14 + $0x228] sm:$0xff]
          %v2836 = vld [vmem:[#allocation14 + $0x230] sm:$0xff]
          %v2837 = vld [vmem:[#allocation14 + $0x238] sm:$0xff]
          %v2838 = vld [vmem:[#allocation14 + $0x240] sm:$0xff]
          %v2839 = vld [vmem:[#allocation14 + $0x248] sm:$0xff]
          %v2840 = vld [vmem:[#allocation14 + $0x250] sm:$0xff]
          %v2841 = vld [vmem:[#allocation14 + $0x258] sm:$0xff]
          %v2842 = vld [vmem:[#allocation14 + $0x260] sm:$0xff]
          %v2843 = vld [vmem:[#allocation14 + $0x268] sm:$0xff]
          %v2844 = vld [vmem:[#allocation14 + $0x270] sm:$0xff]
          %v2845 = vld [vmem:[#allocation14 + $0x278] sm:$0xff]
          %v2846 = vld [vmem:[#allocation14 + $0x280] sm:$0xff]
          %v2847 = vld [vmem:[#allocation14 + $0x288] sm:$0xff]
          %v2848 = vld [vmem:[#allocation14 + $0x290] sm:$0xff]
          %v2849 = vld [vmem:[#allocation14 + $0x298] sm:$0xff]
          %v2850 = vld [vmem:[#allocation14 + $0x2a0] sm:$0xff]
          %v2851 = vld [vmem:[#allocation14 + $0x2a8] sm:$0xff]
          %v2852 = vld [vmem:[#allocation14 + $0x2b0] sm:$0xff]
          %v2853 = vld [vmem:[#allocation14 + $0x2b8] sm:$0xff]
          %v2854 = vld [vmem:[#allocation14 + $0x2c0] sm:$0xff]
          %v2855 = vld [vmem:[#allocation14 + $0x2c8] sm:$0xff]
          %v2856 = vld [vmem:[#allocation14 + $0x2d0] sm:$0xff]
          %v2857 = vld [vmem:[#allocation14 + $0x2d8] sm:$0xff]
          %v2858 = vld [vmem:[#allocation14 + $0x2e0] sm:$0xff]
          %v2859 = vld [vmem:[#allocation14 + $0x2e8] sm:$0xff]
          %v2860 = vld [vmem:[#allocation14 + $0x2f0] sm:$0xff]
          %v2861 = vld [vmem:[#allocation14 + $0x2f8] sm:$0xff]
          %v2862 = vld [vmem:[#allocation14 + $0x300] sm:$0xff]
          %v2863 = vld [vmem:[#allocation14 + $0x308] sm:$0xff]
          %v2864 = vld [vmem:[#allocation14 + $0x310] sm:$0xff]
          %v2865 = vld [vmem:[#allocation14 + $0x318] sm:$0xff]
          %v2866 = vld [vmem:[#allocation14 + $0x320] sm:$0xff]
          %v2867 = vld [vmem:[#allocation14 + $0x328] sm:$0xff]
          %v2868 = vld [vmem:[#allocation14 + $0x330] sm:$0xff]
          %v2869 = vld [vmem:[#allocation14 + $0x338] sm:$0xff]
          %v2870 = vld [vmem:[#allocation14 + $0x340] sm:$0xff]
          %v2871 = vld [vmem:[#allocation14 + $0x348] sm:$0xff]
          %v2872 = vld [vmem:[#allocation14 + $0x350] sm:$0xff]
          %v2873 = vld [vmem:[#allocation14 + $0x358] sm:$0xff]
          %v2874 = vld [vmem:[#allocation14 + $0x360] sm:$0xff]
          %v2875 = vld [vmem:[#allocation14 + $0x368] sm:$0xff]
          %v2876 = vld [vmem:[#allocation14 + $0x370] sm:$0xff]
          %v2877 = vld [vmem:[#allocation14 + $0x378] sm:$0xff]
          %v2878 = vld [vmem:[#allocation14 + $0x380] sm:$0xff]
          %v2879 = vld [vmem:[#allocation14 + $0x388] sm:$0xff]
          %v2880 = vld [vmem:[#allocation14 + $0x390] sm:$0xff]
          %v2881 = vld [vmem:[#allocation14 + $0x398] sm:$0xff]
          %v2882 = vld [vmem:[#allocation14 + $0x3a0] sm:$0xff]
          %v2883 = vld [vmem:[#allocation14 + $0x3a8] sm:$0xff]
          %v2884 = vld [vmem:[#allocation14 + $0x3b0] sm:$0xff]
          %v2885 = vld [vmem:[#allocation14 + $0x3b8] sm:$0xff]
          %v2886 = vld [vmem:[#allocation14 + $0x3c0] sm:$0xff]
          %v2887 = vld [vmem:[#allocation14 + $0x3c8] sm:$0xff]
          %v2888 = vld [vmem:[#allocation14 + $0x3d0] sm:$0xff]
          %v2889 = vld [vmem:[#allocation14 + $0x3d8] sm:$0xff]
          %v2890 = vld [vmem:[#allocation14 + $0x3e0] sm:$0xff]
          %v2891 = vld [vmem:[#allocation14 + $0x3e8] sm:$0xff]
          %v2892 = vld [vmem:[#allocation14 + $0x3f0] sm:$0xff]
          %v2893 = vld [vmem:[#allocation14 + $0x3f8] sm:$0xff]
          %v2894 = vld [vmem:[#allocation14 + $0x400] sm:$0xff]
          %v2895 = vld [vmem:[#allocation14 + $0x408] sm:$0xff]
          %v2896 = vld [vmem:[#allocation14 + $0x410] sm:$0xff]
          %v2897 = vld [vmem:[#allocation14 + $0x418] sm:$0xff]
          %v2898 = vld [vmem:[#allocation14 + $0x420] sm:$0xff]
          %v2899 = vld [vmem:[#allocation14 + $0x428] sm:$0xff]
          %v2900 = vld [vmem:[#allocation14 + $0x430] sm:$0xff]
          %v2901 = vld [vmem:[#allocation14 + $0x438] sm:$0xff]
          %v2902 = vld [vmem:[#allocation14 + $0x440] sm:$0xff]
          %v2903 = vld [vmem:[#allocation14 + $0x448] sm:$0xff]
          %v2904 = vld [vmem:[#allocation14 + $0x450] sm:$0xff]
          %v2905 = vld [vmem:[#allocation14 + $0x458] sm:$0xff]
          %v2906 = vld [vmem:[#allocation14 + $0x460] sm:$0xff]
          %v2907 = vld [vmem:[#allocation14 + $0x468] sm:$0xff]
          %v2908 = vld [vmem:[#allocation14 + $0x470] sm:$0xff]
          %v2909 = vld [vmem:[#allocation14 + $0x478] sm:$0xff]
          %v2910 = vld [vmem:[#allocation14 + $0x480] sm:$0xff]
          %v2911 = vld [vmem:[#allocation14 + $0x488] sm:$0xff]
          %v2912 = vld [vmem:[#allocation14 + $0x490] sm:$0xff]
          %v2913 = vld [vmem:[#allocation14 + $0x498] sm:$0xff]
          %v2914 = vld [vmem:[#allocation14 + $0x4a0] sm:$0xff]
          %v2915 = vld [vmem:[#allocation14 + $0x4a8] sm:$0xff]
          %v2916 = vld [vmem:[#allocation14 + $0x4b0] sm:$0xff]
          %v2917 = vld [vmem:[#allocation14 + $0x4b8] sm:$0xff]
          %v2918 = vld [vmem:[#allocation14 + $0x4c0] sm:$0xff]
          %v2919 = vld [vmem:[#allocation14 + $0x4c8] sm:$0xff]
          %v2920 = vld [vmem:[#allocation14 + $0x4d0] sm:$0xff]
          %v2921 = vld [vmem:[#allocation14 + $0x4d8] sm:$0xff]
          %v2922 = vld [vmem:[#allocation14 + $0x4e0] sm:$0xff]
          %v2923 = vld [vmem:[#allocation14 + $0x4e8] sm:$0xff]
          %v2924 = vld [vmem:[#allocation14 + $0x4f0] sm:$0xff]
          %v2925 = vld [vmem:[#allocation14 + $0x4f8] sm:$0xff]
          %v2926 = vld [vmem:[#allocation14 + $0x500] sm:$0xff]
          %v2927 = vld [vmem:[#allocation14 + $0x508] sm:$0xff]
          %v2928 = vld [vmem:[#allocation14 + $0x510] sm:$0xff]
          %v2929 = vld [vmem:[#allocation14 + $0x518] sm:$0xff]
          %v2930 = vld [vmem:[#allocation14 + $0x520] sm:$0xff]
          %v2931 = vld [vmem:[#allocation14 + $0x528] sm:$0xff]
          %v2932 = vld [vmem:[#allocation14 + $0x530] sm:$0xff]
          %v2933 = vld [vmem:[#allocation14 + $0x538] sm:$0xff]
          %v2934 = vld [vmem:[#allocation14 + $0x540] sm:$0xff]
          %v2935 = vld [vmem:[#allocation14 + $0x548] sm:$0xff]
          %v2936 = vld [vmem:[#allocation14 + $0x550] sm:$0xff]
          %v2937 = vld [vmem:[#allocation14 + $0x558] sm:$0xff]
          %v2938 = vld [vmem:[#allocation14 + $0x560] sm:$0xff]
          %v2939 = vld [vmem:[#allocation14 + $0x568] sm:$0xff]
          %v2940 = vld [vmem:[#allocation14 + $0x570] sm:$0xff]
          %v2941 = vld [vmem:[#allocation14 + $0x578] sm:$0xff]
          %v2942 = vld [vmem:[#allocation14 + $0x580] sm:$0xff]
          %v2943 = vld [vmem:[#allocation14 + $0x588] sm:$0xff]
          %v2944 = vld [vmem:[#allocation14 + $0x590] sm:$0xff]
          %v2945 = vld [vmem:[#allocation14 + $0x598] sm:$0xff]
          %v2946 = vld [vmem:[#allocation14 + $0x5a0] sm:$0xff]
          %v2947 = vld [vmem:[#allocation14 + $0x5a8] sm:$0xff]
          %v2948 = vld [vmem:[#allocation14 + $0x5b0] sm:$0xff]
          %v2949 = vld [vmem:[#allocation14 + $0x5b8] sm:$0xff]
          %v2950 = vld [vmem:[#allocation14 + $0x5c0] sm:$0xff]
          %v2951 = vld [vmem:[#allocation14 + $0x5c8] sm:$0xff]
          %v2952 = vld [vmem:[#allocation14 + $0x5d0] sm:$0xff]
          %v2953 = vld [vmem:[#allocation14 + $0x5d8] sm:$0xff]
          %v2954 = vld [vmem:[#allocation14 + $0x5e0] sm:$0xff]
          %v2955 = vld [vmem:[#allocation14 + $0x5e8] sm:$0xff]
          %v2956 = vld [vmem:[#allocation14 + $0x5f0] sm:$0xff]
          %v2957 = vld [vmem:[#allocation14 + $0x5f8] sm:$0xff]
          %v2958 = vld [vmem:[#allocation14 + $0x600] sm:$0xff]
          %v2959 = vld [vmem:[#allocation14 + $0x608] sm:$0xff]
          %v2960 = vld [vmem:[#allocation14 + $0x610] sm:$0xff]
          %v2961 = vld [vmem:[#allocation14 + $0x618] sm:$0xff]
          %v2962 = vld [vmem:[#allocation14 + $0x620] sm:$0xff]
          %v2963 = vld [vmem:[#allocation14 + $0x628] sm:$0xff]
          %v2964 = vld [vmem:[#allocation14 + $0x630] sm:$0xff]
          %v2965 = vld [vmem:[#allocation14 + $0x638] sm:$0xff]
          %v2966 = vld [vmem:[#allocation14 + $0x640] sm:$0xff]
          %v2967 = vld [vmem:[#allocation14 + $0x648] sm:$0xff]
          %v2968 = vld [vmem:[#allocation14 + $0x650] sm:$0xff]
          %v2969 = vld [vmem:[#allocation14 + $0x658] sm:$0xff]
          %v2970 = vld [vmem:[#allocation14 + $0x660] sm:$0xff]
          %v2971 = vld [vmem:[#allocation14 + $0x668] sm:$0xff]
          %v2972 = vld [vmem:[#allocation14 + $0x670] sm:$0xff]
          %v2973 = vld [vmem:[#allocation14 + $0x678] sm:$0xff]
          %v2974 = vld [vmem:[#allocation14 + $0x680] sm:$0xff]
          %v2975 = vld [vmem:[#allocation14 + $0x688] sm:$0xff]
          %v2976 = vld [vmem:[#allocation14 + $0x690] sm:$0xff]
          %v2977 = vld [vmem:[#allocation14 + $0x698] sm:$0xff]
          %v2978 = vld [vmem:[#allocation14 + $0x6a0] sm:$0xff]
          %v2979 = vld [vmem:[#allocation14 + $0x6a8] sm:$0xff]
          %v2980 = vld [vmem:[#allocation14 + $0x6b0] sm:$0xff]
          %v2981 = vld [vmem:[#allocation14 + $0x6b8] sm:$0xff]
          %v2982 = vld [vmem:[#allocation14 + $0x6c0] sm:$0xff]
          %v2983 = vld [vmem:[#allocation14 + $0x6c8] sm:$0xff]
          %v2984 = vld [vmem:[#allocation14 + $0x6d0] sm:$0xff]
          %v2985 = vld [vmem:[#allocation14 + $0x6d8] sm:$0xff]
          %v2986 = vld [vmem:[#allocation14 + $0x6e0] sm:$0xff]
          %v2987 = vld [vmem:[#allocation14 + $0x6e8] sm:$0xff]
          %v2988 = vld [vmem:[#allocation14 + $0x6f0] sm:$0xff]
          %v2989 = vld [vmem:[#allocation14 + $0x6f8] sm:$0xff]
          %v2990 = vld [vmem:[#allocation14 + $0x700] sm:$0xff]
          %v2991 = vld [vmem:[#allocation14 + $0x708] sm:$0xff]
          %v2992 = vld [vmem:[#allocation14 + $0x710] sm:$0xff]
          %v2993 = vld [vmem:[#allocation14 + $0x718] sm:$0xff]
          %v2994 = vld [vmem:[#allocation14 + $0x720] sm:$0xff]
          %v2995 = vld [vmem:[#allocation14 + $0x728] sm:$0xff]
          %v2996 = vld [vmem:[#allocation14 + $0x730] sm:$0xff]
          %v2997 = vld [vmem:[#allocation14 + $0x738] sm:$0xff]
          %v2998 = vld [vmem:[#allocation14 + $0x740] sm:$0xff]
          %v2999 = vld [vmem:[#allocation14 + $0x748] sm:$0xff]
          %v3000 = vld [vmem:[#allocation14 + $0x750] sm:$0xff]
          %v3001 = vld [vmem:[#allocation14 + $0x758] sm:$0xff]
          %v3002 = vld [vmem:[#allocation14 + $0x760] sm:$0xff]
          %v3003 = vld [vmem:[#allocation14 + $0x768] sm:$0xff]
          %v3004 = vld [vmem:[#allocation14 + $0x770] sm:$0xff]
          %v3005 = vld [vmem:[#allocation14 + $0x778] sm:$0xff]
          %v3006 = vld [vmem:[#allocation14 + $0x780] sm:$0xff]
          %v3007 = vld [vmem:[#allocation14 + $0x788] sm:$0xff]
          %v3008 = vld [vmem:[#allocation14 + $0x790] sm:$0xff]
          %v3009 = vld [vmem:[#allocation14 + $0x798] sm:$0xff]
          %v3010 = vld [vmem:[#allocation14 + $0x7a0] sm:$0xff]
          %v3011 = vld [vmem:[#allocation14 + $0x7a8] sm:$0xff]
          %v3012 = vld [vmem:[#allocation14 + $0x7b0] sm:$0xff]
          %v3013 = vld [vmem:[#allocation14 + $0x7b8] sm:$0xff]
          %v3014 = vld [vmem:[#allocation14 + $0x7c0] sm:$0xff]
          %v3015 = vld [vmem:[#allocation14 + $0x7c8] sm:$0xff]
          %v3016 = vld [vmem:[#allocation14 + $0x7d0] sm:$0xff]
          %v3017 = vld [vmem:[#allocation14 + $0x7d8] sm:$0xff]
          %v3018 = vld [vmem:[#allocation14 + $0x7e0] sm:$0xff]
          %v3019 = vld [vmem:[#allocation14 + $0x7e8] sm:$0xff]
          %v3020 = vld [vmem:[#allocation14 + $0x7f0] sm:$0xff]
          %v3021 = vld [vmem:[#allocation14 + $0x7f8] sm:$0xff]
          %v3022 = vld [vmem:[#allocation14 + $0x800] sm:$0xff]
          %v3023 = vld [vmem:[#allocation14 + $0x808] sm:$0xff]
          %v3024 = vld [vmem:[#allocation14 + $0x810] sm:$0xff]
          %v3025 = vld [vmem:[#allocation14 + $0x818] sm:$0xff]
          %v3026 = vld [vmem:[#allocation14 + $0x820] sm:$0xff]
          %v3027 = vld [vmem:[#allocation14 + $0x828] sm:$0xff]
          %v3028 = vld [vmem:[#allocation14 + $0x830] sm:$0xff]
          %v3029 = vld [vmem:[#allocation14 + $0x838] sm:$0xff]
          %v3030 = vld [vmem:[#allocation14 + $0x840] sm:$0xff]
          %v3031 = vld [vmem:[#allocation14 + $0x848] sm:$0xff]
          %v3032 = vld [vmem:[#allocation14 + $0x850] sm:$0xff]
          %v3033 = vld [vmem:[#allocation14 + $0x858] sm:$0xff]
          %v3034 = vld [vmem:[#allocation14 + $0x860] sm:$0xff]
          %v3035 = vld [vmem:[#allocation14 + $0x868] sm:$0xff]
          %v3036 = vld [vmem:[#allocation14 + $0x870] sm:$0xff]
          %v3037 = vld [vmem:[#allocation14 + $0x878] sm:$0xff]
          %v3038 = vld [vmem:[#allocation14 + $0x880] sm:$0xff]
          %v3039 = vld [vmem:[#allocation14 + $0x888] sm:$0xff]
          %v3040 = vld [vmem:[#allocation14 + $0x890] sm:$0xff]
          %v3041 = vld [vmem:[#allocation14 + $0x898] sm:$0xff]
          %v3042 = vld [vmem:[#allocation14 + $0x8a0] sm:$0xff]
          %v3043 = vld [vmem:[#allocation14 + $0x8a8] sm:$0xff]
          %v3044 = vld [vmem:[#allocation14 + $0x8b0] sm:$0xff]
          %v3045 = vld [vmem:[#allocation14 + $0x8b8] sm:$0xff]
          %v3046 = vld [vmem:[#allocation14 + $0x8c0] sm:$0xff]
          %v3047 = vld [vmem:[#allocation14 + $0x8c8] sm:$0xff]
          %v3048 = vld [vmem:[#allocation14 + $0x8d0] sm:$0xff]
          %v3049 = vld [vmem:[#allocation14 + $0x8d8] sm:$0xff]
          %v3050 = vld [vmem:[#allocation14 + $0x8e0] sm:$0xff]
          %v3051 = vld [vmem:[#allocation14 + $0x8e8] sm:$0xff]
          %v3052 = vld [vmem:[#allocation14 + $0x8f0] sm:$0xff]
          %v3053 = vld [vmem:[#allocation14 + $0x8f8] sm:$0xff]
          %v3054 = vld [vmem:[#allocation14 + $0x900] sm:$0xff]
          %v3055 = vld [vmem:[#allocation14 + $0x908] sm:$0xff]
          %v3056 = vld [vmem:[#allocation14 + $0x910] sm:$0xff]
          %v3057 = vld [vmem:[#allocation14 + $0x918] sm:$0xff]
          %v3058 = vld [vmem:[#allocation14 + $0x920] sm:$0xff]
          %v3059 = vld [vmem:[#allocation14 + $0x928] sm:$0xff]
          %v3060 = vld [vmem:[#allocation14 + $0x930] sm:$0xff]
          %v3061 = vld [vmem:[#allocation14 + $0x938] sm:$0xff]
          %v3062 = vld [vmem:[#allocation14 + $0x940] sm:$0xff]
          %v3063 = vld [vmem:[#allocation14 + $0x948] sm:$0xff]
          %v3064 = vld [vmem:[#allocation14 + $0x950] sm:$0xff]
          %v3065 = vld [vmem:[#allocation14 + $0x958] sm:$0xff]
          %v3066 = vld [vmem:[#allocation14 + $0x960] sm:$0xff]
          %v3067 = vld [vmem:[#allocation14 + $0x968] sm:$0xff]
          %v3068 = vld [vmem:[#allocation14 + $0x970] sm:$0xff]
          %v3069 = vld [vmem:[#allocation14 + $0x978] sm:$0xff]
          %v3070 = vld [vmem:[#allocation14 + $0x980] sm:$0xff]
          %v3071 = vld [vmem:[#allocation14 + $0x988] sm:$0xff]
          %v3072 = vld [vmem:[#allocation14 + $0x990] sm:$0xff]
          %v3073 = vld [vmem:[#allocation14 + $0x998] sm:$0xff]
          %v3074 = vld [vmem:[#allocation14 + $0x9a0] sm:$0xff]
          %v3075 = vld [vmem:[#allocation14 + $0x9a8] sm:$0xff]
          %v3076 = vld [vmem:[#allocation14 + $0x9b0] sm:$0xff]
          %v3077 = vld [vmem:[#allocation14 + $0x9b8] sm:$0xff]
          %v3078 = vld [vmem:[#allocation14 + $0x9c0] sm:$0xff]
          %v3079 = vld [vmem:[#allocation14 + $0x9c8] sm:$0xff]
          %v3080 = vld [vmem:[#allocation14 + $0x9d0] sm:$0xff]
          %v3081 = vld [vmem:[#allocation14 + $0x9d8] sm:$0xff]
          %v3082 = vld [vmem:[#allocation14 + $0x9e0] sm:$0xff]
          %v3083 = vld [vmem:[#allocation14 + $0x9e8] sm:$0xff]
          %v3084 = vld [vmem:[#allocation14 + $0x9f0] sm:$0xff]
          %v3085 = vld [vmem:[#allocation14 + $0x9f8] sm:$0xff]
          %v3086 = vld [vmem:[#allocation14 + $0xa00] sm:$0xff]
          %v3087 = vld [vmem:[#allocation14 + $0xa08] sm:$0xff]
          %v3088 = vld [vmem:[#allocation14 + $0xa10] sm:$0xff]
          %v3089 = vld [vmem:[#allocation14 + $0xa18] sm:$0xff]
          %v3090 = vld [vmem:[#allocation14 + $0xa20] sm:$0xff]
          %v3091 = vld [vmem:[#allocation14 + $0xa28] sm:$0xff]
          %v3092 = vld [vmem:[#allocation14 + $0xa30] sm:$0xff]
          %v3093 = vld [vmem:[#allocation14 + $0xa38] sm:$0xff]
          %v3094 = vld [vmem:[#allocation14 + $0xa40] sm:$0xff]
          %v3095 = vld [vmem:[#allocation14 + $0xa48] sm:$0xff]
          %v3096 = vld [vmem:[#allocation14 + $0xa50] sm:$0xff]
          %v3097 = vld [vmem:[#allocation14 + $0xa58] sm:$0xff]
          %v3098 = vld [vmem:[#allocation14 + $0xa60] sm:$0xff]
          %v3099 = vld [vmem:[#allocation14 + $0xa68] sm:$0xff]
          %v3100 = vld [vmem:[#allocation14 + $0xa70] sm:$0xff]
          %v3101 = vld [vmem:[#allocation14 + $0xa78] sm:$0xff]
          %v3102 = vld [vmem:[#allocation14 + $0xa80] sm:$0xff]
          %v3103 = vld [vmem:[#allocation14 + $0xa88] sm:$0xff]
          %v3104 = vld [vmem:[#allocation14 + $0xa90] sm:$0xff]
          %v3105 = vld [vmem:[#allocation14 + $0xa98] sm:$0xff]
          %v3106 = vld [vmem:[#allocation14 + $0xaa0] sm:$0xff]
          %v3107 = vld [vmem:[#allocation14 + $0xaa8] sm:$0xff]
          %v3108 = vld [vmem:[#allocation14 + $0xab0] sm:$0xff]
          %v3109 = vld [vmem:[#allocation14 + $0xab8] sm:$0xff]
          %v3110 = vld [vmem:[#allocation14 + $0xac0] sm:$0xff]
          %v3111 = vld [vmem:[#allocation14 + $0xac8] sm:$0xff]
          %v3112 = vld [vmem:[#allocation14 + $0xad0] sm:$0xff]
          %v3113 = vld [vmem:[#allocation14 + $0xad8] sm:$0xff]
          %v3114 = vld [vmem:[#allocation14 + $0xae0] sm:$0xff]
          %v3115 = vld [vmem:[#allocation14 + $0xae8] sm:$0xff]
          %v3116 = vld [vmem:[#allocation14 + $0xaf0] sm:$0xff]
          %v3117 = vld [vmem:[#allocation14 + $0xaf8] sm:$0xff]
          %v3118 = vld [vmem:[#allocation14 + $0xb00] sm:$0xff]
          %v3119 = vld [vmem:[#allocation14 + $0xb08] sm:$0xff]
          %v3120 = vld [vmem:[#allocation14 + $0xb10] sm:$0xff]
          %v3121 = vld [vmem:[#allocation14 + $0xb18] sm:$0xff]
          %v3122 = vld [vmem:[#allocation14 + $0xb20] sm:$0xff]
          %v3123 = vld [vmem:[#allocation14 + $0xb28] sm:$0xff]
          %v3124 = vld [vmem:[#allocation14 + $0xb30] sm:$0xff]
          %v3125 = vld [vmem:[#allocation14 + $0xb38] sm:$0xff]
          %v3126 = vld [vmem:[#allocation14 + $0xb40] sm:$0xff]
          %v3127 = vld [vmem:[#allocation14 + $0xb48] sm:$0xff]
          %v3128 = vld [vmem:[#allocation14 + $0xb50] sm:$0xff]
          %v3129 = vld [vmem:[#allocation14 + $0xb58] sm:$0xff]
          %v3130 = vld [vmem:[#allocation14 + $0xb60] sm:$0xff]
          %v3131 = vld [vmem:[#allocation14 + $0xb68] sm:$0xff]
          %v3132 = vld [vmem:[#allocation14 + $0xb70] sm:$0xff]
          %v3133 = vld [vmem:[#allocation14 + $0xb78] sm:$0xff]
          %v3134 = vld [vmem:[#allocation14 + $0xb80] sm:$0xff]
          %v3135 = vld [vmem:[#allocation14 + $0xb88] sm:$0xff]
          %v3136 = vld [vmem:[#allocation14 + $0xb90] sm:$0xff]
          %v3137 = vld [vmem:[#allocation14 + $0xb98] sm:$0xff]
          %v3138 = vld [vmem:[#allocation14 + $0xba0] sm:$0xff]
          %v3139 = vld [vmem:[#allocation14 + $0xba8] sm:$0xff]
          %v3140 = vld [vmem:[#allocation14 + $0xbb0] sm:$0xff]
          %v3141 = vld [vmem:[#allocation14 + $0xbb8] sm:$0xff]
          %v3142 = vld [vmem:[#allocation14 + $0xbc0] sm:$0xff]
          %v3143 = vld [vmem:[#allocation14 + $0xbc8] sm:$0xff]
          %v3144 = vld [vmem:[#allocation14 + $0xbd0] sm:$0xff]
          %v3145 = vld [vmem:[#allocation14 + $0xbd8] sm:$0xff]
          %v3146 = vld [vmem:[#allocation14 + $0xbe0] sm:$0xff]
          %v3147 = vld [vmem:[#allocation14 + $0xbe8] sm:$0xff]
          %v3148 = vld [vmem:[#allocation14 + $0xbf0] sm:$0xff]
          %v3149 = vld [vmem:[#allocation14 + $0xbf8] sm:$0xff]
          %v3150 = vld [vmem:[#allocation15] sm:$0xff]
          %v3151 = vld [vmem:[#allocation15 + $0x8] sm:$0xf]
          %v3154 = vlaneseq
          %v3155 = vshrl.u32 %v3154, 7
          %v3156 = vsub.s32 0, %v3155
          %v3157 = vrot.slane %v3150, %v3156
          %v3158 = vlaneseq
          %v3159 = vshrl.u32 %v3158, 7
          %v3160 = vsub.s32 1, %v3159
          %v3161 = vrot.slane %v3150, %v3160
          %v3162 = vlaneseq
          %v3163 = vshrl.u32 %v3162, 7
          %v3164 = vsub.s32 2, %v3163
          %v3165 = vrot.slane %v3150, %v3164
          %v3166 = vlaneseq
          %v3167 = vshrl.u32 %v3166, 7
          %v3168 = vsub.s32 3, %v3167
          %v3169 = vrot.slane %v3150, %v3168
          %v3170 = vlaneseq
          %v3171 = vshrl.u32 %v3170, 7
          %v3172 = vsub.s32 4, %v3171
          %v3173 = vrot.slane %v3150, %v3172
          %v3174 = vlaneseq
          %v3175 = vshrl.u32 %v3174, 7
          %v3176 = vsub.s32 5, %v3175
          %v3177 = vrot.slane %v3150, %v3176
          %v3178 = vlaneseq
          %v3179 = vshrl.u32 %v3178, 7
          %v3180 = vsub.s32 6, %v3179
          %v3181 = vrot.slane %v3150, %v3180
          %v3182 = vlaneseq
          %v3183 = vshrl.u32 %v3182, 7
          %v3184 = vsub.s32 7, %v3183
          %v3185 = vrot.slane %v3150, %v3184
          %v3186 = vlaneseq
          %v3187 = vshrl.u32 %v3186, 7
          %v3188 = vsub.s32 0, %v3187
          %v3189 = vrot.slane %v3151, %v3188
          %v3190 = vlaneseq
          %v3191 = vshrl.u32 %v3190, 7
          %v3192 = vsub.s32 1, %v3191
          %v3193 = vrot.slane %v3151, %v3192
          %v3194 = vlaneseq
          %v3195 = vshrl.u32 %v3194, 7
          %v3196 = vsub.s32 2, %v3195
          %v3197 = vrot.slane %v3151, %v3196
          %v3198 = vlaneseq
          %v3199 = vshrl.u32 %v3198, 7
          %v3200 = vsub.s32 3, %v3199
          %v3201 = vrot.slane %v3151, %v3200
          %v3598 = vunpack.c.l.b16 %v2766
          %v3599 = vunpack.c.h.b16 %v2766
          %v3600 = vunpack.c.l.b16 %v2767
          %v3601 = vunpack.c.h.b16 %v2767
          %v3602 = vunpack.c.l.b16 %v2768
          %v3603 = vunpack.c.h.b16 %v2768
          %v3604 = vunpack.c.l.b16 %v2769
          %v3605 = vunpack.c.h.b16 %v2769
          %v3606 = vunpack.c.l.b16 %v2770
          %v3607 = vunpack.c.h.b16 %v2770
          %v3608 = vunpack.c.l.b16 %v2771
          %v3609 = vunpack.c.h.b16 %v2771
          %v3610 = vunpack.c.l.b16 %v2772
          %v3611 = vunpack.c.h.b16 %v2772
          %v3612 = vunpack.c.l.b16 %v2773
          %v3613 = vunpack.c.h.b16 %v2773
          %v3614 = vunpack.c.l.b16 %v2774
          %v3615 = vunpack.c.h.b16 %v2774
          %v3616 = vunpack.c.l.b16 %v2775
          %v3617 = vunpack.c.h.b16 %v2775
          %v3618 = vunpack.c.l.b16 %v2776
          %v3619 = vunpack.c.h.b16 %v2776
          %v3620 = vunpack.c.l.b16 %v2777
          %v3621 = vunpack.c.h.b16 %v2777
          %v3622 = vunpack.c.l.b16 %v2778
          %v3623 = vunpack.c.h.b16 %v2778
          %v3624 = vunpack.c.l.b16 %v2779
          %v3625 = vunpack.c.h.b16 %v2779
          %v3626 = vunpack.c.l.b16 %v2780
          %v3627 = vunpack.c.h.b16 %v2780
          %v3628 = vunpack.c.l.b16 %v2781
          %v3629 = vunpack.c.h.b16 %v2781
          %v3630 = vunpack.c.l.b16 %v2782
          %v3631 = vunpack.c.h.b16 %v2782
          %v3632 = vunpack.c.l.b16 %v2783
          %v3633 = vunpack.c.h.b16 %v2783
          %v3634 = vunpack.c.l.b16 %v2784
          %v3635 = vunpack.c.h.b16 %v2784
          %v3636 = vunpack.c.l.b16 %v2785
          %v3637 = vunpack.c.h.b16 %v2785
          %v3638 = vunpack.c.l.b16 %v2786
          %v3639 = vunpack.c.h.b16 %v2786
          %v3640 = vunpack.c.l.b16 %v2787
          %v3641 = vunpack.c.h.b16 %v2787
          %v3642 = vunpack.c.l.b16 %v2788
          %v3643 = vunpack.c.h.b16 %v2788
          %v3644 = vunpack.c.l.b16 %v2789
          %v3645 = vunpack.c.h.b16 %v2789
          %v3646 = vunpack.c.l.b16 %v2790
          %v3647 = vunpack.c.h.b16 %v2790
          %v3648 = vunpack.c.l.b16 %v2791
          %v3649 = vunpack.c.h.b16 %v2791
          %v3650 = vunpack.c.l.b16 %v2792
          %v3651 = vunpack.c.h.b16 %v2792
          %v3652 = vunpack.c.l.b16 %v2793
          %v3653 = vunpack.c.h.b16 %v2793
          %v3654 = vunpack.c.l.b16 %v2794
          %v3655 = vunpack.c.h.b16 %v2794
          %v3656 = vunpack.c.l.b16 %v2795
          %v3657 = vunpack.c.h.b16 %v2795
          %v3658 = vunpack.c.l.b16 %v2796
          %v3659 = vunpack.c.h.b16 %v2796
          %v3660 = vunpack.c.l.b16 %v2797
          %v3661 = vunpack.c.h.b16 %v2797
          %v3662 = vunpack.c.l.b16 %v2798
          %v3663 = vunpack.c.h.b16 %v2798
          %v3664 = vunpack.c.l.b16 %v2799
          %v3665 = vunpack.c.h.b16 %v2799
          %v3666 = vunpack.c.l.b16 %v2800
          %v3667 = vunpack.c.h.b16 %v2800
          %v3668 = vunpack.c.l.b16 %v2801
          %v3669 = vunpack.c.h.b16 %v2801
          %v3670 = vunpack.c.l.b16 %v2802
          %v3671 = vunpack.c.h.b16 %v2802
          %v3672 = vunpack.c.l.b16 %v2803
          %v3673 = vunpack.c.h.b16 %v2803
          %v3674 = vunpack.c.l.b16 %v2804
          %v3675 = vunpack.c.h.b16 %v2804
          %v3676 = vunpack.c.l.b16 %v2805
          %v3677 = vunpack.c.h.b16 %v2805
          %v3678 = vunpack.c.l.b16 %v2806
          %v3679 = vunpack.c.h.b16 %v2806
          %v3680 = vunpack.c.l.b16 %v2807
          %v3681 = vunpack.c.h.b16 %v2807
          %v3682 = vunpack.c.l.b16 %v2808
          %v3683 = vunpack.c.h.b16 %v2808
          %v3684 = vunpack.c.l.b16 %v2809
          %v3685 = vunpack.c.h.b16 %v2809
          %v3686 = vunpack.c.l.b16 %v2810
          %v3687 = vunpack.c.h.b16 %v2810
          %v3688 = vunpack.c.l.b16 %v2811
          %v3689 = vunpack.c.h.b16 %v2811
          %v3690 = vunpack.c.l.b16 %v2812
          %v3691 = vunpack.c.h.b16 %v2812
          %v3692 = vunpack.c.l.b16 %v2813
          %v3693 = vunpack.c.h.b16 %v2813
          %v3694 = vunpack.c.l.b16 %v2814
          %v3695 = vunpack.c.h.b16 %v2814
          %v3696 = vunpack.c.l.b16 %v2815
          %v3697 = vunpack.c.h.b16 %v2815
          %v3698 = vunpack.c.l.b16 %v2816
          %v3699 = vunpack.c.h.b16 %v2816
          %v3700 = vunpack.c.l.b16 %v2817
          %v3701 = vunpack.c.h.b16 %v2817
          %v3702 = vunpack.c.l.b16 %v2818
          %v3703 = vunpack.c.h.b16 %v2818
          %v3704 = vunpack.c.l.b16 %v2819
          %v3705 = vunpack.c.h.b16 %v2819
          %v3706 = vunpack.c.l.b16 %v2820
          %v3707 = vunpack.c.h.b16 %v2820
          %v3708 = vunpack.c.l.b16 %v2821
          %v3709 = vunpack.c.h.b16 %v2821
          %v3710 = vunpack.c.l.b16 %v2822
          %v3711 = vunpack.c.h.b16 %v2822
          %v3712 = vunpack.c.l.b16 %v2823
          %v3713 = vunpack.c.h.b16 %v2823
          %v3714 = vunpack.c.l.b16 %v2824
          %v3715 = vunpack.c.h.b16 %v2824
          %v3716 = vunpack.c.l.b16 %v2825
          %v3717 = vunpack.c.h.b16 %v2825
          %v3718 = vunpack.c.l.b16 %v2826
          %v3719 = vunpack.c.h.b16 %v2826
          %v3720 = vunpack.c.l.b16 %v2827
          %v3721 = vunpack.c.h.b16 %v2827
          %v3722 = vunpack.c.l.b16 %v2828
          %v3723 = vunpack.c.h.b16 %v2828
          %v3724 = vunpack.c.l.b16 %v2829
          %v3725 = vunpack.c.h.b16 %v2829
          %v3726 = vunpack.c.l.b16 %v2830
          %v3727 = vunpack.c.h.b16 %v2830
          %v3728 = vunpack.c.l.b16 %v2831
          %v3729 = vunpack.c.h.b16 %v2831
          %v3730 = vunpack.c.l.b16 %v2832
          %v3731 = vunpack.c.h.b16 %v2832
          %v3732 = vunpack.c.l.b16 %v2833
          %v3733 = vunpack.c.h.b16 %v2833
          %v3734 = vunpack.c.l.b16 %v2834
          %v3735 = vunpack.c.h.b16 %v2834
          %v3736 = vunpack.c.l.b16 %v2835
          %v3737 = vunpack.c.h.b16 %v2835
          %v3738 = vunpack.c.l.b16 %v2836
          %v3739 = vunpack.c.h.b16 %v2836
          %v3740 = vunpack.c.l.b16 %v2837
          %v3741 = vunpack.c.h.b16 %v2837
          %v3742 = vunpack.c.l.b16 %v2838
          %v3743 = vunpack.c.h.b16 %v2838
          %v3744 = vunpack.c.l.b16 %v2839
          %v3745 = vunpack.c.h.b16 %v2839
          %v3746 = vunpack.c.l.b16 %v2840
          %v3747 = vunpack.c.h.b16 %v2840
          %v3748 = vunpack.c.l.b16 %v2841
          %v3749 = vunpack.c.h.b16 %v2841
          %v3750 = vunpack.c.l.b16 %v2842
          %v3751 = vunpack.c.h.b16 %v2842
          %v3752 = vunpack.c.l.b16 %v2843
          %v3753 = vunpack.c.h.b16 %v2843
          %v3754 = vunpack.c.l.b16 %v2844
          %v3755 = vunpack.c.h.b16 %v2844
          %v3756 = vunpack.c.l.b16 %v2845
          %v3757 = vunpack.c.h.b16 %v2845
          %v3758 = vunpack.c.l.b16 %v2846
          %v3759 = vunpack.c.h.b16 %v2846
          %v3760 = vunpack.c.l.b16 %v2847
          %v3761 = vunpack.c.h.b16 %v2847
          %v3762 = vunpack.c.l.b16 %v2848
          %v3763 = vunpack.c.h.b16 %v2848
          %v3764 = vunpack.c.l.b16 %v2849
          %v3765 = vunpack.c.h.b16 %v2849
          %v3766 = vunpack.c.l.b16 %v2850
          %v3767 = vunpack.c.h.b16 %v2850
          %v3768 = vunpack.c.l.b16 %v2851
          %v3769 = vunpack.c.h.b16 %v2851
          %v3770 = vunpack.c.l.b16 %v2852
          %v3771 = vunpack.c.h.b16 %v2852
          %v3772 = vunpack.c.l.b16 %v2853
          %v3773 = vunpack.c.h.b16 %v2853
          %v3774 = vunpack.c.l.b16 %v2854
          %v3775 = vunpack.c.h.b16 %v2854
          %v3776 = vunpack.c.l.b16 %v2855
          %v3777 = vunpack.c.h.b16 %v2855
          %v3778 = vunpack.c.l.b16 %v2856
          %v3779 = vunpack.c.h.b16 %v2856
          %v3780 = vunpack.c.l.b16 %v2857
          %v3781 = vunpack.c.h.b16 %v2857
          %v3782 = vunpack.c.l.b16 %v2858
          %v3783 = vunpack.c.h.b16 %v2858
          %v3784 = vunpack.c.l.b16 %v2859
          %v3785 = vunpack.c.h.b16 %v2859
          %v3786 = vunpack.c.l.b16 %v2860
          %v3787 = vunpack.c.h.b16 %v2860
          %v3788 = vunpack.c.l.b16 %v2861
          %v3789 = vunpack.c.h.b16 %v2861
          %v3790 = vunpack.c.l.b16 %v2862
          %v3791 = vunpack.c.h.b16 %v2862
          %v3792 = vunpack.c.l.b16 %v2863
          %v3793 = vunpack.c.h.b16 %v2863
          %v3794 = vunpack.c.l.b16 %v2864
          %v3795 = vunpack.c.h.b16 %v2864
          %v3796 = vunpack.c.l.b16 %v2865
          %v3797 = vunpack.c.h.b16 %v2865
          %v3798 = vunpack.c.l.b16 %v2866
          %v3799 = vunpack.c.h.b16 %v2866
          %v3800 = vunpack.c.l.b16 %v2867
          %v3801 = vunpack.c.h.b16 %v2867
          %v3802 = vunpack.c.l.b16 %v2868
          %v3803 = vunpack.c.h.b16 %v2868
          %v3804 = vunpack.c.l.b16 %v2869
          %v3805 = vunpack.c.h.b16 %v2869
          %v3806 = vunpack.c.l.b16 %v2870
          %v3807 = vunpack.c.h.b16 %v2870
          %v3808 = vunpack.c.l.b16 %v2871
          %v3809 = vunpack.c.h.b16 %v2871
          %v3810 = vunpack.c.l.b16 %v2872
          %v3811 = vunpack.c.h.b16 %v2872
          %v3812 = vunpack.c.l.b16 %v2873
          %v3813 = vunpack.c.h.b16 %v2873
          %v3814 = vunpack.c.l.b16 %v2874
          %v3815 = vunpack.c.h.b16 %v2874
          %v3816 = vunpack.c.l.b16 %v2875
          %v3817 = vunpack.c.h.b16 %v2875
          %v3818 = vunpack.c.l.b16 %v2876
          %v3819 = vunpack.c.h.b16 %v2876
          %v3820 = vunpack.c.l.b16 %v2877
          %v3821 = vunpack.c.h.b16 %v2877
          %v3822 = vunpack.c.l.b16 %v2878
          %v3823 = vunpack.c.h.b16 %v2878
          %v3824 = vunpack.c.l.b16 %v2879
          %v3825 = vunpack.c.h.b16 %v2879
          %v3826 = vunpack.c.l.b16 %v2880
          %v3827 = vunpack.c.h.b16 %v2880
          %v3828 = vunpack.c.l.b16 %v2881
          %v3829 = vunpack.c.h.b16 %v2881
          %v3830 = vunpack.c.l.b16 %v2882
          %v3831 = vunpack.c.h.b16 %v2882
          %v3832 = vunpack.c.l.b16 %v2883
          %v3833 = vunpack.c.h.b16 %v2883
          %v3834 = vunpack.c.l.b16 %v2884
          %v3835 = vunpack.c.h.b16 %v2884
          %v3836 = vunpack.c.l.b16 %v2885
          %v3837 = vunpack.c.h.b16 %v2885
          %v3838 = vunpack.c.l.b16 %v2886
          %v3839 = vunpack.c.h.b16 %v2886
          %v3840 = vunpack.c.l.b16 %v2887
          %v3841 = vunpack.c.h.b16 %v2887
          %v3842 = vunpack.c.l.b16 %v2888
          %v3843 = vunpack.c.h.b16 %v2888
          %v3844 = vunpack.c.l.b16 %v2889
          %v3845 = vunpack.c.h.b16 %v2889
          %v3846 = vunpack.c.l.b16 %v2890
          %v3847 = vunpack.c.h.b16 %v2890
          %v3848 = vunpack.c.l.b16 %v2891
          %v3849 = vunpack.c.h.b16 %v2891
          %v3850 = vunpack.c.l.b16 %v2892
          %v3851 = vunpack.c.h.b16 %v2892
          %v3852 = vunpack.c.l.b16 %v2893
          %v3853 = vunpack.c.h.b16 %v2893
          %v3854 = vunpack.c.l.b16 %v2894
          %v3855 = vunpack.c.h.b16 %v2894
          %v3856 = vunpack.c.l.b16 %v2895
          %v3857 = vunpack.c.h.b16 %v2895
          %v3858 = vunpack.c.l.b16 %v2896
          %v3859 = vunpack.c.h.b16 %v2896
          %v3860 = vunpack.c.l.b16 %v2897
          %v3861 = vunpack.c.h.b16 %v2897
          %v3862 = vunpack.c.l.b16 %v2898
          %v3863 = vunpack.c.h.b16 %v2898
          %v3864 = vunpack.c.l.b16 %v2899
          %v3865 = vunpack.c.h.b16 %v2899
          %v3866 = vunpack.c.l.b16 %v2900
          %v3867 = vunpack.c.h.b16 %v2900
          %v3868 = vunpack.c.l.b16 %v2901
          %v3869 = vunpack.c.h.b16 %v2901
          %v3870 = vunpack.c.l.b16 %v2902
          %v3871 = vunpack.c.h.b16 %v2902
          %v3872 = vunpack.c.l.b16 %v2903
          %v3873 = vunpack.c.h.b16 %v2903
          %v3874 = vunpack.c.l.b16 %v2904
          %v3875 = vunpack.c.h.b16 %v2904
          %v3876 = vunpack.c.l.b16 %v2905
          %v3877 = vunpack.c.h.b16 %v2905
          %v3878 = vunpack.c.l.b16 %v2906
          %v3879 = vunpack.c.h.b16 %v2906
          %v3880 = vunpack.c.l.b16 %v2907
          %v3881 = vunpack.c.h.b16 %v2907
          %v3882 = vunpack.c.l.b16 %v2908
          %v3883 = vunpack.c.h.b16 %v2908
          %v3884 = vunpack.c.l.b16 %v2909
          %v3885 = vunpack.c.h.b16 %v2909
          %v3886 = vunpack.c.l.b16 %v2910
          %v3887 = vunpack.c.h.b16 %v2910
          %v3888 = vunpack.c.l.b16 %v2911
          %v3889 = vunpack.c.h.b16 %v2911
          %v3890 = vunpack.c.l.b16 %v2912
          %v3891 = vunpack.c.h.b16 %v2912
          %v3892 = vunpack.c.l.b16 %v2913
          %v3893 = vunpack.c.h.b16 %v2913
          %v3894 = vunpack.c.l.b16 %v2914
          %v3895 = vunpack.c.h.b16 %v2914
          %v3896 = vunpack.c.l.b16 %v2915
          %v3897 = vunpack.c.h.b16 %v2915
          %v3898 = vunpack.c.l.b16 %v2916
          %v3899 = vunpack.c.h.b16 %v2916
          %v3900 = vunpack.c.l.b16 %v2917
          %v3901 = vunpack.c.h.b16 %v2917
          %v3902 = vunpack.c.l.b16 %v2918
          %v3903 = vunpack.c.h.b16 %v2918
          %v3904 = vunpack.c.l.b16 %v2919
          %v3905 = vunpack.c.h.b16 %v2919
          %v3906 = vunpack.c.l.b16 %v2920
          %v3907 = vunpack.c.h.b16 %v2920
          %v3908 = vunpack.c.l.b16 %v2921
          %v3909 = vunpack.c.h.b16 %v2921
          %v3910 = vunpack.c.l.b16 %v2922
          %v3911 = vunpack.c.h.b16 %v2922
          %v3912 = vunpack.c.l.b16 %v2923
          %v3913 = vunpack.c.h.b16 %v2923
          %v3914 = vunpack.c.l.b16 %v2924
          %v3915 = vunpack.c.h.b16 %v2924
          %v3916 = vunpack.c.l.b16 %v2925
          %v3917 = vunpack.c.h.b16 %v2925
          %v3918 = vunpack.c.l.b16 %v2926
          %v3919 = vunpack.c.h.b16 %v2926
          %v3920 = vunpack.c.l.b16 %v2927
          %v3921 = vunpack.c.h.b16 %v2927
          %v3922 = vunpack.c.l.b16 %v2928
          %v3923 = vunpack.c.h.b16 %v2928
          %v3924 = vunpack.c.l.b16 %v2929
          %v3925 = vunpack.c.h.b16 %v2929
          %v3926 = vunpack.c.l.b16 %v2930
          %v3927 = vunpack.c.h.b16 %v2930
          %v3928 = vunpack.c.l.b16 %v2931
          %v3929 = vunpack.c.h.b16 %v2931
          %v3930 = vunpack.c.l.b16 %v2932
          %v3931 = vunpack.c.h.b16 %v2932
          %v3932 = vunpack.c.l.b16 %v2933
          %v3933 = vunpack.c.h.b16 %v2933
          %v3934 = vunpack.c.l.b16 %v2934
          %v3935 = vunpack.c.h.b16 %v2934
          %v3936 = vunpack.c.l.b16 %v2935
          %v3937 = vunpack.c.h.b16 %v2935
          %v3938 = vunpack.c.l.b16 %v2936
          %v3939 = vunpack.c.h.b16 %v2936
          %v3940 = vunpack.c.l.b16 %v2937
          %v3941 = vunpack.c.h.b16 %v2937
          %v3942 = vunpack.c.l.b16 %v2938
          %v3943 = vunpack.c.h.b16 %v2938
          %v3944 = vunpack.c.l.b16 %v2939
          %v3945 = vunpack.c.h.b16 %v2939
          %v3946 = vunpack.c.l.b16 %v2940
          %v3947 = vunpack.c.h.b16 %v2940
          %v3948 = vunpack.c.l.b16 %v2941
          %v3949 = vunpack.c.h.b16 %v2941
          %v3950 = vunpack.c.l.b16 %v2942
          %v3951 = vunpack.c.h.b16 %v2942
          %v3952 = vunpack.c.l.b16 %v2943
          %v3953 = vunpack.c.h.b16 %v2943
          %v3954 = vunpack.c.l.b16 %v2944
          %v3955 = vunpack.c.h.b16 %v2944
          %v3956 = vunpack.c.l.b16 %v2945
          %v3957 = vunpack.c.h.b16 %v2945
          %v3958 = vunpack.c.l.b16 %v2946
          %v3959 = vunpack.c.h.b16 %v2946
          %v3960 = vunpack.c.l.b16 %v2947
          %v3961 = vunpack.c.h.b16 %v2947
          %v3962 = vunpack.c.l.b16 %v2948
          %v3963 = vunpack.c.h.b16 %v2948
          %v3964 = vunpack.c.l.b16 %v2949
          %v3965 = vunpack.c.h.b16 %v2949
          %v3966 = vunpack.c.l.b16 %v2950
          %v3967 = vunpack.c.h.b16 %v2950
          %v3968 = vunpack.c.l.b16 %v2951
          %v3969 = vunpack.c.h.b16 %v2951
          %v3970 = vunpack.c.l.b16 %v2952
          %v3971 = vunpack.c.h.b16 %v2952
          %v3972 = vunpack.c.l.b16 %v2953
          %v3973 = vunpack.c.h.b16 %v2953
          %v3974 = vunpack.c.l.b16 %v2954
          %v3975 = vunpack.c.h.b16 %v2954
          %v3976 = vunpack.c.l.b16 %v2955
          %v3977 = vunpack.c.h.b16 %v2955
          %v3978 = vunpack.c.l.b16 %v2956
          %v3979 = vunpack.c.h.b16 %v2956
          %v3980 = vunpack.c.l.b16 %v2957
          %v3981 = vunpack.c.h.b16 %v2957
          %v3982 = vunpack.c.l.b16 %v2958
          %v3983 = vunpack.c.h.b16 %v2958
          %v3984 = vunpack.c.l.b16 %v2959
          %v3985 = vunpack.c.h.b16 %v2959
          %v3986 = vunpack.c.l.b16 %v2960
          %v3987 = vunpack.c.h.b16 %v2960
          %v3988 = vunpack.c.l.b16 %v2961
          %v3989 = vunpack.c.h.b16 %v2961
          %v3990 = vunpack.c.l.b16 %v2962
          %v3991 = vunpack.c.h.b16 %v2962
          %v3992 = vunpack.c.l.b16 %v2963
          %v3993 = vunpack.c.h.b16 %v2963
          %v3994 = vunpack.c.l.b16 %v2964
          %v3995 = vunpack.c.h.b16 %v2964
          %v3996 = vunpack.c.l.b16 %v2965
          %v3997 = vunpack.c.h.b16 %v2965
          %v3998 = vunpack.c.l.b16 %v2966
          %v3999 = vunpack.c.h.b16 %v2966
          %v4000 = vunpack.c.l.b16 %v2967
          %v4001 = vunpack.c.h.b16 %v2967
          %v4002 = vunpack.c.l.b16 %v2968
          %v4003 = vunpack.c.h.b16 %v2968
          %v4004 = vunpack.c.l.b16 %v2969
          %v4005 = vunpack.c.h.b16 %v2969
          %v4006 = vunpack.c.l.b16 %v2970
          %v4007 = vunpack.c.h.b16 %v2970
          %v4008 = vunpack.c.l.b16 %v2971
          %v4009 = vunpack.c.h.b16 %v2971
          %v4010 = vunpack.c.l.b16 %v2972
          %v4011 = vunpack.c.h.b16 %v2972
          %v4012 = vunpack.c.l.b16 %v2973
          %v4013 = vunpack.c.h.b16 %v2973
          %v4014 = vunpack.c.l.b16 %v2974
          %v4015 = vunpack.c.h.b16 %v2974
          %v4016 = vunpack.c.l.b16 %v2975
          %v4017 = vunpack.c.h.b16 %v2975
          %v4018 = vunpack.c.l.b16 %v2976
          %v4019 = vunpack.c.h.b16 %v2976
          %v4020 = vunpack.c.l.b16 %v2977
          %v4021 = vunpack.c.h.b16 %v2977
          %v4022 = vunpack.c.l.b16 %v2978
          %v4023 = vunpack.c.h.b16 %v2978
          %v4024 = vunpack.c.l.b16 %v2979
          %v4025 = vunpack.c.h.b16 %v2979
          %v4026 = vunpack.c.l.b16 %v2980
          %v4027 = vunpack.c.h.b16 %v2980
          %v4028 = vunpack.c.l.b16 %v2981
          %v4029 = vunpack.c.h.b16 %v2981
          %v4030 = vunpack.c.l.b16 %v2982
          %v4031 = vunpack.c.h.b16 %v2982
          %v4032 = vunpack.c.l.b16 %v2983
          %v4033 = vunpack.c.h.b16 %v2983
          %v4034 = vunpack.c.l.b16 %v2984
          %v4035 = vunpack.c.h.b16 %v2984
          %v4036 = vunpack.c.l.b16 %v2985
          %v4037 = vunpack.c.h.b16 %v2985
          %v4038 = vunpack.c.l.b16 %v2986
          %v4039 = vunpack.c.h.b16 %v2986
          %v4040 = vunpack.c.l.b16 %v2987
          %v4041 = vunpack.c.h.b16 %v2987
          %v4042 = vunpack.c.l.b16 %v2988
          %v4043 = vunpack.c.h.b16 %v2988
          %v4044 = vunpack.c.l.b16 %v2989
          %v4045 = vunpack.c.h.b16 %v2989
          %v4046 = vunpack.c.l.b16 %v2990
          %v4047 = vunpack.c.h.b16 %v2990
          %v4048 = vunpack.c.l.b16 %v2991
          %v4049 = vunpack.c.h.b16 %v2991
          %v4050 = vunpack.c.l.b16 %v2992
          %v4051 = vunpack.c.h.b16 %v2992
          %v4052 = vunpack.c.l.b16 %v2993
          %v4053 = vunpack.c.h.b16 %v2993
          %v4054 = vunpack.c.l.b16 %v2994
          %v4055 = vunpack.c.h.b16 %v2994
          %v4056 = vunpack.c.l.b16 %v2995
          %v4057 = vunpack.c.h.b16 %v2995
          %v4058 = vunpack.c.l.b16 %v2996
          %v4059 = vunpack.c.h.b16 %v2996
          %v4060 = vunpack.c.l.b16 %v2997
          %v4061 = vunpack.c.h.b16 %v2997
          %v4062 = vunpack.c.l.b16 %v2998
          %v4063 = vunpack.c.h.b16 %v2998
          %v4064 = vunpack.c.l.b16 %v2999
          %v4065 = vunpack.c.h.b16 %v2999
          %v4066 = vunpack.c.l.b16 %v3000
          %v4067 = vunpack.c.h.b16 %v3000
          %v4068 = vunpack.c.l.b16 %v3001
          %v4069 = vunpack.c.h.b16 %v3001
          %v4070 = vunpack.c.l.b16 %v3002
          %v4071 = vunpack.c.h.b16 %v3002
          %v4072 = vunpack.c.l.b16 %v3003
          %v4073 = vunpack.c.h.b16 %v3003
          %v4074 = vunpack.c.l.b16 %v3004
          %v4075 = vunpack.c.h.b16 %v3004
          %v4076 = vunpack.c.l.b16 %v3005
          %v4077 = vunpack.c.h.b16 %v3005
          %v4078 = vunpack.c.l.b16 %v3006
          %v4079 = vunpack.c.h.b16 %v3006
          %v4080 = vunpack.c.l.b16 %v3007
          %v4081 = vunpack.c.h.b16 %v3007
          %v4082 = vunpack.c.l.b16 %v3008
          %v4083 = vunpack.c.h.b16 %v3008
          %v4084 = vunpack.c.l.b16 %v3009
          %v4085 = vunpack.c.h.b16 %v3009
          %v4086 = vunpack.c.l.b16 %v3010
          %v4087 = vunpack.c.h.b16 %v3010
          %v4088 = vunpack.c.l.b16 %v3011
          %v4089 = vunpack.c.h.b16 %v3011
          %v4090 = vunpack.c.l.b16 %v3012
          %v4091 = vunpack.c.h.b16 %v3012
          %v4092 = vunpack.c.l.b16 %v3013
          %v4093 = vunpack.c.h.b16 %v3013
          %v4094 = vunpack.c.l.b16 %v3014
          %v4095 = vunpack.c.h.b16 %v3014
          %v4096 = vunpack.c.l.b16 %v3015
          %v4097 = vunpack.c.h.b16 %v3015
          %v4098 = vunpack.c.l.b16 %v3016
          %v4099 = vunpack.c.h.b16 %v3016
          %v4100 = vunpack.c.l.b16 %v3017
          %v4101 = vunpack.c.h.b16 %v3017
          %v4102 = vunpack.c.l.b16 %v3018
          %v4103 = vunpack.c.h.b16 %v3018
          %v4104 = vunpack.c.l.b16 %v3019
          %v4105 = vunpack.c.h.b16 %v3019
          %v4106 = vunpack.c.l.b16 %v3020
          %v4107 = vunpack.c.h.b16 %v3020
          %v4108 = vunpack.c.l.b16 %v3021
          %v4109 = vunpack.c.h.b16 %v3021
          %v4110 = vunpack.c.l.b16 %v3022
          %v4111 = vunpack.c.h.b16 %v3022
          %v4112 = vunpack.c.l.b16 %v3023
          %v4113 = vunpack.c.h.b16 %v3023
          %v4114 = vunpack.c.l.b16 %v3024
          %v4115 = vunpack.c.h.b16 %v3024
          %v4116 = vunpack.c.l.b16 %v3025
          %v4117 = vunpack.c.h.b16 %v3025
          %v4118 = vunpack.c.l.b16 %v3026
          %v4119 = vunpack.c.h.b16 %v3026
          %v4120 = vunpack.c.l.b16 %v3027
          %v4121 = vunpack.c.h.b16 %v3027
          %v4122 = vunpack.c.l.b16 %v3028
          %v4123 = vunpack.c.h.b16 %v3028
          %v4124 = vunpack.c.l.b16 %v3029
          %v4125 = vunpack.c.h.b16 %v3029
          %v4126 = vunpack.c.l.b16 %v3030
          %v4127 = vunpack.c.h.b16 %v3030
          %v4128 = vunpack.c.l.b16 %v3031
          %v4129 = vunpack.c.h.b16 %v3031
          %v4130 = vunpack.c.l.b16 %v3032
          %v4131 = vunpack.c.h.b16 %v3032
          %v4132 = vunpack.c.l.b16 %v3033
          %v4133 = vunpack.c.h.b16 %v3033
          %v4134 = vunpack.c.l.b16 %v3034
          %v4135 = vunpack.c.h.b16 %v3034
          %v4136 = vunpack.c.l.b16 %v3035
          %v4137 = vunpack.c.h.b16 %v3035
          %v4138 = vunpack.c.l.b16 %v3036
          %v4139 = vunpack.c.h.b16 %v3036
          %v4140 = vunpack.c.l.b16 %v3037
          %v4141 = vunpack.c.h.b16 %v3037
          %v4142 = vunpack.c.l.b16 %v3038
          %v4143 = vunpack.c.h.b16 %v3038
          %v4144 = vunpack.c.l.b16 %v3039
          %v4145 = vunpack.c.h.b16 %v3039
          %v4146 = vunpack.c.l.b16 %v3040
          %v4147 = vunpack.c.h.b16 %v3040
          %v4148 = vunpack.c.l.b16 %v3041
          %v4149 = vunpack.c.h.b16 %v3041
          %v4150 = vunpack.c.l.b16 %v3042
          %v4151 = vunpack.c.h.b16 %v3042
          %v4152 = vunpack.c.l.b16 %v3043
          %v4153 = vunpack.c.h.b16 %v3043
          %v4154 = vunpack.c.l.b16 %v3044
          %v4155 = vunpack.c.h.b16 %v3044
          %v4156 = vunpack.c.l.b16 %v3045
          %v4157 = vunpack.c.h.b16 %v3045
          %v4158 = vunpack.c.l.b16 %v3046
          %v4159 = vunpack.c.h.b16 %v3046
          %v4160 = vunpack.c.l.b16 %v3047
          %v4161 = vunpack.c.h.b16 %v3047
          %v4162 = vunpack.c.l.b16 %v3048
          %v4163 = vunpack.c.h.b16 %v3048
          %v4164 = vunpack.c.l.b16 %v3049
          %v4165 = vunpack.c.h.b16 %v3049
          %v4166 = vunpack.c.l.b16 %v3050
          %v4167 = vunpack.c.h.b16 %v3050
          %v4168 = vunpack.c.l.b16 %v3051
          %v4169 = vunpack.c.h.b16 %v3051
          %v4170 = vunpack.c.l.b16 %v3052
          %v4171 = vunpack.c.h.b16 %v3052
          %v4172 = vunpack.c.l.b16 %v3053
          %v4173 = vunpack.c.h.b16 %v3053
          %v4174 = vunpack.c.l.b16 %v3054
          %v4175 = vunpack.c.h.b16 %v3054
          %v4176 = vunpack.c.l.b16 %v3055
          %v4177 = vunpack.c.h.b16 %v3055
          %v4178 = vunpack.c.l.b16 %v3056
          %v4179 = vunpack.c.h.b16 %v3056
          %v4180 = vunpack.c.l.b16 %v3057
          %v4181 = vunpack.c.h.b16 %v3057
          %v4182 = vunpack.c.l.b16 %v3058
          %v4183 = vunpack.c.h.b16 %v3058
          %v4184 = vunpack.c.l.b16 %v3059
          %v4185 = vunpack.c.h.b16 %v3059
          %v4186 = vunpack.c.l.b16 %v3060
          %v4187 = vunpack.c.h.b16 %v3060
          %v4188 = vunpack.c.l.b16 %v3061
          %v4189 = vunpack.c.h.b16 %v3061
          %v4190 = vunpack.c.l.b16 %v3062
          %v4191 = vunpack.c.h.b16 %v3062
          %v4192 = vunpack.c.l.b16 %v3063
          %v4193 = vunpack.c.h.b16 %v3063
          %v4194 = vunpack.c.l.b16 %v3064
          %v4195 = vunpack.c.h.b16 %v3064
          %v4196 = vunpack.c.l.b16 %v3065
          %v4197 = vunpack.c.h.b16 %v3065
          %v4198 = vunpack.c.l.b16 %v3066
          %v4199 = vunpack.c.h.b16 %v3066
          %v4200 = vunpack.c.l.b16 %v3067
          %v4201 = vunpack.c.h.b16 %v3067
          %v4202 = vunpack.c.l.b16 %v3068
          %v4203 = vunpack.c.h.b16 %v3068
          %v4204 = vunpack.c.l.b16 %v3069
          %v4205 = vunpack.c.h.b16 %v3069
          %v4206 = vunpack.c.l.b16 %v3070
          %v4207 = vunpack.c.h.b16 %v3070
          %v4208 = vunpack.c.l.b16 %v3071
          %v4209 = vunpack.c.h.b16 %v3071
          %v4210 = vunpack.c.l.b16 %v3072
          %v4211 = vunpack.c.h.b16 %v3072
          %v4212 = vunpack.c.l.b16 %v3073
          %v4213 = vunpack.c.h.b16 %v3073
          %v4214 = vunpack.c.l.b16 %v3074
          %v4215 = vunpack.c.h.b16 %v3074
          %v4216 = vunpack.c.l.b16 %v3075
          %v4217 = vunpack.c.h.b16 %v3075
          %v4218 = vunpack.c.l.b16 %v3076
          %v4219 = vunpack.c.h.b16 %v3076
          %v4220 = vunpack.c.l.b16 %v3077
          %v4221 = vunpack.c.h.b16 %v3077
          %v4222 = vunpack.c.l.b16 %v3078
          %v4223 = vunpack.c.h.b16 %v3078
          %v4224 = vunpack.c.l.b16 %v3079
          %v4225 = vunpack.c.h.b16 %v3079
          %v4226 = vunpack.c.l.b16 %v3080
          %v4227 = vunpack.c.h.b16 %v3080
          %v4228 = vunpack.c.l.b16 %v3081
          %v4229 = vunpack.c.h.b16 %v3081
          %v4230 = vunpack.c.l.b16 %v3082
          %v4231 = vunpack.c.h.b16 %v3082
          %v4232 = vunpack.c.l.b16 %v3083
          %v4233 = vunpack.c.h.b16 %v3083
          %v4234 = vunpack.c.l.b16 %v3084
          %v4235 = vunpack.c.h.b16 %v3084
          %v4236 = vunpack.c.l.b16 %v3085
          %v4237 = vunpack.c.h.b16 %v3085
          %v4238 = vunpack.c.l.b16 %v3086
          %v4239 = vunpack.c.h.b16 %v3086
          %v4240 = vunpack.c.l.b16 %v3087
          %v4241 = vunpack.c.h.b16 %v3087
          %v4242 = vunpack.c.l.b16 %v3088
          %v4243 = vunpack.c.h.b16 %v3088
          %v4244 = vunpack.c.l.b16 %v3089
          %v4245 = vunpack.c.h.b16 %v3089
          %v4246 = vunpack.c.l.b16 %v3090
          %v4247 = vunpack.c.h.b16 %v3090
          %v4248 = vunpack.c.l.b16 %v3091
          %v4249 = vunpack.c.h.b16 %v3091
          %v4250 = vunpack.c.l.b16 %v3092
          %v4251 = vunpack.c.h.b16 %v3092
          %v4252 = vunpack.c.l.b16 %v3093
          %v4253 = vunpack.c.h.b16 %v3093
          %v4254 = vunpack.c.l.b16 %v3094
          %v4255 = vunpack.c.h.b16 %v3094
          %v4256 = vunpack.c.l.b16 %v3095
          %v4257 = vunpack.c.h.b16 %v3095
          %v4258 = vunpack.c.l.b16 %v3096
          %v4259 = vunpack.c.h.b16 %v3096
          %v4260 = vunpack.c.l.b16 %v3097
          %v4261 = vunpack.c.h.b16 %v3097
          %v4262 = vunpack.c.l.b16 %v3098
          %v4263 = vunpack.c.h.b16 %v3098
          %v4264 = vunpack.c.l.b16 %v3099
          %v4265 = vunpack.c.h.b16 %v3099
          %v4266 = vunpack.c.l.b16 %v3100
          %v4267 = vunpack.c.h.b16 %v3100
          %v4268 = vunpack.c.l.b16 %v3101
          %v4269 = vunpack.c.h.b16 %v3101
          %v4270 = vunpack.c.l.b16 %v3102
          %v4271 = vunpack.c.h.b16 %v3102
          %v4272 = vunpack.c.l.b16 %v3103
          %v4273 = vunpack.c.h.b16 %v3103
          %v4274 = vunpack.c.l.b16 %v3104
          %v4275 = vunpack.c.h.b16 %v3104
          %v4276 = vunpack.c.l.b16 %v3105
          %v4277 = vunpack.c.h.b16 %v3105
          %v4278 = vunpack.c.l.b16 %v3106
          %v4279 = vunpack.c.h.b16 %v3106
          %v4280 = vunpack.c.l.b16 %v3107
          %v4281 = vunpack.c.h.b16 %v3107
          %v4282 = vunpack.c.l.b16 %v3108
          %v4283 = vunpack.c.h.b16 %v3108
          %v4284 = vunpack.c.l.b16 %v3109
          %v4285 = vunpack.c.h.b16 %v3109
          %v4286 = vunpack.c.l.b16 %v3110
          %v4287 = vunpack.c.h.b16 %v3110
          %v4288 = vunpack.c.l.b16 %v3111
          %v4289 = vunpack.c.h.b16 %v3111
          %v4290 = vunpack.c.l.b16 %v3112
          %v4291 = vunpack.c.h.b16 %v3112
          %v4292 = vunpack.c.l.b16 %v3113
          %v4293 = vunpack.c.h.b16 %v3113
          %v4294 = vunpack.c.l.b16 %v3114
          %v4295 = vunpack.c.h.b16 %v3114
          %v4296 = vunpack.c.l.b16 %v3115
          %v4297 = vunpack.c.h.b16 %v3115
          %v4298 = vunpack.c.l.b16 %v3116
          %v4299 = vunpack.c.h.b16 %v3116
          %v4300 = vunpack.c.l.b16 %v3117
          %v4301 = vunpack.c.h.b16 %v3117
          %v4302 = vunpack.c.l.b16 %v3118
          %v4303 = vunpack.c.h.b16 %v3118
          %v4304 = vunpack.c.l.b16 %v3119
          %v4305 = vunpack.c.h.b16 %v3119
          %v4306 = vunpack.c.l.b16 %v3120
          %v4307 = vunpack.c.h.b16 %v3120
          %v4308 = vunpack.c.l.b16 %v3121
          %v4309 = vunpack.c.h.b16 %v3121
          %v4310 = vunpack.c.l.b16 %v3122
          %v4311 = vunpack.c.h.b16 %v3122
          %v4312 = vunpack.c.l.b16 %v3123
          %v4313 = vunpack.c.h.b16 %v3123
          %v4314 = vunpack.c.l.b16 %v3124
          %v4315 = vunpack.c.h.b16 %v3124
          %v4316 = vunpack.c.l.b16 %v3125
          %v4317 = vunpack.c.h.b16 %v3125
          %v4318 = vunpack.c.l.b16 %v3126
          %v4319 = vunpack.c.h.b16 %v3126
          %v4320 = vunpack.c.l.b16 %v3127
          %v4321 = vunpack.c.h.b16 %v3127
          %v4322 = vunpack.c.l.b16 %v3128
          %v4323 = vunpack.c.h.b16 %v3128
          %v4324 = vunpack.c.l.b16 %v3129
          %v4325 = vunpack.c.h.b16 %v3129
          %v4326 = vunpack.c.l.b16 %v3130
          %v4327 = vunpack.c.h.b16 %v3130
          %v4328 = vunpack.c.l.b16 %v3131
          %v4329 = vunpack.c.h.b16 %v3131
          %v4330 = vunpack.c.l.b16 %v3132
          %v4331 = vunpack.c.h.b16 %v3132
          %v4332 = vunpack.c.l.b16 %v3133
          %v4333 = vunpack.c.h.b16 %v3133
          %v4334 = vunpack.c.l.b16 %v3134
          %v4335 = vunpack.c.h.b16 %v3134
          %v4336 = vunpack.c.l.b16 %v3135
          %v4337 = vunpack.c.h.b16 %v3135
          %v4338 = vunpack.c.l.b16 %v3136
          %v4339 = vunpack.c.h.b16 %v3136
          %v4340 = vunpack.c.l.b16 %v3137
          %v4341 = vunpack.c.h.b16 %v3137
          %v4342 = vunpack.c.l.b16 %v3138
          %v4343 = vunpack.c.h.b16 %v3138
          %v4344 = vunpack.c.l.b16 %v3139
          %v4345 = vunpack.c.h.b16 %v3139
          %v4346 = vunpack.c.l.b16 %v3140
          %v4347 = vunpack.c.h.b16 %v3140
          %v4348 = vunpack.c.l.b16 %v3141
          %v4349 = vunpack.c.h.b16 %v3141
          %v4350 = vunpack.c.l.b16 %v3142
          %v4351 = vunpack.c.h.b16 %v3142
          %v4352 = vunpack.c.l.b16 %v3143
          %v4353 = vunpack.c.h.b16 %v3143
          %v4354 = vunpack.c.l.b16 %v3144
          %v4355 = vunpack.c.h.b16 %v3144
          %v4356 = vunpack.c.l.b16 %v3145
          %v4357 = vunpack.c.h.b16 %v3145
          %v4358 = vunpack.c.l.b16 %v3146
          %v4359 = vunpack.c.h.b16 %v3146
          %v4360 = vunpack.c.l.b16 %v3147
          %v4361 = vunpack.c.h.b16 %v3147
          %v4362 = vunpack.c.l.b16 %v3148
          %v4363 = vunpack.c.h.b16 %v3148
          %v4364 = vunpack.c.l.b16 %v3149
          %v4365 = vunpack.c.h.b16 %v3149
          %v4366 = vpack.c.b16 %v3610, %v3598
          %v4367 = vpack.c.b16 %v3611, %v3599
          %v4368 = vpack.c.b16 %v3612, %v3600
          %v4369 = vpack.c.b16 %v3613, %v3601
          %v4370 = vpack.c.b16 %v3614, %v3602
          %v4371 = vpack.c.b16 %v3615, %v3603
          %v4372 = vpack.c.b16 %v3616, %v3604
          %v4373 = vpack.c.b16 %v3617, %v3605
          %v4374 = vpack.c.b16 %v3618, %v3606
          %v4375 = vpack.c.b16 %v3619, %v3607
          %v4376 = vpack.c.b16 %v3620, %v3608
          %v4377 = vpack.c.b16 %v3621, %v3609
          %v4378 = vpack.c.b16 %v3634, %v3622
          %v4379 = vpack.c.b16 %v3635, %v3623
          %v4380 = vpack.c.b16 %v3636, %v3624
          %v4381 = vpack.c.b16 %v3637, %v3625
          %v4382 = vpack.c.b16 %v3638, %v3626
          %v4383 = vpack.c.b16 %v3639, %v3627
          %v4384 = vpack.c.b16 %v3640, %v3628
          %v4385 = vpack.c.b16 %v3641, %v3629
          %v4386 = vpack.c.b16 %v3642, %v3630
          %v4387 = vpack.c.b16 %v3643, %v3631
          %v4388 = vpack.c.b16 %v3644, %v3632
          %v4389 = vpack.c.b16 %v3645, %v3633
          %v4390 = vpack.c.b16 %v3658, %v3646
          %v4391 = vpack.c.b16 %v3659, %v3647
          %v4392 = vpack.c.b16 %v3660, %v3648
          %v4393 = vpack.c.b16 %v3661, %v3649
          %v4394 = vpack.c.b16 %v3662, %v3650
          %v4395 = vpack.c.b16 %v3663, %v3651
          %v4396 = vpack.c.b16 %v3664, %v3652
          %v4397 = vpack.c.b16 %v3665, %v3653
          %v4398 = vpack.c.b16 %v3666, %v3654
          %v4399 = vpack.c.b16 %v3667, %v3655
          %v4400 = vpack.c.b16 %v3668, %v3656
          %v4401 = vpack.c.b16 %v3669, %v3657
          %v4402 = vpack.c.b16 %v3682, %v3670
          %v4403 = vpack.c.b16 %v3683, %v3671
          %v4404 = vpack.c.b16 %v3684, %v3672
          %v4405 = vpack.c.b16 %v3685, %v3673
          %v4406 = vpack.c.b16 %v3686, %v3674
          %v4407 = vpack.c.b16 %v3687, %v3675
          %v4408 = vpack.c.b16 %v3688, %v3676
          %v4409 = vpack.c.b16 %v3689, %v3677
          %v4410 = vpack.c.b16 %v3690, %v3678
          %v4411 = vpack.c.b16 %v3691, %v3679
          %v4412 = vpack.c.b16 %v3692, %v3680
          %v4413 = vpack.c.b16 %v3693, %v3681
          %v4414 = vpack.c.b16 %v3706, %v3694
          %v4415 = vpack.c.b16 %v3707, %v3695
          %v4416 = vpack.c.b16 %v3708, %v3696
          %v4417 = vpack.c.b16 %v3709, %v3697
          %v4418 = vpack.c.b16 %v3710, %v3698
          %v4419 = vpack.c.b16 %v3711, %v3699
          %v4420 = vpack.c.b16 %v3712, %v3700
          %v4421 = vpack.c.b16 %v3713, %v3701
          %v4422 = vpack.c.b16 %v3714, %v3702
          %v4423 = vpack.c.b16 %v3715, %v3703
          %v4424 = vpack.c.b16 %v3716, %v3704
          %v4425 = vpack.c.b16 %v3717, %v3705
          %v4426 = vpack.c.b16 %v3730, %v3718
          %v4427 = vpack.c.b16 %v3731, %v3719
          %v4428 = vpack.c.b16 %v3732, %v3720
          %v4429 = vpack.c.b16 %v3733, %v3721
          %v4430 = vpack.c.b16 %v3734, %v3722
          %v4431 = vpack.c.b16 %v3735, %v3723
          %v4432 = vpack.c.b16 %v3736, %v3724
          %v4433 = vpack.c.b16 %v3737, %v3725
          %v4434 = vpack.c.b16 %v3738, %v3726
          %v4435 = vpack.c.b16 %v3739, %v3727
          %v4436 = vpack.c.b16 %v3740, %v3728
          %v4437 = vpack.c.b16 %v3741, %v3729
          %v4438 = vpack.c.b16 %v3754, %v3742
          %v4439 = vpack.c.b16 %v3755, %v3743
          %v4440 = vpack.c.b16 %v3756, %v3744
          %v4441 = vpack.c.b16 %v3757, %v3745
          %v4442 = vpack.c.b16 %v3758, %v3746
          %v4443 = vpack.c.b16 %v3759, %v3747
          %v4444 = vpack.c.b16 %v3760, %v3748
          %v4445 = vpack.c.b16 %v3761, %v3749
          %v4446 = vpack.c.b16 %v3762, %v3750
          %v4447 = vpack.c.b16 %v3763, %v3751
          %v4448 = vpack.c.b16 %v3764, %v3752
          %v4449 = vpack.c.b16 %v3765, %v3753
          %v4450 = vpack.c.b16 %v3778, %v3766
          %v4451 = vpack.c.b16 %v3779, %v3767
          %v4452 = vpack.c.b16 %v3780, %v3768
          %v4453 = vpack.c.b16 %v3781, %v3769
          %v4454 = vpack.c.b16 %v3782, %v3770
          %v4455 = vpack.c.b16 %v3783, %v3771
          %v4456 = vpack.c.b16 %v3784, %v3772
          %v4457 = vpack.c.b16 %v3785, %v3773
          %v4458 = vpack.c.b16 %v3786, %v3774
          %v4459 = vpack.c.b16 %v3787, %v3775
          %v4460 = vpack.c.b16 %v3788, %v3776
          %v4461 = vpack.c.b16 %v3789, %v3777
          %v4462 = vpack.c.b16 %v3802, %v3790
          %v4463 = vpack.c.b16 %v3803, %v3791
          %v4464 = vpack.c.b16 %v3804, %v3792
          %v4465 = vpack.c.b16 %v3805, %v3793
          %v4466 = vpack.c.b16 %v3806, %v3794
          %v4467 = vpack.c.b16 %v3807, %v3795
          %v4468 = vpack.c.b16 %v3808, %v3796
          %v4469 = vpack.c.b16 %v3809, %v3797
          %v4470 = vpack.c.b16 %v3810, %v3798
          %v4471 = vpack.c.b16 %v3811, %v3799
          %v4472 = vpack.c.b16 %v3812, %v3800
          %v4473 = vpack.c.b16 %v3813, %v3801
          %v4474 = vpack.c.b16 %v3826, %v3814
          %v4475 = vpack.c.b16 %v3827, %v3815
          %v4476 = vpack.c.b16 %v3828, %v3816
          %v4477 = vpack.c.b16 %v3829, %v3817
          %v4478 = vpack.c.b16 %v3830, %v3818
          %v4479 = vpack.c.b16 %v3831, %v3819
          %v4480 = vpack.c.b16 %v3832, %v3820
          %v4481 = vpack.c.b16 %v3833, %v3821
          %v4482 = vpack.c.b16 %v3834, %v3822
          %v4483 = vpack.c.b16 %v3835, %v3823
          %v4484 = vpack.c.b16 %v3836, %v3824
          %v4485 = vpack.c.b16 %v3837, %v3825
          %v4486 = vpack.c.b16 %v3850, %v3838
          %v4487 = vpack.c.b16 %v3851, %v3839
          %v4488 = vpack.c.b16 %v3852, %v3840
          %v4489 = vpack.c.b16 %v3853, %v3841
          %v4490 = vpack.c.b16 %v3854, %v3842
          %v4491 = vpack.c.b16 %v3855, %v3843
          %v4492 = vpack.c.b16 %v3856, %v3844
          %v4493 = vpack.c.b16 %v3857, %v3845
          %v4494 = vpack.c.b16 %v3858, %v3846
          %v4495 = vpack.c.b16 %v3859, %v3847
          %v4496 = vpack.c.b16 %v3860, %v3848
          %v4497 = vpack.c.b16 %v3861, %v3849
          %v4498 = vpack.c.b16 %v3874, %v3862
          %v4499 = vpack.c.b16 %v3875, %v3863
          %v4500 = vpack.c.b16 %v3876, %v3864
          %v4501 = vpack.c.b16 %v3877, %v3865
          %v4502 = vpack.c.b16 %v3878, %v3866
          %v4503 = vpack.c.b16 %v3879, %v3867
          %v4504 = vpack.c.b16 %v3880, %v3868
          %v4505 = vpack.c.b16 %v3881, %v3869
          %v4506 = vpack.c.b16 %v3882, %v3870
          %v4507 = vpack.c.b16 %v3883, %v3871
          %v4508 = vpack.c.b16 %v3884, %v3872
          %v4509 = vpack.c.b16 %v3885, %v3873
          %v4510 = vpack.c.b16 %v3898, %v3886
          %v4511 = vpack.c.b16 %v3899, %v3887
          %v4512 = vpack.c.b16 %v3900, %v3888
          %v4513 = vpack.c.b16 %v3901, %v3889
          %v4514 = vpack.c.b16 %v3902, %v3890
          %v4515 = vpack.c.b16 %v3903, %v3891
          %v4516 = vpack.c.b16 %v3904, %v3892
          %v4517 = vpack.c.b16 %v3905, %v3893
          %v4518 = vpack.c.b16 %v3906, %v3894
          %v4519 = vpack.c.b16 %v3907, %v3895
          %v4520 = vpack.c.b16 %v3908, %v3896
          %v4521 = vpack.c.b16 %v3909, %v3897
          %v4522 = vpack.c.b16 %v3922, %v3910
          %v4523 = vpack.c.b16 %v3923, %v3911
          %v4524 = vpack.c.b16 %v3924, %v3912
          %v4525 = vpack.c.b16 %v3925, %v3913
          %v4526 = vpack.c.b16 %v3926, %v3914
          %v4527 = vpack.c.b16 %v3927, %v3915
          %v4528 = vpack.c.b16 %v3928, %v3916
          %v4529 = vpack.c.b16 %v3929, %v3917
          %v4530 = vpack.c.b16 %v3930, %v3918
          %v4531 = vpack.c.b16 %v3931, %v3919
          %v4532 = vpack.c.b16 %v3932, %v3920
          %v4533 = vpack.c.b16 %v3933, %v3921
          %v4534 = vpack.c.b16 %v3946, %v3934
          %v4535 = vpack.c.b16 %v3947, %v3935
          %v4536 = vpack.c.b16 %v3948, %v3936
          %v4537 = vpack.c.b16 %v3949, %v3937
          %v4538 = vpack.c.b16 %v3950, %v3938
          %v4539 = vpack.c.b16 %v3951, %v3939
          %v4540 = vpack.c.b16 %v3952, %v3940
          %v4541 = vpack.c.b16 %v3953, %v3941
          %v4542 = vpack.c.b16 %v3954, %v3942
          %v4543 = vpack.c.b16 %v3955, %v3943
          %v4544 = vpack.c.b16 %v3956, %v3944
          %v4545 = vpack.c.b16 %v3957, %v3945
          %v4546 = vpack.c.b16 %v3970, %v3958
          %v4547 = vpack.c.b16 %v3971, %v3959
          %v4548 = vpack.c.b16 %v3972, %v3960
          %v4549 = vpack.c.b16 %v3973, %v3961
          %v4550 = vpack.c.b16 %v3974, %v3962
          %v4551 = vpack.c.b16 %v3975, %v3963
          %v4552 = vpack.c.b16 %v3976, %v3964
          %v4553 = vpack.c.b16 %v3977, %v3965
          %v4554 = vpack.c.b16 %v3978, %v3966
          %v4555 = vpack.c.b16 %v3979, %v3967
          %v4556 = vpack.c.b16 %v3980, %v3968
          %v4557 = vpack.c.b16 %v3981, %v3969
          %v4558 = vpack.c.b16 %v3994, %v3982
          %v4559 = vpack.c.b16 %v3995, %v3983
          %v4560 = vpack.c.b16 %v3996, %v3984
          %v4561 = vpack.c.b16 %v3997, %v3985
          %v4562 = vpack.c.b16 %v3998, %v3986
          %v4563 = vpack.c.b16 %v3999, %v3987
          %v4564 = vpack.c.b16 %v4000, %v3988
          %v4565 = vpack.c.b16 %v4001, %v3989
          %v4566 = vpack.c.b16 %v4002, %v3990
          %v4567 = vpack.c.b16 %v4003, %v3991
          %v4568 = vpack.c.b16 %v4004, %v3992
          %v4569 = vpack.c.b16 %v4005, %v3993
          %v4570 = vpack.c.b16 %v4018, %v4006
          %v4571 = vpack.c.b16 %v4019, %v4007
          %v4572 = vpack.c.b16 %v4020, %v4008
          %v4573 = vpack.c.b16 %v4021, %v4009
          %v4574 = vpack.c.b16 %v4022, %v4010
          %v4575 = vpack.c.b16 %v4023, %v4011
          %v4576 = vpack.c.b16 %v4024, %v4012
          %v4577 = vpack.c.b16 %v4025, %v4013
          %v4578 = vpack.c.b16 %v4026, %v4014
          %v4579 = vpack.c.b16 %v4027, %v4015
          %v4580 = vpack.c.b16 %v4028, %v4016
          %v4581 = vpack.c.b16 %v4029, %v4017
          %v4582 = vpack.c.b16 %v4042, %v4030
          %v4583 = vpack.c.b16 %v4043, %v4031
          %v4584 = vpack.c.b16 %v4044, %v4032
          %v4585 = vpack.c.b16 %v4045, %v4033
          %v4586 = vpack.c.b16 %v4046, %v4034
          %v4587 = vpack.c.b16 %v4047, %v4035
          %v4588 = vpack.c.b16 %v4048, %v4036
          %v4589 = vpack.c.b16 %v4049, %v4037
          %v4590 = vpack.c.b16 %v4050, %v4038
          %v4591 = vpack.c.b16 %v4051, %v4039
          %v4592 = vpack.c.b16 %v4052, %v4040
          %v4593 = vpack.c.b16 %v4053, %v4041
          %v4594 = vpack.c.b16 %v4066, %v4054
          %v4595 = vpack.c.b16 %v4067, %v4055
          %v4596 = vpack.c.b16 %v4068, %v4056
          %v4597 = vpack.c.b16 %v4069, %v4057
          %v4598 = vpack.c.b16 %v4070, %v4058
          %v4599 = vpack.c.b16 %v4071, %v4059
          %v4600 = vpack.c.b16 %v4072, %v4060
          %v4601 = vpack.c.b16 %v4073, %v4061
          %v4602 = vpack.c.b16 %v4074, %v4062
          %v4603 = vpack.c.b16 %v4075, %v4063
          %v4604 = vpack.c.b16 %v4076, %v4064
          %v4605 = vpack.c.b16 %v4077, %v4065
          %v4606 = vpack.c.b16 %v4090, %v4078
          %v4607 = vpack.c.b16 %v4091, %v4079
          %v4608 = vpack.c.b16 %v4092, %v4080
          %v4609 = vpack.c.b16 %v4093, %v4081
          %v4610 = vpack.c.b16 %v4094, %v4082
          %v4611 = vpack.c.b16 %v4095, %v4083
          %v4612 = vpack.c.b16 %v4096, %v4084
          %v4613 = vpack.c.b16 %v4097, %v4085
          %v4614 = vpack.c.b16 %v4098, %v4086
          %v4615 = vpack.c.b16 %v4099, %v4087
          %v4616 = vpack.c.b16 %v4100, %v4088
          %v4617 = vpack.c.b16 %v4101, %v4089
          %v4618 = vpack.c.b16 %v4114, %v4102
          %v4619 = vpack.c.b16 %v4115, %v4103
          %v4620 = vpack.c.b16 %v4116, %v4104
          %v4621 = vpack.c.b16 %v4117, %v4105
          %v4622 = vpack.c.b16 %v4118, %v4106
          %v4623 = vpack.c.b16 %v4119, %v4107
          %v4624 = vpack.c.b16 %v4120, %v4108
          %v4625 = vpack.c.b16 %v4121, %v4109
          %v4626 = vpack.c.b16 %v4122, %v4110
          %v4627 = vpack.c.b16 %v4123, %v4111
          %v4628 = vpack.c.b16 %v4124, %v4112
          %v4629 = vpack.c.b16 %v4125, %v4113
          %v4630 = vpack.c.b16 %v4138, %v4126
          %v4631 = vpack.c.b16 %v4139, %v4127
          %v4632 = vpack.c.b16 %v4140, %v4128
          %v4633 = vpack.c.b16 %v4141, %v4129
          %v4634 = vpack.c.b16 %v4142, %v4130
          %v4635 = vpack.c.b16 %v4143, %v4131
          %v4636 = vpack.c.b16 %v4144, %v4132
          %v4637 = vpack.c.b16 %v4145, %v4133
          %v4638 = vpack.c.b16 %v4146, %v4134
          %v4639 = vpack.c.b16 %v4147, %v4135
          %v4640 = vpack.c.b16 %v4148, %v4136
          %v4641 = vpack.c.b16 %v4149, %v4137
          %v4642 = vpack.c.b16 %v4162, %v4150
          %v4643 = vpack.c.b16 %v4163, %v4151
          %v4644 = vpack.c.b16 %v4164, %v4152
          %v4645 = vpack.c.b16 %v4165, %v4153
          %v4646 = vpack.c.b16 %v4166, %v4154
          %v4647 = vpack.c.b16 %v4167, %v4155
          %v4648 = vpack.c.b16 %v4168, %v4156
          %v4649 = vpack.c.b16 %v4169, %v4157
          %v4650 = vpack.c.b16 %v4170, %v4158
          %v4651 = vpack.c.b16 %v4171, %v4159
          %v4652 = vpack.c.b16 %v4172, %v4160
          %v4653 = vpack.c.b16 %v4173, %v4161
          %v4654 = vpack.c.b16 %v4186, %v4174
          %v4655 = vpack.c.b16 %v4187, %v4175
          %v4656 = vpack.c.b16 %v4188, %v4176
          %v4657 = vpack.c.b16 %v4189, %v4177
          %v4658 = vpack.c.b16 %v4190, %v4178
          %v4659 = vpack.c.b16 %v4191, %v4179
          %v4660 = vpack.c.b16 %v4192, %v4180
          %v4661 = vpack.c.b16 %v4193, %v4181
          %v4662 = vpack.c.b16 %v4194, %v4182
          %v4663 = vpack.c.b16 %v4195, %v4183
          %v4664 = vpack.c.b16 %v4196, %v4184
          %v4665 = vpack.c.b16 %v4197, %v4185
          %v4666 = vpack.c.b16 %v4210, %v4198
          %v4667 = vpack.c.b16 %v4211, %v4199
          %v4668 = vpack.c.b16 %v4212, %v4200
          %v4669 = vpack.c.b16 %v4213, %v4201
          %v4670 = vpack.c.b16 %v4214, %v4202
          %v4671 = vpack.c.b16 %v4215, %v4203
          %v4672 = vpack.c.b16 %v4216, %v4204
          %v4673 = vpack.c.b16 %v4217, %v4205
          %v4674 = vpack.c.b16 %v4218, %v4206
          %v4675 = vpack.c.b16 %v4219, %v4207
          %v4676 = vpack.c.b16 %v4220, %v4208
          %v4677 = vpack.c.b16 %v4221, %v4209
          %v4678 = vpack.c.b16 %v4234, %v4222
          %v4679 = vpack.c.b16 %v4235, %v4223
          %v4680 = vpack.c.b16 %v4236, %v4224
          %v4681 = vpack.c.b16 %v4237, %v4225
          %v4682 = vpack.c.b16 %v4238, %v4226
          %v4683 = vpack.c.b16 %v4239, %v4227
          %v4684 = vpack.c.b16 %v4240, %v4228
          %v4685 = vpack.c.b16 %v4241, %v4229
          %v4686 = vpack.c.b16 %v4242, %v4230
          %v4687 = vpack.c.b16 %v4243, %v4231
          %v4688 = vpack.c.b16 %v4244, %v4232
          %v4689 = vpack.c.b16 %v4245, %v4233
          %v4690 = vpack.c.b16 %v4258, %v4246
          %v4691 = vpack.c.b16 %v4259, %v4247
          %v4692 = vpack.c.b16 %v4260, %v4248
          %v4693 = vpack.c.b16 %v4261, %v4249
          %v4694 = vpack.c.b16 %v4262, %v4250
          %v4695 = vpack.c.b16 %v4263, %v4251
          %v4696 = vpack.c.b16 %v4264, %v4252
          %v4697 = vpack.c.b16 %v4265, %v4253
          %v4698 = vpack.c.b16 %v4266, %v4254
          %v4699 = vpack.c.b16 %v4267, %v4255
          %v4700 = vpack.c.b16 %v4268, %v4256
          %v4701 = vpack.c.b16 %v4269, %v4257
          %v4702 = vpack.c.b16 %v4282, %v4270
          %v4703 = vpack.c.b16 %v4283, %v4271
          %v4704 = vpack.c.b16 %v4284, %v4272
          %v4705 = vpack.c.b16 %v4285, %v4273
          %v4706 = vpack.c.b16 %v4286, %v4274
          %v4707 = vpack.c.b16 %v4287, %v4275
          %v4708 = vpack.c.b16 %v4288, %v4276
          %v4709 = vpack.c.b16 %v4289, %v4277
          %v4710 = vpack.c.b16 %v4290, %v4278
          %v4711 = vpack.c.b16 %v4291, %v4279
          %v4712 = vpack.c.b16 %v4292, %v4280
          %v4713 = vpack.c.b16 %v4293, %v4281
          %v4714 = vpack.c.b16 %v4306, %v4294
          %v4715 = vpack.c.b16 %v4307, %v4295
          %v4716 = vpack.c.b16 %v4308, %v4296
          %v4717 = vpack.c.b16 %v4309, %v4297
          %v4718 = vpack.c.b16 %v4310, %v4298
          %v4719 = vpack.c.b16 %v4311, %v4299
          %v4720 = vpack.c.b16 %v4312, %v4300
          %v4721 = vpack.c.b16 %v4313, %v4301
          %v4722 = vpack.c.b16 %v4314, %v4302
          %v4723 = vpack.c.b16 %v4315, %v4303
          %v4724 = vpack.c.b16 %v4316, %v4304
          %v4725 = vpack.c.b16 %v4317, %v4305
          %v4726 = vpack.c.b16 %v4330, %v4318
          %v4727 = vpack.c.b16 %v4331, %v4319
          %v4728 = vpack.c.b16 %v4332, %v4320
          %v4729 = vpack.c.b16 %v4333, %v4321
          %v4730 = vpack.c.b16 %v4334, %v4322
          %v4731 = vpack.c.b16 %v4335, %v4323
          %v4732 = vpack.c.b16 %v4336, %v4324
          %v4733 = vpack.c.b16 %v4337, %v4325
          %v4734 = vpack.c.b16 %v4338, %v4326
          %v4735 = vpack.c.b16 %v4339, %v4327
          %v4736 = vpack.c.b16 %v4340, %v4328
          %v4737 = vpack.c.b16 %v4341, %v4329
          %v4738 = vpack.c.b16 %v4354, %v4342
          %v4739 = vpack.c.b16 %v4355, %v4343
          %v4740 = vpack.c.b16 %v4356, %v4344
          %v4741 = vpack.c.b16 %v4357, %v4345
          %v4742 = vpack.c.b16 %v4358, %v4346
          %v4743 = vpack.c.b16 %v4359, %v4347
          %v4744 = vpack.c.b16 %v4360, %v4348
          %v4745 = vpack.c.b16 %v4361, %v4349
          %v4746 = vpack.c.b16 %v4362, %v4350
          %v4747 = vpack.c.b16 %v4363, %v4351
          %v4748 = vpack.c.b16 %v4364, %v4352
          %v4749 = vpack.c.b16 %v4365, %v4353
          %5134 = vmatprep.subr.bf16.mxu0 %v4367
          %5135 = vmatpush1.bf16.msra.mxu0 %v4366
          %5136 = vmatprep.subr.bf16.mxu0 %v4379
          %5137 = vmatpush1.bf16.msra.mxu0 %v4378
          %5138 = vmatprep.subr.bf16.mxu0 %v4391
          %5139 = vmatpush1.bf16.msra.mxu0 %v4390
          %5140 = vmatprep.subr.bf16.mxu0 %v4403
          %5141 = vmatpush1.bf16.msra.mxu0 %v4402
          %5142 = vmatprep.subr.bf16.mxu0 %v4415
          %5143 = vmatpush1.bf16.msra.mxu0 %v4414
          %5144 = vmatprep.subr.bf16.mxu0 %v4427
          %5145 = vmatpush1.bf16.msra.mxu0 %v4426
          %5146 = vmatprep.subr.bf16.mxu0 %v4439
          %5147 = vmatpush1.bf16.msra.mxu0 %v4438
          %5148 = vmatprep.subr.bf16.mxu0 %v4451
          %5149 = vmatpush1.bf16.msra.mxu0 %v4450
          %5150 = vmatprep.subr.bf16.mxu0 %v4463
          %5151 = vmatpush1.bf16.msra.mxu0 %v4462
          %5152 = vmatprep.subr.bf16.mxu0 %v4475
          %5153 = vmatpush1.bf16.msra.mxu0 %v4474
          %5154 = vmatprep.subr.bf16.mxu0 %v4487
          %5155 = vmatpush1.bf16.msra.mxu0 %v4486
          %5156 = vmatprep.subr.bf16.mxu0 %v4499
          %5157 = vmatpush1.bf16.msra.mxu0 %v4498
          %5158 = vmatprep.subr.bf16.mxu0 %v4511
          %5159 = vmatpush1.bf16.msra.mxu0 %v4510
          %5160 = vmatprep.subr.bf16.mxu0 %v4523
          %5161 = vmatpush1.bf16.msra.mxu0 %v4522
          %5162 = vmatprep.subr.bf16.mxu0 %v4535
          %5163 = vmatpush1.bf16.msra.mxu0 %v4534
          %5164 = vmatprep.subr.bf16.mxu0 %v4547
          %5165 = vmatpush1.bf16.msra.mxu0 %v4546
          %5166 = vmatprep.mubr.bf16.mxu0 %v2763
          %5167 = vmatmul.mubr.bf16.gmra.mrb[0].mxu0 %v2762
          %v5168 = vpop.f32.mrb[0].mxu0
          %v5169 = vadd.f32 %v3157, %v5168
          %v5170 = vpop.f32.mrb[0].mxu0
          %v5171 = vadd.f32 %v3161, %v5170
          %v5172 = vpop.f32.mrb[0].mxu0
          %v5173 = vpop.f32.mrb[0].mxu0
          %5174 = vdwg.mxu0
          %5175 = vmatprep.subr.bf16.mxu0 %v4559
          %5176 = vmatpush1.bf16.msra.mxu0 %v4558
          %5177 = vmatprep.subr.bf16.mxu0 %v4571
          %5178 = vmatpush1.bf16.msra.mxu0 %v4570
          %5179 = vmatprep.subr.bf16.mxu0 %v4583
          %5180 = vmatpush1.bf16.msra.mxu0 %v4582
          %5181 = vmatprep.subr.bf16.mxu0 %v4595
          %5182 = vmatpush1.bf16.msra.mxu0 %v4594
          %5183 = vmatprep.subr.bf16.mxu0 %v4607
          %5184 = vmatpush1.bf16.msra.mxu0 %v4606
          %5185 = vmatprep.subr.bf16.mxu0 %v4619
          %5186 = vmatpush1.bf16.msra.mxu0 %v4618
          %5187 = vmatprep.subr.bf16.mxu0 %v4631
          %5188 = vmatpush1.bf16.msra.mxu0 %v4630
          %5189 = vmatprep.subr.bf16.mxu0 %v4643
          %5190 = vmatpush1.bf16.msra.mxu0 %v4642
          %5191 = vmatprep.subr.bf16.mxu0 %v4655
          %5192 = vmatpush1.bf16.msra.mxu0 %v4654
          %5193 = vmatprep.subr.bf16.mxu0 %v4667
          %5194 = vmatpush1.bf16.msra.mxu0 %v4666
          %5195 = vmatprep.subr.bf16.mxu0 %v4679
          %5196 = vmatpush1.bf16.msra.mxu0 %v4678
          %5197 = vmatprep.subr.bf16.mxu0 %v4691
          %5198 = vmatpush1.bf16.msra.mxu0 %v4690
          %5199 = vmatprep.subr.bf16.mxu0 %v4703
          %5200 = vmatpush1.bf16.msra.mxu0 %v4702
          %5201 = vmatprep.subr.bf16.mxu0 %v4715
          %5202 = vmatpush1.bf16.msra.mxu0 %v4714
          %5203 = vmatprep.subr.bf16.mxu0 %v4727
          %5204 = vmatpush1.bf16.msra.mxu0 %v4726
          %5205 = vmatprep.subr.bf16.mxu0 %v4739
          %5206 = vmatpush1.bf16.msra.mxu0 %v4738
          %5207 = vmatprep.mubr.bf16.mxu0 %v2765
          %5208 = vmatmul.mubr.bf16.gmra.mrb[0].mxu0 %v2764
          %v5209 = vpop.f32.mrb[0].mxu0
          %v5210 = vadd.f32 %v5169, %v5209
          %v5211 = vpop.f32.mrb[0].mxu0
          %v5212 = vadd.f32 %v5171, %v5211
          %v5213 = vpop.f32.mrb[0].mxu0
          %v5214 = vpop.f32.mrb[0].mxu0
          %5215 = vdwg.mxu0
          %5216 = vmatprep.subr.bf16.mxu0 %v4369
          %5217 = vmatpush1.bf16.msra.mxu0 %v4368
          %5218 = vmatprep.subr.bf16.mxu0 %v4381
          %5219 = vmatpush1.bf16.msra.mxu0 %v4380
          %5220 = vmatprep.subr.bf16.mxu0 %v4393
          %5221 = vmatpush1.bf16.msra.mxu0 %v4392
          %5222 = vmatprep.subr.bf16.mxu0 %v4405
          %5223 = vmatpush1.bf16.msra.mxu0 %v4404
          %5224 = vmatprep.subr.bf16.mxu0 %v4417
          %5225 = vmatpush1.bf16.msra.mxu0 %v4416
          %5226 = vmatprep.subr.bf16.mxu0 %v4429
          %5227 = vmatpush1.bf16.msra.mxu0 %v4428
          %5228 = vmatprep.subr.bf16.mxu0 %v4441
          %5229 = vmatpush1.bf16.msra.mxu0 %v4440
          %5230 = vmatprep.subr.bf16.mxu0 %v4453
          %5231 = vmatpush1.bf16.msra.mxu0 %v4452
          %5232 = vmatprep.subr.bf16.mxu0 %v4465
          %5233 = vmatpush1.bf16.msra.mxu0 %v4464
          %5234 = vmatprep.subr.bf16.mxu0 %v4477
          %5235 = vmatpush1.bf16.msra.mxu0 %v4476
          %5236 = vmatprep.subr.bf16.mxu0 %v4489
          %5237 = vmatpush1.bf16.msra.mxu0 %v4488
          %5238 = vmatprep.subr.bf16.mxu0 %v4501
          %5239 = vmatpush1.bf16.msra.mxu0 %v4500
          %5240 = vmatprep.subr.bf16.mxu0 %v4513
          %5241 = vmatpush1.bf16.msra.mxu0 %v4512
          %5242 = vmatprep.subr.bf16.mxu0 %v4525
          %5243 = vmatpush1.bf16.msra.mxu0 %v4524
          %5244 = vmatprep.subr.bf16.mxu0 %v4537
          %5245 = vmatpush1.bf16.msra.mxu0 %v4536
          %5246 = vmatprep.subr.bf16.mxu0 %v4549
          %5247 = vmatpush1.bf16.msra.mxu0 %v4548
          %5248 = vmatprep.mubr.bf16.mxu0 %v2763
          %5249 = vmatmul.mubr.bf16.gmra.mrb[0].mxu0 %v2762
          %v5250 = vpop.f32.mrb[0].mxu0
          %v5251 = vadd.f32 %v3165, %v5250
          %v5252 = vpop.f32.mrb[0].mxu0
          %v5253 = vadd.f32 %v3169, %v5252
          %v5254 = vpop.f32.mrb[0].mxu0
          %v5255 = vpop.f32.mrb[0].mxu0
          %5256 = vdwg.mxu0
          %5257 = vmatprep.subr.bf16.mxu0 %v4561
          %5258 = vmatpush1.bf16.msra.mxu0 %v4560
          %5259 = vmatprep.subr.bf16.mxu0 %v4573
          %5260 = vmatpush1.bf16.msra.mxu0 %v4572
          %5261 = vmatprep.subr.bf16.mxu0 %v4585
          %5262 = vmatpush1.bf16.msra.mxu0 %v4584
          %5263 = vmatprep.subr.bf16.mxu0 %v4597
          %5264 = vmatpush1.bf16.msra.mxu0 %v4596
          %5265 = vmatprep.subr.bf16.mxu0 %v4609
          %5266 = vmatpush1.bf16.msra.mxu0 %v4608
          %5267 = vmatprep.subr.bf16.mxu0 %v4621
          %5268 = vmatpush1.bf16.msra.mxu0 %v4620
          %5269 = vmatprep.subr.bf16.mxu0 %v4633
          %5270 = vmatpush1.bf16.msra.mxu0 %v4632
          %5271 = vmatprep.subr.bf16.mxu0 %v4645
          %5272 = vmatpush1.bf16.msra.mxu0 %v4644
          %5273 = vmatprep.subr.bf16.mxu0 %v4657
          %5274 = vmatpush1.bf16.msra.mxu0 %v4656
          %5275 = vmatprep.subr.bf16.mxu0 %v4669
          %5276 = vmatpush1.bf16.msra.mxu0 %v4668
          %5277 = vmatprep.subr.bf16.mxu0 %v4681
          %5278 = vmatpush1.bf16.msra.mxu0 %v4680
          %5279 = vmatprep.subr.bf16.mxu0 %v4693
          %5280 = vmatpush1.bf16.msra.mxu0 %v4692
          %5281 = vmatprep.subr.bf16.mxu0 %v4705
          %5282 = vmatpush1.bf16.msra.mxu0 %v4704
          %5283 = vmatprep.subr.bf16.mxu0 %v4717
          %5284 = vmatpush1.bf16.msra.mxu0 %v4716
          %5285 = vmatprep.subr.bf16.mxu0 %v4729
          %5286 = vmatpush1.bf16.msra.mxu0 %v4728
          %5287 = vmatprep.subr.bf16.mxu0 %v4741
          %5288 = vmatpush1.bf16.msra.mxu0 %v4740
          %5289 = vmatprep.mubr.bf16.mxu0 %v2765
          %5290 = vmatmul.mubr.bf16.gmra.mrb[0].mxu0 %v2764
          %v5291 = vpop.f32.mrb[0].mxu0
          %v5292 = vadd.f32 %v5251, %v5291
          %v5293 = vpop.f32.mrb[0].mxu0
          %v5294 = vadd.f32 %v5253, %v5293
          %v5295 = vpop.f32.mrb[0].mxu0
          %v5296 = vpop.f32.mrb[0].mxu0
          %5297 = vdwg.mxu0
          %5298 = vmatprep.subr.bf16.mxu0 %v4371
          %5299 = vmatpush1.bf16.msra.mxu0 %v4370
          %5300 = vmatprep.subr.bf16.mxu0 %v4383
          %5301 = vmatpush1.bf16.msra.mxu0 %v4382
          %5302 = vmatprep.subr.bf16.mxu0 %v4395
          %5303 = vmatpush1.bf16.msra.mxu0 %v4394
          %5304 = vmatprep.subr.bf16.mxu0 %v4407
          %5305 = vmatpush1.bf16.msra.mxu0 %v4406
          %5306 = vmatprep.subr.bf16.mxu0 %v4419
          %5307 = vmatpush1.bf16.msra.mxu0 %v4418
          %5308 = vmatprep.subr.bf16.mxu0 %v4431
          %5309 = vmatpush1.bf16.msra.mxu0 %v4430
          %5310 = vmatprep.subr.bf16.mxu0 %v4443
          %5311 = vmatpush1.bf16.msra.mxu0 %v4442
          %5312 = vmatprep.subr.bf16.mxu0 %v4455
          %5313 = vmatpush1.bf16.msra.mxu0 %v4454
          %5314 = vmatprep.subr.bf16.mxu0 %v4467
          %5315 = vmatpush1.bf16.msra.mxu0 %v4466
          %5316 = vmatprep.subr.bf16.mxu0 %v4479
          %5317 = vmatpush1.bf16.msra.mxu0 %v4478
          %5318 = vmatprep.subr.bf16.mxu0 %v4491
          %5319 = vmatpush1.bf16.msra.mxu0 %v4490
          %5320 = vmatprep.subr.bf16.mxu0 %v4503
          %5321 = vmatpush1.bf16.msra.mxu0 %v4502
          %5322 = vmatprep.subr.bf16.mxu0 %v4515
          %5323 = vmatpush1.bf16.msra.mxu0 %v4514
          %5324 = vmatprep.subr.bf16.mxu0 %v4527
          %5325 = vmatpush1.bf16.msra.mxu0 %v4526
          %5326 = vmatprep.subr.bf16.mxu0 %v4539
          %5327 = vmatpush1.bf16.msra.mxu0 %v4538
          %5328 = vmatprep.subr.bf16.mxu0 %v4551
          %5329 = vmatpush1.bf16.msra.mxu0 %v4550
          %5330 = vmatprep.mubr.bf16.mxu0 %v2763
          %5331 = vmatmul.mubr.bf16.gmra.mrb[0].mxu0 %v2762
          %v5332 = vpop.f32.mrb[0].mxu0
          %v5333 = vadd.f32 %v3173, %v5332
          %v5334 = vpop.f32.mrb[0].mxu0
          %v5335 = vadd.f32 %v3177, %v5334
          %v5336 = vpop.f32.mrb[0].mxu0
          %v5337 = vpop.f32.mrb[0].mxu0
          %5338 = vdwg.mxu0
          %5339 = vmatprep.subr.bf16.mxu0 %v4563
          %5340 = vmatpush1.bf16.msra.mxu0 %v4562
          %5341 = vmatprep.subr.bf16.mxu0 %v4575
          %5342 = vmatpush1.bf16.msra.mxu0 %v4574
          %5343 = vmatprep.subr.bf16.mxu0 %v4587
          %5344 = vmatpush1.bf16.msra.mxu0 %v4586
          %5345 = vmatprep.subr.bf16.mxu0 %v4599
          %5346 = vmatpush1.bf16.msra.mxu0 %v4598
          %5347 = vmatprep.subr.bf16.mxu0 %v4611
          %5348 = vmatpush1.bf16.msra.mxu0 %v4610
          %5349 = vmatprep.subr.bf16.mxu0 %v4623
          %5350 = vmatpush1.bf16.msra.mxu0 %v4622
          %5351 = vmatprep.subr.bf16.mxu0 %v4635
          %5352 = vmatpush1.bf16.msra.mxu0 %v4634
          %5353 = vmatprep.subr.bf16.mxu0 %v4647
          %5354 = vmatpush1.bf16.msra.mxu0 %v4646
          %5355 = vmatprep.subr.bf16.mxu0 %v4659
          %5356 = vmatpush1.bf16.msra.mxu0 %v4658
          %5357 = vmatprep.subr.bf16.mxu0 %v4671
          %5358 = vmatpush1.bf16.msra.mxu0 %v4670
          %5359 = vmatprep.subr.bf16.mxu0 %v4683
          %5360 = vmatpush1.bf16.msra.mxu0 %v4682
          %5361 = vmatprep.subr.bf16.mxu0 %v4695
          %5362 = vmatpush1.bf16.msra.mxu0 %v4694
          %5363 = vmatprep.subr.bf16.mxu0 %v4707
          %5364 = vmatpush1.bf16.msra.mxu0 %v4706
          %5365 = vmatprep.subr.bf16.mxu0 %v4719
          %5366 = vmatpush1.bf16.msra.mxu0 %v4718
          %5367 = vmatprep.subr.bf16.mxu0 %v4731
          %5368 = vmatpush1.bf16.msra.mxu0 %v4730
          %5369 = vmatprep.subr.bf16.mxu0 %v4743
          %5370 = vmatpush1.bf16.msra.mxu0 %v4742
          %5371 = vmatprep.mubr.bf16.mxu0 %v2765
          %5372 = vmatmul.mubr.bf16.gmra.mrb[0].mxu0 %v2764
          %v5373 = vpop.f32.mrb[0].mxu0
          %v5374 = vadd.f32 %v5333, %v5373
          %v5375 = vpop.f32.mrb[0].mxu0
          %v5376 = vadd.f32 %v5335, %v5375
          %v5377 = vpop.f32.mrb[0].mxu0
          %v5378 = vpop.f32.mrb[0].mxu0
          %5379 = vdwg.mxu0
          %5380 = vmatprep.subr.bf16.mxu0 %v4373
          %5381 = vmatpush1.bf16.msra.mxu0 %v4372
          %5382 = vmatprep.subr.bf16.mxu0 %v4385
          %5383 = vmatpush1.bf16.msra.mxu0 %v4384
          %5384 = vmatprep.subr.bf16.mxu0 %v4397
          %5385 = vmatpush1.bf16.msra.mxu0 %v4396
          %5386 = vmatprep.subr.bf16.mxu0 %v4409
          %5387 = vmatpush1.bf16.msra.mxu0 %v4408
          %5388 = vmatprep.subr.bf16.mxu0 %v4421
          %5389 = vmatpush1.bf16.msra.mxu0 %v4420
          %5390 = vmatprep.subr.bf16.mxu0 %v4433
          %5391 = vmatpush1.bf16.msra.mxu0 %v4432
          %5392 = vmatprep.subr.bf16.mxu0 %v4445
          %5393 = vmatpush1.bf16.msra.mxu0 %v4444
          %5394 = vmatprep.subr.bf16.mxu0 %v4457
          %5395 = vmatpush1.bf16.msra.mxu0 %v4456
          %5396 = vmatprep.subr.bf16.mxu0 %v4469
          %5397 = vmatpush1.bf16.msra.mxu0 %v4468
          %5398 = vmatprep.subr.bf16.mxu0 %v4481
          %5399 = vmatpush1.bf16.msra.mxu0 %v4480
          %5400 = vmatprep.subr.bf16.mxu0 %v4493
          %5401 = vmatpush1.bf16.msra.mxu0 %v4492
          %5402 = vmatprep.subr.bf16.mxu0 %v4505
          %5403 = vmatpush1.bf16.msra.mxu0 %v4504
          %5404 = vmatprep.subr.bf16.mxu0 %v4517
          %5405 = vmatpush1.bf16.msra.mxu0 %v4516
          %5406 = vmatprep.subr.bf16.mxu0 %v4529
          %5407 = vmatpush1.bf16.msra.mxu0 %v4528
          %5408 = vmatprep.subr.bf16.mxu0 %v4541
          %5409 = vmatpush1.bf16.msra.mxu0 %v4540
          %5410 = vmatprep.subr.bf16.mxu0 %v4553
          %5411 = vmatpush1.bf16.msra.mxu0 %v4552
          %5412 = vmatprep.mubr.bf16.mxu0 %v2763
          %5413 = vmatmul.mubr.bf16.gmra.mrb[0].mxu0 %v2762
          %v5414 = vpop.f32.mrb[0].mxu0
          %v5415 = vadd.f32 %v3181, %v5414
          %v5416 = vpop.f32.mrb[0].mxu0
          %v5417 = vadd.f32 %v3185, %v5416
          %v5418 = vpop.f32.mrb[0].mxu0
          %v5419 = vpop.f32.mrb[0].mxu0
          %5420 = vdwg.mxu0
          %5421 = vmatprep.subr.bf16.mxu0 %v4565
          %5422 = vmatpush1.bf16.msra.mxu0 %v4564
          %5423 = vmatprep.subr.bf16.mxu0 %v4577
          %5424 = vmatpush1.bf16.msra.mxu0 %v4576
          %5425 = vmatprep.subr.bf16.mxu0 %v4589
          %5426 = vmatpush1.bf16.msra.mxu0 %v4588
          %5427 = vmatprep.subr.bf16.mxu0 %v4601
          %5428 = vmatpush1.bf16.msra.mxu0 %v4600
          %5429 = vmatprep.subr.bf16.mxu0 %v4613
          %5430 = vmatpush1.bf16.msra.mxu0 %v4612
          %5431 = vmatprep.subr.bf16.mxu0 %v4625
          %5432 = vmatpush1.bf16.msra.mxu0 %v4624
          %5433 = vmatprep.subr.bf16.mxu0 %v4637
          %5434 = vmatpush1.bf16.msra.mxu0 %v4636
          %5435 = vmatprep.subr.bf16.mxu0 %v4649
          %5436 = vmatpush1.bf16.msra.mxu0 %v4648
          %5437 = vmatprep.subr.bf16.mxu0 %v4661
          %5438 = vmatpush1.bf16.msra.mxu0 %v4660
          %5439 = vmatprep.subr.bf16.mxu0 %v4673
          %5440 = vmatpush1.bf16.msra.mxu0 %v4672
          %5441 = vmatprep.subr.bf16.mxu0 %v4685
          %5442 = vmatpush1.bf16.msra.mxu0 %v4684
          %5443 = vmatprep.subr.bf16.mxu0 %v4697
          %5444 = vmatpush1.bf16.msra.mxu0 %v4696
          %5445 = vmatprep.subr.bf16.mxu0 %v4709
          %5446 = vmatpush1.bf16.msra.mxu0 %v4708
          %5447 = vmatprep.subr.bf16.mxu0 %v4721
          %5448 = vmatpush1.bf16.msra.mxu0 %v4720
          %5449 = vmatprep.subr.bf16.mxu0 %v4733
          %5450 = vmatpush1.bf16.msra.mxu0 %v4732
          %5451 = vmatprep.subr.bf16.mxu0 %v4745
          %5452 = vmatpush1.bf16.msra.mxu0 %v4744
          %5453 = vmatprep.mubr.bf16.mxu0 %v2765
          %5454 = vmatmul.mubr.bf16.gmra.mrb[0].mxu0 %v2764
          %v5455 = vpop.f32.mrb[0].mxu0
          %v5456 = vadd.f32 %v5415, %v5455
          %v5457 = vpop.f32.mrb[0].mxu0
          %v5458 = vadd.f32 %v5417, %v5457
          %v5459 = vpop.f32.mrb[0].mxu0
          %v5460 = vpop.f32.mrb[0].mxu0
          %5461 = vdwg.mxu0
          %5462 = vmatprep.subr.bf16.mxu0 %v4375
          %5463 = vmatpush1.bf16.msra.mxu0 %v4374
          %5464 = vmatprep.subr.bf16.mxu0 %v4387
          %5465 = vmatpush1.bf16.msra.mxu0 %v4386
          %5466 = vmatprep.subr.bf16.mxu0 %v4399
          %5467 = vmatpush1.bf16.msra.mxu0 %v4398
          %5468 = vmatprep.subr.bf16.mxu0 %v4411
          %5469 = vmatpush1.bf16.msra.mxu0 %v4410
          %5470 = vmatprep.subr.bf16.mxu0 %v4423
          %5471 = vmatpush1.bf16.msra.mxu0 %v4422
          %5472 = vmatprep.subr.bf16.mxu0 %v4435
          %5473 = vmatpush1.bf16.msra.mxu0 %v4434
          %5474 = vmatprep.subr.bf16.mxu0 %v4447
          %5475 = vmatpush1.bf16.msra.mxu0 %v4446
          %5476 = vmatprep.subr.bf16.mxu0 %v4459
          %5477 = vmatpush1.bf16.msra.mxu0 %v4458
          %5478 = vmatprep.subr.bf16.mxu0 %v4471
          %5479 = vmatpush1.bf16.msra.mxu0 %v4470
          %5480 = vmatprep.subr.bf16.mxu0 %v4483
          %5481 = vmatpush1.bf16.msra.mxu0 %v4482
          %5482 = vmatprep.subr.bf16.mxu0 %v4495
          %5483 = vmatpush1.bf16.msra.mxu0 %v4494
          %5484 = vmatprep.subr.bf16.mxu0 %v4507
          %5485 = vmatpush1.bf16.msra.mxu0 %v4506
          %5486 = vmatprep.subr.bf16.mxu0 %v4519
          %5487 = vmatpush1.bf16.msra.mxu0 %v4518
          %5488 = vmatprep.subr.bf16.mxu0 %v4531
          %5489 = vmatpush1.bf16.msra.mxu0 %v4530
          %5490 = vmatprep.subr.bf16.mxu0 %v4543
          %5491 = vmatpush1.bf16.msra.mxu0 %v4542
          %5492 = vmatprep.subr.bf16.mxu0 %v4555
          %5493 = vmatpush1.bf16.msra.mxu0 %v4554
          %5494 = vmatprep.mubr.bf16.mxu0 %v2763
          %5495 = vmatmul.mubr.bf16.gmra.mrb[0].mxu0 %v2762
          %v5496 = vpop.f32.mrb[0].mxu0
          %v5497 = vadd.f32 %v3189, %v5496
          %v5498 = vpop.f32.mrb[0].mxu0
          %v5499 = vadd.f32 %v3193, %v5498
          %v5500 = vpop.f32.mrb[0].mxu0
          %v5501 = vpop.f32.mrb[0].mxu0
          %5502 = vdwg.mxu0
          %5503 = vmatprep.subr.bf16.mxu0 %v4567
          %5504 = vmatpush1.bf16.msra.mxu0 %v4566
          %5505 = vmatprep.subr.bf16.mxu0 %v4579
          %5506 = vmatpush1.bf16.msra.mxu0 %v4578
          %5507 = vmatprep.subr.bf16.mxu0 %v4591
          %5508 = vmatpush1.bf16.msra.mxu0 %v4590
          %5509 = vmatprep.subr.bf16.mxu0 %v4603
          %5510 = vmatpush1.bf16.msra.mxu0 %v4602
          %5511 = vmatprep.subr.bf16.mxu0 %v4615
          %5512 = vmatpush1.bf16.msra.mxu0 %v4614
          %5513 = vmatprep.subr.bf16.mxu0 %v4627
          %5514 = vmatpush1.bf16.msra.mxu0 %v4626
          %5515 = vmatprep.subr.bf16.mxu0 %v4639
          %5516 = vmatpush1.bf16.msra.mxu0 %v4638
          %5517 = vmatprep.subr.bf16.mxu0 %v4651
          %5518 = vmatpush1.bf16.msra.mxu0 %v4650
          %5519 = vmatprep.subr.bf16.mxu0 %v4663
          %5520 = vmatpush1.bf16.msra.mxu0 %v4662
          %5521 = vmatprep.subr.bf16.mxu0 %v4675
          %5522 = vmatpush1.bf16.msra.mxu0 %v4674
          %5523 = vmatprep.subr.bf16.mxu0 %v4687
          %5524 = vmatpush1.bf16.msra.mxu0 %v4686
          %5525 = vmatprep.subr.bf16.mxu0 %v4699
          %5526 = vmatpush1.bf16.msra.mxu0 %v4698
          %5527 = vmatprep.subr.bf16.mxu0 %v4711
          %5528 = vmatpush1.bf16.msra.mxu0 %v4710
          %5529 = vmatprep.subr.bf16.mxu0 %v4723
          %5530 = vmatpush1.bf16.msra.mxu0 %v4722
          %5531 = vmatprep.subr.bf16.mxu0 %v4735
          %5532 = vmatpush1.bf16.msra.mxu0 %v4734
          %5533 = vmatprep.subr.bf16.mxu0 %v4747
          %5534 = vmatpush1.bf16.msra.mxu0 %v4746
          %5535 = vmatprep.mubr.bf16.mxu0 %v2765
          %5536 = vmatmul.mubr.bf16.gmra.mrb[0].mxu0 %v2764
          %v5537 = vpop.f32.mrb[0].mxu0
          %v5538 = vadd.f32 %v5497, %v5537
          %v5539 = vpop.f32.mrb[0].mxu0
          %v5540 = vadd.f32 %v5499, %v5539
          %v5541 = vpop.f32.mrb[0].mxu0
          %v5542 = vpop.f32.mrb[0].mxu0
          %5543 = vdwg.mxu0
          %5544 = vmatprep.subr.bf16.mxu0 %v4377
          %5545 = vmatpush1.bf16.msra.mxu0 %v4376
          %5546 = vmatprep.subr.bf16.mxu0 %v4389
          %5547 = vmatpush1.bf16.msra.mxu0 %v4388
          %5548 = vmatprep.subr.bf16.mxu0 %v4401
          %5549 = vmatpush1.bf16.msra.mxu0 %v4400
          %5550 = vmatprep.subr.bf16.mxu0 %v4413
          %5551 = vmatpush1.bf16.msra.mxu0 %v4412
          %5552 = vmatprep.subr.bf16.mxu0 %v4425
          %5553 = vmatpush1.bf16.msra.mxu0 %v4424
          %5554 = vmatprep.subr.bf16.mxu0 %v4437
          %5555 = vmatpush1.bf16.msra.mxu0 %v4436
          %5556 = vmatprep.subr.bf16.mxu0 %v4449
          %5557 = vmatpush1.bf16.msra.mxu0 %v4448
          %5558 = vmatprep.subr.bf16.mxu0 %v4461
          %5559 = vmatpush1.bf16.msra.mxu0 %v4460
          %5560 = vmatprep.subr.bf16.mxu0 %v4473
          %5561 = vmatpush1.bf16.msra.mxu0 %v4472
          %5562 = vmatprep.subr.bf16.mxu0 %v4485
          %5563 = vmatpush1.bf16.msra.mxu0 %v4484
          %5564 = vmatprep.subr.bf16.mxu0 %v4497
          %5565 = vmatpush1.bf16.msra.mxu0 %v4496
          %5566 = vmatprep.subr.bf16.mxu0 %v4509
          %5567 = vmatpush1.bf16.msra.mxu0 %v4508
          %5568 = vmatprep.subr.bf16.mxu0 %v4521
          %5569 = vmatpush1.bf16.msra.mxu0 %v4520
          %5570 = vmatprep.subr.bf16.mxu0 %v4533
          %5571 = vmatpush1.bf16.msra.mxu0 %v4532
          %5572 = vmatprep.subr.bf16.mxu0 %v4545
          %5573 = vmatpush1.bf16.msra.mxu0 %v4544
          %5574 = vmatprep.subr.bf16.mxu0 %v4557
          %5575 = vmatpush1.bf16.msra.mxu0 %v4556
          %5576 = vmatprep.mubr.bf16.mxu0 %v2763
          %5577 = vmatmul.mubr.bf16.gmra.mrb[0].mxu0 %v2762
          %v5578 = vpop.f32.mrb[0].mxu0
          %v5579 = vadd.f32 %v3197, %v5578
          %v5580 = vpop.f32.mrb[0].mxu0
          %v5581 = vadd.f32 %v3201, %v5580
          %v5582 = vpop.f32.mrb[0].mxu0
          %v5583 = vpop.f32.mrb[0].mxu0
          %5584 = vdwg.mxu0
          %5585 = vmatprep.subr.bf16.mxu0 %v4569
          %5586 = vmatpush1.bf16.msra.mxu0 %v4568
          %5587 = vmatprep.subr.bf16.mxu0 %v4581
          %5588 = vmatpush1.bf16.msra.mxu0 %v4580
          %5589 = vmatprep.subr.bf16.mxu0 %v4593
          %5590 = vmatpush1.bf16.msra.mxu0 %v4592
          %5591 = vmatprep.subr.bf16.mxu0 %v4605
          %5592 = vmatpush1.bf16.msra.mxu0 %v4604
          %5593 = vmatprep.subr.bf16.mxu0 %v4617
          %5594 = vmatpush1.bf16.msra.mxu0 %v4616
          %5595 = vmatprep.subr.bf16.mxu0 %v4629
          %5596 = vmatpush1.bf16.msra.mxu0 %v4628
          %5597 = vmatprep.subr.bf16.mxu0 %v4641
          %5598 = vmatpush1.bf16.msra.mxu0 %v4640
          %5599 = vmatprep.subr.bf16.mxu0 %v4653
          %5600 = vmatpush1.bf16.msra.mxu0 %v4652
          %5601 = vmatprep.subr.bf16.mxu0 %v4665
          %5602 = vmatpush1.bf16.msra.mxu0 %v4664
          %5603 = vmatprep.subr.bf16.mxu0 %v4677
          %5604 = vmatpush1.bf16.msra.mxu0 %v4676
          %5605 = vmatprep.subr.bf16.mxu0 %v4689
          %5606 = vmatpush1.bf16.msra.mxu0 %v4688
          %5607 = vmatprep.subr.bf16.mxu0 %v4701
          %5608 = vmatpush1.bf16.msra.mxu0 %v4700
          %5609 = vmatprep.subr.bf16.mxu0 %v4713
          %5610 = vmatpush1.bf16.msra.mxu0 %v4712
          %5611 = vmatprep.subr.bf16.mxu0 %v4725
          %5612 = vmatpush1.bf16.msra.mxu0 %v4724
          %5613 = vmatprep.subr.bf16.mxu0 %v4737
          %5614 = vmatpush1.bf16.msra.mxu0 %v4736
          %5615 = vmatprep.subr.bf16.mxu0 %v4749
          %5616 = vmatpush1.bf16.msra.mxu0 %v4748
          %5617 = vmatprep.mubr.bf16.mxu0 %v2765
          %5618 = vmatmul.mubr.bf16.gmra.mrb[0].mxu0 %v2764
          %v5619 = vpop.f32.mrb[0].mxu0
          %v5620 = vadd.f32 %v5579, %v5619
          %v5621 = vpop.f32.mrb[0].mxu0
          %v5622 = vadd.f32 %v5581, %v5621
          %v5623 = vpop.f32.mrb[0].mxu0
          %v5624 = vpop.f32.mrb[0].mxu0
          %5625 = vdwg.mxu0
          %v5626 = vxor.u32 %v5210, 2147483648
          %v5627 = vxor.u32 %v5212, 2147483648
          %v5628 = vxor.u32 %v5292, 2147483648
          %v5629 = vxor.u32 %v5294, 2147483648
          %v5630 = vmul.f32 %v5626, 1.442695
          %v5631 = vpow.pop %v5630
          %v5632 = vmul.f32 %v5627, 1.442695
          %v5633 = vpow.pop %v5632
          %v5634 = vmul.f32 %v5628, 1.442695
          %v5635 = vpow.pop %v5634
          %v5636 = vmul.f32 %v5629, 1.442695
          %v5637 = vpow.pop %v5636
          %v5638 = vadd.f32 %v5631, 1.0
          %v5639 = vadd.f32 %v5633, 1.0
          %v5640 = vadd.f32 %v5635, 1.0
          %v5641 = vadd.f32 %v5637, 1.0
          %v5642 = vrcp.pop %v5638
          %v5643 = vmul.f32 1.0, %v5642
          %v5644 = vrcp.pop %v5639
          %v5645 = vmul.f32 1.0, %v5644
          %v5646 = vrcp.pop %v5640
          %v5647 = vmul.f32 1.0, %v5646
          %v5648 = vrcp.pop %v5641
          %v5649 = vmul.f32 1.0, %v5648
          %v5650 = vtanh.pop %v5374
          %v5651 = vtanh.pop %v5376
          %v5652 = vtanh.pop %v5456
          %v5653 = vtanh.pop %v5458
          %v5654 = vxor.u32 %v5538, 2147483648
          %v5655 = vxor.u32 %v5540, 2147483648
          %v5656 = vxor.u32 %v5620, 2147483648
          %v5657 = vxor.u32 %v5622, 2147483648
          %v5658 = vmul.f32 %v5654, 1.442695
          %v5659 = vpow.pop %v5658
          %v5660 = vmul.f32 %v5655, 1.442695
          %v5661 = vpow.pop %v5660
          %v5662 = vmul.f32 %v5656, 1.442695
          %v5663 = vpow.pop %v5662
          %v5664 = vmul.f32 %v5657, 1.442695
          %v5665 = vpow.pop %v5664
          %v5666 = vadd.f32 %v5659, 1.0
          %v5667 = vadd.f32 %v5661, 1.0
          %v5668 = vadd.f32 %v5663, 1.0
          %v5669 = vadd.f32 %v5665, 1.0
          %v5670 = vrcp.pop %v5666
          %v5671 = vmul.f32 1.0, %v5670
          %v5672 = vrcp.pop %v5667
          %v5673 = vmul.f32 1.0, %v5672
          %v5674 = vrcp.pop %v5668
          %v5675 = vmul.f32 1.0, %v5674
          %v5676 = vrcp.pop %v5669
          %v5677 = vmul.f32 1.0, %v5676
          %v5678 = vmul.f32 %v5643, %v5650
          %v5679 = vmul.f32 %v5645, %v5651
          %v5680 = vmul.f32 %v5647, %v5652
          %v5681 = vmul.f32 %v5649, %v5653
          %v5682 = vtanh.pop %v5678
          %v5683 = vtanh.pop %v5679
          %v5684 = vtanh.pop %v5680
          %v5685 = vtanh.pop %v5681
          %v5686 = vmul.f32 %v5671, %v5682
          %v5687 = vmul.f32 %v5673, %v5683
          %v5688 = vmul.f32 %v5675, %v5684
          %v5689 = vmul.f32 %v5677, %v5685
          %5690 = vst [vmem:[#allocation2] sm:$0xff] %v5686
          %5691 = vst [vmem:[#allocation2 + $0x8] sm:$0xff] %v5687
          %5692 = vst [vmem:[#allocation2 + $0x10] sm:$0xff] %v5688
          %5693 = vst [vmem:[#allocation2 + $0x18] sm:$0xff] %v5689
        $region116: #{tpu_custom_call.1} parent=67 // pred_fallthru
          _
        %v5694 = vld [vmem:[#allocation2] sm:$0xff]
        %v5695 = vld [vmem:[#allocation2 + $0x8] sm:$0xff]
        %v5696 = vld [vmem:[#allocation2 + $0x10] sm:$0xff]
        %v5697 = vld [vmem:[#allocation2 + $0x18] sm:$0xff]
        %v5698 = vpack.c.bf16 %v5694, %v5694
        %v5699 = vpack.c.bf16 %v5695, %v5695
        %v5700 = vpack.c.bf16 %v5696, %v5696
        %v5701 = vpack.c.bf16 %v5697, %v5697
        %v5702 = vld [vmem:[%s523] sm:$0xff]
        %v5703 = vld [vmem:[%s523 + $0x8] sm:$0xff]
        %v5704 = vld [vmem:[%s523 + $0x10] sm:$0xff]
        %v5705 = vld [vmem:[%s523 + $0x18] sm:$0xff]
        %v5706 = vld [vmem:[%s523 + $0x20] sm:$0xff]
        %v5707 = vld [vmem:[%s523 + $0x28] sm:$0xff]
        %v5708 = vld [vmem:[%s523 + $0x30] sm:$0xff]
        %v5709 = vld [vmem:[%s523 + $0x38] sm:$0xff]
        %v5710 = vld [vmem:[%s523 + $0x40] sm:$0xff]
        %v5711 = vld [vmem:[%s523 + $0x48] sm:$0xff]
        %v5712 = vld [vmem:[%s523 + $0x50] sm:$0xff]
        %v5713 = vld [vmem:[%s523 + $0x58] sm:$0xff]
        %v5714 = vld [vmem:[%s523 + $0x60] sm:$0xff]
        %v5715 = vld [vmem:[%s523 + $0x68] sm:$0xff]
        %v5716 = vld [vmem:[%s523 + $0x70] sm:$0xff]
        %v5717 = vld [vmem:[%s523 + $0x78] sm:$0xff]
        %v5718 = vld [vmem:[%s523 + $0x80] sm:$0xff]
        %v5719 = vld [vmem:[%s523 + $0x88] sm:$0xff]
        %v5720 = vld [vmem:[%s523 + $0x90] sm:$0xff]
        %v5721 = vld [vmem:[%s523 + $0x98] sm:$0xff]
        %v5722 = vld [vmem:[%s523 + $0xa0] sm:$0xff]
        %v5723 = vld [vmem:[%s523 + $0xa8] sm:$0xff]
        %v5724 = vld [vmem:[%s523 + $0xb0] sm:$0xff]
        %v5725 = vld [vmem:[%s523 + $0xb8] sm:$0xff]
        %v5726 = vld [vmem:[%s523 + $0xc0] sm:$0xff]
        %v5727 = vld [vmem:[%s523 + $0xc8] sm:$0xff]
        %v5728 = vld [vmem:[%s523 + $0xd0] sm:$0xff]
        %v5729 = vld [vmem:[%s523 + $0xd8] sm:$0xff]
        %v5730 = vld [vmem:[%s523 + $0xe0] sm:$0xff]
        %v5731 = vld [vmem:[%s523 + $0xe8] sm:$0xff]
        %v5732 = vld [vmem:[%s523 + $0xf0] sm:$0xff]
        %v5733 = vld [vmem:[%s523 + $0xf8] sm:$0xff]
        %v5734 = vld [vmem:[%s523 + $0x100] sm:$0xff]
        %v5735 = vld [vmem:[%s523 + $0x108] sm:$0xff]
        %v5736 = vld [vmem:[%s523 + $0x110] sm:$0xff]
        %v5737 = vld [vmem:[%s523 + $0x118] sm:$0xff]
        %v5738 = vld [vmem:[%s523 + $0x120] sm:$0xff]
        %v5739 = vld [vmem:[%s523 + $0x128] sm:$0xff]
        %v5740 = vld [vmem:[%s523 + $0x130] sm:$0xff]
        %v5741 = vld [vmem:[%s523 + $0x138] sm:$0xff]
        %v5742 = vld [vmem:[%s523 + $0x140] sm:$0xff]
        %v5743 = vld [vmem:[%s523 + $0x148] sm:$0xff]
        %v5744 = vld [vmem:[%s523 + $0x150] sm:$0xff]
        %v5745 = vld [vmem:[%s523 + $0x158] sm:$0xff]
        %v5746 = vld [vmem:[%s523 + $0x160] sm:$0xff]
        %v5747 = vld [vmem:[%s523 + $0x168] sm:$0xff]
        %v5748 = vld [vmem:[%s523 + $0x170] sm:$0xff]
        %v5749 = vld [vmem:[%s523 + $0x178] sm:$0xff]
        %v5750 = vld [vmem:[%s523 + $0x180] sm:$0xff]
        %v5751 = vld [vmem:[%s523 + $0x188] sm:$0xff]
        %v5752 = vld [vmem:[%s523 + $0x190] sm:$0xff]
        %v5753 = vld [vmem:[%s523 + $0x198] sm:$0xff]
        %v5754 = vld [vmem:[%s523 + $0x1a0] sm:$0xff]
        %v5755 = vld [vmem:[%s523 + $0x1a8] sm:$0xff]
        %v5756 = vld [vmem:[%s523 + $0x1b0] sm:$0xff]
        %v5757 = vld [vmem:[%s523 + $0x1b8] sm:$0xff]
        %v5758 = vld [vmem:[%s523 + $0x1c0] sm:$0xff]
        %v5759 = vld [vmem:[%s523 + $0x1c8] sm:$0xff]
        %v5760 = vld [vmem:[%s523 + $0x1d0] sm:$0xff]
        %v5761 = vld [vmem:[%s523 + $0x1d8] sm:$0xff]
        %v5762 = vld [vmem:[%s523 + $0x1e0] sm:$0xff]
        %v5763 = vld [vmem:[%s523 + $0x1e8] sm:$0xff]
        %v5764 = vld [vmem:[%s523 + $0x1f0] sm:$0xff]
        %v5765 = vld [vmem:[%s523 + $0x1f8] sm:$0xff]
        %v5766 = vld [vmem:[%s523 + $0x200] sm:$0xff]
        %v5767 = vld [vmem:[%s523 + $0x208] sm:$0xff]
        %v5768 = vld [vmem:[%s523 + $0x210] sm:$0xff]
        %v5769 = vld [vmem:[%s523 + $0x218] sm:$0xff]
        %v5770 = vld [vmem:[%s523 + $0x220] sm:$0xff]
        %v5771 = vld [vmem:[%s523 + $0x228] sm:$0xff]
        %v5772 = vld [vmem:[%s523 + $0x230] sm:$0xff]
        %v5773 = vld [vmem:[%s523 + $0x238] sm:$0xff]
        %v5774 = vld [vmem:[%s523 + $0x240] sm:$0xff]
        %v5775 = vld [vmem:[%s523 + $0x248] sm:$0xff]
        %v5776 = vld [vmem:[%s523 + $0x250] sm:$0xff]
        %v5777 = vld [vmem:[%s523 + $0x258] sm:$0xff]
        %v5778 = vld [vmem:[%s523 + $0x260] sm:$0xff]
        %v5779 = vld [vmem:[%s523 + $0x268] sm:$0xff]
        %v5780 = vld [vmem:[%s523 + $0x270] sm:$0xff]
        %v5781 = vld [vmem:[%s523 + $0x278] sm:$0xff]
        %v5782 = vld [vmem:[%s523 + $0x280] sm:$0xff]
        %v5783 = vld [vmem:[%s523 + $0x288] sm:$0xff]
        %v5784 = vld [vmem:[%s523 + $0x290] sm:$0xff]
        %v5785 = vld [vmem:[%s523 + $0x298] sm:$0xff]
        %v5786 = vld [vmem:[%s523 + $0x2a0] sm:$0xff]
        %v5787 = vld [vmem:[%s523 + $0x2a8] sm:$0xff]
        %v5788 = vld [vmem:[%s523 + $0x2b0] sm:$0xff]
        %v5789 = vld [vmem:[%s523 + $0x2b8] sm:$0xff]
        %v5790 = vld [vmem:[%s523 + $0x2c0] sm:$0xff]
        %v5791 = vld [vmem:[%s523 + $0x2c8] sm:$0xff]
        %v5792 = vld [vmem:[%s523 + $0x2d0] sm:$0xff]
        %v5793 = vld [vmem:[%s523 + $0x2d8] sm:$0xff]
        %v5794 = vld [vmem:[%s523 + $0x2e0] sm:$0xff]
        %v5795 = vld [vmem:[%s523 + $0x2e8] sm:$0xff]
        %v5796 = vld [vmem:[%s523 + $0x2f0] sm:$0xff]
        %v5797 = vld [vmem:[%s523 + $0x2f8] sm:$0xff]
        %v5798 = vld [vmem:[%s523 + $0x300] sm:$0xff]
        %v5799 = vld [vmem:[%s523 + $0x308] sm:$0xff]
        %v5800 = vld [vmem:[%s523 + $0x310] sm:$0xff]
        %v5801 = vld [vmem:[%s523 + $0x318] sm:$0xff]
        %v5802 = vld [vmem:[%s523 + $0x320] sm:$0xff]
        %v5803 = vld [vmem:[%s523 + $0x328] sm:$0xff]
        %v5804 = vld [vmem:[%s523 + $0x330] sm:$0xff]
        %v5805 = vld [vmem:[%s523 + $0x338] sm:$0xff]
        %v5806 = vld [vmem:[%s523 + $0x340] sm:$0xff]
        %v5807 = vld [vmem:[%s523 + $0x348] sm:$0xff]
        %v5808 = vld [vmem:[%s523 + $0x350] sm:$0xff]
        %v5809 = vld [vmem:[%s523 + $0x358] sm:$0xff]
        %v5810 = vld [vmem:[%s523 + $0x360] sm:$0xff]
        %v5811 = vld [vmem:[%s523 + $0x368] sm:$0xff]
        %v5812 = vld [vmem:[%s523 + $0x370] sm:$0xff]
        %v5813 = vld [vmem:[%s523 + $0x378] sm:$0xff]
        %v5814 = vld [vmem:[%s523 + $0x380] sm:$0xff]
        %v5815 = vld [vmem:[%s523 + $0x388] sm:$0xff]
        %v5816 = vld [vmem:[%s523 + $0x390] sm:$0xff]
        %v5817 = vld [vmem:[%s523 + $0x398] sm:$0xff]
        %v5818 = vld [vmem:[%s523 + $0x3a0] sm:$0xff]
        %v5819 = vld [vmem:[%s523 + $0x3a8] sm:$0xff]
        %v5820 = vld [vmem:[%s523 + $0x3b0] sm:$0xff]
        %v5821 = vld [vmem:[%s523 + $0x3b8] sm:$0xff]
        %v5822 = vld [vmem:[%s523 + $0x3c0] sm:$0xff]
        %v5823 = vld [vmem:[%s523 + $0x3c8] sm:$0xff]
        %v5824 = vld [vmem:[%s523 + $0x3d0] sm:$0xff]
        %v5825 = vld [vmem:[%s523 + $0x3d8] sm:$0xff]
        %v5826 = vld [vmem:[%s523 + $0x3e0] sm:$0xff]
        %v5827 = vld [vmem:[%s523 + $0x3e8] sm:$0xff]
        %v5828 = vld [vmem:[%s523 + $0x3f0] sm:$0xff]
        %v5829 = vld [vmem:[%s523 + $0x3f8] sm:$0xff]
        %v5830 = vld [vmem:[%s523 + $0x400] sm:$0xff]
        %v5831 = vld [vmem:[%s523 + $0x408] sm:$0xff]
        %v5832 = vld [vmem:[%s523 + $0x410] sm:$0xff]
        %v5833 = vld [vmem:[%s523 + $0x418] sm:$0xff]
        %v5834 = vld [vmem:[%s523 + $0x420] sm:$0xff]
        %v5835 = vld [vmem:[%s523 + $0x428] sm:$0xff]
        %v5836 = vld [vmem:[%s523 + $0x430] sm:$0xff]
        %v5837 = vld [vmem:[%s523 + $0x438] sm:$0xff]
        %v5838 = vld [vmem:[%s523 + $0x440] sm:$0xff]
        %v5839 = vld [vmem:[%s523 + $0x448] sm:$0xff]
        %v5840 = vld [vmem:[%s523 + $0x450] sm:$0xff]
        %v5841 = vld [vmem:[%s523 + $0x458] sm:$0xff]
        %v5842 = vld [vmem:[%s523 + $0x460] sm:$0xff]
        %v5843 = vld [vmem:[%s523 + $0x468] sm:$0xff]
        %v5844 = vld [vmem:[%s523 + $0x470] sm:$0xff]
        %v5845 = vld [vmem:[%s523 + $0x478] sm:$0xff]
        %v5846 = vld [vmem:[%s523 + $0x480] sm:$0xff]
        %v5847 = vld [vmem:[%s523 + $0x488] sm:$0xff]
        %v5848 = vld [vmem:[%s523 + $0x490] sm:$0xff]
        %v5849 = vld [vmem:[%s523 + $0x498] sm:$0xff]
        %v5850 = vld [vmem:[%s523 + $0x4a0] sm:$0xff]
        %v5851 = vld [vmem:[%s523 + $0x4a8] sm:$0xff]
        %v5852 = vld [vmem:[%s523 + $0x4b0] sm:$0xff]
        %v5853 = vld [vmem:[%s523 + $0x4b8] sm:$0xff]
        %v5854 = vld [vmem:[%s523 + $0x4c0] sm:$0xff]
        %v5855 = vld [vmem:[%s523 + $0x4c8] sm:$0xff]
        %v5856 = vld [vmem:[%s523 + $0x4d0] sm:$0xff]
        %v5857 = vld [vmem:[%s523 + $0x4d8] sm:$0xff]
        %v5858 = vld [vmem:[%s523 + $0x4e0] sm:$0xff]
        %v5859 = vld [vmem:[%s523 + $0x4e8] sm:$0xff]
        %v5860 = vld [vmem:[%s523 + $0x4f0] sm:$0xff]
        %v5861 = vld [vmem:[%s523 + $0x4f8] sm:$0xff]
        %v5862 = vld [vmem:[%s523 + $0x500] sm:$0xff]
        %v5863 = vld [vmem:[%s523 + $0x508] sm:$0xff]
        %v5864 = vld [vmem:[%s523 + $0x510] sm:$0xff]
        %v5865 = vld [vmem:[%s523 + $0x518] sm:$0xff]
        %v5866 = vld [vmem:[%s523 + $0x520] sm:$0xff]
        %v5867 = vld [vmem:[%s523 + $0x528] sm:$0xff]
        %v5868 = vld [vmem:[%s523 + $0x530] sm:$0xff]
        %v5869 = vld [vmem:[%s523 + $0x538] sm:$0xff]
        %v5870 = vld [vmem:[%s523 + $0x540] sm:$0xff]
        %v5871 = vld [vmem:[%s523 + $0x548] sm:$0xff]
        %v5872 = vld [vmem:[%s523 + $0x550] sm:$0xff]
        %v5873 = vld [vmem:[%s523 + $0x558] sm:$0xff]
        %v5874 = vld [vmem:[%s523 + $0x560] sm:$0xff]
        %v5875 = vld [vmem:[%s523 + $0x568] sm:$0xff]
        %v5876 = vld [vmem:[%s523 + $0x570] sm:$0xff]
        %v5877 = vld [vmem:[%s523 + $0x578] sm:$0xff]
        %v5878 = vld [vmem:[%s523 + $0x580] sm:$0xff]
        %v5879 = vld [vmem:[%s523 + $0x588] sm:$0xff]
        %v5880 = vld [vmem:[%s523 + $0x590] sm:$0xff]
        %v5881 = vld [vmem:[%s523 + $0x598] sm:$0xff]
        %v5882 = vld [vmem:[%s523 + $0x5a0] sm:$0xff]
        %v5883 = vld [vmem:[%s523 + $0x5a8] sm:$0xff]
        %v5884 = vld [vmem:[%s523 + $0x5b0] sm:$0xff]
        %v5885 = vld [vmem:[%s523 + $0x5b8] sm:$0xff]
        %v5886 = vld [vmem:[%s523 + $0x5c0] sm:$0xff]
        %v5887 = vld [vmem:[%s523 + $0x5c8] sm:$0xff]
        %v5888 = vld [vmem:[%s523 + $0x5d0] sm:$0xff]
        %v5889 = vld [vmem:[%s523 + $0x5d8] sm:$0xff]
        %v5890 = vld [vmem:[%s523 + $0x5e0] sm:$0xff]
        %v5891 = vld [vmem:[%s523 + $0x5e8] sm:$0xff]
        %v5892 = vld [vmem:[%s523 + $0x5f0] sm:$0xff]
        %v5893 = vld [vmem:[%s523 + $0x5f8] sm:$0xff]
        %v5894 = vld [vmem:[%s523 + $0x600] sm:$0xff]
        %v5895 = vld [vmem:[%s523 + $0x608] sm:$0xff]
        %v5896 = vld [vmem:[%s523 + $0x610] sm:$0xff]
        %v5897 = vld [vmem:[%s523 + $0x618] sm:$0xff]
        %v5898 = vld [vmem:[%s523 + $0x620] sm:$0xff]
        %v5899 = vld [vmem:[%s523 + $0x628] sm:$0xff]
        %v5900 = vld [vmem:[%s523 + $0x630] sm:$0xff]
        %v5901 = vld [vmem:[%s523 + $0x638] sm:$0xff]
        %v5902 = vld [vmem:[%s523 + $0x640] sm:$0xff]
        %v5903 = vld [vmem:[%s523 + $0x648] sm:$0xff]
        %v5904 = vld [vmem:[%s523 + $0x650] sm:$0xff]
        %v5905 = vld [vmem:[%s523 + $0x658] sm:$0xff]
        %v5906 = vld [vmem:[%s523 + $0x660] sm:$0xff]
        %v5907 = vld [vmem:[%s523 + $0x668] sm:$0xff]
        %v5908 = vld [vmem:[%s523 + $0x670] sm:$0xff]
        %v5909 = vld [vmem:[%s523 + $0x678] sm:$0xff]
        %v5910 = vld [vmem:[%s523 + $0x680] sm:$0xff]
        %v5911 = vld [vmem:[%s523 + $0x688] sm:$0xff]
        %v5912 = vld [vmem:[%s523 + $0x690] sm:$0xff]
        %v5913 = vld [vmem:[%s523 + $0x698] sm:$0xff]
        %v5914 = vld [vmem:[%s523 + $0x6a0] sm:$0xff]
        %v5915 = vld [vmem:[%s523 + $0x6a8] sm:$0xff]
        %v5916 = vld [vmem:[%s523 + $0x6b0] sm:$0xff]
        %v5917 = vld [vmem:[%s523 + $0x6b8] sm:$0xff]
        %v5918 = vld [vmem:[%s523 + $0x6c0] sm:$0xff]
        %v5919 = vld [vmem:[%s523 + $0x6c8] sm:$0xff]
        %v5920 = vld [vmem:[%s523 + $0x6d0] sm:$0xff]
        %v5921 = vld [vmem:[%s523 + $0x6d8] sm:$0xff]
        %v5922 = vld [vmem:[%s523 + $0x6e0] sm:$0xff]
        %v5923 = vld [vmem:[%s523 + $0x6e8] sm:$0xff]
        %v5924 = vld [vmem:[%s523 + $0x6f0] sm:$0xff]
        %v5925 = vld [vmem:[%s523 + $0x6f8] sm:$0xff]
        %v5926 = vld [vmem:[%s523 + $0x700] sm:$0xff]
        %v5927 = vld [vmem:[%s523 + $0x708] sm:$0xff]
        %v5928 = vld [vmem:[%s523 + $0x710] sm:$0xff]
        %v5929 = vld [vmem:[%s523 + $0x718] sm:$0xff]
        %v5930 = vld [vmem:[%s523 + $0x720] sm:$0xff]
        %v5931 = vld [vmem:[%s523 + $0x728] sm:$0xff]
        %v5932 = vld [vmem:[%s523 + $0x730] sm:$0xff]
        %v5933 = vld [vmem:[%s523 + $0x738] sm:$0xff]
        %v5934 = vld [vmem:[%s523 + $0x740] sm:$0xff]
        %v5935 = vld [vmem:[%s523 + $0x748] sm:$0xff]
        %v5936 = vld [vmem:[%s523 + $0x750] sm:$0xff]
        %v5937 = vld [vmem:[%s523 + $0x758] sm:$0xff]
        %v5938 = vld [vmem:[%s523 + $0x760] sm:$0xff]
        %v5939 = vld [vmem:[%s523 + $0x768] sm:$0xff]
        %v5940 = vld [vmem:[%s523 + $0x770] sm:$0xff]
        %v5941 = vld [vmem:[%s523 + $0x778] sm:$0xff]
        %v5942 = vld [vmem:[%s523 + $0x780] sm:$0xff]
        %v5943 = vld [vmem:[%s523 + $0x788] sm:$0xff]
        %v5944 = vld [vmem:[%s523 + $0x790] sm:$0xff]
        %v5945 = vld [vmem:[%s523 + $0x798] sm:$0xff]
        %v5946 = vld [vmem:[%s523 + $0x7a0] sm:$0xff]
        %v5947 = vld [vmem:[%s523 + $0x7a8] sm:$0xff]
        %v5948 = vld [vmem:[%s523 + $0x7b0] sm:$0xff]
        %v5949 = vld [vmem:[%s523 + $0x7b8] sm:$0xff]
        %v5950 = vld [vmem:[%s523 + $0x7c0] sm:$0xff]
        %v5951 = vld [vmem:[%s523 + $0x7c8] sm:$0xff]
        %v5952 = vld [vmem:[%s523 + $0x7d0] sm:$0xff]
        %v5953 = vld [vmem:[%s523 + $0x7d8] sm:$0xff]
        %v5954 = vld [vmem:[%s523 + $0x7e0] sm:$0xff]
        %v5955 = vld [vmem:[%s523 + $0x7e8] sm:$0xff]
        %v5956 = vld [vmem:[%s523 + $0x7f0] sm:$0xff]
        %v5957 = vld [vmem:[%s523 + $0x7f8] sm:$0xff]
        %v5958 = vld [vmem:[%s523 + $0x800] sm:$0xff]
        %v5959 = vld [vmem:[%s523 + $0x808] sm:$0xff]
        %v5960 = vld [vmem:[%s523 + $0x810] sm:$0xff]
        %v5961 = vld [vmem:[%s523 + $0x818] sm:$0xff]
        %v5962 = vld [vmem:[%s523 + $0x820] sm:$0xff]
        %v5963 = vld [vmem:[%s523 + $0x828] sm:$0xff]
        %v5964 = vld [vmem:[%s523 + $0x830] sm:$0xff]
        %v5965 = vld [vmem:[%s523 + $0x838] sm:$0xff]
        %v5966 = vld [vmem:[%s523 + $0x840] sm:$0xff]
        %v5967 = vld [vmem:[%s523 + $0x848] sm:$0xff]
        %v5968 = vld [vmem:[%s523 + $0x850] sm:$0xff]
        %v5969 = vld [vmem:[%s523 + $0x858] sm:$0xff]
        %v5970 = vld [vmem:[%s523 + $0x860] sm:$0xff]
        %v5971 = vld [vmem:[%s523 + $0x868] sm:$0xff]
        %v5972 = vld [vmem:[%s523 + $0x870] sm:$0xff]
        %v5973 = vld [vmem:[%s523 + $0x878] sm:$0xff]
        %v5974 = vld [vmem:[%s523 + $0x880] sm:$0xff]
        %v5975 = vld [vmem:[%s523 + $0x888] sm:$0xff]
        %v5976 = vld [vmem:[%s523 + $0x890] sm:$0xff]
        %v5977 = vld [vmem:[%s523 + $0x898] sm:$0xff]
        %v5978 = vld [vmem:[%s523 + $0x8a0] sm:$0xff]
        %v5979 = vld [vmem:[%s523 + $0x8a8] sm:$0xff]
        %v5980 = vld [vmem:[%s523 + $0x8b0] sm:$0xff]
        %v5981 = vld [vmem:[%s523 + $0x8b8] sm:$0xff]
        %v5982 = vld [vmem:[%s523 + $0x8c0] sm:$0xff]
        %v5983 = vld [vmem:[%s523 + $0x8c8] sm:$0xff]
        %v5984 = vld [vmem:[%s523 + $0x8d0] sm:$0xff]
        %v5985 = vld [vmem:[%s523 + $0x8d8] sm:$0xff]
        %v5986 = vld [vmem:[%s523 + $0x8e0] sm:$0xff]
        %v5987 = vld [vmem:[%s523 + $0x8e8] sm:$0xff]
        %v5988 = vld [vmem:[%s523 + $0x8f0] sm:$0xff]
        %v5989 = vld [vmem:[%s523 + $0x8f8] sm:$0xff]
        %v5990 = vld [vmem:[%s523 + $0x900] sm:$0xff]
        %v5991 = vld [vmem:[%s523 + $0x908] sm:$0xff]
        %v5992 = vld [vmem:[%s523 + $0x910] sm:$0xff]
        %v5993 = vld [vmem:[%s523 + $0x918] sm:$0xff]
        %v5994 = vld [vmem:[%s523 + $0x920] sm:$0xff]
        %v5995 = vld [vmem:[%s523 + $0x928] sm:$0xff]
        %v5996 = vld [vmem:[%s523 + $0x930] sm:$0xff]
        %v5997 = vld [vmem:[%s523 + $0x938] sm:$0xff]
        %v5998 = vld [vmem:[%s523 + $0x940] sm:$0xff]
        %v5999 = vld [vmem:[%s523 + $0x948] sm:$0xff]
        %v6000 = vld [vmem:[%s523 + $0x950] sm:$0xff]
        %v6001 = vld [vmem:[%s523 + $0x958] sm:$0xff]
        %v6002 = vld [vmem:[%s523 + $0x960] sm:$0xff]
        %v6003 = vld [vmem:[%s523 + $0x968] sm:$0xff]
        %v6004 = vld [vmem:[%s523 + $0x970] sm:$0xff]
        %v6005 = vld [vmem:[%s523 + $0x978] sm:$0xff]
        %v6006 = vld [vmem:[%s523 + $0x980] sm:$0xff]
        %v6007 = vld [vmem:[%s523 + $0x988] sm:$0xff]
        %v6008 = vld [vmem:[%s523 + $0x990] sm:$0xff]
        %v6009 = vld [vmem:[%s523 + $0x998] sm:$0xff]
        %v6010 = vld [vmem:[%s523 + $0x9a0] sm:$0xff]
        %v6011 = vld [vmem:[%s523 + $0x9a8] sm:$0xff]
        %v6012 = vld [vmem:[%s523 + $0x9b0] sm:$0xff]
        %v6013 = vld [vmem:[%s523 + $0x9b8] sm:$0xff]
        %v6014 = vld [vmem:[%s523 + $0x9c0] sm:$0xff]
        %v6015 = vld [vmem:[%s523 + $0x9c8] sm:$0xff]
        %v6016 = vld [vmem:[%s523 + $0x9d0] sm:$0xff]
        %v6017 = vld [vmem:[%s523 + $0x9d8] sm:$0xff]
        %v6018 = vld [vmem:[%s523 + $0x9e0] sm:$0xff]
        %v6019 = vld [vmem:[%s523 + $0x9e8] sm:$0xff]
        %v6020 = vld [vmem:[%s523 + $0x9f0] sm:$0xff]
        %v6021 = vld [vmem:[%s523 + $0x9f8] sm:$0xff]
        %v6022 = vld [vmem:[%s523 + $0xa00] sm:$0xff]
        %v6023 = vld [vmem:[%s523 + $0xa08] sm:$0xff]
        %v6024 = vld [vmem:[%s523 + $0xa10] sm:$0xff]
        %v6025 = vld [vmem:[%s523 + $0xa18] sm:$0xff]
        %v6026 = vld [vmem:[%s523 + $0xa20] sm:$0xff]
        %v6027 = vld [vmem:[%s523 + $0xa28] sm:$0xff]
        %v6028 = vld [vmem:[%s523 + $0xa30] sm:$0xff]
        %v6029 = vld [vmem:[%s523 + $0xa38] sm:$0xff]
        %v6030 = vld [vmem:[%s523 + $0xa40] sm:$0xff]
        %v6031 = vld [vmem:[%s523 + $0xa48] sm:$0xff]
        %v6032 = vld [vmem:[%s523 + $0xa50] sm:$0xff]
        %v6033 = vld [vmem:[%s523 + $0xa58] sm:$0xff]
        %v6034 = vld [vmem:[%s523 + $0xa60] sm:$0xff]
        %v6035 = vld [vmem:[%s523 + $0xa68] sm:$0xff]
        %v6036 = vld [vmem:[%s523 + $0xa70] sm:$0xff]
        %v6037 = vld [vmem:[%s523 + $0xa78] sm:$0xff]
        %v6038 = vld [vmem:[%s523 + $0xa80] sm:$0xff]
        %v6039 = vld [vmem:[%s523 + $0xa88] sm:$0xff]
        %v6040 = vld [vmem:[%s523 + $0xa90] sm:$0xff]
        %v6041 = vld [vmem:[%s523 + $0xa98] sm:$0xff]
        %v6042 = vld [vmem:[%s523 + $0xaa0] sm:$0xff]
        %v6043 = vld [vmem:[%s523 + $0xaa8] sm:$0xff]
        %v6044 = vld [vmem:[%s523 + $0xab0] sm:$0xff]
        %v6045 = vld [vmem:[%s523 + $0xab8] sm:$0xff]
        %v6046 = vld [vmem:[%s523 + $0xac0] sm:$0xff]
        %v6047 = vld [vmem:[%s523 + $0xac8] sm:$0xff]
        %v6048 = vld [vmem:[%s523 + $0xad0] sm:$0xff]
        %v6049 = vld [vmem:[%s523 + $0xad8] sm:$0xff]
        %v6050 = vld [vmem:[%s523 + $0xae0] sm:$0xff]
        %v6051 = vld [vmem:[%s523 + $0xae8] sm:$0xff]
        %v6052 = vld [vmem:[%s523 + $0xaf0] sm:$0xff]
        %v6053 = vld [vmem:[%s523 + $0xaf8] sm:$0xff]
        %v6054 = vld [vmem:[%s523 + $0xb00] sm:$0xff]
        %v6055 = vld [vmem:[%s523 + $0xb08] sm:$0xff]
        %v6056 = vld [vmem:[%s523 + $0xb10] sm:$0xff]
        %v6057 = vld [vmem:[%s523 + $0xb18] sm:$0xff]
        %v6058 = vld [vmem:[%s523 + $0xb20] sm:$0xff]
        %v6059 = vld [vmem:[%s523 + $0xb28] sm:$0xff]
        %v6060 = vld [vmem:[%s523 + $0xb30] sm:$0xff]
        %v6061 = vld [vmem:[%s523 + $0xb38] sm:$0xff]
        %v6062 = vld [vmem:[%s523 + $0xb40] sm:$0xff]
        %v6063 = vld [vmem:[%s523 + $0xb48] sm:$0xff]
        %v6064 = vld [vmem:[%s523 + $0xb50] sm:$0xff]
        %v6065 = vld [vmem:[%s523 + $0xb58] sm:$0xff]
        %v6066 = vld [vmem:[%s523 + $0xb60] sm:$0xff]
        %v6067 = vld [vmem:[%s523 + $0xb68] sm:$0xff]
        %v6068 = vld [vmem:[%s523 + $0xb70] sm:$0xff]
        %v6069 = vld [vmem:[%s523 + $0xb78] sm:$0xff]
        %v6070 = vld [vmem:[%s523 + $0xb80] sm:$0xff]
        %v6071 = vld [vmem:[%s523 + $0xb88] sm:$0xff]
        %v6072 = vld [vmem:[%s523 + $0xb90] sm:$0xff]
        %v6073 = vld [vmem:[%s523 + $0xb98] sm:$0xff]
        %v6074 = vld [vmem:[%s523 + $0xba0] sm:$0xff]
        %v6075 = vld [vmem:[%s523 + $0xba8] sm:$0xff]
        %v6076 = vld [vmem:[%s523 + $0xbb0] sm:$0xff]
        %v6077 = vld [vmem:[%s523 + $0xbb8] sm:$0xff]
        %v6078 = vld [vmem:[%s523 + $0xbc0] sm:$0xff]
        %v6079 = vld [vmem:[%s523 + $0xbc8] sm:$0xff]
        %v6080 = vld [vmem:[%s523 + $0xbd0] sm:$0xff]
        %v6081 = vld [vmem:[%s523 + $0xbd8] sm:$0xff]
        %v6082 = vld [vmem:[%s523 + $0xbe0] sm:$0xff]
        %v6083 = vld [vmem:[%s523 + $0xbe8] sm:$0xff]
        %v6084 = vld [vmem:[%s523 + $0xbf0] sm:$0xff]
        %v6085 = vld [vmem:[%s523 + $0xbf8] sm:$0xff]
        %v6086 = vld [vmem:[%s532] sm:$0xff]
        %v6087 = vld [vmem:[%s532 + $0x8] sm:$0xf]
        %v6090 = vlaneseq
        %v6091 = vshrl.u32 %v6090, 7
        %v6092 = vsub.s32 0, %v6091
        %v6093 = vrot.slane %v6086, %v6092
        %v6094 = vlaneseq
        %v6095 = vshrl.u32 %v6094, 7
        %v6096 = vsub.s32 1, %v6095
        %v6097 = vrot.slane %v6086, %v6096
        %v6098 = vlaneseq
        %v6099 = vshrl.u32 %v6098, 7
        %v6100 = vsub.s32 2, %v6099
        %v6101 = vrot.slane %v6086, %v6100
        %v6102 = vlaneseq
        %v6103 = vshrl.u32 %v6102, 7
        %v6104 = vsub.s32 3, %v6103
        %v6105 = vrot.slane %v6086, %v6104
        %v6106 = vlaneseq
        %v6107 = vshrl.u32 %v6106, 7
        %v6108 = vsub.s32 4, %v6107
        %v6109 = vrot.slane %v6086, %v6108
        %v6110 = vlaneseq
        %v6111 = vshrl.u32 %v6110, 7
        %v6112 = vsub.s32 5, %v6111
        %v6113 = vrot.slane %v6086, %v6112
        %v6114 = vlaneseq
        %v6115 = vshrl.u32 %v6114, 7
        %v6116 = vsub.s32 6, %v6115
        %v6117 = vrot.slane %v6086, %v6116
        %v6118 = vlaneseq
        %v6119 = vshrl.u32 %v6118, 7
        %v6120 = vsub.s32 7, %v6119
        %v6121 = vrot.slane %v6086, %v6120
        %v6122 = vlaneseq
        %v6123 = vshrl.u32 %v6122, 7
        %v6124 = vsub.s32 0, %v6123
        %v6125 = vrot.slane %v6087, %v6124
        %v6126 = vlaneseq
        %v6127 = vshrl.u32 %v6126, 7
        %v6128 = vsub.s32 1, %v6127
        %v6129 = vrot.slane %v6087, %v6128
        %v6130 = vlaneseq
        %v6131 = vshrl.u32 %v6130, 7
        %v6132 = vsub.s32 2, %v6131
        %v6133 = vrot.slane %v6087, %v6132
        %v6134 = vlaneseq
        %v6135 = vshrl.u32 %v6134, 7
        %v6136 = vsub.s32 3, %v6135
        %v6137 = vrot.slane %v6087, %v6136
        %v6534 = vunpack.c.l.b16 %v5702
        %v6535 = vunpack.c.h.b16 %v5702
        %v6536 = vunpack.c.l.b16 %v5703
        %v6537 = vunpack.c.h.b16 %v5703
        %v6538 = vunpack.c.l.b16 %v5704
        %v6539 = vunpack.c.h.b16 %v5704
        %v6540 = vunpack.c.l.b16 %v5705
        %v6541 = vunpack.c.h.b16 %v5705
        %v6542 = vunpack.c.l.b16 %v5706
        %v6543 = vunpack.c.h.b16 %v5706
        %v6544 = vunpack.c.l.b16 %v5707
        %v6545 = vunpack.c.h.b16 %v5707
        %v6546 = vunpack.c.l.b16 %v5708
        %v6547 = vunpack.c.h.b16 %v5708
        %v6548 = vunpack.c.l.b16 %v5709
        %v6549 = vunpack.c.h.b16 %v5709
        %v6550 = vunpack.c.l.b16 %v5710
        %v6551 = vunpack.c.h.b16 %v5710
        %v6552 = vunpack.c.l.b16 %v5711
        %v6553 = vunpack.c.h.b16 %v5711
        %v6554 = vunpack.c.l.b16 %v5712
        %v6555 = vunpack.c.h.b16 %v5712
        %v6556 = vunpack.c.l.b16 %v5713
        %v6557 = vunpack.c.h.b16 %v5713
        %v6558 = vunpack.c.l.b16 %v5714
        %v6559 = vunpack.c.h.b16 %v5714
        %v6560 = vunpack.c.l.b16 %v5715
        %v6561 = vunpack.c.h.b16 %v5715
        %v6562 = vunpack.c.l.b16 %v5716
        %v6563 = vunpack.c.h.b16 %v5716
        %v6564 = vunpack.c.l.b16 %v5717
        %v6565 = vunpack.c.h.b16 %v5717
        %v6566 = vunpack.c.l.b16 %v5718
        %v6567 = vunpack.c.h.b16 %v5718
        %v6568 = vunpack.c.l.b16 %v5719
        %v6569 = vunpack.c.h.b16 %v5719
        %v6570 = vunpack.c.l.b16 %v5720
        %v6571 = vunpack.c.h.b16 %v5720
        %v6572 = vunpack.c.l.b16 %v5721
        %v6573 = vunpack.c.h.b16 %v5721
        %v6574 = vunpack.c.l.b16 %v5722
        %v6575 = vunpack.c.h.b16 %v5722
        %v6576 = vunpack.c.l.b16 %v5723
        %v6577 = vunpack.c.h.b16 %v5723
        %v6578 = vunpack.c.l.b16 %v5724
        %v6579 = vunpack.c.h.b16 %v5724
        %v6580 = vunpack.c.l.b16 %v5725
        %v6581 = vunpack.c.h.b16 %v5725
        %v6582 = vunpack.c.l.b16 %v5726
        %v6583 = vunpack.c.h.b16 %v5726
        %v6584 = vunpack.c.l.b16 %v5727
        %v6585 = vunpack.c.h.b16 %v5727
        %v6586 = vunpack.c.l.b16 %v5728
        %v6587 = vunpack.c.h.b16 %v5728
        %v6588 = vunpack.c.l.b16 %v5729
        %v6589 = vunpack.c.h.b16 %v5729
        %v6590 = vunpack.c.l.b16 %v5730
        %v6591 = vunpack.c.h.b16 %v5730
        %v6592 = vunpack.c.l.b16 %v5731
        %v6593 = vunpack.c.h.b16 %v5731
        %v6594 = vunpack.c.l.b16 %v5732
        %v6595 = vunpack.c.h.b16 %v5732
        %v6596 = vunpack.c.l.b16 %v5733
        %v6597 = vunpack.c.h.b16 %v5733
        %v6598 = vunpack.c.l.b16 %v5734
        %v6599 = vunpack.c.h.b16 %v5734
        %v6600 = vunpack.c.l.b16 %v5735
        %v6601 = vunpack.c.h.b16 %v5735
        %v6602 = vunpack.c.l.b16 %v5736
        %v6603 = vunpack.c.h.b16 %v5736
        %v6604 = vunpack.c.l.b16 %v5737
        %v6605 = vunpack.c.h.b16 %v5737
        %v6606 = vunpack.c.l.b16 %v5738
        %v6607 = vunpack.c.h.b16 %v5738
        %v6608 = vunpack.c.l.b16 %v5739
        %v6609 = vunpack.c.h.b16 %v5739
        %v6610 = vunpack.c.l.b16 %v5740
        %v6611 = vunpack.c.h.b16 %v5740
        %v6612 = vunpack.c.l.b16 %v5741
        %v6613 = vunpack.c.h.b16 %v5741
        %v6614 = vunpack.c.l.b16 %v5742
        %v6615 = vunpack.c.h.b16 %v5742
        %v6616 = vunpack.c.l.b16 %v5743
        %v6617 = vunpack.c.h.b16 %v5743
        %v6618 = vunpack.c.l.b16 %v5744
        %v6619 = vunpack.c.h.b16 %v5744
        %v6620 = vunpack.c.l.b16 %v5745
        %v6621 = vunpack.c.h.b16 %v5745
        %v6622 = vunpack.c.l.b16 %v5746
        %v6623 = vunpack.c.h.b16 %v5746
        %v6624 = vunpack.c.l.b16 %v5747
        %v6625 = vunpack.c.h.b16 %v5747
        %v6626 = vunpack.c.l.b16 %v5748
        %v6627 = vunpack.c.h.b16 %v5748
        %v6628 = vunpack.c.l.b16 %v5749
        %v6629 = vunpack.c.h.b16 %v5749
        %v6630 = vunpack.c.l.b16 %v5750
        %v6631 = vunpack.c.h.b16 %v5750
        %v6632 = vunpack.c.l.b16 %v5751
        %v6633 = vunpack.c.h.b16 %v5751
        %v6634 = vunpack.c.l.b16 %v5752
        %v6635 = vunpack.c.h.b16 %v5752
        %v6636 = vunpack.c.l.b16 %v5753
        %v6637 = vunpack.c.h.b16 %v5753
        %v6638 = vunpack.c.l.b16 %v5754
        %v6639 = vunpack.c.h.b16 %v5754
        %v6640 = vunpack.c.l.b16 %v5755
        %v6641 = vunpack.c.h.b16 %v5755
        %v6642 = vunpack.c.l.b16 %v5756
        %v6643 = vunpack.c.h.b16 %v5756
        %v6644 = vunpack.c.l.b16 %v5757
        %v6645 = vunpack.c.h.b16 %v5757
        %v6646 = vunpack.c.l.b16 %v5758
        %v6647 = vunpack.c.h.b16 %v5758
        %v6648 = vunpack.c.l.b16 %v5759
        %v6649 = vunpack.c.h.b16 %v5759
        %v6650 = vunpack.c.l.b16 %v5760
        %v6651 = vunpack.c.h.b16 %v5760
        %v6652 = vunpack.c.l.b16 %v5761
        %v6653 = vunpack.c.h.b16 %v5761
        %v6654 = vunpack.c.l.b16 %v5762
        %v6655 = vunpack.c.h.b16 %v5762
        %v6656 = vunpack.c.l.b16 %v5763
        %v6657 = vunpack.c.h.b16 %v5763
        %v6658 = vunpack.c.l.b16 %v5764
        %v6659 = vunpack.c.h.b16 %v5764
        %v6660 = vunpack.c.l.b16 %v5765
        %v6661 = vunpack.c.h.b16 %v5765
        %v6662 = vunpack.c.l.b16 %v5766
        %v6663 = vunpack.c.h.b16 %v5766
        %v6664 = vunpack.c.l.b16 %v5767
        %v6665 = vunpack.c.h.b16 %v5767
        %v6666 = vunpack.c.l.b16 %v5768
        %v6667 = vunpack.c.h.b16 %v5768
        %v6668 = vunpack.c.l.b16 %v5769
        %v6669 = vunpack.c.h.b16 %v5769
        %v6670 = vunpack.c.l.b16 %v5770
        %v6671 = vunpack.c.h.b16 %v5770
        %v6672 = vunpack.c.l.b16 %v5771
        %v6673 = vunpack.c.h.b16 %v5771
        %v6674 = vunpack.c.l.b16 %v5772
        %v6675 = vunpack.c.h.b16 %v5772
        %v6676 = vunpack.c.l.b16 %v5773
        %v6677 = vunpack.c.h.b16 %v5773
        %v6678 = vunpack.c.l.b16 %v5774
        %v6679 = vunpack.c.h.b16 %v5774
        %v6680 = vunpack.c.l.b16 %v5775
        %v6681 = vunpack.c.h.b16 %v5775
        %v6682 = vunpack.c.l.b16 %v5776
        %v6683 = vunpack.c.h.b16 %v5776
        %v6684 = vunpack.c.l.b16 %v5777
        %v6685 = vunpack.c.h.b16 %v5777
        %v6686 = vunpack.c.l.b16 %v5778
        %v6687 = vunpack.c.h.b16 %v5778
        %v6688 = vunpack.c.l.b16 %v5779
        %v6689 = vunpack.c.h.b16 %v5779
        %v6690 = vunpack.c.l.b16 %v5780
        %v6691 = vunpack.c.h.b16 %v5780
        %v6692 = vunpack.c.l.b16 %v5781
        %v6693 = vunpack.c.h.b16 %v5781
        %v6694 = vunpack.c.l.b16 %v5782
        %v6695 = vunpack.c.h.b16 %v5782
        %v6696 = vunpack.c.l.b16 %v5783
        %v6697 = vunpack.c.h.b16 %v5783
        %v6698 = vunpack.c.l.b16 %v5784
        %v6699 = vunpack.c.h.b16 %v5784
        %v6700 = vunpack.c.l.b16 %v5785
        %v6701 = vunpack.c.h.b16 %v5785
        %v6702 = vunpack.c.l.b16 %v5786
        %v6703 = vunpack.c.h.b16 %v5786
        %v6704 = vunpack.c.l.b16 %v5787
        %v6705 = vunpack.c.h.b16 %v5787
        %v6706 = vunpack.c.l.b16 %v5788
        %v6707 = vunpack.c.h.b16 %v5788
        %v6708 = vunpack.c.l.b16 %v5789
        %v6709 = vunpack.c.h.b16 %v5789
        %v6710 = vunpack.c.l.b16 %v5790
        %v6711 = vunpack.c.h.b16 %v5790
        %v6712 = vunpack.c.l.b16 %v5791
        %v6713 = vunpack.c.h.b16 %v5791
        %v6714 = vunpack.c.l.b16 %v5792
        %v6715 = vunpack.c.h.b16 %v5792
        %v6716 = vunpack.c.l.b16 %v5793
        %v6717 = vunpack.c.h.b16 %v5793
        %v6718 = vunpack.c.l.b16 %v5794
        %v6719 = vunpack.c.h.b16 %v5794
        %v6720 = vunpack.c.l.b16 %v5795
        %v6721 = vunpack.c.h.b16 %v5795
        %v6722 = vunpack.c.l.b16 %v5796
        %v6723 = vunpack.c.h.b16 %v5796
        %v6724 = vunpack.c.l.b16 %v5797
        %v6725 = vunpack.c.h.b16 %v5797
        %v6726 = vunpack.c.l.b16 %v5798
        %v6727 = vunpack.c.h.b16 %v5798
        %v6728 = vunpack.c.l.b16 %v5799
        %v6729 = vunpack.c.h.b16 %v5799
        %v6730 = vunpack.c.l.b16 %v5800
        %v6731 = vunpack.c.h.b16 %v5800
        %v6732 = vunpack.c.l.b16 %v5801
        %v6733 = vunpack.c.h.b16 %v5801
        %v6734 = vunpack.c.l.b16 %v5802
        %v6735 = vunpack.c.h.b16 %v5802
        %v6736 = vunpack.c.l.b16 %v5803
        %v6737 = vunpack.c.h.b16 %v5803
        %v6738 = vunpack.c.l.b16 %v5804
        %v6739 = vunpack.c.h.b16 %v5804
        %v6740 = vunpack.c.l.b16 %v5805
        %v6741 = vunpack.c.h.b16 %v5805
        %v6742 = vunpack.c.l.b16 %v5806
        %v6743 = vunpack.c.h.b16 %v5806
        %v6744 = vunpack.c.l.b16 %v5807
        %v6745 = vunpack.c.h.b16 %v5807
        %v6746 = vunpack.c.l.b16 %v5808
        %v6747 = vunpack.c.h.b16 %v5808
        %v6748 = vunpack.c.l.b16 %v5809
        %v6749 = vunpack.c.h.b16 %v5809
        %v6750 = vunpack.c.l.b16 %v5810
        %v6751 = vunpack.c.h.b16 %v5810
        %v6752 = vunpack.c.l.b16 %v5811
        %v6753 = vunpack.c.h.b16 %v5811
        %v6754 = vunpack.c.l.b16 %v5812
        %v6755 = vunpack.c.h.b16 %v5812
        %v6756 = vunpack.c.l.b16 %v5813
        %v6757 = vunpack.c.h.b16 %v5813
        %v6758 = vunpack.c.l.b16 %v5814
        %v6759 = vunpack.c.h.b16 %v5814
        %v6760 = vunpack.c.l.b16 %v5815
        %v6761 = vunpack.c.h.b16 %v5815
        %v6762 = vunpack.c.l.b16 %v5816
        %v6763 = vunpack.c.h.b16 %v5816
        %v6764 = vunpack.c.l.b16 %v5817
        %v6765 = vunpack.c.h.b16 %v5817
        %v6766 = vunpack.c.l.b16 %v5818
        %v6767 = vunpack.c.h.b16 %v5818
        %v6768 = vunpack.c.l.b16 %v5819
        %v6769 = vunpack.c.h.b16 %v5819
        %v6770 = vunpack.c.l.b16 %v5820
        %v6771 = vunpack.c.h.b16 %v5820
        %v6772 = vunpack.c.l.b16 %v5821
        %v6773 = vunpack.c.h.b16 %v5821
        %v6774 = vunpack.c.l.b16 %v5822
        %v6775 = vunpack.c.h.b16 %v5822
        %v6776 = vunpack.c.l.b16 %v5823
        %v6777 = vunpack.c.h.b16 %v5823
        %v6778 = vunpack.c.l.b16 %v5824
        %v6779 = vunpack.c.h.b16 %v5824
        %v6780 = vunpack.c.l.b16 %v5825
        %v6781 = vunpack.c.h.b16 %v5825
        %v6782 = vunpack.c.l.b16 %v5826
        %v6783 = vunpack.c.h.b16 %v5826
        %v6784 = vunpack.c.l.b16 %v5827
        %v6785 = vunpack.c.h.b16 %v5827
        %v6786 = vunpack.c.l.b16 %v5828
        %v6787 = vunpack.c.h.b16 %v5828
        %v6788 = vunpack.c.l.b16 %v5829
        %v6789 = vunpack.c.h.b16 %v5829
        %v6790 = vunpack.c.l.b16 %v5830
        %v6791 = vunpack.c.h.b16 %v5830
        %v6792 = vunpack.c.l.b16 %v5831
        %v6793 = vunpack.c.h.b16 %v5831
        %v6794 = vunpack.c.l.b16 %v5832
        %v6795 = vunpack.c.h.b16 %v5832
        %v6796 = vunpack.c.l.b16 %v5833
        %v6797 = vunpack.c.h.b16 %v5833
        %v6798 = vunpack.c.l.b16 %v5834
        %v6799 = vunpack.c.h.b16 %v5834
        %v6800 = vunpack.c.l.b16 %v5835
        %v6801 = vunpack.c.h.b16 %v5835
        %v6802 = vunpack.c.l.b16 %v5836
        %v6803 = vunpack.c.h.b16 %v5836
        %v6804 = vunpack.c.l.b16 %v5837
        %v6805 = vunpack.c.h.b16 %v5837
        %v6806 = vunpack.c.l.b16 %v5838
        %v6807 = vunpack.c.h.b16 %v5838
        %v6808 = vunpack.c.l.b16 %v5839
        %v6809 = vunpack.c.h.b16 %v5839
        %v6810 = vunpack.c.l.b16 %v5840
        %v6811 = vunpack.c.h.b16 %v5840
        %v6812 = vunpack.c.l.b16 %v5841
        %v6813 = vunpack.c.h.b16 %v5841
        %v6814 = vunpack.c.l.b16 %v5842
        %v6815 = vunpack.c.h.b16 %v5842
        %v6816 = vunpack.c.l.b16 %v5843
        %v6817 = vunpack.c.h.b16 %v5843
        %v6818 = vunpack.c.l.b16 %v5844
        %v6819 = vunpack.c.h.b16 %v5844
        %v6820 = vunpack.c.l.b16 %v5845
        %v6821 = vunpack.c.h.b16 %v5845
        %v6822 = vunpack.c.l.b16 %v5846
        %v6823 = vunpack.c.h.b16 %v5846
        %v6824 = vunpack.c.l.b16 %v5847
        %v6825 = vunpack.c.h.b16 %v5847
        %v6826 = vunpack.c.l.b16 %v5848
        %v6827 = vunpack.c.h.b16 %v5848
        %v6828 = vunpack.c.l.b16 %v5849
        %v6829 = vunpack.c.h.b16 %v5849
        %v6830 = vunpack.c.l.b16 %v5850
        %v6831 = vunpack.c.h.b16 %v5850
        %v6832 = vunpack.c.l.b16 %v5851
        %v6833 = vunpack.c.h.b16 %v5851
        %v6834 = vunpack.c.l.b16 %v5852
        %v6835 = vunpack.c.h.b16 %v5852
        %v6836 = vunpack.c.l.b16 %v5853
        %v6837 = vunpack.c.h.b16 %v5853
        %v6838 = vunpack.c.l.b16 %v5854
        %v6839 = vunpack.c.h.b16 %v5854
        %v6840 = vunpack.c.l.b16 %v5855
        %v6841 = vunpack.c.h.b16 %v5855
        %v6842 = vunpack.c.l.b16 %v5856
        %v6843 = vunpack.c.h.b16 %v5856
        %v6844 = vunpack.c.l.b16 %v5857
        %v6845 = vunpack.c.h.b16 %v5857
        %v6846 = vunpack.c.l.b16 %v5858
        %v6847 = vunpack.c.h.b16 %v5858
        %v6848 = vunpack.c.l.b16 %v5859
        %v6849 = vunpack.c.h.b16 %v5859
        %v6850 = vunpack.c.l.b16 %v5860
        %v6851 = vunpack.c.h.b16 %v5860
        %v6852 = vunpack.c.l.b16 %v5861
        %v6853 = vunpack.c.h.b16 %v5861
        %v6854 = vunpack.c.l.b16 %v5862
        %v6855 = vunpack.c.h.b16 %v5862
        %v6856 = vunpack.c.l.b16 %v5863
        %v6857 = vunpack.c.h.b16 %v5863
        %v6858 = vunpack.c.l.b16 %v5864
        %v6859 = vunpack.c.h.b16 %v5864
        %v6860 = vunpack.c.l.b16 %v5865
        %v6861 = vunpack.c.h.b16 %v5865
        %v6862 = vunpack.c.l.b16 %v5866
        %v6863 = vunpack.c.h.b16 %v5866
        %v6864 = vunpack.c.l.b16 %v5867
        %v6865 = vunpack.c.h.b16 %v5867
        %v6866 = vunpack.c.l.b16 %v5868
        %v6867 = vunpack.c.h.b16 %v5868
        %v6868 = vunpack.c.l.b16 %v5869
        %v6869 = vunpack.c.h.b16 %v5869
        %v6870 = vunpack.c.l.b16 %v5870
        %v6871 = vunpack.c.h.b16 %v5870
        %v6872 = vunpack.c.l.b16 %v5871
        %v6873 = vunpack.c.h.b16 %v5871
        %v6874 = vunpack.c.l.b16 %v5872
        %v6875 = vunpack.c.h.b16 %v5872
        %v6876 = vunpack.c.l.b16 %v5873
        %v6877 = vunpack.c.h.b16 %v5873
        %v6878 = vunpack.c.l.b16 %v5874
        %v6879 = vunpack.c.h.b16 %v5874
        %v6880 = vunpack.c.l.b16 %v5875
        %v6881 = vunpack.c.h.b16 %v5875
        %v6882 = vunpack.c.l.b16 %v5876
        %v6883 = vunpack.c.h.b16 %v5876
        %v6884 = vunpack.c.l.b16 %v5877
        %v6885 = vunpack.c.h.b16 %v5877
        %v6886 = vunpack.c.l.b16 %v5878
        %v6887 = vunpack.c.h.b16 %v5878
        %v6888 = vunpack.c.l.b16 %v5879
        %v6889 = vunpack.c.h.b16 %v5879
        %v6890 = vunpack.c.l.b16 %v5880
        %v6891 = vunpack.c.h.b16 %v5880
        %v6892 = vunpack.c.l.b16 %v5881
        %v6893 = vunpack.c.h.b16 %v5881
        %v6894 = vunpack.c.l.b16 %v5882
        %v6895 = vunpack.c.h.b16 %v5882
        %v6896 = vunpack.c.l.b16 %v5883
        %v6897 = vunpack.c.h.b16 %v5883
        %v6898 = vunpack.c.l.b16 %v5884
        %v6899 = vunpack.c.h.b16 %v5884
        %v6900 = vunpack.c.l.b16 %v5885
        %v6901 = vunpack.c.h.b16 %v5885
        %v6902 = vunpack.c.l.b16 %v5886
        %v6903 = vunpack.c.h.b16 %v5886
        %v6904 = vunpack.c.l.b16 %v5887
        %v6905 = vunpack.c.h.b16 %v5887
        %v6906 = vunpack.c.l.b16 %v5888
        %v6907 = vunpack.c.h.b16 %v5888
        %v6908 = vunpack.c.l.b16 %v5889
        %v6909 = vunpack.c.h.b16 %v5889
        %v6910 = vunpack.c.l.b16 %v5890
        %v6911 = vunpack.c.h.b16 %v5890
        %v6912 = vunpack.c.l.b16 %v5891
        %v6913 = vunpack.c.h.b16 %v5891
        %v6914 = vunpack.c.l.b16 %v5892
        %v6915 = vunpack.c.h.b16 %v5892
        %v6916 = vunpack.c.l.b16 %v5893
        %v6917 = vunpack.c.h.b16 %v5893
        %v6918 = vunpack.c.l.b16 %v5894
        %v6919 = vunpack.c.h.b16 %v5894
        %v6920 = vunpack.c.l.b16 %v5895
        %v6921 = vunpack.c.h.b16 %v5895
        %v6922 = vunpack.c.l.b16 %v5896
        %v6923 = vunpack.c.h.b16 %v5896
        %v6924 = vunpack.c.l.b16 %v5897
        %v6925 = vunpack.c.h.b16 %v5897
        %v6926 = vunpack.c.l.b16 %v5898
        %v6927 = vunpack.c.h.b16 %v5898
        %v6928 = vunpack.c.l.b16 %v5899
        %v6929 = vunpack.c.h.b16 %v5899
        %v6930 = vunpack.c.l.b16 %v5900
        %v6931 = vunpack.c.h.b16 %v5900
        %v6932 = vunpack.c.l.b16 %v5901
        %v6933 = vunpack.c.h.b16 %v5901
        %v6934 = vunpack.c.l.b16 %v5902
        %v6935 = vunpack.c.h.b16 %v5902
        %v6936 = vunpack.c.l.b16 %v5903
        %v6937 = vunpack.c.h.b16 %v5903
        %v6938 = vunpack.c.l.b16 %v5904
        %v6939 = vunpack.c.h.b16 %v5904
        %v6940 = vunpack.c.l.b16 %v5905
        %v6941 = vunpack.c.h.b16 %v5905
        %v6942 = vunpack.c.l.b16 %v5906
        %v6943 = vunpack.c.h.b16 %v5906
        %v6944 = vunpack.c.l.b16 %v5907
        %v6945 = vunpack.c.h.b16 %v5907
        %v6946 = vunpack.c.l.b16 %v5908
        %v6947 = vunpack.c.h.b16 %v5908
        %v6948 = vunpack.c.l.b16 %v5909
        %v6949 = vunpack.c.h.b16 %v5909
        %v6950 = vunpack.c.l.b16 %v5910
        %v6951 = vunpack.c.h.b16 %v5910
        %v6952 = vunpack.c.l.b16 %v5911
        %v6953 = vunpack.c.h.b16 %v5911
        %v6954 = vunpack.c.l.b16 %v5912
        %v6955 = vunpack.c.h.b16 %v5912
        %v6956 = vunpack.c.l.b16 %v5913
        %v6957 = vunpack.c.h.b16 %v5913
        %v6958 = vunpack.c.l.b16 %v5914
        %v6959 = vunpack.c.h.b16 %v5914
        %v6960 = vunpack.c.l.b16 %v5915
        %v6961 = vunpack.c.h.b16 %v5915
        %v6962 = vunpack.c.l.b16 %v5916
        %v6963 = vunpack.c.h.b16 %v5916
        %v6964 = vunpack.c.l.b16 %v5917
        %v6965 = vunpack.c.h.b16 %v5917
        %v6966 = vunpack.c.l.b16 %v5918
        %v6967 = vunpack.c.h.b16 %v5918
        %v6968 = vunpack.c.l.b16 %v5919
        %v6969 = vunpack.c.h.b16 %v5919
        %v6970 = vunpack.c.l.b16 %v5920
        %v6971 = vunpack.c.h.b16 %v5920
        %v6972 = vunpack.c.l.b16 %v5921
        %v6973 = vunpack.c.h.b16 %v5921
        %v6974 = vunpack.c.l.b16 %v5922
        %v6975 = vunpack.c.h.b16 %v5922
        %v6976 = vunpack.c.l.b16 %v5923
        %v6977 = vunpack.c.h.b16 %v5923
        %v6978 = vunpack.c.l.b16 %v5924
        %v6979 = vunpack.c.h.b16 %v5924
        %v6980 = vunpack.c.l.b16 %v5925
        %v6981 = vunpack.c.h.b16 %v5925
        %v6982 = vunpack.c.l.b16 %v5926
        %v6983 = vunpack.c.h.b16 %v5926
        %v6984 = vunpack.c.l.b16 %v5927
        %v6985 = vunpack.c.h.b16 %v5927
        %v6986 = vunpack.c.l.b16 %v5928
        %v6987 = vunpack.c.h.b16 %v5928
        %v6988 = vunpack.c.l.b16 %v5929
        %v6989 = vunpack.c.h.b16 %v5929
        %v6990 = vunpack.c.l.b16 %v5930
        %v6991 = vunpack.c.h.b16 %v5930
        %v6992 = vunpack.c.l.b16 %v5931
        %v6993 = vunpack.c.h.b16 %v5931
        %v6994 = vunpack.c.l.b16 %v5932
        %v6995 = vunpack.c.h.b16 %v5932
        %v6996 = vunpack.c.l.b16 %v5933
        %v6997 = vunpack.c.h.b16 %v5933
        %v6998 = vunpack.c.l.b16 %v5934
        %v6999 = vunpack.c.h.b16 %v5934
        %v7000 = vunpack.c.l.b16 %v5935
        %v7001 = vunpack.c.h.b16 %v5935
        %v7002 = vunpack.c.l.b16 %v5936
        %v7003 = vunpack.c.h.b16 %v5936
        %v7004 = vunpack.c.l.b16 %v5937
        %v7005 = vunpack.c.h.b16 %v5937
        %v7006 = vunpack.c.l.b16 %v5938
        %v7007 = vunpack.c.h.b16 %v5938
        %v7008 = vunpack.c.l.b16 %v5939
        %v7009 = vunpack.c.h.b16 %v5939
        %v7010 = vunpack.c.l.b16 %v5940
        %v7011 = vunpack.c.h.b16 %v5940
        %v7012 = vunpack.c.l.b16 %v5941
        %v7013 = vunpack.c.h.b16 %v5941
        %v7014 = vunpack.c.l.b16 %v5942
        %v7015 = vunpack.c.h.b16 %v5942
        %v7016 = vunpack.c.l.b16 %v5943
        %v7017 = vunpack.c.h.b16 %v5943
        %v7018 = vunpack.c.l.b16 %v5944
        %v7019 = vunpack.c.h.b16 %v5944
        %v7020 = vunpack.c.l.b16 %v5945
        %v7021 = vunpack.c.h.b16 %v5945
        %v7022 = vunpack.c.l.b16 %v5946
        %v7023 = vunpack.c.h.b16 %v5946
        %v7024 = vunpack.c.l.b16 %v5947
        %v7025 = vunpack.c.h.b16 %v5947
        %v7026 = vunpack.c.l.b16 %v5948
        %v7027 = vunpack.c.h.b16 %v5948
        %v7028 = vunpack.c.l.b16 %v5949
        %v7029 = vunpack.c.h.b16 %v5949
        %v7030 = vunpack.c.l.b16 %v5950
        %v7031 = vunpack.c.h.b16 %v5950
        %v7032 = vunpack.c.l.b16 %v5951
        %v7033 = vunpack.c.h.b16 %v5951
        %v7034 = vunpack.c.l.b16 %v5952
        %v7035 = vunpack.c.h.b16 %v5952
        %v7036 = vunpack.c.l.b16 %v5953
        %v7037 = vunpack.c.h.b16 %v5953
        %v7038 = vunpack.c.l.b16 %v5954
        %v7039 = vunpack.c.h.b16 %v5954
        %v7040 = vunpack.c.l.b16 %v5955
        %v7041 = vunpack.c.h.b16 %v5955
        %v7042 = vunpack.c.l.b16 %v5956
        %v7043 = vunpack.c.h.b16 %v5956
        %v7044 = vunpack.c.l.b16 %v5957
        %v7045 = vunpack.c.h.b16 %v5957
        %v7046 = vunpack.c.l.b16 %v5958
        %v7047 = vunpack.c.h.b16 %v5958
        %v7048 = vunpack.c.l.b16 %v5959
        %v7049 = vunpack.c.h.b16 %v5959
        %v7050 = vunpack.c.l.b16 %v5960
        %v7051 = vunpack.c.h.b16 %v5960
        %v7052 = vunpack.c.l.b16 %v5961
        %v7053 = vunpack.c.h.b16 %v5961
        %v7054 = vunpack.c.l.b16 %v5962
        %v7055 = vunpack.c.h.b16 %v5962
        %v7056 = vunpack.c.l.b16 %v5963
        %v7057 = vunpack.c.h.b16 %v5963
        %v7058 = vunpack.c.l.b16 %v5964
        %v7059 = vunpack.c.h.b16 %v5964
        %v7060 = vunpack.c.l.b16 %v5965
        %v7061 = vunpack.c.h.b16 %v5965
        %v7062 = vunpack.c.l.b16 %v5966
        %v7063 = vunpack.c.h.b16 %v5966
        %v7064 = vunpack.c.l.b16 %v5967
        %v7065 = vunpack.c.h.b16 %v5967
        %v7066 = vunpack.c.l.b16 %v5968
        %v7067 = vunpack.c.h.b16 %v5968
        %v7068 = vunpack.c.l.b16 %v5969
        %v7069 = vunpack.c.h.b16 %v5969
        %v7070 = vunpack.c.l.b16 %v5970
        %v7071 = vunpack.c.h.b16 %v5970
        %v7072 = vunpack.c.l.b16 %v5971
        %v7073 = vunpack.c.h.b16 %v5971
        %v7074 = vunpack.c.l.b16 %v5972
        %v7075 = vunpack.c.h.b16 %v5972
        %v7076 = vunpack.c.l.b16 %v5973
        %v7077 = vunpack.c.h.b16 %v5973
        %v7078 = vunpack.c.l.b16 %v5974
        %v7079 = vunpack.c.h.b16 %v5974
        %v7080 = vunpack.c.l.b16 %v5975
        %v7081 = vunpack.c.h.b16 %v5975
        %v7082 = vunpack.c.l.b16 %v5976
        %v7083 = vunpack.c.h.b16 %v5976
        %v7084 = vunpack.c.l.b16 %v5977
        %v7085 = vunpack.c.h.b16 %v5977
        %v7086 = vunpack.c.l.b16 %v5978
        %v7087 = vunpack.c.h.b16 %v5978
        %v7088 = vunpack.c.l.b16 %v5979
        %v7089 = vunpack.c.h.b16 %v5979
        %v7090 = vunpack.c.l.b16 %v5980
        %v7091 = vunpack.c.h.b16 %v5980
        %v7092 = vunpack.c.l.b16 %v5981
        %v7093 = vunpack.c.h.b16 %v5981
        %v7094 = vunpack.c.l.b16 %v5982
        %v7095 = vunpack.c.h.b16 %v5982
        %v7096 = vunpack.c.l.b16 %v5983
        %v7097 = vunpack.c.h.b16 %v5983
        %v7098 = vunpack.c.l.b16 %v5984
        %v7099 = vunpack.c.h.b16 %v5984
        %v7100 = vunpack.c.l.b16 %v5985
        %v7101 = vunpack.c.h.b16 %v5985
        %v7102 = vunpack.c.l.b16 %v5986
        %v7103 = vunpack.c.h.b16 %v5986
        %v7104 = vunpack.c.l.b16 %v5987
        %v7105 = vunpack.c.h.b16 %v5987
        %v7106 = vunpack.c.l.b16 %v5988
        %v7107 = vunpack.c.h.b16 %v5988
        %v7108 = vunpack.c.l.b16 %v5989
        %v7109 = vunpack.c.h.b16 %v5989
        %v7110 = vunpack.c.l.b16 %v5990
        %v7111 = vunpack.c.h.b16 %v5990
        %v7112 = vunpack.c.l.b16 %v5991
        %v7113 = vunpack.c.h.b16 %v5991
        %v7114 = vunpack.c.l.b16 %v5992
        %v7115 = vunpack.c.h.b16 %v5992
        %v7116 = vunpack.c.l.b16 %v5993
        %v7117 = vunpack.c.h.b16 %v5993
        %v7118 = vunpack.c.l.b16 %v5994
        %v7119 = vunpack.c.h.b16 %v5994
        %v7120 = vunpack.c.l.b16 %v5995
        %v7121 = vunpack.c.h.b16 %v5995
        %v7122 = vunpack.c.l.b16 %v5996
        %v7123 = vunpack.c.h.b16 %v5996
        %v7124 = vunpack.c.l.b16 %v5997
        %v7125 = vunpack.c.h.b16 %v5997
        %v7126 = vunpack.c.l.b16 %v5998
        %v7127 = vunpack.c.h.b16 %v5998
        %v7128 = vunpack.c.l.b16 %v5999
        %v7129 = vunpack.c.h.b16 %v5999
        %v7130 = vunpack.c.l.b16 %v6000
        %v7131 = vunpack.c.h.b16 %v6000
        %v7132 = vunpack.c.l.b16 %v6001
        %v7133 = vunpack.c.h.b16 %v6001
        %v7134 = vunpack.c.l.b16 %v6002
        %v7135 = vunpack.c.h.b16 %v6002
        %v7136 = vunpack.c.l.b16 %v6003
        %v7137 = vunpack.c.h.b16 %v6003
        %v7138 = vunpack.c.l.b16 %v6004
        %v7139 = vunpack.c.h.b16 %v6004
        %v7140 = vunpack.c.l.b16 %v6005
        %v7141 = vunpack.c.h.b16 %v6005
        %v7142 = vunpack.c.l.b16 %v6006
        %v7143 = vunpack.c.h.b16 %v6006
        %v7144 = vunpack.c.l.b16 %v6007
        %v7145 = vunpack.c.h.b16 %v6007
        %v7146 = vunpack.c.l.b16 %v6008
        %v7147 = vunpack.c.h.b16 %v6008
        %v7148 = vunpack.c.l.b16 %v6009
        %v7149 = vunpack.c.h.b16 %v6009
        %v7150 = vunpack.c.l.b16 %v6010
        %v7151 = vunpack.c.h.b16 %v6010
        %v7152 = vunpack.c.l.b16 %v6011
        %v7153 = vunpack.c.h.b16 %v6011
        %v7154 = vunpack.c.l.b16 %v6012
        %v7155 = vunpack.c.h.b16 %v6012
        %v7156 = vunpack.c.l.b16 %v6013
        %v7157 = vunpack.c.h.b16 %v6013
        %v7158 = vunpack.c.l.b16 %v6014
        %v7159 = vunpack.c.h.b16 %v6014
        %v7160 = vunpack.c.l.b16 %v6015
        %v7161 = vunpack.c.h.b16 %v6015
        %v7162 = vunpack.c.l.b16 %v6016
        %v7163 = vunpack.c.h.b16 %v6016
        %v7164 = vunpack.c.l.b16 %v6017
        %v7165 = vunpack.c.h.b16 %v6017
        %v7166 = vunpack.c.l.b16 %v6018
        %v7167 = vunpack.c.h.b16 %v6018
        %v7168 = vunpack.c.l.b16 %v6019
        %v7169 = vunpack.c.h.b16 %v6019
        %v7170 = vunpack.c.l.b16 %v6020
        %v7171 = vunpack.c.h.b16 %v6020
        %v7172 = vunpack.c.l.b16 %v6021
        %v7173 = vunpack.c.h.b16 %v6021
        %v7174 = vunpack.c.l.b16 %v6022
        %v7175 = vunpack.c.h.b16 %v6022
        %v7176 = vunpack.c.l.b16 %v6023
        %v7177 = vunpack.c.h.b16 %v6023
        %v7178 = vunpack.c.l.b16 %v6024
        %v7179 = vunpack.c.h.b16 %v6024
        %v7180 = vunpack.c.l.b16 %v6025
        %v7181 = vunpack.c.h.b16 %v6025
        %v7182 = vunpack.c.l.b16 %v6026
        %v7183 = vunpack.c.h.b16 %v6026
        %v7184 = vunpack.c.l.b16 %v6027
        %v7185 = vunpack.c.h.b16 %v6027
        %v7186 = vunpack.c.l.b16 %v6028
        %v7187 = vunpack.c.h.b16 %v6028
        %v7188 = vunpack.c.l.b16 %v6029
        %v7189 = vunpack.c.h.b16 %v6029
        %v7190 = vunpack.c.l.b16 %v6030
        %v7191 = vunpack.c.h.b16 %v6030
        %v7192 = vunpack.c.l.b16 %v6031
        %v7193 = vunpack.c.h.b16 %v6031
        %v7194 = vunpack.c.l.b16 %v6032
        %v7195 = vunpack.c.h.b16 %v6032
        %v7196 = vunpack.c.l.b16 %v6033
        %v7197 = vunpack.c.h.b16 %v6033
        %v7198 = vunpack.c.l.b16 %v6034
        %v7199 = vunpack.c.h.b16 %v6034
        %v7200 = vunpack.c.l.b16 %v6035
        %v7201 = vunpack.c.h.b16 %v6035
        %v7202 = vunpack.c.l.b16 %v6036
        %v7203 = vunpack.c.h.b16 %v6036
        %v7204 = vunpack.c.l.b16 %v6037
        %v7205 = vunpack.c.h.b16 %v6037
        %v7206 = vunpack.c.l.b16 %v6038
        %v7207 = vunpack.c.h.b16 %v6038
        %v7208 = vunpack.c.l.b16 %v6039
        %v7209 = vunpack.c.h.b16 %v6039
        %v7210 = vunpack.c.l.b16 %v6040
        %v7211 = vunpack.c.h.b16 %v6040
        %v7212 = vunpack.c.l.b16 %v6041
        %v7213 = vunpack.c.h.b16 %v6041
        %v7214 = vunpack.c.l.b16 %v6042
        %v7215 = vunpack.c.h.b16 %v6042
        %v7216 = vunpack.c.l.b16 %v6043
        %v7217 = vunpack.c.h.b16 %v6043
        %v7218 = vunpack.c.l.b16 %v6044
        %v7219 = vunpack.c.h.b16 %v6044
        %v7220 = vunpack.c.l.b16 %v6045
        %v7221 = vunpack.c.h.b16 %v6045
        %v7222 = vunpack.c.l.b16 %v6046
        %v7223 = vunpack.c.h.b16 %v6046
        %v7224 = vunpack.c.l.b16 %v6047
        %v7225 = vunpack.c.h.b16 %v6047
        %v7226 = vunpack.c.l.b16 %v6048
        %v7227 = vunpack.c.h.b16 %v6048
        %v7228 = vunpack.c.l.b16 %v6049
        %v7229 = vunpack.c.h.b16 %v6049
        %v7230 = vunpack.c.l.b16 %v6050
        %v7231 = vunpack.c.h.b16 %v6050
        %v7232 = vunpack.c.l.b16 %v6051
        %v7233 = vunpack.c.h.b16 %v6051
        %v7234 = vunpack.c.l.b16 %v6052
        %v7235 = vunpack.c.h.b16 %v6052
        %v7236 = vunpack.c.l.b16 %v6053
        %v7237 = vunpack.c.h.b16 %v6053
        %v7238 = vunpack.c.l.b16 %v6054
        %v7239 = vunpack.c.h.b16 %v6054
        %v7240 = vunpack.c.l.b16 %v6055
        %v7241 = vunpack.c.h.b16 %v6055
        %v7242 = vunpack.c.l.b16 %v6056
        %v7243 = vunpack.c.h.b16 %v6056
        %v7244 = vunpack.c.l.b16 %v6057
        %v7245 = vunpack.c.h.b16 %v6057
        %v7246 = vunpack.c.l.b16 %v6058
        %v7247 = vunpack.c.h.b16 %v6058
        %v7248 = vunpack.c.l.b16 %v6059
        %v7249 = vunpack.c.h.b16 %v6059
        %v7250 = vunpack.c.l.b16 %v6060
        %v7251 = vunpack.c.h.b16 %v6060
        %v7252 = vunpack.c.l.b16 %v6061
        %v7253 = vunpack.c.h.b16 %v6061
        %v7254 = vunpack.c.l.b16 %v6062
        %v7255 = vunpack.c.h.b16 %v6062
        %v7256 = vunpack.c.l.b16 %v6063
        %v7257 = vunpack.c.h.b16 %v6063
        %v7258 = vunpack.c.l.b16 %v6064
        %v7259 = vunpack.c.h.b16 %v6064
        %v7260 = vunpack.c.l.b16 %v6065
        %v7261 = vunpack.c.h.b16 %v6065
        %v7262 = vunpack.c.l.b16 %v6066
        %v7263 = vunpack.c.h.b16 %v6066
        %v7264 = vunpack.c.l.b16 %v6067
        %v7265 = vunpack.c.h.b16 %v6067
        %v7266 = vunpack.c.l.b16 %v6068
        %v7267 = vunpack.c.h.b16 %v6068
        %v7268 = vunpack.c.l.b16 %v6069
        %v7269 = vunpack.c.h.b16 %v6069
        %v7270 = vunpack.c.l.b16 %v6070
        %v7271 = vunpack.c.h.b16 %v6070
        %v7272 = vunpack.c.l.b16 %v6071
        %v7273 = vunpack.c.h.b16 %v6071
        %v7274 = vunpack.c.l.b16 %v6072
        %v7275 = vunpack.c.h.b16 %v6072
        %v7276 = vunpack.c.l.b16 %v6073
        %v7277 = vunpack.c.h.b16 %v6073
        %v7278 = vunpack.c.l.b16 %v6074
        %v7279 = vunpack.c.h.b16 %v6074
        %v7280 = vunpack.c.l.b16 %v6075
        %v7281 = vunpack.c.h.b16 %v6075
        %v7282 = vunpack.c.l.b16 %v6076
        %v7283 = vunpack.c.h.b16 %v6076
        %v7284 = vunpack.c.l.b16 %v6077
        %v7285 = vunpack.c.h.b16 %v6077
        %v7286 = vunpack.c.l.b16 %v6078
        %v7287 = vunpack.c.h.b16 %v6078
        %v7288 = vunpack.c.l.b16 %v6079
        %v7289 = vunpack.c.h.b16 %v6079
        %v7290 = vunpack.c.l.b16 %v6080
        %v7291 = vunpack.c.h.b16 %v6080
        %v7292 = vunpack.c.l.b16 %v6081
        %v7293 = vunpack.c.h.b16 %v6081
        %v7294 = vunpack.c.l.b16 %v6082
        %v7295 = vunpack.c.h.b16 %v6082
        %v7296 = vunpack.c.l.b16 %v6083
        %v7297 = vunpack.c.h.b16 %v6083
        %v7298 = vunpack.c.l.b16 %v6084
        %v7299 = vunpack.c.h.b16 %v6084
        %v7300 = vunpack.c.l.b16 %v6085
        %v7301 = vunpack.c.h.b16 %v6085
        %v7302 = vpack.c.b16 %v6546, %v6534
        %v7303 = vpack.c.b16 %v6547, %v6535
        %v7304 = vpack.c.b16 %v6548, %v6536
        %v7305 = vpack.c.b16 %v6549, %v6537
        %v7306 = vpack.c.b16 %v6550, %v6538
        %v7307 = vpack.c.b16 %v6551, %v6539
        %v7308 = vpack.c.b16 %v6552, %v6540
        %v7309 = vpack.c.b16 %v6553, %v6541
        %v7310 = vpack.c.b16 %v6554, %v6542
        %v7311 = vpack.c.b16 %v6555, %v6543
        %v7312 = vpack.c.b16 %v6556, %v6544
        %v7313 = vpack.c.b16 %v6557, %v6545
        %v7314 = vpack.c.b16 %v6570, %v6558
        %v7315 = vpack.c.b16 %v6571, %v6559
        %v7316 = vpack.c.b16 %v6572, %v6560
        %v7317 = vpack.c.b16 %v6573, %v6561
        %v7318 = vpack.c.b16 %v6574, %v6562
        %v7319 = vpack.c.b16 %v6575, %v6563
        %v7320 = vpack.c.b16 %v6576, %v6564
        %v7321 = vpack.c.b16 %v6577, %v6565
        %v7322 = vpack.c.b16 %v6578, %v6566
        %v7323 = vpack.c.b16 %v6579, %v6567
        %v7324 = vpack.c.b16 %v6580, %v6568
        %v7325 = vpack.c.b16 %v6581, %v6569
        %v7326 = vpack.c.b16 %v6594, %v6582
        %v7327 = vpack.c.b16 %v6595, %v6583
        %v7328 = vpack.c.b16 %v6596, %v6584
        %v7329 = vpack.c.b16 %v6597, %v6585
        %v7330 = vpack.c.b16 %v6598, %v6586
        %v7331 = vpack.c.b16 %v6599, %v6587
        %v7332 = vpack.c.b16 %v6600, %v6588
        %v7333 = vpack.c.b16 %v6601, %v6589
        %v7334 = vpack.c.b16 %v6602, %v6590
        %v7335 = vpack.c.b16 %v6603, %v6591
        %v7336 = vpack.c.b16 %v6604, %v6592
        %v7337 = vpack.c.b16 %v6605, %v6593
        %v7338 = vpack.c.b16 %v6618, %v6606
        %v7339 = vpack.c.b16 %v6619, %v6607
        %v7340 = vpack.c.b16 %v6620, %v6608
        %v7341 = vpack.c.b16 %v6621, %v6609
        %v7342 = vpack.c.b16 %v6622, %v6610
        %v7343 = vpack.c.b16 %v6623, %v6611
        %v7344 = vpack.c.b16 %v6624, %v6612
        %v7345 = vpack.c.b16 %v6625, %v6613
        %v7346 = vpack.c.b16 %v6626, %v6614
        %v7347 = vpack.c.b16 %v6627, %v6615
        %v7348 = vpack.c.b16 %v6628, %v6616
        %v7349 = vpack.c.b16 %v6629, %v6617
        %v7350 = vpack.c.b16 %v6642, %v6630
        %v7351 = vpack.c.b16 %v6643, %v6631
        %v7352 = vpack.c.b16 %v6644, %v6632
        %v7353 = vpack.c.b16 %v6645, %v6633
        %v7354 = vpack.c.b16 %v6646, %v6634
        %v7355 = vpack.c.b16 %v6647, %v6635
        %v7356 = vpack.c.b16 %v6648, %v6636
        %v7357 = vpack.c.b16 %v6649, %v6637
        %v7358 = vpack.c.b16 %v6650, %v6638
        %v7359 = vpack.c.b16 %v6651, %v6639
        %v7360 = vpack.c.b16 %v6652, %v6640
        %v7361 = vpack.c.b16 %v6653, %v6641
        %v7362 = vpack.c.b16 %v6666, %v6654
        %v7363 = vpack.c.b16 %v6667, %v6655
        %v7364 = vpack.c.b16 %v6668, %v6656
        %v7365 = vpack.c.b16 %v6669, %v6657
        %v7366 = vpack.c.b16 %v6670, %v6658
        %v7367 = vpack.c.b16 %v6671, %v6659
        %v7368 = vpack.c.b16 %v6672, %v6660
        %v7369 = vpack.c.b16 %v6673, %v6661
        %v7370 = vpack.c.b16 %v6674, %v6662
        %v7371 = vpack.c.b16 %v6675, %v6663
        %v7372 = vpack.c.b16 %v6676, %v6664
        %v7373 = vpack.c.b16 %v6677, %v6665
        %v7374 = vpack.c.b16 %v6690, %v6678
        %v7375 = vpack.c.b16 %v6691, %v6679
        %v7376 = vpack.c.b16 %v6692, %v6680
        %v7377 = vpack.c.b16 %v6693, %v6681
        %v7378 = vpack.c.b16 %v6694, %v6682
        %v7379 = vpack.c.b16 %v6695, %v6683
        %v7380 = vpack.c.b16 %v6696, %v6684
        %v7381 = vpack.c.b16 %v6697, %v6685
        %v7382 = vpack.c.b16 %v6698, %v6686
        %v7383 = vpack.c.b16 %v6699, %v6687
        %v7384 = vpack.c.b16 %v6700, %v6688
        %v7385 = vpack.c.b16 %v6701, %v6689
        %v7386 = vpack.c.b16 %v6714, %v6702
        %v7387 = vpack.c.b16 %v6715, %v6703
        %v7388 = vpack.c.b16 %v6716, %v6704
        %v7389 = vpack.c.b16 %v6717, %v6705
        %v7390 = vpack.c.b16 %v6718, %v6706
        %v7391 = vpack.c.b16 %v6719, %v6707
        %v7392 = vpack.c.b16 %v6720, %v6708
        %v7393 = vpack.c.b16 %v6721, %v6709
        %v7394 = vpack.c.b16 %v6722, %v6710
        %v7395 = vpack.c.b16 %v6723, %v6711
        %v7396 = vpack.c.b16 %v6724, %v6712
        %v7397 = vpack.c.b16 %v6725, %v6713
        %v7398 = vpack.c.b16 %v6738, %v6726
        %v7399 = vpack.c.b16 %v6739, %v6727
        %v7400 = vpack.c.b16 %v6740, %v6728
        %v7401 = vpack.c.b16 %v6741, %v6729
        %v7402 = vpack.c.b16 %v6742, %v6730
        %v7403 = vpack.c.b16 %v6743, %v6731
        %v7404 = vpack.c.b16 %v6744, %v6732
        %v7405 = vpack.c.b16 %v6745, %v6733
        %v7406 = vpack.c.b16 %v6746, %v6734
        %v7407 = vpack.c.b16 %v6747, %v6735
        %v7408 = vpack.c.b16 %v6748, %v6736
        %v7409 = vpack.c.b16 %v6749, %v6737
        %v7410 = vpack.c.b16 %v6762, %v6750
        %v7411 = vpack.c.b16 %v6763, %v6751
        %v7412 = vpack.c.b16 %v6764, %v6752
        %v7413 = vpack.c.b16 %v6765, %v6753
        %v7414 = vpack.c.b16 %v6766, %v6754
        %v7415 = vpack.c.b16 %v6767, %v6755
        %v7416 = vpack.c.b16 %v6768, %v6756
        %v7417 = vpack.c.b16 %v6769, %v6757
        %v7418 = vpack.c.b16 %v6770, %v6758
        %v7419 = vpack.c.b16 %v6771, %v6759
        %v7420 = vpack.c.b16 %v6772, %v6760
        %v7421 = vpack.c.b16 %v6773, %v6761
        %v7422 = vpack.c.b16 %v6786, %v6774
        %v7423 = vpack.c.b16 %v6787, %v6775
        %v7424 = vpack.c.b16 %v6788, %v6776
        %v7425 = vpack.c.b16 %v6789, %v6777
        %v7426 = vpack.c.b16 %v6790, %v6778
        %v7427 = vpack.c.b16 %v6791, %v6779
        %v7428 = vpack.c.b16 %v6792, %v6780
        %v7429 = vpack.c.b16 %v6793, %v6781
        %v7430 = vpack.c.b16 %v6794, %v6782
        %v7431 = vpack.c.b16 %v6795, %v6783
        %v7432 = vpack.c.b16 %v6796, %v6784
        %v7433 = vpack.c.b16 %v6797, %v6785
        %v7434 = vpack.c.b16 %v6810, %v6798
        %v7435 = vpack.c.b16 %v6811, %v6799
        %v7436 = vpack.c.b16 %v6812, %v6800
        %v7437 = vpack.c.b16 %v6813, %v6801
        %v7438 = vpack.c.b16 %v6814, %v6802
        %v7439 = vpack.c.b16 %v6815, %v6803
        %v7440 = vpack.c.b16 %v6816, %v6804
        %v7441 = vpack.c.b16 %v6817, %v6805
        %v7442 = vpack.c.b16 %v6818, %v6806
        %v7443 = vpack.c.b16 %v6819, %v6807
        %v7444 = vpack.c.b16 %v6820, %v6808
        %v7445 = vpack.c.b16 %v6821, %v6809
        %v7446 = vpack.c.b16 %v6834, %v6822
        %v7447 = vpack.c.b16 %v6835, %v6823
        %v7448 = vpack.c.b16 %v6836, %v6824
        %v7449 = vpack.c.b16 %v6837, %v6825
        %v7450 = vpack.c.b16 %v6838, %v6826
        %v7451 = vpack.c.b16 %v6839, %v6827
        %v7452 = vpack.c.b16 %v6840, %v6828
        %v7453 = vpack.c.b16 %v6841, %v6829
        %v7454 = vpack.c.b16 %v6842, %v6830
        %v7455 = vpack.c.b16 %v6843, %v6831
        %v7456 = vpack.c.b16 %v6844, %v6832
        %v7457 = vpack.c.b16 %v6845, %v6833
        %v7458 = vpack.c.b16 %v6858, %v6846
        %v7459 = vpack.c.b16 %v6859, %v6847
        %v7460 = vpack.c.b16 %v6860, %v6848
        %v7461 = vpack.c.b16 %v6861, %v6849
        %v7462 = vpack.c.b16 %v6862, %v6850
        %v7463 = vpack.c.b16 %v6863, %v6851
        %v7464 = vpack.c.b16 %v6864, %v6852
        %v7465 = vpack.c.b16 %v6865, %v6853
        %v7466 = vpack.c.b16 %v6866, %v6854
        %v7467 = vpack.c.b16 %v6867, %v6855
        %v7468 = vpack.c.b16 %v6868, %v6856
        %v7469 = vpack.c.b16 %v6869, %v6857
        %v7470 = vpack.c.b16 %v6882, %v6870
        %v7471 = vpack.c.b16 %v6883, %v6871
        %v7472 = vpack.c.b16 %v6884, %v6872
        %v7473 = vpack.c.b16 %v6885, %v6873
        %v7474 = vpack.c.b16 %v6886, %v6874
        %v7475 = vpack.c.b16 %v6887, %v6875
        %v7476 = vpack.c.b16 %v6888, %v6876
        %v7477 = vpack.c.b16 %v6889, %v6877
        %v7478 = vpack.c.b16 %v6890, %v6878
        %v7479 = vpack.c.b16 %v6891, %v6879
        %v7480 = vpack.c.b16 %v6892, %v6880
        %v7481 = vpack.c.b16 %v6893, %v6881
        %v7482 = vpack.c.b16 %v6906, %v6894
        %v7483 = vpack.c.b16 %v6907, %v6895
        %v7484 = vpack.c.b16 %v6908, %v6896
        %v7485 = vpack.c.b16 %v6909, %v6897
        %v7486 = vpack.c.b16 %v6910, %v6898
        %v7487 = vpack.c.b16 %v6911, %v6899
        %v7488 = vpack.c.b16 %v6912, %v6900
        %v7489 = vpack.c.b16 %v6913, %v6901
        %v7490 = vpack.c.b16 %v6914, %v6902
        %v7491 = vpack.c.b16 %v6915, %v6903
        %v7492 = vpack.c.b16 %v6916, %v6904
        %v7493 = vpack.c.b16 %v6917, %v6905
        %v7494 = vpack.c.b16 %v6930, %v6918
        %v7495 = vpack.c.b16 %v6931, %v6919
        %v7496 = vpack.c.b16 %v6932, %v6920
        %v7497 = vpack.c.b16 %v6933, %v6921
        %v7498 = vpack.c.b16 %v6934, %v6922
        %v7499 = vpack.c.b16 %v6935, %v6923
        %v7500 = vpack.c.b16 %v6936, %v6924
        %v7501 = vpack.c.b16 %v6937, %v6925
        %v7502 = vpack.c.b16 %v6938, %v6926
        %v7503 = vpack.c.b16 %v6939, %v6927
        %v7504 = vpack.c.b16 %v6940, %v6928
        %v7505 = vpack.c.b16 %v6941, %v6929
        %v7506 = vpack.c.b16 %v6954, %v6942
        %v7507 = vpack.c.b16 %v6955, %v6943
        %v7508 = vpack.c.b16 %v6956, %v6944
        %v7509 = vpack.c.b16 %v6957, %v6945
        %v7510 = vpack.c.b16 %v6958, %v6946
        %v7511 = vpack.c.b16 %v6959, %v6947
        %v7512 = vpack.c.b16 %v6960, %v6948
        %v7513 = vpack.c.b16 %v6961, %v6949
        %v7514 = vpack.c.b16 %v6962, %v6950
        %v7515 = vpack.c.b16 %v6963, %v6951
        %v7516 = vpack.c.b16 %v6964, %v6952
        %v7517 = vpack.c.b16 %v6965, %v6953
        %v7518 = vpack.c.b16 %v6978, %v6966
        %v7519 = vpack.c.b16 %v6979, %v6967
        %v7520 = vpack.c.b16 %v6980, %v6968
        %v7521 = vpack.c.b16 %v6981, %v6969
        %v7522 = vpack.c.b16 %v6982, %v6970
        %v7523 = vpack.c.b16 %v6983, %v6971
        %v7524 = vpack.c.b16 %v6984, %v6972
        %v7525 = vpack.c.b16 %v6985, %v6973
        %v7526 = vpack.c.b16 %v6986, %v6974
        %v7527 = vpack.c.b16 %v6987, %v6975
        %v7528 = vpack.c.b16 %v6988, %v6976
        %v7529 = vpack.c.b16 %v6989, %v6977
        %v7530 = vpack.c.b16 %v7002, %v6990
        %v7531 = vpack.c.b16 %v7003, %v6991
        %v7532 = vpack.c.b16 %v7004, %v6992
        %v7533 = vpack.c.b16 %v7005, %v6993
        %v7534 = vpack.c.b16 %v7006, %v6994
        %v7535 = vpack.c.b16 %v7007, %v6995
        %v7536 = vpack.c.b16 %v7008, %v6996
        %v7537 = vpack.c.b16 %v7009, %v6997
        %v7538 = vpack.c.b16 %v7010, %v6998
        %v7539 = vpack.c.b16 %v7011, %v6999
        %v7540 = vpack.c.b16 %v7012, %v7000
        %v7541 = vpack.c.b16 %v7013, %v7001
        %v7542 = vpack.c.b16 %v7026, %v7014
        %v7543 = vpack.c.b16 %v7027, %v7015
        %v7544 = vpack.c.b16 %v7028, %v7016
        %v7545 = vpack.c.b16 %v7029, %v7017
        %v7546 = vpack.c.b16 %v7030, %v7018
        %v7547 = vpack.c.b16 %v7031, %v7019
        %v7548 = vpack.c.b16 %v7032, %v7020
        %v7549 = vpack.c.b16 %v7033, %v7021
        %v7550 = vpack.c.b16 %v7034, %v7022
        %v7551 = vpack.c.b16 %v7035, %v7023
        %v7552 = vpack.c.b16 %v7036, %v7024
        %v7553 = vpack.c.b16 %v7037, %v7025
        %v7554 = vpack.c.b16 %v7050, %v7038
        %v7555 = vpack.c.b16 %v7051, %v7039
        %v7556 = vpack.c.b16 %v7052, %v7040
        %v7557 = vpack.c.b16 %v7053, %v7041
        %v7558 = vpack.c.b16 %v7054, %v7042
        %v7559 = vpack.c.b16 %v7055, %v7043
        %v7560 = vpack.c.b16 %v7056, %v7044
        %v7561 = vpack.c.b16 %v7057, %v7045
        %v7562 = vpack.c.b16 %v7058, %v7046
        %v7563 = vpack.c.b16 %v7059, %v7047
        %v7564 = vpack.c.b16 %v7060, %v7048
        %v7565 = vpack.c.b16 %v7061, %v7049
        %v7566 = vpack.c.b16 %v7074, %v7062
        %v7567 = vpack.c.b16 %v7075, %v7063
        %v7568 = vpack.c.b16 %v7076, %v7064
        %v7569 = vpack.c.b16 %v7077, %v7065
        %v7570 = vpack.c.b16 %v7078, %v7066
        %v7571 = vpack.c.b16 %v7079, %v7067
        %v7572 = vpack.c.b16 %v7080, %v7068
        %v7573 = vpack.c.b16 %v7081, %v7069
        %v7574 = vpack.c.b16 %v7082, %v7070
        %v7575 = vpack.c.b16 %v7083, %v7071
        %v7576 = vpack.c.b16 %v7084, %v7072
        %v7577 = vpack.c.b16 %v7085, %v7073
        %v7578 = vpack.c.b16 %v7098, %v7086
        %v7579 = vpack.c.b16 %v7099, %v7087
        %v7580 = vpack.c.b16 %v7100, %v7088
        %v7581 = vpack.c.b16 %v7101, %v7089
        %v7582 = vpack.c.b16 %v7102, %v7090
        %v7583 = vpack.c.b16 %v7103, %v7091
        %v7584 = vpack.c.b16 %v7104, %v7092
        %v7585 = vpack.c.b16 %v7105, %v7093
        %v7586 = vpack.c.b16 %v7106, %v7094
        %v7587 = vpack.c.b16 %v7107, %v7095
        %v7588 = vpack.c.b16 %v7108, %v7096
        %v7589 = vpack.c.b16 %v7109, %v7097
        %v7590 = vpack.c.b16 %v7122, %v7110
        %v7591 = vpack.c.b16 %v7123, %v7111
        %v7592 = vpack.c.b16 %v7124, %v7112
        %v7593 = vpack.c.b16 %v7125, %v7113
        %v7594 = vpack.c.b16 %v7126, %v7114
        %v7595 = vpack.c.b16 %v7127, %v7115
        %v7596 = vpack.c.b16 %v7128, %v7116
        %v7597 = vpack.c.b16 %v7129, %v7117
        %v7598 = vpack.c.b16 %v7130, %v7118
        %v7599 = vpack.c.b16 %v7131, %v7119
        %v7600 = vpack.c.b16 %v7132, %v7120
        %v7601 = vpack.c.b16 %v7133, %v7121
        %v7602 = vpack.c.b16 %v7146, %v7134
        %v7603 = vpack.c.b16 %v7147, %v7135
        %v7604 = vpack.c.b16 %v7148, %v7136
        %v7605 = vpack.c.b16 %v7149, %v7137
        %v7606 = vpack.c.b16 %v7150, %v7138
        %v7607 = vpack.c.b16 %v7151, %v7139
        %v7608 = vpack.c.b16 %v7152, %v7140
        %v7609 = vpack.c.b16 %v7153, %v7141
        %v7610 = vpack.c.b16 %v7154, %v7142
        %v7611 = vpack.c.b16 %v7155, %v7143
        %v7612 = vpack.c.b16 %v7156, %v7144
        %v7613 = vpack.c.b16 %v7157, %v7145
        %v7614 = vpack.c.b16 %v7170, %v7158
        %v7615 = vpack.c.b16 %v7171, %v7159
        %v7616 = vpack.c.b16 %v7172, %v7160
        %v7617 = vpack.c.b16 %v7173, %v7161
        %v7618 = vpack.c.b16 %v7174, %v7162
        %v7619 = vpack.c.b16 %v7175, %v7163
        %v7620 = vpack.c.b16 %v7176, %v7164
        %v7621 = vpack.c.b16 %v7177, %v7165
        %v7622 = vpack.c.b16 %v7178, %v7166
        %v7623 = vpack.c.b16 %v7179, %v7167
        %v7624 = vpack.c.b16 %v7180, %v7168
        %v7625 = vpack.c.b16 %v7181, %v7169
        %v7626 = vpack.c.b16 %v7194, %v7182
        %v7627 = vpack.c.b16 %v7195, %v7183
        %v7628 = vpack.c.b16 %v7196, %v7184
        %v7629 = vpack.c.b16 %v7197, %v7185
        %v7630 = vpack.c.b16 %v7198, %v7186
        %v7631 = vpack.c.b16 %v7199, %v7187
        %v7632 = vpack.c.b16 %v7200, %v7188
        %v7633 = vpack.c.b16 %v7201, %v7189
        %v7634 = vpack.c.b16 %v7202, %v7190
        %v7635 = vpack.c.b16 %v7203, %v7191
        %v7636 = vpack.c.b16 %v7204, %v7192
        %v7637 = vpack.c.b16 %v7205, %v7193
        %v7638 = vpack.c.b16 %v7218, %v7206
        %v7639 = vpack.c.b16 %v7219, %v7207
        %v7640 = vpack.c.b16 %v7220, %v7208
        %v7641 = vpack.c.b16 %v7221, %v7209
        %v7642 = vpack.c.b16 %v7222, %v7210
        %v7643 = vpack.c.b16 %v7223, %v7211
        %v7644 = vpack.c.b16 %v7224, %v7212
        %v7645 = vpack.c.b16 %v7225, %v7213
        %v7646 = vpack.c.b16 %v7226, %v7214
        %v7647 = vpack.c.b16 %v7227, %v7215
        %v7648 = vpack.c.b16 %v7228, %v7216
        %v7649 = vpack.c.b16 %v7229, %v7217
        %v7650 = vpack.c.b16 %v7242, %v7230
        %v7651 = vpack.c.b16 %v7243, %v7231
        %v7652 = vpack.c.b16 %v7244, %v7232
        %v7653 = vpack.c.b16 %v7245, %v7233
        %v7654 = vpack.c.b16 %v7246, %v7234
        %v7655 = vpack.c.b16 %v7247, %v7235
        %v7656 = vpack.c.b16 %v7248, %v7236
        %v7657 = vpack.c.b16 %v7249, %v7237
        %v7658 = vpack.c.b16 %v7250, %v7238
        %v7659 = vpack.c.b16 %v7251, %v7239
        %v7660 = vpack.c.b16 %v7252, %v7240
        %v7661 = vpack.c.b16 %v7253, %v7241
        %v7662 = vpack.c.b16 %v7266, %v7254
        %v7663 = vpack.c.b16 %v7267, %v7255
        %v7664 = vpack.c.b16 %v7268, %v7256
        %v7665 = vpack.c.b16 %v7269, %v7257
        %v7666 = vpack.c.b16 %v7270, %v7258
        %v7667 = vpack.c.b16 %v7271, %v7259
        %v7668 = vpack.c.b16 %v7272, %v7260
        %v7669 = vpack.c.b16 %v7273, %v7261
        %v7670 = vpack.c.b16 %v7274, %v7262
        %v7671 = vpack.c.b16 %v7275, %v7263
        %v7672 = vpack.c.b16 %v7276, %v7264
        %v7673 = vpack.c.b16 %v7277, %v7265
        %v7674 = vpack.c.b16 %v7290, %v7278
        %v7675 = vpack.c.b16 %v7291, %v7279
        %v7676 = vpack.c.b16 %v7292, %v7280
        %v7677 = vpack.c.b16 %v7293, %v7281
        %v7678 = vpack.c.b16 %v7294, %v7282
        %v7679 = vpack.c.b16 %v7295, %v7283
        %v7680 = vpack.c.b16 %v7296, %v7284
        %v7681 = vpack.c.b16 %v7297, %v7285
        %v7682 = vpack.c.b16 %v7298, %v7286
        %v7683 = vpack.c.b16 %v7299, %v7287
        %v7684 = vpack.c.b16 %v7300, %v7288
        %v7685 = vpack.c.b16 %v7301, %v7289
        %8070 = vmatprep.subr.bf16.mxu0 %v7303
        %8071 = vmatpush1.bf16.msra.mxu0 %v7302
        %8072 = vmatprep.subr.bf16.mxu0 %v7315
        %8073 = vmatpush1.bf16.msra.mxu0 %v7314
        %8074 = vmatprep.subr.bf16.mxu0 %v7327
        %8075 = vmatpush1.bf16.msra.mxu0 %v7326
        %8076 = vmatprep.subr.bf16.mxu0 %v7339
        %8077 = vmatpush1.bf16.msra.mxu0 %v7338
        %8078 = vmatprep.subr.bf16.mxu0 %v7351
        %8079 = vmatpush1.bf16.msra.mxu0 %v7350
        %8080 = vmatprep.subr.bf16.mxu0 %v7363
        %8081 = vmatpush1.bf16.msra.mxu0 %v7362
        %8082 = vmatprep.subr.bf16.mxu0 %v7375
        %8083 = vmatpush1.bf16.msra.mxu0 %v7374
        %8084 = vmatprep.subr.bf16.mxu0 %v7387
        %8085 = vmatpush1.bf16.msra.mxu0 %v7386
        %8086 = vmatprep.subr.bf16.mxu0 %v7399
        %8087 = vmatpush1.bf16.msra.mxu0 %v7398
        %8088 = vmatprep.subr.bf16.mxu0 %v7411
        %8089 = vmatpush1.bf16.msra.mxu0 %v7410
        %8090 = vmatprep.subr.bf16.mxu0 %v7423
        %8091 = vmatpush1.bf16.msra.mxu0 %v7422
        %8092 = vmatprep.subr.bf16.mxu0 %v7435
        %8093 = vmatpush1.bf16.msra.mxu0 %v7434
        %8094 = vmatprep.subr.bf16.mxu0 %v7447
        %8095 = vmatpush1.bf16.msra.mxu0 %v7446
        %8096 = vmatprep.subr.bf16.mxu0 %v7459
        %8097 = vmatpush1.bf16.msra.mxu0 %v7458
        %8098 = vmatprep.subr.bf16.mxu0 %v7471
        %8099 = vmatpush1.bf16.msra.mxu0 %v7470
        %8100 = vmatprep.subr.bf16.mxu0 %v7483
        %8101 = vmatpush1.bf16.msra.mxu0 %v7482
        %8102 = vmatprep.mubr.bf16.mxu0 %v5699
        %8103 = vmatmul.mubr.bf16.gmra.mrb[0].mxu0 %v5698
        %v8104 = vpop.f32.mrb[0].mxu0
        %v8105 = vadd.f32 %v6093, %v8104
        %v8106 = vpop.f32.mrb[0].mxu0
        %v8107 = vadd.f32 %v6097, %v8106
        %v8108 = vpop.f32.mrb[0].mxu0
        %v8109 = vpop.f32.mrb[0].mxu0
        %8110 = vdwg.mxu0
        %8111 = vmatprep.subr.bf16.mxu0 %v7495
        %8112 = vmatpush1.bf16.msra.mxu0 %v7494
        %8113 = vmatprep.subr.bf16.mxu0 %v7507
        %8114 = vmatpush1.bf16.msra.mxu0 %v7506
        %8115 = vmatprep.subr.bf16.mxu0 %v7519
        %8116 = vmatpush1.bf16.msra.mxu0 %v7518
        %8117 = vmatprep.subr.bf16.mxu0 %v7531
        %8118 = vmatpush1.bf16.msra.mxu0 %v7530
        %8119 = vmatprep.subr.bf16.mxu0 %v7543
        %8120 = vmatpush1.bf16.msra.mxu0 %v7542
        %8121 = vmatprep.subr.bf16.mxu0 %v7555
        %8122 = vmatpush1.bf16.msra.mxu0 %v7554
        %8123 = vmatprep.subr.bf16.mxu0 %v7567
        %8124 = vmatpush1.bf16.msra.mxu0 %v7566
        %8125 = vmatprep.subr.bf16.mxu0 %v7579
        %8126 = vmatpush1.bf16.msra.mxu0 %v7578
        %8127 = vmatprep.subr.bf16.mxu0 %v7591
        %8128 = vmatpush1.bf16.msra.mxu0 %v7590
        %8129 = vmatprep.subr.bf16.mxu0 %v7603
        %8130 = vmatpush1.bf16.msra.mxu0 %v7602
        %8131 = vmatprep.subr.bf16.mxu0 %v7615
        %8132 = vmatpush1.bf16.msra.mxu0 %v7614
        %8133 = vmatprep.subr.bf16.mxu0 %v7627
        %8134 = vmatpush1.bf16.msra.mxu0 %v7626
        %8135 = vmatprep.subr.bf16.mxu0 %v7639
        %8136 = vmatpush1.bf16.msra.mxu0 %v7638
        %8137 = vmatprep.subr.bf16.mxu0 %v7651
        %8138 = vmatpush1.bf16.msra.mxu0 %v7650
        %8139 = vmatprep.subr.bf16.mxu0 %v7663
        %8140 = vmatpush1.bf16.msra.mxu0 %v7662
        %8141 = vmatprep.subr.bf16.mxu0 %v7675
        %8142 = vmatpush1.bf16.msra.mxu0 %v7674
        %8143 = vmatprep.mubr.bf16.mxu0 %v5701
        %8144 = vmatmul.mubr.bf16.gmra.mrb[0].mxu0 %v5700
        %v8145 = vpop.f32.mrb[0].mxu0
        %v8146 = vadd.f32 %v8105, %v8145
        %v8147 = vpop.f32.mrb[0].mxu0
        %v8148 = vadd.f32 %v8107, %v8147
        %v8149 = vpop.f32.mrb[0].mxu0
        %v8150 = vpop.f32.mrb[0].mxu0
        %8151 = vdwg.mxu0
        %8152 = vmatprep.subr.bf16.mxu0 %v7305
        %8153 = vmatpush1.bf16.msra.mxu0 %v7304
        %8154 = vmatprep.subr.bf16.mxu0 %v7317
        %8155 = vmatpush1.bf16.msra.mxu0 %v7316
        %8156 = vmatprep.subr.bf16.mxu0 %v7329
        %8157 = vmatpush1.bf16.msra.mxu0 %v7328
        %8158 = vmatprep.subr.bf16.mxu0 %v7341
        %8159 = vmatpush1.bf16.msra.mxu0 %v7340
        %8160 = vmatprep.subr.bf16.mxu0 %v7353
        %8161 = vmatpush1.bf16.msra.mxu0 %v7352
        %8162 = vmatprep.subr.bf16.mxu0 %v7365
        %8163 = vmatpush1.bf16.msra.mxu0 %v7364
        %8164 = vmatprep.subr.bf16.mxu0 %v7377
        %8165 = vmatpush1.bf16.msra.mxu0 %v7376
        %8166 = vmatprep.subr.bf16.mxu0 %v7389
        %8167 = vmatpush1.bf16.msra.mxu0 %v7388
        %8168 = vmatprep.subr.bf16.mxu0 %v7401
        %8169 = vmatpush1.bf16.msra.mxu0 %v7400
        %8170 = vmatprep.subr.bf16.mxu0 %v7413
        %8171 = vmatpush1.bf16.msra.mxu0 %v7412
        %8172 = vmatprep.subr.bf16.mxu0 %v7425
        %8173 = vmatpush1.bf16.msra.mxu0 %v7424
        %8174 = vmatprep.subr.bf16.mxu0 %v7437
        %8175 = vmatpush1.bf16.msra.mxu0 %v7436
        %8176 = vmatprep.subr.bf16.mxu0 %v7449
        %8177 = vmatpush1.bf16.msra.mxu0 %v7448
        %8178 = vmatprep.subr.bf16.mxu0 %v7461
        %8179 = vmatpush1.bf16.msra.mxu0 %v7460
        %8180 = vmatprep.subr.bf16.mxu0 %v7473
        %8181 = vmatpush1.bf16.msra.mxu0 %v7472
        %8182 = vmatprep.subr.bf16.mxu0 %v7485
        %8183 = vmatpush1.bf16.msra.mxu0 %v7484
        %8184 = vmatprep.mubr.bf16.mxu0 %v5699
        %8185 = vmatmul.mubr.bf16.gmra.mrb[0].mxu0 %v5698
        %v8186 = vpop.f32.mrb[0].mxu0
        %v8187 = vadd.f32 %v6101, %v8186
        %v8188 = vpop.f32.mrb[0].mxu0
        %v8189 = vadd.f32 %v6105, %v8188
        %v8190 = vpop.f32.mrb[0].mxu0
        %v8191 = vpop.f32.mrb[0].mxu0
        %8192 = vdwg.mxu0
        %8193 = vmatprep.subr.bf16.mxu0 %v7497
        %8194 = vmatpush1.bf16.msra.mxu0 %v7496
        %8195 = vmatprep.subr.bf16.mxu0 %v7509
        %8196 = vmatpush1.bf16.msra.mxu0 %v7508
        %8197 = vmatprep.subr.bf16.mxu0 %v7521
        %8198 = vmatpush1.bf16.msra.mxu0 %v7520
        %8199 = vmatprep.subr.bf16.mxu0 %v7533
        %8200 = vmatpush1.bf16.msra.mxu0 %v7532
        %8201 = vmatprep.subr.bf16.mxu0 %v7545
        %8202 = vmatpush1.bf16.msra.mxu0 %v7544
        %8203 = vmatprep.subr.bf16.mxu0 %v7557
        %8204 = vmatpush1.bf16.msra.mxu0 %v7556
        %8205 = vmatprep.subr.bf16.mxu0 %v7569
        %8206 = vmatpush1.bf16.msra.mxu0 %v7568
        %8207 = vmatprep.subr.bf16.mxu0 %v7581
        %8208 = vmatpush1.bf16.msra.mxu0 %v7580
        %8209 = vmatprep.subr.bf16.mxu0 %v7593
        %8210 = vmatpush1.bf16.msra.mxu0 %v7592
        %8211 = vmatprep.subr.bf16.mxu0 %v7605
        %8212 = vmatpush1.bf16.msra.mxu0 %v7604
        %8213 = vmatprep.subr.bf16.mxu0 %v7617
        %8214 = vmatpush1.bf16.msra.mxu0 %v7616
        %8215 = vmatprep.subr.bf16.mxu0 %v7629
        %8216 = vmatpush1.bf16.msra.mxu0 %v7628
        %8217 = vmatprep.subr.bf16.mxu0 %v7641
        %8218 = vmatpush1.bf16.msra.mxu0 %v7640
        %8219 = vmatprep.subr.bf16.mxu0 %v7653
        %8220 = vmatpush1.bf16.msra.mxu0 %v7652
        %8221 = vmatprep.subr.bf16.mxu0 %v7665
        %8222 = vmatpush1.bf16.msra.mxu0 %v7664
        %8223 = vmatprep.subr.bf16.mxu0 %v7677
        %8224 = vmatpush1.bf16.msra.mxu0 %v7676
        %8225 = vmatprep.mubr.bf16.mxu0 %v5701
        %8226 = vmatmul.mubr.bf16.gmra.mrb[0].mxu0 %v5700
        %v8227 = vpop.f32.mrb[0].mxu0
        %v8228 = vadd.f32 %v8187, %v8227
        %v8229 = vpop.f32.mrb[0].mxu0
        %v8230 = vadd.f32 %v8189, %v8229
        %v8231 = vpop.f32.mrb[0].mxu0
        %v8232 = vpop.f32.mrb[0].mxu0
        %8233 = vdwg.mxu0
        %8234 = vmatprep.subr.bf16.mxu0 %v7307
        %8235 = vmatpush1.bf16.msra.mxu0 %v7306
        %8236 = vmatprep.subr.bf16.mxu0 %v7319
        %8237 = vmatpush1.bf16.msra.mxu0 %v7318
        %8238 = vmatprep.subr.bf16.mxu0 %v7331
        %8239 = vmatpush1.bf16.msra.mxu0 %v7330
        %8240 = vmatprep.subr.bf16.mxu0 %v7343
        %8241 = vmatpush1.bf16.msra.mxu0 %v7342
        %8242 = vmatprep.subr.bf16.mxu0 %v7355
        %8243 = vmatpush1.bf16.msra.mxu0 %v7354
        %8244 = vmatprep.subr.bf16.mxu0 %v7367
        %8245 = vmatpush1.bf16.msra.mxu0 %v7366
        %8246 = vmatprep.subr.bf16.mxu0 %v7379
        %8247 = vmatpush1.bf16.msra.mxu0 %v7378
        %8248 = vmatprep.subr.bf16.mxu0 %v7391
        %8249 = vmatpush1.bf16.msra.mxu0 %v7390
        %8250 = vmatprep.subr.bf16.mxu0 %v7403
        %8251 = vmatpush1.bf16.msra.mxu0 %v7402
        %8252 = vmatprep.subr.bf16.mxu0 %v7415
        %8253 = vmatpush1.bf16.msra.mxu0 %v7414
        %8254 = vmatprep.subr.bf16.mxu0 %v7427
        %8255 = vmatpush1.bf16.msra.mxu0 %v7426
        %8256 = vmatprep.subr.bf16.mxu0 %v7439
        %8257 = vmatpush1.bf16.msra.mxu0 %v7438
        %8258 = vmatprep.subr.bf16.mxu0 %v7451
        %8259 = vmatpush1.bf16.msra.mxu0 %v7450
        %8260 = vmatprep.subr.bf16.mxu0 %v7463
        %8261 = vmatpush1.bf16.msra.mxu0 %v7462
        %8262 = vmatprep.subr.bf16.mxu0 %v7475
        %8263 = vmatpush1.bf16.msra.mxu0 %v7474
        %8264 = vmatprep.subr.bf16.mxu0 %v7487
        %8265 = vmatpush1.bf16.msra.mxu0 %v7486
        %8266 = vmatprep.mubr.bf16.mxu0 %v5699
        %8267 = vmatmul.mubr.bf16.gmra.mrb[0].mxu0 %v5698
        %v8268 = vpop.f32.mrb[0].mxu0
        %v8269 = vadd.f32 %v6109, %v8268
        %v8270 = vpop.f32.mrb[0].mxu0
        %v8271 = vadd.f32 %v6113, %v8270
        %v8272 = vpop.f32.mrb[0].mxu0
        %v8273 = vpop.f32.mrb[0].mxu0
        %8274 = vdwg.mxu0
        %8275 = vmatprep.subr.bf16.mxu0 %v7499
        %8276 = vmatpush1.bf16.msra.mxu0 %v7498
        %8277 = vmatprep.subr.bf16.mxu0 %v7511
        %8278 = vmatpush1.bf16.msra.mxu0 %v7510
        %8279 = vmatprep.subr.bf16.mxu0 %v7523
        %8280 = vmatpush1.bf16.msra.mxu0 %v7522
        %8281 = vmatprep.subr.bf16.mxu0 %v7535
        %8282 = vmatpush1.bf16.msra.mxu0 %v7534
        %8283 = vmatprep.subr.bf16.mxu0 %v7547
        %8284 = vmatpush1.bf16.msra.mxu0 %v7546
        %8285 = vmatprep.subr.bf16.mxu0 %v7559
        %8286 = vmatpush1.bf16.msra.mxu0 %v7558
        %8287 = vmatprep.subr.bf16.mxu0 %v7571
        %8288 = vmatpush1.bf16.msra.mxu0 %v7570
        %8289 = vmatprep.subr.bf16.mxu0 %v7583
        %8290 = vmatpush1.bf16.msra.mxu0 %v7582
        %8291 = vmatprep.subr.bf16.mxu0 %v7595
        %8292 = vmatpush1.bf16.msra.mxu0 %v7594
        %8293 = vmatprep.subr.bf16.mxu0 %v7607
        %8294 = vmatpush1.bf16.msra.mxu0 %v7606
        %8295 = vmatprep.subr.bf16.mxu0 %v7619
        %8296 = vmatpush1.bf16.msra.mxu0 %v7618
        %8297 = vmatprep.subr.bf16.mxu0 %v7631
        %8298 = vmatpush1.bf16.msra.mxu0 %v7630
        %8299 = vmatprep.subr.bf16.mxu0 %v7643
        %8300 = vmatpush1.bf16.msra.mxu0 %v7642
        %8301 = vmatprep.subr.bf16.mxu0 %v7655
        %8302 = vmatpush1.bf16.msra.mxu0 %v7654
        %8303 = vmatprep.subr.bf16.mxu0 %v7667
        %8304 = vmatpush1.bf16.msra.mxu0 %v7666
        %8305 = vmatprep.subr.bf16.mxu0 %v7679
        %8306 = vmatpush1.bf16.msra.mxu0 %v7678
        %8307 = vmatprep.mubr.bf16.mxu0 %v5701
        %8308 = vmatmul.mubr.bf16.gmra.mrb[0].mxu0 %v5700
        %v8309 = vpop.f32.mrb[0].mxu0
        %v8310 = vadd.f32 %v8269, %v8309
        %v8311 = vpop.f32.mrb[0].mxu0
        %v8312 = vadd.f32 %v8271, %v8311
        %v8313 = vpop.f32.mrb[0].mxu0
        %v8314 = vpop.f32.mrb[0].mxu0
        %8315 = vdwg.mxu0
        %8316 = vmatprep.subr.bf16.mxu0 %v7309
        %8317 = vmatpush1.bf16.msra.mxu0 %v7308
        %8318 = vmatprep.subr.bf16.mxu0 %v7321
        %8319 = vmatpush1.bf16.msra.mxu0 %v7320
        %8320 = vmatprep.subr.bf16.mxu0 %v7333
        %8321 = vmatpush1.bf16.msra.mxu0 %v7332
        %8322 = vmatprep.subr.bf16.mxu0 %v7345
        %8323 = vmatpush1.bf16.msra.mxu0 %v7344
        %8324 = vmatprep.subr.bf16.mxu0 %v7357
        %8325 = vmatpush1.bf16.msra.mxu0 %v7356
        %8326 = vmatprep.subr.bf16.mxu0 %v7369
        %8327 = vmatpush1.bf16.msra.mxu0 %v7368
        %8328 = vmatprep.subr.bf16.mxu0 %v7381
        %8329 = vmatpush1.bf16.msra.mxu0 %v7380
        %8330 = vmatprep.subr.bf16.mxu0 %v7393
        %8331 = vmatpush1.bf16.msra.mxu0 %v7392
        %8332 = vmatprep.subr.bf16.mxu0 %v7405
        %8333 = vmatpush1.bf16.msra.mxu0 %v7404
        %8334 = vmatprep.subr.bf16.mxu0 %v7417
        %8335 = vmatpush1.bf16.msra.mxu0 %v7416
        %8336 = vmatprep.subr.bf16.mxu0 %v7429
        %8337 = vmatpush1.bf16.msra.mxu0 %v7428
        %8338 = vmatprep.subr.bf16.mxu0 %v7441
        %8339 = vmatpush1.bf16.msra.mxu0 %v7440
        %8340 = vmatprep.subr.bf16.mxu0 %v7453
        %8341 = vmatpush1.bf16.msra.mxu0 %v7452
        %8342 = vmatprep.subr.bf16.mxu0 %v7465
        %8343 = vmatpush1.bf16.msra.mxu0 %v7464
        %8344 = vmatprep.subr.bf16.mxu0 %v7477
        %8345 = vmatpush1.bf16.msra.mxu0 %v7476
        %8346 = vmatprep.subr.bf16.mxu0 %v7489
        %8347 = vmatpush1.bf16.msra.mxu0 %v7488
        %8348 = vmatprep.mubr.bf16.mxu0 %v5699
        %8349 = vmatmul.mubr.bf16.gmra.mrb[0].mxu0 %v5698
        %v8350 = vpop.f32.mrb[0].mxu0
        %v8351 = vadd.f32 %v6117, %v8350
        %v8352 = vpop.f32.mrb[0].mxu0
        %v8353 = vadd.f32 %v6121, %v8352
        %v8354 = vpop.f32.mrb[0].mxu0
        %v8355 = vpop.f32.mrb[0].mxu0
        %8356 = vdwg.mxu0
        %8357 = vmatprep.subr.bf16.mxu0 %v7501
        %8358 = vmatpush1.bf16.msra.mxu0 %v7500
        %8359 = vmatprep.subr.bf16.mxu0 %v7513
        %8360 = vmatpush1.bf16.msra.mxu0 %v7512
        %8361 = vmatprep.subr.bf16.mxu0 %v7525
        %8362 = vmatpush1.bf16.msra.mxu0 %v7524
        %8363 = vmatprep.subr.bf16.mxu0 %v7537
        %8364 = vmatpush1.bf16.msra.mxu0 %v7536
        %8365 = vmatprep.subr.bf16.mxu0 %v7549
        %8366 = vmatpush1.bf16.msra.mxu0 %v7548
        %8367 = vmatprep.subr.bf16.mxu0 %v7561
        %8368 = vmatpush1.bf16.msra.mxu0 %v7560
        %8369 = vmatprep.subr.bf16.mxu0 %v7573
        %8370 = vmatpush1.bf16.msra.mxu0 %v7572
        %8371 = vmatprep.subr.bf16.mxu0 %v7585
        %8372 = vmatpush1.bf16.msra.mxu0 %v7584
        %8373 = vmatprep.subr.bf16.mxu0 %v7597
        %8374 = vmatpush1.bf16.msra.mxu0 %v7596
        %8375 = vmatprep.subr.bf16.mxu0 %v7609
        %8376 = vmatpush1.bf16.msra.mxu0 %v7608
        %8377 = vmatprep.subr.bf16.mxu0 %v7621
        %8378 = vmatpush1.bf16.msra.mxu0 %v7620
        %8379 = vmatprep.subr.bf16.mxu0 %v7633
        %8380 = vmatpush1.bf16.msra.mxu0 %v7632
        %8381 = vmatprep.subr.bf16.mxu0 %v7645
        %8382 = vmatpush1.bf16.msra.mxu0 %v7644
        %8383 = vmatprep.subr.bf16.mxu0 %v7657
        %8384 = vmatpush1.bf16.msra.mxu0 %v7656
        %8385 = vmatprep.subr.bf16.mxu0 %v7669
        %8386 = vmatpush1.bf16.msra.mxu0 %v7668
        %8387 = vmatprep.subr.bf16.mxu0 %v7681
        %8388 = vmatpush1.bf16.msra.mxu0 %v7680
        %8389 = vmatprep.mubr.bf16.mxu0 %v5701
        %8390 = vmatmul.mubr.bf16.gmra.mrb[0].mxu0 %v5700
        %v8391 = vpop.f32.mrb[0].mxu0
        %v8392 = vadd.f32 %v8351, %v8391
        %v8393 = vpop.f32.mrb[0].mxu0
        %v8394 = vadd.f32 %v8353, %v8393
        %v8395 = vpop.f32.mrb[0].mxu0
        %v8396 = vpop.f32.mrb[0].mxu0
        %8397 = vdwg.mxu0
        %8398 = vmatprep.subr.bf16.mxu0 %v7311
        %8399 = vmatpush1.bf16.msra.mxu0 %v7310
        %8400 = vmatprep.subr.bf16.mxu0 %v7323
        %8401 = vmatpush1.bf16.msra.mxu0 %v7322
        %8402 = vmatprep.subr.bf16.mxu0 %v7335
        %8403 = vmatpush1.bf16.msra.mxu0 %v7334
        %8404 = vmatprep.subr.bf16.mxu0 %v7347
        %8405 = vmatpush1.bf16.msra.mxu0 %v7346
        %8406 = vmatprep.subr.bf16.mxu0 %v7359
        %8407 = vmatpush1.bf16.msra.mxu0 %v7358
        %8408 = vmatprep.subr.bf16.mxu0 %v7371
        %8409 = vmatpush1.bf16.msra.mxu0 %v7370
        %8410 = vmatprep.subr.bf16.mxu0 %v7383
        %8411 = vmatpush1.bf16.msra.mxu0 %v7382
        %8412 = vmatprep.subr.bf16.mxu0 %v7395
        %8413 = vmatpush1.bf16.msra.mxu0 %v7394
        %8414 = vmatprep.subr.bf16.mxu0 %v7407
        %8415 = vmatpush1.bf16.msra.mxu0 %v7406
        %8416 = vmatprep.subr.bf16.mxu0 %v7419
        %8417 = vmatpush1.bf16.msra.mxu0 %v7418
        %8418 = vmatprep.subr.bf16.mxu0 %v7431
        %8419 = vmatpush1.bf16.msra.mxu0 %v7430
        %8420 = vmatprep.subr.bf16.mxu0 %v7443
        %8421 = vmatpush1.bf16.msra.mxu0 %v7442
        %8422 = vmatprep.subr.bf16.mxu0 %v7455
        %8423 = vmatpush1.bf16.msra.mxu0 %v7454
        %8424 = vmatprep.subr.bf16.mxu0 %v7467
        %8425 = vmatpush1.bf16.msra.mxu0 %v7466
        %8426 = vmatprep.subr.bf16.mxu0 %v7479
        %8427 = vmatpush1.bf16.msra.mxu0 %v7478
        %8428 = vmatprep.subr.bf16.mxu0 %v7491
        %8429 = vmatpush1.bf16.msra.mxu0 %v7490
        %8430 = vmatprep.mubr.bf16.mxu0 %v5699
        %8431 = vmatmul.mubr.bf16.gmra.mrb[0].mxu0 %v5698
        %v8432 = vpop.f32.mrb[0].mxu0
        %v8433 = vadd.f32 %v6125, %v8432
        %v8434 = vpop.f32.mrb[0].mxu0
        %v8435 = vadd.f32 %v6129, %v8434
        %v8436 = vpop.f32.mrb[0].mxu0
        %v8437 = vpop.f32.mrb[0].mxu0
        %8438 = vdwg.mxu0
        %8439 = vmatprep.subr.bf16.mxu0 %v7503
        %8440 = vmatpush1.bf16.msra.mxu0 %v7502
        %8441 = vmatprep.subr.bf16.mxu0 %v7515
        %8442 = vmatpush1.bf16.msra.mxu0 %v7514
        %8443 = vmatprep.subr.bf16.mxu0 %v7527
        %8444 = vmatpush1.bf16.msra.mxu0 %v7526
        %8445 = vmatprep.subr.bf16.mxu0 %v7539
        %8446 = vmatpush1.bf16.msra.mxu0 %v7538
        %8447 = vmatprep.subr.bf16.mxu0 %v7551
        %8448 = vmatpush1.bf16.msra.mxu0 %v7550
        %8449 = vmatprep.subr.bf16.mxu0 %v7563
        %8450 = vmatpush1.bf16.msra.mxu0 %v7562
        %8451 = vmatprep.subr.bf16.mxu0 %v7575
        %8452 = vmatpush1.bf16.msra.mxu0 %v7574
        %8453 = vmatprep.subr.bf16.mxu0 %v7587
        %8454 = vmatpush1.bf16.msra.mxu0 %v7586
        %8455 = vmatprep.subr.bf16.mxu0 %v7599
        %8456 = vmatpush1.bf16.msra.mxu0 %v7598
        %8457 = vmatprep.subr.bf16.mxu0 %v7611
        %8458 = vmatpush1.bf16.msra.mxu0 %v7610
        %8459 = vmatprep.subr.bf16.mxu0 %v7623
        %8460 = vmatpush1.bf16.msra.mxu0 %v7622
        %8461 = vmatprep.subr.bf16.mxu0 %v7635
        %8462 = vmatpush1.bf16.msra.mxu0 %v7634
        %8463 = vmatprep.subr.bf16.mxu0 %v7647
        %8464 = vmatpush1.bf16.msra.mxu0 %v7646
        %8465 = vmatprep.subr.bf16.mxu0 %v7659
        %8466 = vmatpush1.bf16.msra.mxu0 %v7658
        %8467 = vmatprep.subr.bf16.mxu0 %v7671
        %8468 = vmatpush1.bf16.msra.mxu0 %v7670
        %8469 = vmatprep.subr.bf16.mxu0 %v7683
        %8470 = vmatpush1.bf16.msra.mxu0 %v7682
        %8471 = vmatprep.mubr.bf16.mxu0 %v5701
        %8472 = vmatmul.mubr.bf16.gmra.mrb[0].mxu0 %v5700
        %v8473 = vpop.f32.mrb[0].mxu0
        %v8474 = vadd.f32 %v8433, %v8473
        %v8475 = vpop.f32.mrb[0].mxu0
        %v8476 = vadd.f32 %v8435, %v8475
        %v8477 = vpop.f32.mrb[0].mxu0
        %v8478 = vpop.f32.mrb[0].mxu0
        %8479 = vdwg.mxu0
        %8480 = vmatprep.subr.bf16.mxu0 %v7313
        %8481 = vmatpush1.bf16.msra.mxu0 %v7312
        %8482 = vmatprep.subr.bf16.mxu0 %v7325
        %8483 = vmatpush1.bf16.msra.mxu0 %v7324
        %8484 = vmatprep.subr.bf16.mxu0 %v7337
        %8485 = vmatpush1.bf16.msra.mxu0 %v7336
        %8486 = vmatprep.subr.bf16.mxu0 %v7349
        %8487 = vmatpush1.bf16.msra.mxu0 %v7348
        %8488 = vmatprep.subr.bf16.mxu0 %v7361
        %8489 = vmatpush1.bf16.msra.mxu0 %v7360
        %8490 = vmatprep.subr.bf16.mxu0 %v7373
        %8491 = vmatpush1.bf16.msra.mxu0 %v7372
        %8492 = vmatprep.subr.bf16.mxu0 %v7385
        %8493 = vmatpush1.bf16.msra.mxu0 %v7384
        %8494 = vmatprep.subr.bf16.mxu0 %v7397
        %8495 = vmatpush1.bf16.msra.mxu0 %v7396
        %8496 = vmatprep.subr.bf16.mxu0 %v7409
        %8497 = vmatpush1.bf16.msra.mxu0 %v7408
        %8498 = vmatprep.subr.bf16.mxu0 %v7421
        %8499 = vmatpush1.bf16.msra.mxu0 %v7420
        %8500 = vmatprep.subr.bf16.mxu0 %v7433
        %8501 = vmatpush1.bf16.msra.mxu0 %v7432
        %8502 = vmatprep.subr.bf16.mxu0 %v7445
        %8503 = vmatpush1.bf16.msra.mxu0 %v7444
        %8504 = vmatprep.subr.bf16.mxu0 %v7457
        %8505 = vmatpush1.bf16.msra.mxu0 %v7456
        %8506 = vmatprep.subr.bf16.mxu0 %v7469
        %8507 = vmatpush1.bf16.msra.mxu0 %v7468
        %8508 = vmatprep.subr.bf16.mxu0 %v7481
        %8509 = vmatpush1.bf16.msra.mxu0 %v7480
        %8510 = vmatprep.subr.bf16.mxu0 %v7493
        %8511 = vmatpush1.bf16.msra.mxu0 %v7492
        %8512 = vmatprep.mubr.bf16.mxu0 %v5699
        %8513 = vmatmul.mubr.bf16.gmra.mrb[0].mxu0 %v5698
        %v8514 = vpop.f32.mrb[0].mxu0
        %v8515 = vadd.f32 %v6133, %v8514
        %v8516 = vpop.f32.mrb[0].mxu0
        %v8517 = vadd.f32 %v6137, %v8516
        %v8518 = vpop.f32.mrb[0].mxu0
        %v8519 = vpop.f32.mrb[0].mxu0
        %8520 = vdwg.mxu0
        %8521 = vmatprep.subr.bf16.mxu0 %v7505
        %8522 = vmatpush1.bf16.msra.mxu0 %v7504
        %8523 = vmatprep.subr.bf16.mxu0 %v7517
        %8524 = vmatpush1.bf16.msra.mxu0 %v7516
        %8525 = vmatprep.subr.bf16.mxu0 %v7529
        %8526 = vmatpush1.bf16.msra.mxu0 %v7528
        %8527 = vmatprep.subr.bf16.mxu0 %v7541
        %8528 = vmatpush1.bf16.msra.mxu0 %v7540
        %8529 = vmatprep.subr.bf16.mxu0 %v7553
        %8530 = vmatpush1.bf16.msra.mxu0 %v7552
        %8531 = vmatprep.subr.bf16.mxu0 %v7565
        %8532 = vmatpush1.bf16.msra.mxu0 %v7564
        %8533 = vmatprep.subr.bf16.mxu0 %v7577
        %8534 = vmatpush1.bf16.msra.mxu0 %v7576
        %8535 = vmatprep.subr.bf16.mxu0 %v7589
        %8536 = vmatpush1.bf16.msra.mxu0 %v7588
        %8537 = vmatprep.subr.bf16.mxu0 %v7601
        %8538 = vmatpush1.bf16.msra.mxu0 %v7600
        %8539 = vmatprep.subr.bf16.mxu0 %v7613
        %8540 = vmatpush1.bf16.msra.mxu0 %v7612
        %8541 = vmatprep.subr.bf16.mxu0 %v7625
        %8542 = vmatpush1.bf16.msra.mxu0 %v7624
        %8543 = vmatprep.subr.bf16.mxu0 %v7637
        %8544 = vmatpush1.bf16.msra.mxu0 %v7636
        %8545 = vmatprep.subr.bf16.mxu0 %v7649
        %8546 = vmatpush1.bf16.msra.mxu0 %v7648
        %8547 = vmatprep.subr.bf16.mxu0 %v7661
        %8548 = vmatpush1.bf16.msra.mxu0 %v7660
        %8549 = vmatprep.subr.bf16.mxu0 %v7673
        %8550 = vmatpush1.bf16.msra.mxu0 %v7672
        %8551 = vmatprep.subr.bf16.mxu0 %v7685
        %8552 = vmatpush1.bf16.msra.mxu0 %v7684
        %8553 = vmatprep.mubr.bf16.mxu0 %v5701
        %8554 = vmatmul.mubr.bf16.gmra.mrb[0].mxu0 %v5700
        %v8555 = vpop.f32.mrb[0].mxu0
        %v8556 = vadd.f32 %v8515, %v8555
        %v8557 = vpop.f32.mrb[0].mxu0
        %v8558 = vadd.f32 %v8517, %v8557
        %v8559 = vpop.f32.mrb[0].mxu0
        %v8560 = vpop.f32.mrb[0].mxu0
        %8561 = vdwg.mxu0
        %v8562 = vxor.u32 %v8146, 2147483648
        %v8563 = vxor.u32 %v8148, 2147483648
        %v8564 = vxor.u32 %v8228, 2147483648
        %v8565 = vxor.u32 %v8230, 2147483648
        %v8566 = vmul.f32 %v8562, 1.442695
        %v8567 = vpow.pop %v8566
        %v8568 = vmul.f32 %v8563, 1.442695
        %v8569 = vpow.pop %v8568
        %v8570 = vmul.f32 %v8564, 1.442695
        %v8571 = vpow.pop %v8570
        %v8572 = vmul.f32 %v8565, 1.442695
        %v8573 = vpow.pop %v8572
        %v8574 = vadd.f32 %v8567, 1.0
        %v8575 = vadd.f32 %v8569, 1.0
        %v8576 = vadd.f32 %v8571, 1.0
        %v8577 = vadd.f32 %v8573, 1.0
        %v8578 = vrcp.pop %v8574
        %v8579 = vmul.f32 1.0, %v8578
        %v8580 = vrcp.pop %v8575
        %v8581 = vmul.f32 1.0, %v8580
        %v8582 = vrcp.pop %v8576
        %v8583 = vmul.f32 1.0, %v8582
        %v8584 = vrcp.pop %v8577
        %v8585 = vmul.f32 1.0, %v8584
        %v8586 = vtanh.pop %v8310
        %v8587 = vtanh.pop %v8312
        %v8588 = vtanh.pop %v8392
        %v8589 = vtanh.pop %v8394
        %v8590 = vxor.u32 %v8474, 2147483648
        %v8591 = vxor.u32 %v8476, 2147483648
        %v8592 = vxor.u32 %v8556, 2147483648
        %v8593 = vxor.u32 %v8558, 2147483648
        %v8594 = vmul.f32 %v8590, 1.442695
        %v8595 = vpow.pop %v8594
        %v8596 = vmul.f32 %v8591, 1.442695
        %v8597 = vpow.pop %v8596
        %v8598 = vmul.f32 %v8592, 1.442695
        %v8599 = vpow.pop %v8598
        %v8600 = vmul.f32 %v8593, 1.442695
        %v8601 = vpow.pop %v8600
        %v8602 = vadd.f32 %v8595, 1.0
        %v8603 = vadd.f32 %v8597, 1.0
        %v8604 = vadd.f32 %v8599, 1.0
        %v8605 = vadd.f32 %v8601, 1.0
        %v8606 = vrcp.pop %v8602
        %v8607 = vmul.f32 1.0, %v8606
        %v8608 = vrcp.pop %v8603
        %v8609 = vmul.f32 1.0, %v8608
        %v8610 = vrcp.pop %v8604
        %v8611 = vmul.f32 1.0, %v8610
        %v8612 = vrcp.pop %v8605
        %v8613 = vmul.f32 1.0, %v8612
        %v8614 = vmul.f32 %v8579, %v8586
        %v8615 = vmul.f32 %v8581, %v8587
        %v8616 = vmul.f32 %v8583, %v8588
        %v8617 = vmul.f32 %v8585, %v8589
        %v8618 = vtanh.pop %v8614
        %v8619 = vtanh.pop %v8615
        %v8620 = vtanh.pop %v8616
        %v8621 = vtanh.pop %v8617
        %v8622 = vmul.f32 %v8607, %v8618
        %v8623 = vmul.f32 %v8609, %v8619
        %v8624 = vmul.f32 %v8611, %v8620
        %v8625 = vmul.f32 %v8613, %v8621
        %8626 = vst [vmem:[#allocation2] sm:$0xff] %v8622
        %8627 = vst [vmem:[#allocation2 + $0x8] sm:$0xff] %v8623
        %8628 = vst [vmem:[#allocation2 + $0x10] sm:$0xff] %v8624
        %8629 = vst [vmem:[#allocation2 + $0x18] sm:$0xff] %v8625
        %p8630 = scmp.eq.s32.totalorder %s29, 3
        // Predicated region
        $region117: #{tpu_custom_call.1} parent=67 // pred_check
          %p8631 = pneg %p8630
        $region118: #{tpu_custom_call.1} parent=67 // pred_check_branch
          %8633 = sbr.rel (%p8631) target = $region120
        $region119: #{tpu_custom_call.1} parent=67 // pred_region
          %v8634 = vld [vmem:[#allocation2] sm:$0xff]
          %v8635 = vld [vmem:[#allocation2 + $0x8] sm:$0xff]
          %v8636 = vld [vmem:[#allocation2 + $0x10] sm:$0xff]
          %v8637 = vld [vmem:[#allocation2 + $0x18] sm:$0xff]
          %v8638 = vld [vmem:[%s10] sm:$0xff]
          %v8639 = vld [vmem:[%s10 + $0x8] sm:$0xff]
          %v8640 = vld [vmem:[%s10 + $0x10] sm:$0xff]
          %v8641 = vld [vmem:[%s10 + $0x18] sm:$0xff]
          %v8642 = vld [vmem:[%s10 + $0x20] sm:$0xff]
          %v8643 = vld [vmem:[%s10 + $0x28] sm:$0xff]
          %v8644 = vld [vmem:[%s10 + $0x30] sm:$0xff]
          %v8645 = vld [vmem:[%s10 + $0x38] sm:$0xff]
          %v8646 = vld [vmem:[%s10 + $0x40] sm:$0xff]
          %v8647 = vld [vmem:[%s10 + $0x48] sm:$0xff]
          %v8648 = vld [vmem:[%s10 + $0x50] sm:$0xff]
          %v8649 = vld [vmem:[%s10 + $0x58] sm:$0xff]
          %v8650 = vld [vmem:[%s10 + $0x60] sm:$0xff]
          %v8651 = vld [vmem:[%s10 + $0x68] sm:$0xff]
          %v8652 = vld [vmem:[%s10 + $0x70] sm:$0xff]
          %v8653 = vld [vmem:[%s10 + $0x78] sm:$0xff]
          %v8654 = vld [vmem:[%s10 + $0x80] sm:$0xff]
          %v8655 = vld [vmem:[%s10 + $0x88] sm:$0xff]
          %v8656 = vld [vmem:[%s10 + $0x90] sm:$0xff]
          %v8657 = vld [vmem:[%s10 + $0x98] sm:$0xff]
          %v8658 = vld [vmem:[%s10 + $0xa0] sm:$0xff]
          %v8659 = vld [vmem:[%s10 + $0xa8] sm:$0xff]
          %v8660 = vld [vmem:[%s10 + $0xb0] sm:$0xff]
          %v8661 = vld [vmem:[%s10 + $0xb8] sm:$0xff]
          %v8662 = vld [vmem:[%s10 + $0xc0] sm:$0xff]
          %v8663 = vld [vmem:[%s10 + $0xc8] sm:$0xff]
          %v8664 = vld [vmem:[%s10 + $0xd0] sm:$0xff]
          %v8665 = vld [vmem:[%s10 + $0xd8] sm:$0xff]
          %v8666 = vld [vmem:[%s10 + $0xe0] sm:$0xff]
          %v8667 = vld [vmem:[%s10 + $0xe8] sm:$0xff]
          %v8668 = vld [vmem:[%s10 + $0xf0] sm:$0xff]
          %v8669 = vld [vmem:[%s10 + $0xf8] sm:$0xff]
          %v8670 = vld [vmem:[%s10 + $0x100] sm:$0xff]
          %v8671 = vld [vmem:[%s10 + $0x108] sm:$0xff]
          %v8672 = vld [vmem:[%s10 + $0x110] sm:$0xff]
          %v8673 = vld [vmem:[%s10 + $0x118] sm:$0xff]
          %v8674 = vld [vmem:[%s10 + $0x120] sm:$0xff]
          %v8675 = vld [vmem:[%s10 + $0x128] sm:$0xff]
          %v8676 = vld [vmem:[%s10 + $0x130] sm:$0xff]
          %v8677 = vld [vmem:[%s10 + $0x138] sm:$0xff]
          %v8678 = vld [vmem:[%s10 + $0x140] sm:$0xff]
          %v8679 = vld [vmem:[%s10 + $0x148] sm:$0xff]
          %v8680 = vld [vmem:[%s10 + $0x150] sm:$0xff]
          %v8681 = vld [vmem:[%s10 + $0x158] sm:$0xff]
          %v8682 = vld [vmem:[%s10 + $0x160] sm:$0xff]
          %v8683 = vld [vmem:[%s10 + $0x168] sm:$0xff]
          %v8684 = vld [vmem:[%s10 + $0x170] sm:$0xff]
          %v8685 = vld [vmem:[%s10 + $0x178] sm:$0xff]
          %v8686 = vld [vmem:[%s10 + $0x180] sm:$0xff]
          %v8687 = vld [vmem:[%s10 + $0x188] sm:$0xff]
          %v8688 = vld [vmem:[%s10 + $0x190] sm:$0xff]
          %v8689 = vld [vmem:[%s10 + $0x198] sm:$0xff]
          %v8690 = vld [vmem:[%s10 + $0x1a0] sm:$0xff]
          %v8691 = vld [vmem:[%s10 + $0x1a8] sm:$0xff]
          %v8692 = vld [vmem:[%s10 + $0x1b0] sm:$0xff]
          %v8693 = vld [vmem:[%s10 + $0x1b8] sm:$0xff]
          %v8694 = vld [vmem:[%s10 + $0x1c0] sm:$0xff]
          %v8695 = vld [vmem:[%s10 + $0x1c8] sm:$0xff]
          %v8696 = vld [vmem:[%s10 + $0x1d0] sm:$0xff]
          %v8697 = vld [vmem:[%s10 + $0x1d8] sm:$0xff]
          %v8698 = vld [vmem:[%s10 + $0x1e0] sm:$0xff]
          %v8699 = vld [vmem:[%s10 + $0x1e8] sm:$0xff]
          %v8700 = vld [vmem:[%s10 + $0x1f0] sm:$0xff]
          %v8701 = vld [vmem:[%s10 + $0x1f8] sm:$0xff]
          %v8702 = vld [vmem:[#allocation19] sm:$0x1]
          %v8704 = vlaneseq
          %v8705 = vshrl.u32 %v8704, 7
          %v8706 = vsub.s32 0, %v8705
          %v8707 = vrot.slane %v8702, %v8706
          %8709 = vmatprep.subr.mxu0 0.0
          %8710 = vmatpush1.msra.mxu0 %v8638
          %8711 = vmatprep.subr.mxu0 0.0
          %8712 = vmatpush1.msra.mxu0 %v8639
          %8713 = vmatprep.subr.mxu0 0.0
          %8714 = vmatpush1.msra.mxu0 %v8640
          %8715 = vmatprep.subr.mxu0 0.0
          %8716 = vmatpush1.msra.mxu0 %v8641
          %8717 = vmatprep.subr.mxu0 0.0
          %8718 = vmatpush1.msra.mxu0 %v8642
          %8719 = vmatprep.subr.mxu0 0.0
          %8720 = vmatpush1.msra.mxu0 %v8643
          %8721 = vmatprep.subr.mxu0 0.0
          %8722 = vmatpush1.msra.mxu0 %v8644
          %8723 = vmatprep.subr.mxu0 0.0
          %8724 = vmatpush1.msra.mxu0 %v8645
          %8725 = vmatprep.subr.mxu0 0.0
          %8726 = vmatpush1.msra.mxu0 %v8646
          %8727 = vmatprep.subr.mxu0 0.0
          %8728 = vmatpush1.msra.mxu0 %v8647
          %8729 = vmatprep.subr.mxu0 0.0
          %8730 = vmatpush1.msra.mxu0 %v8648
          %8731 = vmatprep.subr.mxu0 0.0
          %8732 = vmatpush1.msra.mxu0 %v8649
          %8733 = vmatprep.subr.mxu0 0.0
          %8734 = vmatpush1.msra.mxu0 %v8650
          %8735 = vmatprep.subr.mxu0 0.0
          %8736 = vmatpush1.msra.mxu0 %v8651
          %8737 = vmatprep.subr.mxu0 0.0
          %8738 = vmatpush1.msra.mxu0 %v8652
          %8739 = vmatprep.subr.mxu0 0.0
          %8740 = vmatpush1.msra.mxu0 %v8653
          %8741 = vmatprep.subr.mxu0 0.0
          %8742 = vmatpush1.msra.mxu0 %v8654
          %8743 = vmatprep.subr.mxu0 0.0
          %8744 = vmatpush1.msra.mxu0 %v8655
          %8745 = vmatprep.subr.mxu0 0.0
          %8746 = vmatpush1.msra.mxu0 %v8656
          %8747 = vmatprep.subr.mxu0 0.0
          %8748 = vmatpush1.msra.mxu0 %v8657
          %8749 = vmatprep.subr.mxu0 0.0
          %8750 = vmatpush1.msra.mxu0 %v8658
          %8751 = vmatprep.subr.mxu0 0.0
          %8752 = vmatpush1.msra.mxu0 %v8659
          %8753 = vmatprep.subr.mxu0 0.0
          %8754 = vmatpush1.msra.mxu0 %v8660
          %8755 = vmatprep.subr.mxu0 0.0
          %8756 = vmatpush1.msra.mxu0 %v8661
          %8757 = vmatprep.subr.mxu0 0.0
          %8758 = vmatpush1.msra.mxu0 %v8662
          %8759 = vmatprep.subr.mxu0 0.0
          %8760 = vmatpush1.msra.mxu0 %v8663
          %8761 = vmatprep.subr.mxu0 0.0
          %8762 = vmatpush1.msra.mxu0 %v8664
          %8763 = vmatprep.subr.mxu0 0.0
          %8764 = vmatpush1.msra.mxu0 %v8665
          %8765 = vmatprep.subr.mxu0 0.0
          %8766 = vmatpush1.msra.mxu0 %v8666
          %8767 = vmatprep.subr.mxu0 0.0
          %8768 = vmatpush1.msra.mxu0 %v8667
          %8769 = vmatprep.subr.mxu0 0.0
          %8770 = vmatpush1.msra.mxu0 %v8668
          %8771 = vmatprep.subr.mxu0 0.0
          %8772 = vmatpush1.msra.mxu0 %v8669
          %8773 = vmatprep.mubr.f32.mxu0 %v8635
          %8774 = vmatmul.mubr.f32.gmra.mrb[0].mxu0 %v8634
          %v8775 = vpop.f32.mrb[0].mxu0
          %v8776 = vadd.f32 %v8707, %v8775
          %v8777 = vpop.f32.mrb[0].mxu0
          %8778 = vdwg.mxu0
          %8779 = vmatprep.subr.mxu0 0.0
          %8780 = vmatpush1.msra.mxu0 %v8670
          %8781 = vmatprep.subr.mxu0 0.0
          %8782 = vmatpush1.msra.mxu0 %v8671
          %8783 = vmatprep.subr.mxu0 0.0
          %8784 = vmatpush1.msra.mxu0 %v8672
          %8785 = vmatprep.subr.mxu0 0.0
          %8786 = vmatpush1.msra.mxu0 %v8673
          %8787 = vmatprep.subr.mxu0 0.0
          %8788 = vmatpush1.msra.mxu0 %v8674
          %8789 = vmatprep.subr.mxu0 0.0
          %8790 = vmatpush1.msra.mxu0 %v8675
          %8791 = vmatprep.subr.mxu0 0.0
          %8792 = vmatpush1.msra.mxu0 %v8676
          %8793 = vmatprep.subr.mxu0 0.0
          %8794 = vmatpush1.msra.mxu0 %v8677
          %8795 = vmatprep.subr.mxu0 0.0
          %8796 = vmatpush1.msra.mxu0 %v8678
          %8797 = vmatprep.subr.mxu0 0.0
          %8798 = vmatpush1.msra.mxu0 %v8679
          %8799 = vmatprep.subr.mxu0 0.0
          %8800 = vmatpush1.msra.mxu0 %v8680
          %8801 = vmatprep.subr.mxu0 0.0
          %8802 = vmatpush1.msra.mxu0 %v8681
          %8803 = vmatprep.subr.mxu0 0.0
          %8804 = vmatpush1.msra.mxu0 %v8682
          %8805 = vmatprep.subr.mxu0 0.0
          %8806 = vmatpush1.msra.mxu0 %v8683
          %8807 = vmatprep.subr.mxu0 0.0
          %8808 = vmatpush1.msra.mxu0 %v8684
          %8809 = vmatprep.subr.mxu0 0.0
          %8810 = vmatpush1.msra.mxu0 %v8685
          %8811 = vmatprep.subr.mxu0 0.0
          %8812 = vmatpush1.msra.mxu0 %v8686
          %8813 = vmatprep.subr.mxu0 0.0
          %8814 = vmatpush1.msra.mxu0 %v8687
          %8815 = vmatprep.subr.mxu0 0.0
          %8816 = vmatpush1.msra.mxu0 %v8688
          %8817 = vmatprep.subr.mxu0 0.0
          %8818 = vmatpush1.msra.mxu0 %v8689
          %8819 = vmatprep.subr.mxu0 0.0
          %8820 = vmatpush1.msra.mxu0 %v8690
          %8821 = vmatprep.subr.mxu0 0.0
          %8822 = vmatpush1.msra.mxu0 %v8691
          %8823 = vmatprep.subr.mxu0 0.0
          %8824 = vmatpush1.msra.mxu0 %v8692
          %8825 = vmatprep.subr.mxu0 0.0
          %8826 = vmatpush1.msra.mxu0 %v8693
          %8827 = vmatprep.subr.mxu0 0.0
          %8828 = vmatpush1.msra.mxu0 %v8694
          %8829 = vmatprep.subr.mxu0 0.0
          %8830 = vmatpush1.msra.mxu0 %v8695
          %8831 = vmatprep.subr.mxu0 0.0
          %8832 = vmatpush1.msra.mxu0 %v8696
          %8833 = vmatprep.subr.mxu0 0.0
          %8834 = vmatpush1.msra.mxu0 %v8697
          %8835 = vmatprep.subr.mxu0 0.0
          %8836 = vmatpush1.msra.mxu0 %v8698
          %8837 = vmatprep.subr.mxu0 0.0
          %8838 = vmatpush1.msra.mxu0 %v8699
          %8839 = vmatprep.subr.mxu0 0.0
          %8840 = vmatpush1.msra.mxu0 %v8700
          %8841 = vmatprep.subr.mxu0 0.0
          %8842 = vmatpush1.msra.mxu0 %v8701
          %8843 = vmatprep.mubr.f32.mxu0 %v8637
          %8844 = vmatmul.mubr.f32.gmra.mrb[0].mxu0 %v8636
          %v8845 = vpop.f32.mrb[0].mxu0
          %v8846 = vadd.f32 %v8776, %v8845
          %v8847 = vpop.f32.mrb[0].mxu0
          %8848 = vdwg.mxu0
          %vm8849 = vcmask 64512
          %8850 = vst.msk [vmem:[#allocation20] sm:$0xff] %vm8849, %v8846
        $region120: #{tpu_custom_call.1} parent=67 // pred_fallthru
          _
        // Predicated region
        $region121: #{tpu_custom_call.1} parent=67 // pred_check
          %p8851 = pneg %p304
        $region122: #{tpu_custom_call.1} parent=67 // pred_check_branch
          %8853 = sbr.rel (%p8851) target = $region124
        $region123: #{tpu_custom_call.1} parent=67 // pred_region
          %s8855 = ssub.s32 128, 128
          %8856 = vsyncadd [#allocation5], %s8855
          %s8858 = sshll.u32 [#allocation20], 4
          %s8859 = int_to_ptr.vmem [resolvable:$true] %s8858
          %8861 = dma.vmem_to_hbm [thread:$0]  %s8859, 128, %s12, [#allocation5]
        $region124: #{tpu_custom_call.1} parent=67 // pred_fallthru
          _
        // Predicated region
        $region125: #{tpu_custom_call.1} parent=67 // pred_check
          %p8862 = pneg %p304
        $region126: #{tpu_custom_call.1} parent=67 // pred_check_branch
          %8864 = sbr.rel (%p8862) target = $region128
        $region127: #{tpu_custom_call.1} parent=67 // pred_region
          %8865 = dma.done [#allocation5], 128
        $region128: #{tpu_custom_call.1} parent=67 // pred_fallthru
          _
      $region68: #{tpu_custom_call.1} parent=5 // pred_fallthru
        _
      %p8866 = scmp.le.s32.totalorder 2, %s24
      // Predicated region
      $region129: #{tpu_custom_call.1} parent=5 // pred_check
        %p8867 = pneg %p8866
      $region130: #{tpu_custom_call.1} parent=5 // pred_check_branch
        %8869 = sbr.rel (%p8867) target = $region132
      $region131: #{tpu_custom_call.1} parent=5 // pred_region
        %s8870 = ssub.s32 %s24, 2
      $region132: #{tpu_custom_call.1} parent=5 // pred_fallthru
        _
    $region6: #{tpu_custom_call.1} parent=1 // loop_footer
      %s28 = sadd.s32 1, %s24
    $region7: #{tpu_custom_call.1} parent=1 // loop_footer_branch
      %23 = sbr.rel target = $region3
    $region8: #{tpu_custom_call.1} parent=1 // loop_exit
      _
    %8871 = vsyncpa [#allocation4], 1
    %s8872 = scalar_lea.sflag [#allocation4], 1
    %8873 = vsyncpa %s8872, 1
    %8874 = vsyncpa [#allocation7], 1
    %8875 = vsyncpa [#allocation10], 1
    %8876 = vsyncpa [#allocation13], 1
    %8877 = vsyncpa [#allocation16], 1
    %8878 = vsyncpa [#allocation5], 1
    %s8879 = scalar_lea.sflag [#allocation5], 1
    %8880 = vsyncpa %s8879, 1

</llo_original>
